<compile_context>
chip_gen: v6e
topology: v6e:2x2x1
jax: 0.10.0
libtpu: 0.0.40
codegen_flags: <defaults>
</compile_context>

<pallas_src>
import jax
import jax.numpy as jnp
from jax import lax
from jax.experimental import pallas as pl
from jax.experimental.pallas import tpu as pltpu

# Module constants (cov_test on 28x28 single-channel input).
K = 5                      # conv kernel size
PAD = 2                    # "same" padding
C_OUT = 10                 # output channels of cov_test
H = 28
W = 28
Hp = H + 2 * PAD           # 32
Wp = W + 2 * PAD           # 32
LANES = 128                # vreg lane width
IMGS = LANES // Wp         # 4 images packed along the lane axis per grid step
LANEW = (IMGS - 1) * Wp + W  # 124: widest lane extent any tap window touches
assert LANES % Wp == 0 and IMGS * Wp == LANES


def _conv5x5_kernel(x_ref, w_ref, o_ref, xp_ref, pre_ref):
    """One group of IMGS images.

    x_ref:   (IMGS, H, W)        f32 VMEM  - unpadded input images
    w_ref:   (C_OUT*K*K,)        f32 SMEM  - flattened OIHW weights (Cin==1)
    o_ref:   (IMGS, C_OUT, H, W) f32 VMEM  - output block (NCHW)
    xp_ref:  (Hp, LANES)         f32 VMEM  - zero-padded, lane-packed slab
    pre_ref: (K*K, H, LANEW)     f32 VMEM  - pre-shifted per-tap views
    """
    # 1) Build the zero-padded, lane-packed input slab entirely in-kernel:
    #    image j occupies lanes [j*Wp, (j+1)*Wp) with a 2-wide zero halo.
    xp_ref[...] = jnp.zeros((Hp, LANES), jnp.float32)
    for j in range(IMGS):
        xp_ref[PAD:PAD + H, j * Wp + PAD: j * Wp + PAD + W] = x_ref[j]

    # 2) Stage the 25 shifted tap views once; they are reused by all 10 output
    #    channels, so the hot loop below only does aligned full-width loads.
    for kh in range(K):
        for kw in range(K):
            pre_ref[kh * K + kw] = xp_ref[kh:kh + H, kw:kw + LANEW]

    # 3) 25-tap shift-and-MAC per output channel.  Weights are SMEM scalars:
    #    scalar * vreg broadcasts for free on the VPU (no cross-lane work).
    for c in range(C_OUT):
        base = c * K * K
        acc = w_ref[base] * pre_ref[0]
        for t in range(1, K * K):
            acc = acc + w_ref[base + t] * pre_ref[t]
        # 4) Unpack the lane-packed accumulator back to per-image NCHW tiles
        #    (done in-kernel so no extra wrapper-side relayout pass on the
        #    10x-larger output).
        for j in range(IMGS):
            o_ref[j, c, :, :] = acc[:, j * Wp: j * Wp + W].astype(o_ref.dtype)


def cov_test_forward(x_nchw, weight):
    """x_nchw: (N, 1, 28, 28) f32, weight: (10, 1, 5, 5) f32 -> (N, 10, 28, 28)."""
    N, Cin, Hin, Win = x_nchw.shape
    assert Cin == 1 and Hin == H and Win == W, (x_nchw.shape,)
    assert weight.shape == (C_OUT, 1, K, K), (weight.shape,)

    # Free reshapes (contiguous): squeeze Cin, flatten weights for SMEM.
    x = x_nchw.reshape(N, H, W)
    w_flat = weight.reshape(C_OUT * K * K)

    # Group the batch into lane-packed groups of IMGS images.
    n_groups = pl.cdiv(N, IMGS)
    n_pad = n_groups * IMGS
    if n_pad != N:  # remainder groups: pad batch with zero images (rare path)
        x = jnp.pad(x, ((0, n_pad - N), (0, 0), (0, 0)))

    out = pl.pallas_call(
        _conv5x5_kernel,
        out_shape=jax.ShapeDtypeStruct((n_pad, C_OUT, H, W), x_nchw.dtype),
        grid_spec=pltpu.PrefetchScalarGridSpec(
            num_scalar_prefetch=0,
            grid=(n_groups,),
            in_specs=[
                pl.BlockSpec((IMGS, H, W), lambda g: (g, 0, 0)),
                pl.BlockSpec(memory_space=pltpu.MemorySpace.SMEM),
            ],
            out_specs=pl.BlockSpec((IMGS, C_OUT, H, W), lambda g: (g, 0, 0, 0)),
            scratch_shapes=[
                pltpu.VMEM((Hp, LANES), jnp.float32),
                pltpu.VMEM((K * K, H, LANEW), jnp.float32),
            ],
        ),
        compiler_params=pltpu.CompilerParams(
            dimension_semantics=("parallel",),  # v7x: shard groups over 2 TCs
        ),
    )(x, w_flat)
    return out[:N]


def _reference_conv(x_nchw, weight):
    return lax.conv_general_dilated(
        x_nchw, weight,
        window_strides=(1, 1),
        padding=((PAD, PAD), (PAD, PAD)),
        dimension_numbers=("NCHW", "OIHW", "NCHW"),
    )


if __name__ == "__main__":
    key = jax.random.PRNGKey(0)
    kx, kw = jax.random.split(key)

    # Small shapes consistent with the module: x = (N, 1, 28, 28).
    N = 8
    x = jax.random.normal(kx, (N, 1, H, W), dtype=jnp.float32)

    # PyTorch-like uniform(-1/sqrt(fan_in), 1/sqrt(fan_in)), fan_in = 1*5*5.
    bound = 1.0 / jnp.sqrt(1.0 * K * K)
    weight = jax.random.uniform(kw, (C_OUT, 1, K, K), dtype=jnp.float32,
                                minval=-bound, maxval=bound)

    out = cov_test_forward(x, weight)
    out = jax.block_until_ready(out)

    ref = _reference_conv(x, weight)
    assert out.shape == (N, C_OUT, H, W), out.shape
    assert jnp.allclose(out, ref, atol=1e-4, rtol=1e-4), \
        float(jnp.max(jnp.abs(out - ref)))

    print("KERNEL_OK")
</pallas_src>

<mosaic_0001>
module attributes {stable_mosaic.version = 11 : i64} {
  func.func @_conv5x5_kernel(%arg0: i32, %arg1: memref<4x28x28xf32, #tpu.memory_space<vmem>>, %arg2: memref<250xf32, #tpu.memory_space<smem>>, %arg3: memref<4x10x28x28xf32, #tpu.memory_space<vmem>>, %arg4: memref<32x128xf32, #tpu.memory_space<vmem>>, %arg5: memref<25x28x124xf32, #tpu.memory_space<vmem>>) attributes {dimension_semantics = [#tpu.dimension_semantics<parallel>], iteration_bounds = array<i64: 2>, scalar_prefetch = 0 : i64, scratch_operands = 2 : i64, tpu.core_type = #tpu.core_type<tc>, window_params = [{transform_indices = @transform_0, window_bounds = array<i64: 4, 28, 28>}, {transform_indices = @transform_1, window_bounds = array<i64: 250>}, {transform_indices = @transform_2, window_bounds = array<i64: 4, 10, 28, 28>}]} {
    %cst = arith.constant 0.000000e+00 : f32
    %0 = vector.broadcast %cst : f32 to vector<32x128xf32>
    %c0 = arith.constant 0 : index
    %c0_0 = arith.constant 0 : index
    %1 = vector.load %arg4[%c0, %c0_0] : memref<32x128xf32, #tpu.memory_space<vmem>>, vector<32x128xf32>
    tpu.vector_store %arg4[%c0, %c0_0], %0 {strides = array<i32>} : memref<32x128xf32, #tpu.memory_space<vmem>>, vector<32x128xf32>,
    %c0_1 = arith.constant 0 : index
    %c0_2 = arith.constant 0 : index
    %c0_3 = arith.constant 0 : index
    %2 = vector.load %arg1[%c0_1, %c0_2, %c0_3] : memref<4x28x28xf32, #tpu.memory_space<vmem>>, vector<1x28x28xf32>
    %3 = vector.shape_cast %2 : vector<1x28x28xf32> to vector<28x28xf32>
    %c2 = arith.constant 2 : index
    %c2_4 = arith.constant 2 : index
    %4 = vector.load %arg4[%c2, %c2_4] : memref<32x128xf32, #tpu.memory_space<vmem>>, vector<28x28xf32>
    tpu.vector_store %arg4[%c2, %c2_4], %3 {strides = array<i32>} : memref<32x128xf32, #tpu.memory_space<vmem>>, vector<28x28xf32>,
    %c1 = arith.constant 1 : index
    %c0_5 = arith.constant 0 : index
    %c0_6 = arith.constant 0 : index
    %5 = vector.load %arg1[%c1, %c0_5, %c0_6] : memref<4x28x28xf32, #tpu.memory_space<vmem>>, vector<1x28x28xf32>
    %6 = vector.shape_cast %5 : vector<1x28x28xf32> to vector<28x28xf32>
    %c2_7 = arith.constant 2 : index
    %c34 = arith.constant 34 : index
    %7 = vector.load %arg4[%c2_7, %c34] : memref<32x128xf32, #tpu.memory_space<vmem>>, vector<28x28xf32>
    tpu.vector_store %arg4[%c2_7, %c34], %6 {strides = array<i32>} : memref<32x128xf32, #tpu.memory_space<vmem>>, vector<28x28xf32>,
    %c2_8 = arith.constant 2 : index
    %c0_9 = arith.constant 0 : index
    %c0_10 = arith.constant 0 : index
    %8 = vector.load %arg1[%c2_8, %c0_9, %c0_10] : memref<4x28x28xf32, #tpu.memory_space<vmem>>, vector<1x28x28xf32>
    %9 = vector.shape_cast %8 : vector<1x28x28xf32> to vector<28x28xf32>
    %c2_11 = arith.constant 2 : index
    %c66 = arith.constant 66 : index
    %10 = vector.load %arg4[%c2_11, %c66] : memref<32x128xf32, #tpu.memory_space<vmem>>, vector<28x28xf32>
    tpu.vector_store %arg4[%c2_11, %c66], %9 {strides = array<i32>} : memref<32x128xf32, #tpu.memory_space<vmem>>, vector<28x28xf32>,
    %c3 = arith.constant 3 : index
    %c0_12 = arith.constant 0 : index
    %c0_13 = arith.constant 0 : index
    %11 = vector.load %arg1[%c3, %c0_12, %c0_13] : memref<4x28x28xf32, #tpu.memory_space<vmem>>, vector<1x28x28xf32>
    %12 = vector.shape_cast %11 : vector<1x28x28xf32> to vector<28x28xf32>
    %c2_14 = arith.constant 2 : index
    %c98 = arith.constant 98 : index
    %13 = vector.load %arg4[%c2_14, %c98] : memref<32x128xf32, #tpu.memory_space<vmem>>, vector<28x28xf32>
    tpu.vector_store %arg4[%c2_14, %c98], %12 {strides = array<i32>} : memref<32x128xf32, #tpu.memory_space<vmem>>, vector<28x28xf32>,
    %c0_15 = arith.constant 0 : index
    %c0_16 = arith.constant 0 : index
    %14 = vector.load %arg4[%c0_15, %c0_16] : memref<32x128xf32, #tpu.memory_space<vmem>>, vector<28x124xf32>
    %c0_17 = arith.constant 0 : index
    %c0_18 = arith.constant 0 : index
    %c0_19 = arith.constant 0 : index
    %15 = vector.load %arg5[%c0_17, %c0_18, %c0_19] : memref<25x28x124xf32, #tpu.memory_space<vmem>>, vector<1x28x124xf32>
    %16 = vector.shape_cast %15 : vector<1x28x124xf32> to vector<28x124xf32>
    %17 = vector.shape_cast %14 : vector<28x124xf32> to vector<1x28x124xf32>
    tpu.vector_store %arg5[%c0_17, %c0_18, %c0_19], %17 {strides = array<i32>} : memref<25x28x124xf32, #tpu.memory_space<vmem>>, vector<1x28x124xf32>,
    %c0_20 = arith.constant 0 : index
    %c1_21 = arith.constant 1 : index
    %18 = vector.load %arg4[%c0_20, %c1_21] : memref<32x128xf32, #tpu.memory_space<vmem>>, vector<28x124xf32>
    %c1_22 = arith.constant 1 : index
    %c0_23 = arith.constant 0 : index
    %c0_24 = arith.constant 0 : index
    %19 = vector.load %arg5[%c1_22, %c0_23, %c0_24] : memref<25x28x124xf32, #tpu.memory_space<vmem>>, vector<1x28x124xf32>
    %20 = vector.shape_cast %19 : vector<1x28x124xf32> to vector<28x124xf32>
    %21 = vector.shape_cast %18 : vector<28x124xf32> to vector<1x28x124xf32>
    tpu.vector_store %arg5[%c1_22, %c0_23, %c0_24], %21 {strides = array<i32>} : memref<25x28x124xf32, #tpu.memory_space<vmem>>, vector<1x28x124xf32>,
    %c0_25 = arith.constant 0 : index
    %c2_26 = arith.constant 2 : index
    %22 = vector.load %arg4[%c0_25, %c2_26] : memref<32x128xf32, #tpu.memory_space<vmem>>, vector<28x124xf32>
    %c2_27 = arith.constant 2 : index
    %c0_28 = arith.constant 0 : index
    %c0_29 = arith.constant 0 : index
    %23 = vector.load %arg5[%c2_27, %c0_28, %c0_29] : memref<25x28x124xf32, #tpu.memory_space<vmem>>, vector<1x28x124xf32>
    %24 = vector.shape_cast %23 : vector<1x28x124xf32> to vector<28x124xf32>
    %25 = vector.shape_cast %22 : vector<28x124xf32> to vector<1x28x124xf32>
    tpu.vector_store %arg5[%c2_27, %c0_28, %c0_29], %25 {strides = array<i32>} : memref<25x28x124xf32, #tpu.memory_space<vmem>>, vector<1x28x124xf32>,
    %c0_30 = arith.constant 0 : index
    %c3_31 = arith.constant 3 : index
    %26 = vector.load %arg4[%c0_30, %c3_31] : memref<32x128xf32, #tpu.memory_space<vmem>>, vector<28x124xf32>
    %c3_32 = arith.constant 3 : index
    %c0_33 = arith.constant 0 : index
    %c0_34 = arith.constant 0 : index
    %27 = vector.load %arg5[%c3_32, %c0_33, %c0_34] : memref<25x28x124xf32, #tpu.memory_space<vmem>>, vector<1x28x124xf32>
    %28 = vector.shape_cast %27 : vector<1x28x124xf32> to vector<28x124xf32>
    %29 = vector.shape_cast %26 : vector<28x124xf32> to vector<1x28x124xf32>
    tpu.vector_store %arg5[%c3_32, %c0_33, %c0_34], %29 {strides = array<i32>} : memref<25x28x124xf32, #tpu.memory_space<vmem>>, vector<1x28x124xf32>,
    %c0_35 = arith.constant 0 : index
    %c4 = arith.constant 4 : index
    %30 = vector.load %arg4[%c0_35, %c4] : memref<32x128xf32, #tpu.memory_space<vmem>>, vector<28x124xf32>
    %c4_36 = arith.constant 4 : index
    %c0_37 = arith.constant 0 : index
    %c0_38 = arith.constant 0 : index
    %31 = vector.load %arg5[%c4_36, %c0_37, %c0_38] : memref<25x28x124xf32, #tpu.memory_space<vmem>>, vector<1x28x124xf32>
    %32 = vector.shape_cast %31 : vector<1x28x124xf32> to vector<28x124xf32>
    %33 = vector.shape_cast %30 : vector<28x124xf32> to vector<1x28x124xf32>
    tpu.vector_store %arg5[%c4_36, %c0_37, %c0_38], %33 {strides = array<i32>} : memref<25x28x124xf32, #tpu.memory_space<vmem>>, vector<1x28x124xf32>,
    %c1_39 = arith.constant 1 : index
    %c0_40 = arith.constant 0 : index
    %34 = vector.load %arg4[%c1_39, %c0_40] : memref<32x128xf32, #tpu.memory_space<vmem>>, vector<28x124xf32>
    %c5 = arith.constant 5 : index
    %c0_41 = arith.constant 0 : index
    %c0_42 = arith.constant 0 : index
    %35 = vector.load %arg5[%c5, %c0_41, %c0_42] : memref<25x28x124xf32, #tpu.memory_space<vmem>>, vector<1x28x124xf32>
    %36 = vector.shape_cast %35 : vector<1x28x124xf32> to vector<28x124xf32>
    %37 = vector.shape_cast %34 : vector<28x124xf32> to vector<1x28x124xf32>
    tpu.vector_store %arg5[%c5, %c0_41, %c0_42], %37 {strides = array<i32>} : memref<25x28x124xf32, #tpu.memory_space<vmem>>, vector<1x28x124xf32>,
    %c1_43 = arith.constant 1 : index
    %c1_44 = arith.constant 1 : index
    %38 = vector.load %arg4[%c1_43, %c1_44] : memref<32x128xf32, #tpu.memory_space<vmem>>, vector<28x124xf32>
    %c6 = arith.constant 6 : index
    %c0_45 = arith.constant 0 : index
    %c0_46 = arith.constant 0 : index
    %39 = vector.load %arg5[%c6, %c0_45, %c0_46] : memref<25x28x124xf32, #tpu.memory_space<vmem>>, vector<1x28x124xf32>
    %40 = vector.shape_cast %39 : vector<1x28x124xf32> to vector<28x124xf32>
    %41 = vector.shape_cast %38 : vector<28x124xf32> to vector<1x28x124xf32>
    tpu.vector_store %arg5[%c6, %c0_45, %c0_46], %41 {strides = array<i32>} : memref<25x28x124xf32, #tpu.memory_space<vmem>>, vector<1x28x124xf32>,
    %c1_47 = arith.constant 1 : index
    %c2_48 = arith.constant 2 : index
    %42 = vector.load %arg4[%c1_47, %c2_48] : memref<32x128xf32, #tpu.memory_space<vmem>>, vector<28x124xf32>
    %c7 = arith.constant 7 : index
    %c0_49 = arith.constant 0 : index
    %c0_50 = arith.constant 0 : index
    %43 = vector.load %arg5[%c7, %c0_49, %c0_50] : memref<25x28x124xf32, #tpu.memory_space<vmem>>, vector<1x28x124xf32>
    %44 = vector.shape_cast %43 : vector<1x28x124xf32> to vector<28x124xf32>
    %45 = vector.shape_cast %42 : vector<28x124xf32> to vector<1x28x124xf32>
    tpu.vector_store %arg5[%c7, %c0_49, %c0_50], %45 {strides = array<i32>} : memref<25x28x124xf32, #tpu.memory_space<vmem>>, vector<1x28x124xf32>,
    %c1_51 = arith.constant 1 : index
    %c3_52 = arith.constant 3 : index
    %46 = vector.load %arg4[%c1_51, %c3_52] : memref<32x128xf32, #tpu.memory_space<vmem>>, vector<28x124xf32>
    %c8 = arith.constant 8 : index
    %c0_53 = arith.constant 0 : index
    %c0_54 = arith.constant 0 : index
    %47 = vector.load %arg5[%c8, %c0_53, %c0_54] : memref<25x28x124xf32, #tpu.memory_space<vmem>>, vector<1x28x124xf32>
    %48 = vector.shape_cast %47 : vector<1x28x124xf32> to vector<28x124xf32>
    %49 = vector.shape_cast %46 : vector<28x124xf32> to vector<1x28x124xf32>
    tpu.vector_store %arg5[%c8, %c0_53, %c0_54], %49 {strides = array<i32>} : memref<25x28x124xf32, #tpu.memory_space<vmem>>, vector<1x28x124xf32>,
    %c1_55 = arith.constant 1 : index
    %c4_56 = arith.constant 4 : index
    %50 = vector.load %arg4[%c1_55, %c4_56] : memref<32x128xf32, #tpu.memory_space<vmem>>, vector<28x124xf32>
    %c9 = arith.constant 9 : index
    %c0_57 = arith.constant 0 : index
    %c0_58 = arith.constant 0 : index
    %51 = vector.load %arg5[%c9, %c0_57, %c0_58] : memref<25x28x124xf32, #tpu.memory_space<vmem>>, vector<1x28x124xf32>
    %52 = vector.shape_cast %51 : vector<1x28x124xf32> to vector<28x124xf32>
    %53 = vector.shape_cast %50 : vector<28x124xf32> to vector<1x28x124xf32>
    tpu.vector_store %arg5[%c9, %c0_57, %c0_58], %53 {strides = array<i32>} : memref<25x28x124xf32, #tpu.memory_space<vmem>>, vector<1x28x124xf32>,
    %c2_59 = arith.constant 2 : index
    %c0_60 = arith.constant 0 : index
    %54 = vector.load %arg4[%c2_59, %c0_60] : memref<32x128xf32, #tpu.memory_space<vmem>>, vector<28x124xf32>
    %c10 = arith.constant 10 : index
    %c0_61 = arith.constant 0 : index
    %c0_62 = arith.constant 0 : index
    %55 = vector.load %arg5[%c10, %c0_61, %c0_62] : memref<25x28x124xf32, #tpu.memory_space<vmem>>, vector<1x28x124xf32>
    %56 = vector.shape_cast %55 : vector<1x28x124xf32> to vector<28x124xf32>
    %57 = vector.shape_cast %54 : vector<28x124xf32> to vector<1x28x124xf32>
    tpu.vector_store %arg5[%c10, %c0_61, %c0_62], %57 {strides = array<i32>} : memref<25x28x124xf32, #tpu.memory_space<vmem>>, vector<1x28x124xf32>,
    %c2_63 = arith.constant 2 : index
    %c1_64 = arith.constant 1 : index
    %58 = vector.load %arg4[%c2_63, %c1_64] : memref<32x128xf32, #tpu.memory_space<vmem>>, vector<28x124xf32>
    %c11 = arith.constant 11 : index
    %c0_65 = arith.constant 0 : index
    %c0_66 = arith.constant 0 : index
    %59 = vector.load %arg5[%c11, %c0_65, %c0_66] : memref<25x28x124xf32, #tpu.memory_space<vmem>>, vector<1x28x124xf32>
    %60 = vector.shape_cast %59 : vector<1x28x124xf32> to vector<28x124xf32>
    %61 = vector.shape_cast %58 : vector<28x124xf32> to vector<1x28x124xf32>
    tpu.vector_store %arg5[%c11, %c0_65, %c0_66], %61 {strides = array<i32>} : memref<25x28x124xf32, #tpu.memory_space<vmem>>, vector<1x28x124xf32>,
    %c2_67 = arith.constant 2 : index
    %c2_68 = arith.constant 2 : index
    %62 = vector.load %arg4[%c2_67, %c2_68] : memref<32x128xf32, #tpu.memory_space<vmem>>, vector<28x124xf32>
    %c12 = arith.constant 12 : index
    %c0_69 = arith.constant 0 : index
    %c0_70 = arith.constant 0 : index
    %63 = vector.load %arg5[%c12, %c0_69, %c0_70] : memref<25x28x124xf32, #tpu.memory_space<vmem>>, vector<1x28x124xf32>
    %64 = vector.shape_cast %63 : vector<1x28x124xf32> to vector<28x124xf32>
    %65 = vector.shape_cast %62 : vector<28x124xf32> to vector<1x28x124xf32>
    tpu.vector_store %arg5[%c12, %c0_69, %c0_70], %65 {strides = array<i32>} : memref<25x28x124xf32, #tpu.memory_space<vmem>>, vector<1x28x124xf32>,
    %c2_71 = arith.constant 2 : index
    %c3_72 = arith.constant 3 : index
    %66 = vector.load %arg4[%c2_71, %c3_72] : memref<32x128xf32, #tpu.memory_space<vmem>>, vector<28x124xf32>
    %c13 = arith.constant 13 : index
    %c0_73 = arith.constant 0 : index
    %c0_74 = arith.constant 0 : index
    %67 = vector.load %arg5[%c13, %c0_73, %c0_74] : memref<25x28x124xf32, #tpu.memory_space<vmem>>, vector<1x28x124xf32>
    %68 = vector.shape_cast %67 : vector<1x28x124xf32> to vector<28x124xf32>
    %69 = vector.shape_cast %66 : vector<28x124xf32> to vector<1x28x124xf32>
    tpu.vector_store %arg5[%c13, %c0_73, %c0_74], %69 {strides = array<i32>} : memref<25x28x124xf32, #tpu.memory_space<vmem>>, vector<1x28x124xf32>,
    %c2_75 = arith.constant 2 : index
    %c4_76 = arith.constant 4 : index
    %70 = vector.load %arg4[%c2_75, %c4_76] : memref<32x128xf32, #tpu.memory_space<vmem>>, vector<28x124xf32>
    %c14 = arith.constant 14 : index
    %c0_77 = arith.constant 0 : index
    %c0_78 = arith.constant 0 : index
    %71 = vector.load %arg5[%c14, %c0_77, %c0_78] : memref<25x28x124xf32, #tpu.memory_space<vmem>>, vector<1x28x124xf32>
    %72 = vector.shape_cast %71 : vector<1x28x124xf32> to vector<28x124xf32>
    %73 = vector.shape_cast %70 : vector<28x124xf32> to vector<1x28x124xf32>
    tpu.vector_store %arg5[%c14, %c0_77, %c0_78], %73 {strides = array<i32>} : memref<25x28x124xf32, #tpu.memory_space<vmem>>, vector<1x28x124xf32>,
    %c3_79 = arith.constant 3 : index
    %c0_80 = arith.constant 0 : index
    %74 = vector.load %arg4[%c3_79, %c0_80] : memref<32x128xf32, #tpu.memory_space<vmem>>, vector<28x124xf32>
    %c15 = arith.constant 15 : index
    %c0_81 = arith.constant 0 : index
    %c0_82 = arith.constant 0 : index
    %75 = vector.load %arg5[%c15, %c0_81, %c0_82] : memref<25x28x124xf32, #tpu.memory_space<vmem>>, vector<1x28x124xf32>
    %76 = vector.shape_cast %75 : vector<1x28x124xf32> to vector<28x124xf32>
    %77 = vector.shape_cast %74 : vector<28x124xf32> to vector<1x28x124xf32>
    tpu.vector_store %arg5[%c15, %c0_81, %c0_82], %77 {strides = array<i32>} : memref<25x28x124xf32, #tpu.memory_space<vmem>>, vector<1x28x124xf32>,
    %c3_83 = arith.constant 3 : index
    %c1_84 = arith.constant 1 : index
    %78 = vector.load %arg4[%c3_83, %c1_84] : memref<32x128xf32, #tpu.memory_space<vmem>>, vector<28x124xf32>
    %c16 = arith.constant 16 : index
    %c0_85 = arith.constant 0 : index
    %c0_86 = arith.constant 0 : index
    %79 = vector.load %arg5[%c16, %c0_85, %c0_86] : memref<25x28x124xf32, #tpu.memory_space<vmem>>, vector<1x28x124xf32>
    %80 = vector.shape_cast %79 : vector<1x28x124xf32> to vector<28x124xf32>
    %81 = vector.shape_cast %78 : vector<28x124xf32> to vector<1x28x124xf32>
    tpu.vector_store %arg5[%c16, %c0_85, %c0_86], %81 {strides = array<i32>} : memref<25x28x124xf32, #tpu.memory_space<vmem>>, vector<1x28x124xf32>,
    %c3_87 = arith.constant 3 : index
    %c2_88 = arith.constant 2 : index
    %82 = vector.load %arg4[%c3_87, %c2_88] : memref<32x128xf32, #tpu.memory_space<vmem>>, vector<28x124xf32>
    %c17 = arith.constant 17 : index
    %c0_89 = arith.constant 0 : index
    %c0_90 = arith.constant 0 : index
    %83 = vector.load %arg5[%c17, %c0_89, %c0_90] : memref<25x28x124xf32, #tpu.memory_space<vmem>>, vector<1x28x124xf32>
    %84 = vector.shape_cast %83 : vector<1x28x124xf32> to vector<28x124xf32>
    %85 = vector.shape_cast %82 : vector<28x124xf32> to vector<1x28x124xf32>
    tpu.vector_store %arg5[%c17, %c0_89, %c0_90], %85 {strides = array<i32>} : memref<25x28x124xf32, #tpu.memory_space<vmem>>, vector<1x28x124xf32>,
    %c3_91 = arith.constant 3 : index
    %c3_92 = arith.constant 3 : index
    %86 = vector.load %arg4[%c3_91, %c3_92] : memref<32x128xf32, #tpu.memory_space<vmem>>, vector<28x124xf32>
    %c18 = arith.constant 18 : index
    %c0_93 = arith.constant 0 : index
    %c0_94 = arith.constant 0 : index
    %87 = vector.load %arg5[%c18, %c0_93, %c0_94] : memref<25x28x124xf32, #tpu.memory_space<vmem>>, vector<1x28x124xf32>
    %88 = vector.shape_cast %87 : vector<1x28x124xf32> to vector<28x124xf32>
    %89 = vector.shape_cast %86 : vector<28x124xf32> to vector<1x28x124xf32>
    tpu.vector_store %arg5[%c18, %c0_93, %c0_94], %89 {strides = array<i32>} : memref<25x28x124xf32, #tpu.memory_space<vmem>>, vector<1x28x124xf32>,
    %c3_95 = arith.constant 3 : index
    %c4_96 = arith.constant 4 : index
    %90 = vector.load %arg4[%c3_95, %c4_96] : memref<32x128xf32, #tpu.memory_space<vmem>>, vector<28x124xf32>
    %c19 = arith.constant 19 : index
    %c0_97 = arith.constant 0 : index
    %c0_98 = arith.constant 0 : index
    %91 = vector.load %arg5[%c19, %c0_97, %c0_98] : memref<25x28x124xf32, #tpu.memory_space<vmem>>, vector<1x28x124xf32>
    %92 = vector.shape_cast %91 : vector<1x28x124xf32> to vector<28x124xf32>
    %93 = vector.shape_cast %90 : vector<28x124xf32> to vector<1x28x124xf32>
    tpu.vector_store %arg5[%c19, %c0_97, %c0_98], %93 {strides = array<i32>} : memref<25x28x124xf32, #tpu.memory_space<vmem>>, vector<1x28x124xf32>,
    %c4_99 = arith.constant 4 : index
    %c0_100 = arith.constant 0 : index
    %94 = vector.load %arg4[%c4_99, %c0_100] : memref<32x128xf32, #tpu.memory_space<vmem>>, vector<28x124xf32>
    %c20 = arith.constant 20 : index
    %c0_101 = arith.constant 0 : index
    %c0_102 = arith.constant 0 : index
    %95 = vector.load %arg5[%c20, %c0_101, %c0_102] : memref<25x28x124xf32, #tpu.memory_space<vmem>>, vector<1x28x124xf32>
    %96 = vector.shape_cast %95 : vector<1x28x124xf32> to vector<28x124xf32>
    %97 = vector.shape_cast %94 : vector<28x124xf32> to vector<1x28x124xf32>
    tpu.vector_store %arg5[%c20, %c0_101, %c0_102], %97 {strides = array<i32>} : memref<25x28x124xf32, #tpu.memory_space<vmem>>, vector<1x28x124xf32>,
    %c4_103 = arith.constant 4 : index
    %c1_104 = arith.constant 1 : index
    %98 = vector.load %arg4[%c4_103, %c1_104] : memref<32x128xf32, #tpu.memory_space<vmem>>, vector<28x124xf32>
    %c21 = arith.constant 21 : index
    %c0_105 = arith.constant 0 : index
    %c0_106 = arith.constant 0 : index
    %99 = vector.load %arg5[%c21, %c0_105, %c0_106] : memref<25x28x124xf32, #tpu.memory_space<vmem>>, vector<1x28x124xf32>
    %100 = vector.shape_cast %99 : vector<1x28x124xf32> to vector<28x124xf32>
    %101 = vector.shape_cast %98 : vector<28x124xf32> to vector<1x28x124xf32>
    tpu.vector_store %arg5[%c21, %c0_105, %c0_106], %101 {strides = array<i32>} : memref<25x28x124xf32, #tpu.memory_space<vmem>>, vector<1x28x124xf32>,
    %c4_107 = arith.constant 4 : index
    %c2_108 = arith.constant 2 : index
    %102 = vector.load %arg4[%c4_107, %c2_108] : memref<32x128xf32, #tpu.memory_space<vmem>>, vector<28x124xf32>
    %c22 = arith.constant 22 : index
    %c0_109 = arith.constant 0 : index
    %c0_110 = arith.constant 0 : index
    %103 = vector.load %arg5[%c22, %c0_109, %c0_110] : memref<25x28x124xf32, #tpu.memory_space<vmem>>, vector<1x28x124xf32>
    %104 = vector.shape_cast %103 : vector<1x28x124xf32> to vector<28x124xf32>
    %105 = vector.shape_cast %102 : vector<28x124xf32> to vector<1x28x124xf32>
    tpu.vector_store %arg5[%c22, %c0_109, %c0_110], %105 {strides = array<i32>} : memref<25x28x124xf32, #tpu.memory_space<vmem>>, vector<1x28x124xf32>,
    %c4_111 = arith.constant 4 : index
    %c3_112 = arith.constant 3 : index
    %106 = vector.load %arg4[%c4_111, %c3_112] : memref<32x128xf32, #tpu.memory_space<vmem>>, vector<28x124xf32>
    %c23 = arith.constant 23 : index
    %c0_113 = arith.constant 0 : index
    %c0_114 = arith.constant 0 : index
    %107 = vector.load %arg5[%c23, %c0_113, %c0_114] : memref<25x28x124xf32, #tpu.memory_space<vmem>>, vector<1x28x124xf32>
    %108 = vector.shape_cast %107 : vector<1x28x124xf32> to vector<28x124xf32>
    %109 = vector.shape_cast %106 : vector<28x124xf32> to vector<1x28x124xf32>
    tpu.vector_store %arg5[%c23, %c0_113, %c0_114], %109 {strides = array<i32>} : memref<25x28x124xf32, #tpu.memory_space<vmem>>, vector<1x28x124xf32>,
    %c4_115 = arith.constant 4 : index
    %c4_116 = arith.constant 4 : index
    %110 = vector.load %arg4[%c4_115, %c4_116] : memref<32x128xf32, #tpu.memory_space<vmem>>, vector<28x124xf32>
    %c24 = arith.constant 24 : index
    %c0_117 = arith.constant 0 : index
    %c0_118 = arith.constant 0 : index
    %111 = vector.load %arg5[%c24, %c0_117, %c0_118] : memref<25x28x124xf32, #tpu.memory_space<vmem>>, vector<1x28x124xf32>
    %112 = vector.shape_cast %111 : vector<1x28x124xf32> to vector<28x124xf32>
    %113 = vector.shape_cast %110 : vector<28x124xf32> to vector<1x28x124xf32>
    tpu.vector_store %arg5[%c24, %c0_117, %c0_118], %113 {strides = array<i32>} : memref<25x28x124xf32, #tpu.memory_space<vmem>>, vector<1x28x124xf32>,
    %c0_119 = arith.constant 0 : index
    %114 = memref.load %arg2[%c0_119] : memref<250xf32, #tpu.memory_space<smem>>
    %c0_120 = arith.constant 0 : index
    %c0_121 = arith.constant 0 : index
    %c0_122 = arith.constant 0 : index
    %115 = vector.load %arg5[%c0_120, %c0_121, %c0_122] : memref<25x28x124xf32, #tpu.memory_space<vmem>>, vector<1x28x124xf32>
    %116 = vector.shape_cast %115 : vector<1x28x124xf32> to vector<28x124xf32>
    %117 = vector.broadcast %114 : f32 to vector<28x124xf32>
    %118 = arith.mulf %117, %116 : vector<28x124xf32>
    %c1_123 = arith.constant 1 : index
    %119 = memref.load %arg2[%c1_123] : memref<250xf32, #tpu.memory_space<smem>>
    %c1_124 = arith.constant 1 : index
    %c0_125 = arith.constant 0 : index
    %c0_126 = arith.constant 0 : index
    %120 = vector.load %arg5[%c1_124, %c0_125, %c0_126] : memref<25x28x124xf32, #tpu.memory_space<vmem>>, vector<1x28x124xf32>
    %121 = vector.shape_cast %120 : vector<1x28x124xf32> to vector<28x124xf32>
    %122 = vector.broadcast %119 : f32 to vector<28x124xf32>
    %123 = arith.mulf %122, %121 : vector<28x124xf32>
    %124 = arith.addf %118, %123 : vector<28x124xf32>
    %c2_127 = arith.constant 2 : index
    %125 = memref.load %arg2[%c2_127] : memref<250xf32, #tpu.memory_space<smem>>
    %c2_128 = arith.constant 2 : index
    %c0_129 = arith.constant 0 : index
    %c0_130 = arith.constant 0 : index
    %126 = vector.load %arg5[%c2_128, %c0_129, %c0_130] : memref<25x28x124xf32, #tpu.memory_space<vmem>>, vector<1x28x124xf32>
    %127 = vector.shape_cast %126 : vector<1x28x124xf32> to vector<28x124xf32>
    %128 = vector.broadcast %125 : f32 to vector<28x124xf32>
    %129 = arith.mulf %128, %127 : vector<28x124xf32>
    %130 = arith.addf %124, %129 : vector<28x124xf32>
    %c3_131 = arith.constant 3 : index
    %131 = memref.load %arg2[%c3_131] : memref<250xf32, #tpu.memory_space<smem>>
    %c3_132 = arith.constant 3 : index
    %c0_133 = arith.constant 0 : index
    %c0_134 = arith.constant 0 : index
    %132 = vector.load %arg5[%c3_132, %c0_133, %c0_134] : memref<25x28x124xf32, #tpu.memory_space<vmem>>, vector<1x28x124xf32>
    %133 = vector.shape_cast %132 : vector<1x28x124xf32> to vector<28x124xf32>
    %134 = vector.broadcast %131 : f32 to vector<28x124xf32>
    %135 = arith.mulf %134, %133 : vector<28x124xf32>
    %136 = arith.addf %130, %135 : vector<28x124xf32>
    %c4_135 = arith.constant 4 : index
    %137 = memref.load %arg2[%c4_135] : memref<250xf32, #tpu.memory_space<smem>>
    %c4_136 = arith.constant 4 : index
    %c0_137 = arith.constant 0 : index
    %c0_138 = arith.constant 0 : index
    %138 = vector.load %arg5[%c4_136, %c0_137, %c0_138] : memref<25x28x124xf32, #tpu.memory_space<vmem>>, vector<1x28x124xf32>
    %139 = vector.shape_cast %138 : vector<1x28x124xf32> to vector<28x124xf32>
    %140 = vector.broadcast %137 : f32 to vector<28x124xf32>
    %141 = arith.mulf %140, %139 : vector<28x124xf32>
    %142 = arith.addf %136, %141 : vector<28x124xf32>
    %c5_139 = arith.constant 5 : index
    %143 = memref.load %arg2[%c5_139] : memref<250xf32, #tpu.memory_space<smem>>
    %c5_140 = arith.constant 5 : index
    %c0_141 = arith.constant 0 : index
    %c0_142 = arith.constant 0 : index
    %144 = vector.load %arg5[%c5_140, %c0_141, %c0_142] : memref<25x28x124xf32, #tpu.memory_space<vmem>>, vector<1x28x124xf32>
    %145 = vector.shape_cast %144 : vector<1x28x124xf32> to vector<28x124xf32>
    %146 = vector.broadcast %143 : f32 to vector<28x124xf32>
    %147 = arith.mulf %146, %145 : vector<28x124xf32>
    %148 = arith.addf %142, %147 : vector<28x124xf32>
    %c6_143 = arith.constant 6 : index
    %149 = memref.load %arg2[%c6_143] : memref<250xf32, #tpu.memory_space<smem>>
    %c6_144 = arith.constant 6 : index
    %c0_145 = arith.constant 0 : index
    %c0_146 = arith.constant 0 : index
    %150 = vector.load %arg5[%c6_144, %c0_145, %c0_146] : memref<25x28x124xf32, #tpu.memory_space<vmem>>, vector<1x28x124xf32>
    %151 = vector.shape_cast %150 : vector<1x28x124xf32> to vector<28x124xf32>
    %152 = vector.broadcast %149 : f32 to vector<28x124xf32>
    %153 = arith.mulf %152, %151 : vector<28x124xf32>
    %154 = arith.addf %148, %153 : vector<28x124xf32>
    %c7_147 = arith.constant 7 : index
    %155 = memref.load %arg2[%c7_147] : memref<250xf32, #tpu.memory_space<smem>>
    %c7_148 = arith.constant 7 : index
    %c0_149 = arith.constant 0 : index
    %c0_150 = arith.constant 0 : index
    %156 = vector.load %arg5[%c7_148, %c0_149, %c0_150] : memref<25x28x124xf32, #tpu.memory_space<vmem>>, vector<1x28x124xf32>
    %157 = vector.shape_cast %156 : vector<1x28x124xf32> to vector<28x124xf32>
    %158 = vector.broadcast %155 : f32 to vector<28x124xf32>
    %159 = arith.mulf %158, %157 : vector<28x124xf32>
    %160 = arith.addf %154, %159 : vector<28x124xf32>
    %c8_151 = arith.constant 8 : index
    %161 = memref.load %arg2[%c8_151] : memref<250xf32, #tpu.memory_space<smem>>
    %c8_152 = arith.constant 8 : index
    %c0_153 = arith.constant 0 : index
    %c0_154 = arith.constant 0 : index
    %162 = vector.load %arg5[%c8_152, %c0_153, %c0_154] : memref<25x28x124xf32, #tpu.memory_space<vmem>>, vector<1x28x124xf32>
    %163 = vector.shape_cast %162 : vector<1x28x124xf32> to vector<28x124xf32>
    %164 = vector.broadcast %161 : f32 to vector<28x124xf32>
    %165 = arith.mulf %164, %163 : vector<28x124xf32>
    %166 = arith.addf %160, %165 : vector<28x124xf32>
    %c9_155 = arith.constant 9 : index
    %167 = memref.load %arg2[%c9_155] : memref<250xf32, #tpu.memory_space<smem>>
    %c9_156 = arith.constant 9 : index
    %c0_157 = arith.constant 0 : index
    %c0_158 = arith.constant 0 : index
    %168 = vector.load %arg5[%c9_156, %c0_157, %c0_158] : memref<25x28x124xf32, #tpu.memory_space<vmem>>, vector<1x28x124xf32>
    %169 = vector.shape_cast %168 : vector<1x28x124xf32> to vector<28x124xf32>
    %170 = vector.broadcast %167 : f32 to vector<28x124xf32>
    %171 = arith.mulf %170, %169 : vector<28x124xf32>
    %172 = arith.addf %166, %171 : vector<28x124xf32>
    %c10_159 = arith.constant 10 : index
    %173 = memref.load %arg2[%c10_159] : memref<250xf32, #tpu.memory_space<smem>>
    %c10_160 = arith.constant 10 : index
    %c0_161 = arith.constant 0 : index
    %c0_162 = arith.constant 0 : index
    %174 = vector.load %arg5[%c10_160, %c0_161, %c0_162] : memref<25x28x124xf32, #tpu.memory_space<vmem>>, vector<1x28x124xf32>
    %175 = vector.shape_cast %174 : vector<1x28x124xf32> to vector<28x124xf32>
    %176 = vector.broadcast %173 : f32 to vector<28x124xf32>
    %177 = arith.mulf %176, %175 : vector<28x124xf32>
    %178 = arith.addf %172, %177 : vector<28x124xf32>
    %c11_163 = arith.constant 11 : index
    %179 = memref.load %arg2[%c11_163] : memref<250xf32, #tpu.memory_space<smem>>
    %c11_164 = arith.constant 11 : index
    %c0_165 = arith.constant 0 : index
    %c0_166 = arith.constant 0 : index
    %180 = vector.load %arg5[%c11_164, %c0_165, %c0_166] : memref<25x28x124xf32, #tpu.memory_space<vmem>>, vector<1x28x124xf32>
    %181 = vector.shape_cast %180 : vector<1x28x124xf32> to vector<28x124xf32>
    %182 = vector.broadcast %179 : f32 to vector<28x124xf32>
    %183 = arith.mulf %182, %181 : vector<28x124xf32>
    %184 = arith.addf %178, %183 : vector<28x124xf32>
    %c12_167 = arith.constant 12 : index
    %185 = memref.load %arg2[%c12_167] : memref<250xf32, #tpu.memory_space<smem>>
    %c12_168 = arith.constant 12 : index
    %c0_169 = arith.constant 0 : index
    %c0_170 = arith.constant 0 : index
    %186 = vector.load %arg5[%c12_168, %c0_169, %c0_170] : memref<25x28x124xf32, #tpu.memory_space<vmem>>, vector<1x28x124xf32>
    %187 = vector.shape_cast %186 : vector<1x28x124xf32> to vector<28x124xf32>
    %188 = vector.broadcast %185 : f32 to vector<28x124xf32>
    %189 = arith.mulf %188, %187 : vector<28x124xf32>
    %190 = arith.addf %184, %189 : vector<28x124xf32>
    %c13_171 = arith.constant 13 : index
    %191 = memref.load %arg2[%c13_171] : memref<250xf32, #tpu.memory_space<smem>>
    %c13_172 = arith.constant 13 : index
    %c0_173 = arith.constant 0 : index
    %c0_174 = arith.constant 0 : index
    %192 = vector.load %arg5[%c13_172, %c0_173, %c0_174] : memref<25x28x124xf32, #tpu.memory_space<vmem>>, vector<1x28x124xf32>
    %193 = vector.shape_cast %192 : vector<1x28x124xf32> to vector<28x124xf32>
    %194 = vector.broadcast %191 : f32 to vector<28x124xf32>
    %195 = arith.mulf %194, %193 : vector<28x124xf32>
    %196 = arith.addf %190, %195 : vector<28x124xf32>
    %c14_175 = arith.constant 14 : index
    %197 = memref.load %arg2[%c14_175] : memref<250xf32, #tpu.memory_space<smem>>
    %c14_176 = arith.constant 14 : index
    %c0_177 = arith.constant 0 : index
    %c0_178 = arith.constant 0 : index
    %198 = vector.load %arg5[%c14_176, %c0_177, %c0_178] : memref<25x28x124xf32, #tpu.memory_space<vmem>>, vector<1x28x124xf32>
    %199 = vector.shape_cast %198 : vector<1x28x124xf32> to vector<28x124xf32>
    %200 = vector.broadcast %197 : f32 to vector<28x124xf32>
    %201 = arith.mulf %200, %199 : vector<28x124xf32>
    %202 = arith.addf %196, %201 : vector<28x124xf32>
    %c15_179 = arith.constant 15 : index
    %203 = memref.load %arg2[%c15_179] : memref<250xf32, #tpu.memory_space<smem>>
    %c15_180 = arith.constant 15 : index
    %c0_181 = arith.constant 0 : index
    %c0_182 = arith.constant 0 : index
    %204 = vector.load %arg5[%c15_180, %c0_181, %c0_182] : memref<25x28x124xf32, #tpu.memory_space<vmem>>, vector<1x28x124xf32>
    %205 = vector.shape_cast %204 : vector<1x28x124xf32> to vector<28x124xf32>
    %206 = vector.broadcast %203 : f32 to vector<28x124xf32>
    %207 = arith.mulf %206, %205 : vector<28x124xf32>
    %208 = arith.addf %202, %207 : vector<28x124xf32>
    %c16_183 = arith.constant 16 : index
    %209 = memref.load %arg2[%c16_183] : memref<250xf32, #tpu.memory_space<smem>>
    %c16_184 = arith.constant 16 : index
    %c0_185 = arith.constant 0 : index
    %c0_186 = arith.constant 0 : index
    %210 = vector.load %arg5[%c16_184, %c0_185, %c0_186] : memref<25x28x124xf32, #tpu.memory_space<vmem>>, vector<1x28x124xf32>
    %211 = vector.shape_cast %210 : vector<1x28x124xf32> to vector<28x124xf32>
    %212 = vector.broadcast %209 : f32 to vector<28x124xf32>
    %213 = arith.mulf %212, %211 : vector<28x124xf32>
    %214 = arith.addf %208, %213 : vector<28x124xf32>
    %c17_187 = arith.constant 17 : index
    %215 = memref.load %arg2[%c17_187] : memref<250xf32, #tpu.memory_space<smem>>
    %c17_188 = arith.constant 17 : index
    %c0_189 = arith.constant 0 : index
    %c0_190 = arith.constant 0 : index
    %216 = vector.load %arg5[%c17_188, %c0_189, %c0_190] : memref<25x28x124xf32, #tpu.memory_space<vmem>>, vector<1x28x124xf32>
    %217 = vector.shape_cast %216 : vector<1x28x124xf32> to vector<28x124xf32>
    %218 = vector.broadcast %215 : f32 to vector<28x124xf32>
    %219 = arith.mulf %218, %217 : vector<28x124xf32>
    %220 = arith.addf %214, %219 : vector<28x124xf32>
    %c18_191 = arith.constant 18 : index
    %221 = memref.load %arg2[%c18_191] : memref<250xf32, #tpu.memory_space<smem>>
    %c18_192 = arith.constant 18 : index
    %c0_193 = arith.constant 0 : index
    %c0_194 = arith.constant 0 : index
    %222 = vector.load %arg5[%c18_192, %c0_193, %c0_194] : memref<25x28x124xf32, #tpu.memory_space<vmem>>, vector<1x28x124xf32>
    %223 = vector.shape_cast %222 : vector<1x28x124xf32> to vector<28x124xf32>
    %224 = vector.broadcast %221 : f32 to vector<28x124xf32>
    %225 = arith.mulf %224, %223 : vector<28x124xf32>
    %226 = arith.addf %220, %225 : vector<28x124xf32>
    %c19_195 = arith.constant 19 : index
    %227 = memref.load %arg2[%c19_195] : memref<250xf32, #tpu.memory_space<smem>>
    %c19_196 = arith.constant 19 : index
    %c0_197 = arith.constant 0 : index
    %c0_198 = arith.constant 0 : index
    %228 = vector.load %arg5[%c19_196, %c0_197, %c0_198] : memref<25x28x124xf32, #tpu.memory_space<vmem>>, vector<1x28x124xf32>
    %229 = vector.shape_cast %228 : vector<1x28x124xf32> to vector<28x124xf32>
    %230 = vector.broadcast %227 : f32 to vector<28x124xf32>
    %231 = arith.mulf %230, %229 : vector<28x124xf32>
    %232 = arith.addf %226, %231 : vector<28x124xf32>
    %c20_199 = arith.constant 20 : index
    %233 = memref.load %arg2[%c20_199] : memref<250xf32, #tpu.memory_space<smem>>
    %c20_200 = arith.constant 20 : index
    %c0_201 = arith.constant 0 : index
    %c0_202 = arith.constant 0 : index
    %234 = vector.load %arg5[%c20_200, %c0_201, %c0_202] : memref<25x28x124xf32, #tpu.memory_space<vmem>>, vector<1x28x124xf32>
    %235 = vector.shape_cast %234 : vector<1x28x124xf32> to vector<28x124xf32>
    %236 = vector.broadcast %233 : f32 to vector<28x124xf32>
    %237 = arith.mulf %236, %235 : vector<28x124xf32>
    %238 = arith.addf %232, %237 : vector<28x124xf32>
    %c21_203 = arith.constant 21 : index
    %239 = memref.load %arg2[%c21_203] : memref<250xf32, #tpu.memory_space<smem>>
    %c21_204 = arith.constant 21 : index
    %c0_205 = arith.constant 0 : index
    %c0_206 = arith.constant 0 : index
    %240 = vector.load %arg5[%c21_204, %c0_205, %c0_206] : memref<25x28x124xf32, #tpu.memory_space<vmem>>, vector<1x28x124xf32>
    %241 = vector.shape_cast %240 : vector<1x28x124xf32> to vector<28x124xf32>
    %242 = vector.broadcast %239 : f32 to vector<28x124xf32>
    %243 = arith.mulf %242, %241 : vector<28x124xf32>
    %244 = arith.addf %238, %243 : vector<28x124xf32>
    %c22_207 = arith.constant 22 : index
    %245 = memref.load %arg2[%c22_207] : memref<250xf32, #tpu.memory_space<smem>>
    %c22_208 = arith.constant 22 : index
    %c0_209 = arith.constant 0 : index
    %c0_210 = arith.constant 0 : index
    %246 = vector.load %arg5[%c22_208, %c0_209, %c0_210] : memref<25x28x124xf32, #tpu.memory_space<vmem>>, vector<1x28x124xf32>
    %247 = vector.shape_cast %246 : vector<1x28x124xf32> to vector<28x124xf32>
    %248 = vector.broadcast %245 : f32 to vector<28x124xf32>
    %249 = arith.mulf %248, %247 : vector<28x124xf32>
    %250 = arith.addf %244, %249 : vector<28x124xf32>
    %c23_211 = arith.constant 23 : index
    %251 = memref.load %arg2[%c23_211] : memref<250xf32, #tpu.memory_space<smem>>
    %c23_212 = arith.constant 23 : index
    %c0_213 = arith.constant 0 : index
    %c0_214 = arith.constant 0 : index
    %252 = vector.load %arg5[%c23_212, %c0_213, %c0_214] : memref<25x28x124xf32, #tpu.memory_space<vmem>>, vector<1x28x124xf32>
    %253 = vector.shape_cast %252 : vector<1x28x124xf32> to vector<28x124xf32>
    %254 = vector.broadcast %251 : f32 to vector<28x124xf32>
    %255 = arith.mulf %254, %253 : vector<28x124xf32>
    %256 = arith.addf %250, %255 : vector<28x124xf32>
    %c24_215 = arith.constant 24 : index
    %257 = memref.load %arg2[%c24_215] : memref<250xf32, #tpu.memory_space<smem>>
    %c24_216 = arith.constant 24 : index
    %c0_217 = arith.constant 0 : index
    %c0_218 = arith.constant 0 : index
    %258 = vector.load %arg5[%c24_216, %c0_217, %c0_218] : memref<25x28x124xf32, #tpu.memory_space<vmem>>, vector<1x28x124xf32>
    %259 = vector.shape_cast %258 : vector<1x28x124xf32> to vector<28x124xf32>
    %260 = vector.broadcast %257 : f32 to vector<28x124xf32>
    %261 = arith.mulf %260, %259 : vector<28x124xf32>
    %262 = arith.addf %256, %261 : vector<28x124xf32>
    %263 = vector.extract_strided_slice %262 {offsets = [0, 0], sizes = [28, 28], strides = [1, 1]} : vector<28x124xf32> to vector<28x28xf32>
    %c0_219 = arith.constant 0 : index
    %c0_220 = arith.constant 0 : index
    %c0_221 = arith.constant 0 : index
    %c0_222 = arith.constant 0 : index
    %264 = vector.load %arg3[%c0_219, %c0_220, %c0_221, %c0_222] : memref<4x10x28x28xf32, #tpu.memory_space<vmem>>, vector<1x1x28x28xf32>
    %265 = vector.shape_cast %264 : vector<1x1x28x28xf32> to vector<28x28xf32>
    %266 = vector.shape_cast %263 : vector<28x28xf32> to vector<1x1x28x28xf32>
    tpu.vector_store %arg3[%c0_219, %c0_220, %c0_221, %c0_222], %266 {strides = array<i32>} : memref<4x10x28x28xf32, #tpu.memory_space<vmem>>, vector<1x1x28x28xf32>,
    %267 = vector.extract_strided_slice %262 {offsets = [0, 32], sizes = [28, 28], strides = [1, 1]} : vector<28x124xf32> to vector<28x28xf32>
    %c1_223 = arith.constant 1 : index
    %c0_224 = arith.constant 0 : index
    %c0_225 = arith.constant 0 : index
    %c0_226 = arith.constant 0 : index
    %268 = vector.load %arg3[%c1_223, %c0_224, %c0_225, %c0_226] : memref<4x10x28x28xf32, #tpu.memory_space<vmem>>, vector<1x1x28x28xf32>
    %269 = vector.shape_cast %268 : vector<1x1x28x28xf32> to vector<28x28xf32>
    %270 = vector.shape_cast %267 : vector<28x28xf32> to vector<1x1x28x28xf32>
    tpu.vector_store %arg3[%c1_223, %c0_224, %c0_225, %c0_226], %270 {strides = array<i32>} : memref<4x10x28x28xf32, #tpu.memory_space<vmem>>, vector<1x1x28x28xf32>,
    %271 = vector.extract_strided_slice %262 {offsets = [0, 64], sizes = [28, 28], strides = [1, 1]} : vector<28x124xf32> to vector<28x28xf32>
    %c2_227 = arith.constant 2 : index
    %c0_228 = arith.constant 0 : index
    %c0_229 = arith.constant 0 : index
    %c0_230 = arith.constant 0 : index
    %272 = vector.load %arg3[%c2_227, %c0_228, %c0_229, %c0_230] : memref<4x10x28x28xf32, #tpu.memory_space<vmem>>, vector<1x1x28x28xf32>
    %273 = vector.shape_cast %272 : vector<1x1x28x28xf32> to vector<28x28xf32>
    %274 = vector.shape_cast %271 : vector<28x28xf32> to vector<1x1x28x28xf32>
    tpu.vector_store %arg3[%c2_227, %c0_228, %c0_229, %c0_230], %274 {strides = array<i32>} : memref<4x10x28x28xf32, #tpu.memory_space<vmem>>, vector<1x1x28x28xf32>,
    %275 = vector.extract_strided_slice %262 {offsets = [0, 96], sizes = [28, 28], strides = [1, 1]} : vector<28x124xf32> to vector<28x28xf32>
    %c3_231 = arith.constant 3 : index
    %c0_232 = arith.constant 0 : index
    %c0_233 = arith.constant 0 : index
    %c0_234 = arith.constant 0 : index
    %276 = vector.load %arg3[%c3_231, %c0_232, %c0_233, %c0_234] : memref<4x10x28x28xf32, #tpu.memory_space<vmem>>, vector<1x1x28x28xf32>
    %277 = vector.shape_cast %276 : vector<1x1x28x28xf32> to vector<28x28xf32>
    %278 = vector.shape_cast %275 : vector<28x28xf32> to vector<1x1x28x28xf32>
    tpu.vector_store %arg3[%c3_231, %c0_232, %c0_233, %c0_234], %278 {strides = array<i32>} : memref<4x10x28x28xf32, #tpu.memory_space<vmem>>, vector<1x1x28x28xf32>,
    %c25 = arith.constant 25 : index
    %279 = memref.load %arg2[%c25] : memref<250xf32, #tpu.memory_space<smem>>
    %c0_235 = arith.constant 0 : index
    %c0_236 = arith.constant 0 : index
    %c0_237 = arith.constant 0 : index
    %280 = vector.load %arg5[%c0_235, %c0_236, %c0_237] : memref<25x28x124xf32, #tpu.memory_space<vmem>>, vector<1x28x124xf32>
    %281 = vector.shape_cast %280 : vector<1x28x124xf32> to vector<28x124xf32>
    %282 = vector.broadcast %279 : f32 to vector<28x124xf32>
    %283 = arith.mulf %282, %281 : vector<28x124xf32>
    %c26 = arith.constant 26 : index
    %284 = memref.load %arg2[%c26] : memref<250xf32, #tpu.memory_space<smem>>
    %c1_238 = arith.constant 1 : index
    %c0_239 = arith.constant 0 : index
    %c0_240 = arith.constant 0 : index
    %285 = vector.load %arg5[%c1_238, %c0_239, %c0_240] : memref<25x28x124xf32, #tpu.memory_space<vmem>>, vector<1x28x124xf32>
    %286 = vector.shape_cast %285 : vector<1x28x124xf32> to vector<28x124xf32>
    %287 = vector.broadcast %284 : f32 to vector<28x124xf32>
    %288 = arith.mulf %287, %286 : vector<28x124xf32>
    %289 = arith.addf %283, %288 : vector<28x124xf32>
    %c27 = arith.constant 27 : index
    %290 = memref.load %arg2[%c27] : memref<250xf32, #tpu.memory_space<smem>>
    %c2_241 = arith.constant 2 : index
    %c0_242 = arith.constant 0 : index
    %c0_243 = arith.constant 0 : index
    %291 = vector.load %arg5[%c2_241, %c0_242, %c0_243] : memref<25x28x124xf32, #tpu.memory_space<vmem>>, vector<1x28x124xf32>
    %292 = vector.shape_cast %291 : vector<1x28x124xf32> to vector<28x124xf32>
    %293 = vector.broadcast %290 : f32 to vector<28x124xf32>
    %294 = arith.mulf %293, %292 : vector<28x124xf32>
    %295 = arith.addf %289, %294 : vector<28x124xf32>
    %c28 = arith.constant 28 : index
    %296 = memref.load %arg2[%c28] : memref<250xf32, #tpu.memory_space<smem>>
    %c3_244 = arith.constant 3 : index
    %c0_245 = arith.constant 0 : index
    %c0_246 = arith.constant 0 : index
    %297 = vector.load %arg5[%c3_244, %c0_245, %c0_246] : memref<25x28x124xf32, #tpu.memory_space<vmem>>, vector<1x28x124xf32>
    %298 = vector.shape_cast %297 : vector<1x28x124xf32> to vector<28x124xf32>
    %299 = vector.broadcast %296 : f32 to vector<28x124xf32>
    %300 = arith.mulf %299, %298 : vector<28x124xf32>
    %301 = arith.addf %295, %300 : vector<28x124xf32>
    %c29 = arith.constant 29 : index
    %302 = memref.load %arg2[%c29] : memref<250xf32, #tpu.memory_space<smem>>
    %c4_247 = arith.constant 4 : index
    %c0_248 = arith.constant 0 : index
    %c0_249 = arith.constant 0 : index
    %303 = vector.load %arg5[%c4_247, %c0_248, %c0_249] : memref<25x28x124xf32, #tpu.memory_space<vmem>>, vector<1x28x124xf32>
    %304 = vector.shape_cast %303 : vector<1x28x124xf32> to vector<28x124xf32>
    %305 = vector.broadcast %302 : f32 to vector<28x124xf32>
    %306 = arith.mulf %305, %304 : vector<28x124xf32>
    %307 = arith.addf %301, %306 : vector<28x124xf32>
    %c30 = arith.constant 30 : index
    %308 = memref.load %arg2[%c30] : memref<250xf32, #tpu.memory_space<smem>>
    %c5_250 = arith.constant 5 : index
    %c0_251 = arith.constant 0 : index
    %c0_252 = arith.constant 0 : index
    %309 = vector.load %arg5[%c5_250, %c0_251, %c0_252] : memref<25x28x124xf32, #tpu.memory_space<vmem>>, vector<1x28x124xf32>
    %310 = vector.shape_cast %309 : vector<1x28x124xf32> to vector<28x124xf32>
    %311 = vector.broadcast %308 : f32 to vector<28x124xf32>
    %312 = arith.mulf %311, %310 : vector<28x124xf32>
    %313 = arith.addf %307, %312 : vector<28x124xf32>
    %c31 = arith.constant 31 : index
    %314 = memref.load %arg2[%c31] : memref<250xf32, #tpu.memory_space<smem>>
    %c6_253 = arith.constant 6 : index
    %c0_254 = arith.constant 0 : index
    %c0_255 = arith.constant 0 : index
    %315 = vector.load %arg5[%c6_253, %c0_254, %c0_255] : memref<25x28x124xf32, #tpu.memory_space<vmem>>, vector<1x28x124xf32>
    %316 = vector.shape_cast %315 : vector<1x28x124xf32> to vector<28x124xf32>
    %317 = vector.broadcast %314 : f32 to vector<28x124xf32>
    %318 = arith.mulf %317, %316 : vector<28x124xf32>
    %319 = arith.addf %313, %318 : vector<28x124xf32>
    %c32 = arith.constant 32 : index
    %320 = memref.load %arg2[%c32] : memref<250xf32, #tpu.memory_space<smem>>
    %c7_256 = arith.constant 7 : index
    %c0_257 = arith.constant 0 : index
    %c0_258 = arith.constant 0 : index
    %321 = vector.load %arg5[%c7_256, %c0_257, %c0_258] : memref<25x28x124xf32, #tpu.memory_space<vmem>>, vector<1x28x124xf32>
    %322 = vector.shape_cast %321 : vector<1x28x124xf32> to vector<28x124xf32>
    %323 = vector.broadcast %320 : f32 to vector<28x124xf32>
    %324 = arith.mulf %323, %322 : vector<28x124xf32>
    %325 = arith.addf %319, %324 : vector<28x124xf32>
    %c33 = arith.constant 33 : index
    %326 = memref.load %arg2[%c33] : memref<250xf32, #tpu.memory_space<smem>>
    %c8_259 = arith.constant 8 : index
    %c0_260 = arith.constant 0 : index
    %c0_261 = arith.constant 0 : index
    %327 = vector.load %arg5[%c8_259, %c0_260, %c0_261] : memref<25x28x124xf32, #tpu.memory_space<vmem>>, vector<1x28x124xf32>
    %328 = vector.shape_cast %327 : vector<1x28x124xf32> to vector<28x124xf32>
    %329 = vector.broadcast %326 : f32 to vector<28x124xf32>
    %330 = arith.mulf %329, %328 : vector<28x124xf32>
    %331 = arith.addf %325, %330 : vector<28x124xf32>
    %c34_262 = arith.constant 34 : index
    %332 = memref.load %arg2[%c34_262] : memref<250xf32, #tpu.memory_space<smem>>
    %c9_263 = arith.constant 9 : index
    %c0_264 = arith.constant 0 : index
    %c0_265 = arith.constant 0 : index
    %333 = vector.load %arg5[%c9_263, %c0_264, %c0_265] : memref<25x28x124xf32, #tpu.memory_space<vmem>>, vector<1x28x124xf32>
    %334 = vector.shape_cast %333 : vector<1x28x124xf32> to vector<28x124xf32>
    %335 = vector.broadcast %332 : f32 to vector<28x124xf32>
    %336 = arith.mulf %335, %334 : vector<28x124xf32>
    %337 = arith.addf %331, %336 : vector<28x124xf32>
    %c35 = arith.constant 35 : index
    %338 = memref.load %arg2[%c35] : memref<250xf32, #tpu.memory_space<smem>>
    %c10_266 = arith.constant 10 : index
    %c0_267 = arith.constant 0 : index
    %c0_268 = arith.constant 0 : index
    %339 = vector.load %arg5[%c10_266, %c0_267, %c0_268] : memref<25x28x124xf32, #tpu.memory_space<vmem>>, vector<1x28x124xf32>
    %340 = vector.shape_cast %339 : vector<1x28x124xf32> to vector<28x124xf32>
    %341 = vector.broadcast %338 : f32 to vector<28x124xf32>
    %342 = arith.mulf %341, %340 : vector<28x124xf32>
    %343 = arith.addf %337, %342 : vector<28x124xf32>
    %c36 = arith.constant 36 : index
    %344 = memref.load %arg2[%c36] : memref<250xf32, #tpu.memory_space<smem>>
    %c11_269 = arith.constant 11 : index
    %c0_270 = arith.constant 0 : index
    %c0_271 = arith.constant 0 : index
    %345 = vector.load %arg5[%c11_269, %c0_270, %c0_271] : memref<25x28x124xf32, #tpu.memory_space<vmem>>, vector<1x28x124xf32>
    %346 = vector.shape_cast %345 : vector<1x28x124xf32> to vector<28x124xf32>
    %347 = vector.broadcast %344 : f32 to vector<28x124xf32>
    %348 = arith.mulf %347, %346 : vector<28x124xf32>
    %349 = arith.addf %343, %348 : vector<28x124xf32>
    %c37 = arith.constant 37 : index
    %350 = memref.load %arg2[%c37] : memref<250xf32, #tpu.memory_space<smem>>
    %c12_272 = arith.constant 12 : index
    %c0_273 = arith.constant 0 : index
    %c0_274 = arith.constant 0 : index
    %351 = vector.load %arg5[%c12_272, %c0_273, %c0_274] : memref<25x28x124xf32, #tpu.memory_space<vmem>>, vector<1x28x124xf32>
    %352 = vector.shape_cast %351 : vector<1x28x124xf32> to vector<28x124xf32>
    %353 = vector.broadcast %350 : f32 to vector<28x124xf32>
    %354 = arith.mulf %353, %352 : vector<28x124xf32>
    %355 = arith.addf %349, %354 : vector<28x124xf32>
    %c38 = arith.constant 38 : index
    %356 = memref.load %arg2[%c38] : memref<250xf32, #tpu.memory_space<smem>>
    %c13_275 = arith.constant 13 : index
    %c0_276 = arith.constant 0 : index
    %c0_277 = arith.constant 0 : index
    %357 = vector.load %arg5[%c13_275, %c0_276, %c0_277] : memref<25x28x124xf32, #tpu.memory_space<vmem>>, vector<1x28x124xf32>
    %358 = vector.shape_cast %357 : vector<1x28x124xf32> to vector<28x124xf32>
    %359 = vector.broadcast %356 : f32 to vector<28x124xf32>
    %360 = arith.mulf %359, %358 : vector<28x124xf32>
    %361 = arith.addf %355, %360 : vector<28x124xf32>
    %c39 = arith.constant 39 : index
    %362 = memref.load %arg2[%c39] : memref<250xf32, #tpu.memory_space<smem>>
    %c14_278 = arith.constant 14 : index
    %c0_279 = arith.constant 0 : index
    %c0_280 = arith.constant 0 : index
    %363 = vector.load %arg5[%c14_278, %c0_279, %c0_280] : memref<25x28x124xf32, #tpu.memory_space<vmem>>, vector<1x28x124xf32>
    %364 = vector.shape_cast %363 : vector<1x28x124xf32> to vector<28x124xf32>
    %365 = vector.broadcast %362 : f32 to vector<28x124xf32>
    %366 = arith.mulf %365, %364 : vector<28x124xf32>
    %367 = arith.addf %361, %366 : vector<28x124xf32>
    %c40 = arith.constant 40 : index
    %368 = memref.load %arg2[%c40] : memref<250xf32, #tpu.memory_space<smem>>
    %c15_281 = arith.constant 15 : index
    %c0_282 = arith.constant 0 : index
    %c0_283 = arith.constant 0 : index
    %369 = vector.load %arg5[%c15_281, %c0_282, %c0_283] : memref<25x28x124xf32, #tpu.memory_space<vmem>>, vector<1x28x124xf32>
    %370 = vector.shape_cast %369 : vector<1x28x124xf32> to vector<28x124xf32>
    %371 = vector.broadcast %368 : f32 to vector<28x124xf32>
    %372 = arith.mulf %371, %370 : vector<28x124xf32>
    %373 = arith.addf %367, %372 : vector<28x124xf32>
    %c41 = arith.constant 41 : index
    %374 = memref.load %arg2[%c41] : memref<250xf32, #tpu.memory_space<smem>>
    %c16_284 = arith.constant 16 : index
    %c0_285 = arith.constant 0 : index
    %c0_286 = arith.constant 0 : index
    %375 = vector.load %arg5[%c16_284, %c0_285, %c0_286] : memref<25x28x124xf32, #tpu.memory_space<vmem>>, vector<1x28x124xf32>
    %376 = vector.shape_cast %375 : vector<1x28x124xf32> to vector<28x124xf32>
    %377 = vector.broadcast %374 : f32 to vector<28x124xf32>
    %378 = arith.mulf %377, %376 : vector<28x124xf32>
    %379 = arith.addf %373, %378 : vector<28x124xf32>
    %c42 = arith.constant 42 : index
    %380 = memref.load %arg2[%c42] : memref<250xf32, #tpu.memory_space<smem>>
    %c17_287 = arith.constant 17 : index
    %c0_288 = arith.constant 0 : index
    %c0_289 = arith.constant 0 : index
    %381 = vector.load %arg5[%c17_287, %c0_288, %c0_289] : memref<25x28x124xf32, #tpu.memory_space<vmem>>, vector<1x28x124xf32>
    %382 = vector.shape_cast %381 : vector<1x28x124xf32> to vector<28x124xf32>
    %383 = vector.broadcast %380 : f32 to vector<28x124xf32>
    %384 = arith.mulf %383, %382 : vector<28x124xf32>
    %385 = arith.addf %379, %384 : vector<28x124xf32>
    %c43 = arith.constant 43 : index
    %386 = memref.load %arg2[%c43] : memref<250xf32, #tpu.memory_space<smem>>
    %c18_290 = arith.constant 18 : index
    %c0_291 = arith.constant 0 : index
    %c0_292 = arith.constant 0 : index
    %387 = vector.load %arg5[%c18_290, %c0_291, %c0_292] : memref<25x28x124xf32, #tpu.memory_space<vmem>>, vector<1x28x124xf32>
    %388 = vector.shape_cast %387 : vector<1x28x124xf32> to vector<28x124xf32>
    %389 = vector.broadcast %386 : f32 to vector<28x124xf32>
    %390 = arith.mulf %389, %388 : vector<28x124xf32>
    %391 = arith.addf %385, %390 : vector<28x124xf32>
    %c44 = arith.constant 44 : index
    %392 = memref.load %arg2[%c44] : memref<250xf32, #tpu.memory_space<smem>>
    %c19_293 = arith.constant 19 : index
    %c0_294 = arith.constant 0 : index
    %c0_295 = arith.constant 0 : index
    %393 = vector.load %arg5[%c19_293, %c0_294, %c0_295] : memref<25x28x124xf32, #tpu.memory_space<vmem>>, vector<1x28x124xf32>
    %394 = vector.shape_cast %393 : vector<1x28x124xf32> to vector<28x124xf32>
    %395 = vector.broadcast %392 : f32 to vector<28x124xf32>
    %396 = arith.mulf %395, %394 : vector<28x124xf32>
    %397 = arith.addf %391, %396 : vector<28x124xf32>
    %c45 = arith.constant 45 : index
    %398 = memref.load %arg2[%c45] : memref<250xf32, #tpu.memory_space<smem>>
    %c20_296 = arith.constant 20 : index
    %c0_297 = arith.constant 0 : index
    %c0_298 = arith.constant 0 : index
    %399 = vector.load %arg5[%c20_296, %c0_297, %c0_298] : memref<25x28x124xf32, #tpu.memory_space<vmem>>, vector<1x28x124xf32>
    %400 = vector.shape_cast %399 : vector<1x28x124xf32> to vector<28x124xf32>
    %401 = vector.broadcast %398 : f32 to vector<28x124xf32>
    %402 = arith.mulf %401, %400 : vector<28x124xf32>
    %403 = arith.addf %397, %402 : vector<28x124xf32>
    %c46 = arith.constant 46 : index
    %404 = memref.load %arg2[%c46] : memref<250xf32, #tpu.memory_space<smem>>
    %c21_299 = arith.constant 21 : index
    %c0_300 = arith.constant 0 : index
    %c0_301 = arith.constant 0 : index
    %405 = vector.load %arg5[%c21_299, %c0_300, %c0_301] : memref<25x28x124xf32, #tpu.memory_space<vmem>>, vector<1x28x124xf32>
    %406 = vector.shape_cast %405 : vector<1x28x124xf32> to vector<28x124xf32>
    %407 = vector.broadcast %404 : f32 to vector<28x124xf32>
    %408 = arith.mulf %407, %406 : vector<28x124xf32>
    %409 = arith.addf %403, %408 : vector<28x124xf32>
    %c47 = arith.constant 47 : index
    %410 = memref.load %arg2[%c47] : memref<250xf32, #tpu.memory_space<smem>>
    %c22_302 = arith.constant 22 : index
    %c0_303 = arith.constant 0 : index
    %c0_304 = arith.constant 0 : index
    %411 = vector.load %arg5[%c22_302, %c0_303, %c0_304] : memref<25x28x124xf32, #tpu.memory_space<vmem>>, vector<1x28x124xf32>
    %412 = vector.shape_cast %411 : vector<1x28x124xf32> to vector<28x124xf32>
    %413 = vector.broadcast %410 : f32 to vector<28x124xf32>
    %414 = arith.mulf %413, %412 : vector<28x124xf32>
    %415 = arith.addf %409, %414 : vector<28x124xf32>
    %c48 = arith.constant 48 : index
    %416 = memref.load %arg2[%c48] : memref<250xf32, #tpu.memory_space<smem>>
    %c23_305 = arith.constant 23 : index
    %c0_306 = arith.constant 0 : index
    %c0_307 = arith.constant 0 : index
    %417 = vector.load %arg5[%c23_305, %c0_306, %c0_307] : memref<25x28x124xf32, #tpu.memory_space<vmem>>, vector<1x28x124xf32>
    %418 = vector.shape_cast %417 : vector<1x28x124xf32> to vector<28x124xf32>
    %419 = vector.broadcast %416 : f32 to vector<28x124xf32>
    %420 = arith.mulf %419, %418 : vector<28x124xf32>
    %421 = arith.addf %415, %420 : vector<28x124xf32>
    %c49 = arith.constant 49 : index
    %422 = memref.load %arg2[%c49] : memref<250xf32, #tpu.memory_space<smem>>
    %c24_308 = arith.constant 24 : index
    %c0_309 = arith.constant 0 : index
    %c0_310 = arith.constant 0 : index
    %423 = vector.load %arg5[%c24_308, %c0_309, %c0_310] : memref<25x28x124xf32, #tpu.memory_space<vmem>>, vector<1x28x124xf32>
    %424 = vector.shape_cast %423 : vector<1x28x124xf32> to vector<28x124xf32>
    %425 = vector.broadcast %422 : f32 to vector<28x124xf32>
    %426 = arith.mulf %425, %424 : vector<28x124xf32>
    %427 = arith.addf %421, %426 : vector<28x124xf32>
    %428 = vector.extract_strided_slice %427 {offsets = [0, 0], sizes = [28, 28], strides = [1, 1]} : vector<28x124xf32> to vector<28x28xf32>
    %c0_311 = arith.constant 0 : index
    %c1_312 = arith.constant 1 : index
    %c0_313 = arith.constant 0 : index
    %c0_314 = arith.constant 0 : index
    %429 = vector.load %arg3[%c0_311, %c1_312, %c0_313, %c0_314] : memref<4x10x28x28xf32, #tpu.memory_space<vmem>>, vector<1x1x28x28xf32>
    %430 = vector.shape_cast %429 : vector<1x1x28x28xf32> to vector<28x28xf32>
    %431 = vector.shape_cast %428 : vector<28x28xf32> to vector<1x1x28x28xf32>
    tpu.vector_store %arg3[%c0_311, %c1_312, %c0_313, %c0_314], %431 {strides = array<i32>} : memref<4x10x28x28xf32, #tpu.memory_space<vmem>>, vector<1x1x28x28xf32>,
    %432 = vector.extract_strided_slice %427 {offsets = [0, 32], sizes = [28, 28], strides = [1, 1]} : vector<28x124xf32> to vector<28x28xf32>
    %c1_315 = arith.constant 1 : index
    %c1_316 = arith.constant 1 : index
    %c0_317 = arith.constant 0 : index
    %c0_318 = arith.constant 0 : index
    %433 = vector.load %arg3[%c1_315, %c1_316, %c0_317, %c0_318] : memref<4x10x28x28xf32, #tpu.memory_space<vmem>>, vector<1x1x28x28xf32>
    %434 = vector.shape_cast %433 : vector<1x1x28x28xf32> to vector<28x28xf32>
    %435 = vector.shape_cast %432 : vector<28x28xf32> to vector<1x1x28x28xf32>
    tpu.vector_store %arg3[%c1_315, %c1_316, %c0_317, %c0_318], %435 {strides = array<i32>} : memref<4x10x28x28xf32, #tpu.memory_space<vmem>>, vector<1x1x28x28xf32>,
    %436 = vector.extract_strided_slice %427 {offsets = [0, 64], sizes = [28, 28], strides = [1, 1]} : vector<28x124xf32> to vector<28x28xf32>
    %c2_319 = arith.constant 2 : index
    %c1_320 = arith.constant 1 : index
    %c0_321 = arith.constant 0 : index
    %c0_322 = arith.constant 0 : index
    %437 = vector.load %arg3[%c2_319, %c1_320, %c0_321, %c0_322] : memref<4x10x28x28xf32, #tpu.memory_space<vmem>>, vector<1x1x28x28xf32>
    %438 = vector.shape_cast %437 : vector<1x1x28x28xf32> to vector<28x28xf32>
    %439 = vector.shape_cast %436 : vector<28x28xf32> to vector<1x1x28x28xf32>
    tpu.vector_store %arg3[%c2_319, %c1_320, %c0_321, %c0_322], %439 {strides = array<i32>} : memref<4x10x28x28xf32, #tpu.memory_space<vmem>>, vector<1x1x28x28xf32>,
    %440 = vector.extract_strided_slice %427 {offsets = [0, 96], sizes = [28, 28], strides = [1, 1]} : vector<28x124xf32> to vector<28x28xf32>
    %c3_323 = arith.constant 3 : index
    %c1_324 = arith.constant 1 : index
    %c0_325 = arith.constant 0 : index
    %c0_326 = arith.constant 0 : index
    %441 = vector.load %arg3[%c3_323, %c1_324, %c0_325, %c0_326] : memref<4x10x28x28xf32, #tpu.memory_space<vmem>>, vector<1x1x28x28xf32>
    %442 = vector.shape_cast %441 : vector<1x1x28x28xf32> to vector<28x28xf32>
    %443 = vector.shape_cast %440 : vector<28x28xf32> to vector<1x1x28x28xf32>
    tpu.vector_store %arg3[%c3_323, %c1_324, %c0_325, %c0_326], %443 {strides = array<i32>} : memref<4x10x28x28xf32, #tpu.memory_space<vmem>>, vector<1x1x28x28xf32>,
    %c50 = arith.constant 50 : index
    %444 = memref.load %arg2[%c50] : memref<250xf32, #tpu.memory_space<smem>>
    %c0_327 = arith.constant 0 : index
    %c0_328 = arith.constant 0 : index
    %c0_329 = arith.constant 0 : index
    %445 = vector.load %arg5[%c0_327, %c0_328, %c0_329] : memref<25x28x124xf32, #tpu.memory_space<vmem>>, vector<1x28x124xf32>
    %446 = vector.shape_cast %445 : vector<1x28x124xf32> to vector<28x124xf32>
    %447 = vector.broadcast %444 : f32 to vector<28x124xf32>
    %448 = arith.mulf %447, %446 : vector<28x124xf32>
    %c51 = arith.constant 51 : index
    %449 = memref.load %arg2[%c51] : memref<250xf32, #tpu.memory_space<smem>>
    %c1_330 = arith.constant 1 : index
    %c0_331 = arith.constant 0 : index
    %c0_332 = arith.constant 0 : index
    %450 = vector.load %arg5[%c1_330, %c0_331, %c0_332] : memref<25x28x124xf32, #tpu.memory_space<vmem>>, vector<1x28x124xf32>
    %451 = vector.shape_cast %450 : vector<1x28x124xf32> to vector<28x124xf32>
    %452 = vector.broadcast %449 : f32 to vector<28x124xf32>
    %453 = arith.mulf %452, %451 : vector<28x124xf32>
    %454 = arith.addf %448, %453 : vector<28x124xf32>
    %c52 = arith.constant 52 : index
    %455 = memref.load %arg2[%c52] : memref<250xf32, #tpu.memory_space<smem>>
    %c2_333 = arith.constant 2 : index
    %c0_334 = arith.constant 0 : index
    %c0_335 = arith.constant 0 : index
    %456 = vector.load %arg5[%c2_333, %c0_334, %c0_335] : memref<25x28x124xf32, #tpu.memory_space<vmem>>, vector<1x28x124xf32>
    %457 = vector.shape_cast %456 : vector<1x28x124xf32> to vector<28x124xf32>
    %458 = vector.broadcast %455 : f32 to vector<28x124xf32>
    %459 = arith.mulf %458, %457 : vector<28x124xf32>
    %460 = arith.addf %454, %459 : vector<28x124xf32>
    %c53 = arith.constant 53 : index
    %461 = memref.load %arg2[%c53] : memref<250xf32, #tpu.memory_space<smem>>
    %c3_336 = arith.constant 3 : index
    %c0_337 = arith.constant 0 : index
    %c0_338 = arith.constant 0 : index
    %462 = vector.load %arg5[%c3_336, %c0_337, %c0_338] : memref<25x28x124xf32, #tpu.memory_space<vmem>>, vector<1x28x124xf32>
    %463 = vector.shape_cast %462 : vector<1x28x124xf32> to vector<28x124xf32>
    %464 = vector.broadcast %461 : f32 to vector<28x124xf32>
    %465 = arith.mulf %464, %463 : vector<28x124xf32>
    %466 = arith.addf %460, %465 : vector<28x124xf32>
    %c54 = arith.constant 54 : index
    %467 = memref.load %arg2[%c54] : memref<250xf32, #tpu.memory_space<smem>>
    %c4_339 = arith.constant 4 : index
    %c0_340 = arith.constant 0 : index
    %c0_341 = arith.constant 0 : index
    %468 = vector.load %arg5[%c4_339, %c0_340, %c0_341] : memref<25x28x124xf32, #tpu.memory_space<vmem>>, vector<1x28x124xf32>
    %469 = vector.shape_cast %468 : vector<1x28x124xf32> to vector<28x124xf32>
    %470 = vector.broadcast %467 : f32 to vector<28x124xf32>
    %471 = arith.mulf %470, %469 : vector<28x124xf32>
    %472 = arith.addf %466, %471 : vector<28x124xf32>
    %c55 = arith.constant 55 : index
    %473 = memref.load %arg2[%c55] : memref<250xf32, #tpu.memory_space<smem>>
    %c5_342 = arith.constant 5 : index
    %c0_343 = arith.constant 0 : index
    %c0_344 = arith.constant 0 : index
    %474 = vector.load %arg5[%c5_342, %c0_343, %c0_344] : memref<25x28x124xf32, #tpu.memory_space<vmem>>, vector<1x28x124xf32>
    %475 = vector.shape_cast %474 : vector<1x28x124xf32> to vector<28x124xf32>
    %476 = vector.broadcast %473 : f32 to vector<28x124xf32>
    %477 = arith.mulf %476, %475 : vector<28x124xf32>
    %478 = arith.addf %472, %477 : vector<28x124xf32>
    %c56 = arith.constant 56 : index
    %479 = memref.load %arg2[%c56] : memref<250xf32, #tpu.memory_space<smem>>
    %c6_345 = arith.constant 6 : index
    %c0_346 = arith.constant 0 : index
    %c0_347 = arith.constant 0 : index
    %480 = vector.load %arg5[%c6_345, %c0_346, %c0_347] : memref<25x28x124xf32, #tpu.memory_space<vmem>>, vector<1x28x124xf32>
    %481 = vector.shape_cast %480 : vector<1x28x124xf32> to vector<28x124xf32>
    %482 = vector.broadcast %479 : f32 to vector<28x124xf32>
    %483 = arith.mulf %482, %481 : vector<28x124xf32>
    %484 = arith.addf %478, %483 : vector<28x124xf32>
    %c57 = arith.constant 57 : index
    %485 = memref.load %arg2[%c57] : memref<250xf32, #tpu.memory_space<smem>>
    %c7_348 = arith.constant 7 : index
    %c0_349 = arith.constant 0 : index
    %c0_350 = arith.constant 0 : index
    %486 = vector.load %arg5[%c7_348, %c0_349, %c0_350] : memref<25x28x124xf32, #tpu.memory_space<vmem>>, vector<1x28x124xf32>
    %487 = vector.shape_cast %486 : vector<1x28x124xf32> to vector<28x124xf32>
    %488 = vector.broadcast %485 : f32 to vector<28x124xf32>
    %489 = arith.mulf %488, %487 : vector<28x124xf32>
    %490 = arith.addf %484, %489 : vector<28x124xf32>
    %c58 = arith.constant 58 : index
    %491 = memref.load %arg2[%c58] : memref<250xf32, #tpu.memory_space<smem>>
    %c8_351 = arith.constant 8 : index
    %c0_352 = arith.constant 0 : index
    %c0_353 = arith.constant 0 : index
    %492 = vector.load %arg5[%c8_351, %c0_352, %c0_353] : memref<25x28x124xf32, #tpu.memory_space<vmem>>, vector<1x28x124xf32>
    %493 = vector.shape_cast %492 : vector<1x28x124xf32> to vector<28x124xf32>
    %494 = vector.broadcast %491 : f32 to vector<28x124xf32>
    %495 = arith.mulf %494, %493 : vector<28x124xf32>
    %496 = arith.addf %490, %495 : vector<28x124xf32>
    %c59 = arith.constant 59 : index
    %497 = memref.load %arg2[%c59] : memref<250xf32, #tpu.memory_space<smem>>
    %c9_354 = arith.constant 9 : index
    %c0_355 = arith.constant 0 : index
    %c0_356 = arith.constant 0 : index
    %498 = vector.load %arg5[%c9_354, %c0_355, %c0_356] : memref<25x28x124xf32, #tpu.memory_space<vmem>>, vector<1x28x124xf32>
    %499 = vector.shape_cast %498 : vector<1x28x124xf32> to vector<28x124xf32>
    %500 = vector.broadcast %497 : f32 to vector<28x124xf32>
    %501 = arith.mulf %500, %499 : vector<28x124xf32>
    %502 = arith.addf %496, %501 : vector<28x124xf32>
    %c60 = arith.constant 60 : index
    %503 = memref.load %arg2[%c60] : memref<250xf32, #tpu.memory_space<smem>>
    %c10_357 = arith.constant 10 : index
    %c0_358 = arith.constant 0 : index
    %c0_359 = arith.constant 0 : index
    %504 = vector.load %arg5[%c10_357, %c0_358, %c0_359] : memref<25x28x124xf32, #tpu.memory_space<vmem>>, vector<1x28x124xf32>
    %505 = vector.shape_cast %504 : vector<1x28x124xf32> to vector<28x124xf32>
    %506 = vector.broadcast %503 : f32 to vector<28x124xf32>
    %507 = arith.mulf %506, %505 : vector<28x124xf32>
    %508 = arith.addf %502, %507 : vector<28x124xf32>
    %c61 = arith.constant 61 : index
    %509 = memref.load %arg2[%c61] : memref<250xf32, #tpu.memory_space<smem>>
    %c11_360 = arith.constant 11 : index
    %c0_361 = arith.constant 0 : index
    %c0_362 = arith.constant 0 : index
    %510 = vector.load %arg5[%c11_360, %c0_361, %c0_362] : memref<25x28x124xf32, #tpu.memory_space<vmem>>, vector<1x28x124xf32>
    %511 = vector.shape_cast %510 : vector<1x28x124xf32> to vector<28x124xf32>
    %512 = vector.broadcast %509 : f32 to vector<28x124xf32>
    %513 = arith.mulf %512, %511 : vector<28x124xf32>
    %514 = arith.addf %508, %513 : vector<28x124xf32>
    %c62 = arith.constant 62 : index
    %515 = memref.load %arg2[%c62] : memref<250xf32, #tpu.memory_space<smem>>
    %c12_363 = arith.constant 12 : index
    %c0_364 = arith.constant 0 : index
    %c0_365 = arith.constant 0 : index
    %516 = vector.load %arg5[%c12_363, %c0_364, %c0_365] : memref<25x28x124xf32, #tpu.memory_space<vmem>>, vector<1x28x124xf32>
    %517 = vector.shape_cast %516 : vector<1x28x124xf32> to vector<28x124xf32>
    %518 = vector.broadcast %515 : f32 to vector<28x124xf32>
    %519 = arith.mulf %518, %517 : vector<28x124xf32>
    %520 = arith.addf %514, %519 : vector<28x124xf32>
    %c63 = arith.constant 63 : index
    %521 = memref.load %arg2[%c63] : memref<250xf32, #tpu.memory_space<smem>>
    %c13_366 = arith.constant 13 : index
    %c0_367 = arith.constant 0 : index
    %c0_368 = arith.constant 0 : index
    %522 = vector.load %arg5[%c13_366, %c0_367, %c0_368] : memref<25x28x124xf32, #tpu.memory_space<vmem>>, vector<1x28x124xf32>
    %523 = vector.shape_cast %522 : vector<1x28x124xf32> to vector<28x124xf32>
    %524 = vector.broadcast %521 : f32 to vector<28x124xf32>
    %525 = arith.mulf %524, %523 : vector<28x124xf32>
    %526 = arith.addf %520, %525 : vector<28x124xf32>
    %c64 = arith.constant 64 : index
    %527 = memref.load %arg2[%c64] : memref<250xf32, #tpu.memory_space<smem>>
    %c14_369 = arith.constant 14 : index
    %c0_370 = arith.constant 0 : index
    %c0_371 = arith.constant 0 : index
    %528 = vector.load %arg5[%c14_369, %c0_370, %c0_371] : memref<25x28x124xf32, #tpu.memory_space<vmem>>, vector<1x28x124xf32>
    %529 = vector.shape_cast %528 : vector<1x28x124xf32> to vector<28x124xf32>
    %530 = vector.broadcast %527 : f32 to vector<28x124xf32>
    %531 = arith.mulf %530, %529 : vector<28x124xf32>
    %532 = arith.addf %526, %531 : vector<28x124xf32>
    %c65 = arith.constant 65 : index
    %533 = memref.load %arg2[%c65] : memref<250xf32, #tpu.memory_space<smem>>
    %c15_372 = arith.constant 15 : index
    %c0_373 = arith.constant 0 : index
    %c0_374 = arith.constant 0 : index
    %534 = vector.load %arg5[%c15_372, %c0_373, %c0_374] : memref<25x28x124xf32, #tpu.memory_space<vmem>>, vector<1x28x124xf32>
    %535 = vector.shape_cast %534 : vector<1x28x124xf32> to vector<28x124xf32>
    %536 = vector.broadcast %533 : f32 to vector<28x124xf32>
    %537 = arith.mulf %536, %535 : vector<28x124xf32>
    %538 = arith.addf %532, %537 : vector<28x124xf32>
    %c66_375 = arith.constant 66 : index
    %539 = memref.load %arg2[%c66_375] : memref<250xf32, #tpu.memory_space<smem>>
    %c16_376 = arith.constant 16 : index
    %c0_377 = arith.constant 0 : index
    %c0_378 = arith.constant 0 : index
    %540 = vector.load %arg5[%c16_376, %c0_377, %c0_378] : memref<25x28x124xf32, #tpu.memory_space<vmem>>, vector<1x28x124xf32>
    %541 = vector.shape_cast %540 : vector<1x28x124xf32> to vector<28x124xf32>
    %542 = vector.broadcast %539 : f32 to vector<28x124xf32>
    %543 = arith.mulf %542, %541 : vector<28x124xf32>
    %544 = arith.addf %538, %543 : vector<28x124xf32>
    %c67 = arith.constant 67 : index
    %545 = memref.load %arg2[%c67] : memref<250xf32, #tpu.memory_space<smem>>
    %c17_379 = arith.constant 17 : index
    %c0_380 = arith.constant 0 : index
    %c0_381 = arith.constant 0 : index
    %546 = vector.load %arg5[%c17_379, %c0_380, %c0_381] : memref<25x28x124xf32, #tpu.memory_space<vmem>>, vector<1x28x124xf32>
    %547 = vector.shape_cast %546 : vector<1x28x124xf32> to vector<28x124xf32>
    %548 = vector.broadcast %545 : f32 to vector<28x124xf32>
    %549 = arith.mulf %548, %547 : vector<28x124xf32>
    %550 = arith.addf %544, %549 : vector<28x124xf32>
    %c68 = arith.constant 68 : index
    %551 = memref.load %arg2[%c68] : memref<250xf32, #tpu.memory_space<smem>>
    %c18_382 = arith.constant 18 : index
    %c0_383 = arith.constant 0 : index
    %c0_384 = arith.constant 0 : index
    %552 = vector.load %arg5[%c18_382, %c0_383, %c0_384] : memref<25x28x124xf32, #tpu.memory_space<vmem>>, vector<1x28x124xf32>
    %553 = vector.shape_cast %552 : vector<1x28x124xf32> to vector<28x124xf32>
    %554 = vector.broadcast %551 : f32 to vector<28x124xf32>
    %555 = arith.mulf %554, %553 : vector<28x124xf32>
    %556 = arith.addf %550, %555 : vector<28x124xf32>
    %c69 = arith.constant 69 : index
    %557 = memref.load %arg2[%c69] : memref<250xf32, #tpu.memory_space<smem>>
    %c19_385 = arith.constant 19 : index
    %c0_386 = arith.constant 0 : index
    %c0_387 = arith.constant 0 : index
    %558 = vector.load %arg5[%c19_385, %c0_386, %c0_387] : memref<25x28x124xf32, #tpu.memory_space<vmem>>, vector<1x28x124xf32>
    %559 = vector.shape_cast %558 : vector<1x28x124xf32> to vector<28x124xf32>
    %560 = vector.broadcast %557 : f32 to vector<28x124xf32>
    %561 = arith.mulf %560, %559 : vector<28x124xf32>
    %562 = arith.addf %556, %561 : vector<28x124xf32>
    %c70 = arith.constant 70 : index
    %563 = memref.load %arg2[%c70] : memref<250xf32, #tpu.memory_space<smem>>
    %c20_388 = arith.constant 20 : index
    %c0_389 = arith.constant 0 : index
    %c0_390 = arith.constant 0 : index
    %564 = vector.load %arg5[%c20_388, %c0_389, %c0_390] : memref<25x28x124xf32, #tpu.memory_space<vmem>>, vector<1x28x124xf32>
    %565 = vector.shape_cast %564 : vector<1x28x124xf32> to vector<28x124xf32>
    %566 = vector.broadcast %563 : f32 to vector<28x124xf32>
    %567 = arith.mulf %566, %565 : vector<28x124xf32>
    %568 = arith.addf %562, %567 : vector<28x124xf32>
    %c71 = arith.constant 71 : index
    %569 = memref.load %arg2[%c71] : memref<250xf32, #tpu.memory_space<smem>>
    %c21_391 = arith.constant 21 : index
    %c0_392 = arith.constant 0 : index
    %c0_393 = arith.constant 0 : index
    %570 = vector.load %arg5[%c21_391, %c0_392, %c0_393] : memref<25x28x124xf32, #tpu.memory_space<vmem>>, vector<1x28x124xf32>
    %571 = vector.shape_cast %570 : vector<1x28x124xf32> to vector<28x124xf32>
    %572 = vector.broadcast %569 : f32 to vector<28x124xf32>
    %573 = arith.mulf %572, %571 : vector<28x124xf32>
    %574 = arith.addf %568, %573 : vector<28x124xf32>
    %c72 = arith.constant 72 : index
    %575 = memref.load %arg2[%c72] : memref<250xf32, #tpu.memory_space<smem>>
    %c22_394 = arith.constant 22 : index
    %c0_395 = arith.constant 0 : index
    %c0_396 = arith.constant 0 : index
    %576 = vector.load %arg5[%c22_394, %c0_395, %c0_396] : memref<25x28x124xf32, #tpu.memory_space<vmem>>, vector<1x28x124xf32>
    %577 = vector.shape_cast %576 : vector<1x28x124xf32> to vector<28x124xf32>
    %578 = vector.broadcast %575 : f32 to vector<28x124xf32>
    %579 = arith.mulf %578, %577 : vector<28x124xf32>
    %580 = arith.addf %574, %579 : vector<28x124xf32>
    %c73 = arith.constant 73 : index
    %581 = memref.load %arg2[%c73] : memref<250xf32, #tpu.memory_space<smem>>
    %c23_397 = arith.constant 23 : index
    %c0_398 = arith.constant 0 : index
    %c0_399 = arith.constant 0 : index
    %582 = vector.load %arg5[%c23_397, %c0_398, %c0_399] : memref<25x28x124xf32, #tpu.memory_space<vmem>>, vector<1x28x124xf32>
    %583 = vector.shape_cast %582 : vector<1x28x124xf32> to vector<28x124xf32>
    %584 = vector.broadcast %581 : f32 to vector<28x124xf32>
    %585 = arith.mulf %584, %583 : vector<28x124xf32>
    %586 = arith.addf %580, %585 : vector<28x124xf32>
    %c74 = arith.constant 74 : index
    %587 = memref.load %arg2[%c74] : memref<250xf32, #tpu.memory_space<smem>>
    %c24_400 = arith.constant 24 : index
    %c0_401 = arith.constant 0 : index
    %c0_402 = arith.constant 0 : index
    %588 = vector.load %arg5[%c24_400, %c0_401, %c0_402] : memref<25x28x124xf32, #tpu.memory_space<vmem>>, vector<1x28x124xf32>
    %589 = vector.shape_cast %588 : vector<1x28x124xf32> to vector<28x124xf32>
    %590 = vector.broadcast %587 : f32 to vector<28x124xf32>
    %591 = arith.mulf %590, %589 : vector<28x124xf32>
    %592 = arith.addf %586, %591 : vector<28x124xf32>
    %593 = vector.extract_strided_slice %592 {offsets = [0, 0], sizes = [28, 28], strides = [1, 1]} : vector<28x124xf32> to vector<28x28xf32>
    %c0_403 = arith.constant 0 : index
    %c2_404 = arith.constant 2 : index
    %c0_405 = arith.constant 0 : index
    %c0_406 = arith.constant 0 : index
    %594 = vector.load %arg3[%c0_403, %c2_404, %c0_405, %c0_406] : memref<4x10x28x28xf32, #tpu.memory_space<vmem>>, vector<1x1x28x28xf32>
    %595 = vector.shape_cast %594 : vector<1x1x28x28xf32> to vector<28x28xf32>
    %596 = vector.shape_cast %593 : vector<28x28xf32> to vector<1x1x28x28xf32>
    tpu.vector_store %arg3[%c0_403, %c2_404, %c0_405, %c0_406], %596 {strides = array<i32>} : memref<4x10x28x28xf32, #tpu.memory_space<vmem>>, vector<1x1x28x28xf32>,
    %597 = vector.extract_strided_slice %592 {offsets = [0, 32], sizes = [28, 28], strides = [1, 1]} : vector<28x124xf32> to vector<28x28xf32>
    %c1_407 = arith.constant 1 : index
    %c2_408 = arith.constant 2 : index
    %c0_409 = arith.constant 0 : index
    %c0_410 = arith.constant 0 : index
    %598 = vector.load %arg3[%c1_407, %c2_408, %c0_409, %c0_410] : memref<4x10x28x28xf32, #tpu.memory_space<vmem>>, vector<1x1x28x28xf32>
    %599 = vector.shape_cast %598 : vector<1x1x28x28xf32> to vector<28x28xf32>
    %600 = vector.shape_cast %597 : vector<28x28xf32> to vector<1x1x28x28xf32>
    tpu.vector_store %arg3[%c1_407, %c2_408, %c0_409, %c0_410], %600 {strides = array<i32>} : memref<4x10x28x28xf32, #tpu.memory_space<vmem>>, vector<1x1x28x28xf32>,
    %601 = vector.extract_strided_slice %592 {offsets = [0, 64], sizes = [28, 28], strides = [1, 1]} : vector<28x124xf32> to vector<28x28xf32>
    %c2_411 = arith.constant 2 : index
    %c2_412 = arith.constant 2 : index
    %c0_413 = arith.constant 0 : index
    %c0_414 = arith.constant 0 : index
    %602 = vector.load %arg3[%c2_411, %c2_412, %c0_413, %c0_414] : memref<4x10x28x28xf32, #tpu.memory_space<vmem>>, vector<1x1x28x28xf32>
    %603 = vector.shape_cast %602 : vector<1x1x28x28xf32> to vector<28x28xf32>
    %604 = vector.shape_cast %601 : vector<28x28xf32> to vector<1x1x28x28xf32>
    tpu.vector_store %arg3[%c2_411, %c2_412, %c0_413, %c0_414], %604 {strides = array<i32>} : memref<4x10x28x28xf32, #tpu.memory_space<vmem>>, vector<1x1x28x28xf32>,
    %605 = vector.extract_strided_slice %592 {offsets = [0, 96], sizes = [28, 28], strides = [1, 1]} : vector<28x124xf32> to vector<28x28xf32>
    %c3_415 = arith.constant 3 : index
    %c2_416 = arith.constant 2 : index
    %c0_417 = arith.constant 0 : index
    %c0_418 = arith.constant 0 : index
    %606 = vector.load %arg3[%c3_415, %c2_416, %c0_417, %c0_418] : memref<4x10x28x28xf32, #tpu.memory_space<vmem>>, vector<1x1x28x28xf32>
    %607 = vector.shape_cast %606 : vector<1x1x28x28xf32> to vector<28x28xf32>
    %608 = vector.shape_cast %605 : vector<28x28xf32> to vector<1x1x28x28xf32>
    tpu.vector_store %arg3[%c3_415, %c2_416, %c0_417, %c0_418], %608 {strides = array<i32>} : memref<4x10x28x28xf32, #tpu.memory_space<vmem>>, vector<1x1x28x28xf32>,
    %c75 = arith.constant 75 : index
    %609 = memref.load %arg2[%c75] : memref<250xf32, #tpu.memory_space<smem>>
    %c0_419 = arith.constant 0 : index
    %c0_420 = arith.constant 0 : index
    %c0_421 = arith.constant 0 : index
    %610 = vector.load %arg5[%c0_419, %c0_420, %c0_421] : memref<25x28x124xf32, #tpu.memory_space<vmem>>, vector<1x28x124xf32>
    %611 = vector.shape_cast %610 : vector<1x28x124xf32> to vector<28x124xf32>
    %612 = vector.broadcast %609 : f32 to vector<28x124xf32>
    %613 = arith.mulf %612, %611 : vector<28x124xf32>
    %c76 = arith.constant 76 : index
    %614 = memref.load %arg2[%c76] : memref<250xf32, #tpu.memory_space<smem>>
    %c1_422 = arith.constant 1 : index
    %c0_423 = arith.constant 0 : index
    %c0_424 = arith.constant 0 : index
    %615 = vector.load %arg5[%c1_422, %c0_423, %c0_424] : memref<25x28x124xf32, #tpu.memory_space<vmem>>, vector<1x28x124xf32>
    %616 = vector.shape_cast %615 : vector<1x28x124xf32> to vector<28x124xf32>
    %617 = vector.broadcast %614 : f32 to vector<28x124xf32>
    %618 = arith.mulf %617, %616 : vector<28x124xf32>
    %619 = arith.addf %613, %618 : vector<28x124xf32>
    %c77 = arith.constant 77 : index
    %620 = memref.load %arg2[%c77] : memref<250xf32, #tpu.memory_space<smem>>
    %c2_425 = arith.constant 2 : index
    %c0_426 = arith.constant 0 : index
    %c0_427 = arith.constant 0 : index
    %621 = vector.load %arg5[%c2_425, %c0_426, %c0_427] : memref<25x28x124xf32, #tpu.memory_space<vmem>>, vector<1x28x124xf32>
    %622 = vector.shape_cast %621 : vector<1x28x124xf32> to vector<28x124xf32>
    %623 = vector.broadcast %620 : f32 to vector<28x124xf32>
    %624 = arith.mulf %623, %622 : vector<28x124xf32>
    %625 = arith.addf %619, %624 : vector<28x124xf32>
    %c78 = arith.constant 78 : index
    %626 = memref.load %arg2[%c78] : memref<250xf32, #tpu.memory_space<smem>>
    %c3_428 = arith.constant 3 : index
    %c0_429 = arith.constant 0 : index
    %c0_430 = arith.constant 0 : index
    %627 = vector.load %arg5[%c3_428, %c0_429, %c0_430] : memref<25x28x124xf32, #tpu.memory_space<vmem>>, vector<1x28x124xf32>
    %628 = vector.shape_cast %627 : vector<1x28x124xf32> to vector<28x124xf32>
    %629 = vector.broadcast %626 : f32 to vector<28x124xf32>
    %630 = arith.mulf %629, %628 : vector<28x124xf32>
    %631 = arith.addf %625, %630 : vector<28x124xf32>
    %c79 = arith.constant 79 : index
    %632 = memref.load %arg2[%c79] : memref<250xf32, #tpu.memory_space<smem>>
    %c4_431 = arith.constant 4 : index
    %c0_432 = arith.constant 0 : index
    %c0_433 = arith.constant 0 : index
    %633 = vector.load %arg5[%c4_431, %c0_432, %c0_433] : memref<25x28x124xf32, #tpu.memory_space<vmem>>, vector<1x28x124xf32>
    %634 = vector.shape_cast %633 : vector<1x28x124xf32> to vector<28x124xf32>
    %635 = vector.broadcast %632 : f32 to vector<28x124xf32>
    %636 = arith.mulf %635, %634 : vector<28x124xf32>
    %637 = arith.addf %631, %636 : vector<28x124xf32>
    %c80 = arith.constant 80 : index
    %638 = memref.load %arg2[%c80] : memref<250xf32, #tpu.memory_space<smem>>
    %c5_434 = arith.constant 5 : index
    %c0_435 = arith.constant 0 : index
    %c0_436 = arith.constant 0 : index
    %639 = vector.load %arg5[%c5_434, %c0_435, %c0_436] : memref<25x28x124xf32, #tpu.memory_space<vmem>>, vector<1x28x124xf32>
    %640 = vector.shape_cast %639 : vector<1x28x124xf32> to vector<28x124xf32>
    %641 = vector.broadcast %638 : f32 to vector<28x124xf32>
    %642 = arith.mulf %641, %640 : vector<28x124xf32>
    %643 = arith.addf %637, %642 : vector<28x124xf32>
    %c81 = arith.constant 81 : index
    %644 = memref.load %arg2[%c81] : memref<250xf32, #tpu.memory_space<smem>>
    %c6_437 = arith.constant 6 : index
    %c0_438 = arith.constant 0 : index
    %c0_439 = arith.constant 0 : index
    %645 = vector.load %arg5[%c6_437, %c0_438, %c0_439] : memref<25x28x124xf32, #tpu.memory_space<vmem>>, vector<1x28x124xf32>
    %646 = vector.shape_cast %645 : vector<1x28x124xf32> to vector<28x124xf32>
    %647 = vector.broadcast %644 : f32 to vector<28x124xf32>
    %648 = arith.mulf %647, %646 : vector<28x124xf32>
    %649 = arith.addf %643, %648 : vector<28x124xf32>
    %c82 = arith.constant 82 : index
    %650 = memref.load %arg2[%c82] : memref<250xf32, #tpu.memory_space<smem>>
    %c7_440 = arith.constant 7 : index
    %c0_441 = arith.constant 0 : index
    %c0_442 = arith.constant 0 : index
    %651 = vector.load %arg5[%c7_440, %c0_441, %c0_442] : memref<25x28x124xf32, #tpu.memory_space<vmem>>, vector<1x28x124xf32>
    %652 = vector.shape_cast %651 : vector<1x28x124xf32> to vector<28x124xf32>
    %653 = vector.broadcast %650 : f32 to vector<28x124xf32>
    %654 = arith.mulf %653, %652 : vector<28x124xf32>
    %655 = arith.addf %649, %654 : vector<28x124xf32>
    %c83 = arith.constant 83 : index
    %656 = memref.load %arg2[%c83] : memref<250xf32, #tpu.memory_space<smem>>
    %c8_443 = arith.constant 8 : index
    %c0_444 = arith.constant 0 : index
    %c0_445 = arith.constant 0 : index
    %657 = vector.load %arg5[%c8_443, %c0_444, %c0_445] : memref<25x28x124xf32, #tpu.memory_space<vmem>>, vector<1x28x124xf32>
    %658 = vector.shape_cast %657 : vector<1x28x124xf32> to vector<28x124xf32>
    %659 = vector.broadcast %656 : f32 to vector<28x124xf32>
    %660 = arith.mulf %659, %658 : vector<28x124xf32>
    %661 = arith.addf %655, %660 : vector<28x124xf32>
    %c84 = arith.constant 84 : index
    %662 = memref.load %arg2[%c84] : memref<250xf32, #tpu.memory_space<smem>>
    %c9_446 = arith.constant 9 : index
    %c0_447 = arith.constant 0 : index
    %c0_448 = arith.constant 0 : index
    %663 = vector.load %arg5[%c9_446, %c0_447, %c0_448] : memref<25x28x124xf32, #tpu.memory_space<vmem>>, vector<1x28x124xf32>
    %664 = vector.shape_cast %663 : vector<1x28x124xf32> to vector<28x124xf32>
    %665 = vector.broadcast %662 : f32 to vector<28x124xf32>
    %666 = arith.mulf %665, %664 : vector<28x124xf32>
    %667 = arith.addf %661, %666 : vector<28x124xf32>
    %c85 = arith.constant 85 : index
    %668 = memref.load %arg2[%c85] : memref<250xf32, #tpu.memory_space<smem>>
    %c10_449 = arith.constant 10 : index
    %c0_450 = arith.constant 0 : index
    %c0_451 = arith.constant 0 : index
    %669 = vector.load %arg5[%c10_449, %c0_450, %c0_451] : memref<25x28x124xf32, #tpu.memory_space<vmem>>, vector<1x28x124xf32>
    %670 = vector.shape_cast %669 : vector<1x28x124xf32> to vector<28x124xf32>
    %671 = vector.broadcast %668 : f32 to vector<28x124xf32>
    %672 = arith.mulf %671, %670 : vector<28x124xf32>
    %673 = arith.addf %667, %672 : vector<28x124xf32>
    %c86 = arith.constant 86 : index
    %674 = memref.load %arg2[%c86] : memref<250xf32, #tpu.memory_space<smem>>
    %c11_452 = arith.constant 11 : index
    %c0_453 = arith.constant 0 : index
    %c0_454 = arith.constant 0 : index
    %675 = vector.load %arg5[%c11_452, %c0_453, %c0_454] : memref<25x28x124xf32, #tpu.memory_space<vmem>>, vector<1x28x124xf32>
    %676 = vector.shape_cast %675 : vector<1x28x124xf32> to vector<28x124xf32>
    %677 = vector.broadcast %674 : f32 to vector<28x124xf32>
    %678 = arith.mulf %677, %676 : vector<28x124xf32>
    %679 = arith.addf %673, %678 : vector<28x124xf32>
    %c87 = arith.constant 87 : index
    %680 = memref.load %arg2[%c87] : memref<250xf32, #tpu.memory_space<smem>>
    %c12_455 = arith.constant 12 : index
    %c0_456 = arith.constant 0 : index
    %c0_457 = arith.constant 0 : index
    %681 = vector.load %arg5[%c12_455, %c0_456, %c0_457] : memref<25x28x124xf32, #tpu.memory_space<vmem>>, vector<1x28x124xf32>
    %682 = vector.shape_cast %681 : vector<1x28x124xf32> to vector<28x124xf32>
    %683 = vector.broadcast %680 : f32 to vector<28x124xf32>
    %684 = arith.mulf %683, %682 : vector<28x124xf32>
    %685 = arith.addf %679, %684 : vector<28x124xf32>
    %c88 = arith.constant 88 : index
    %686 = memref.load %arg2[%c88] : memref<250xf32, #tpu.memory_space<smem>>
    %c13_458 = arith.constant 13 : index
    %c0_459 = arith.constant 0 : index
    %c0_460 = arith.constant 0 : index
    %687 = vector.load %arg5[%c13_458, %c0_459, %c0_460] : memref<25x28x124xf32, #tpu.memory_space<vmem>>, vector<1x28x124xf32>
    %688 = vector.shape_cast %687 : vector<1x28x124xf32> to vector<28x124xf32>
    %689 = vector.broadcast %686 : f32 to vector<28x124xf32>
    %690 = arith.mulf %689, %688 : vector<28x124xf32>
    %691 = arith.addf %685, %690 : vector<28x124xf32>
    %c89 = arith.constant 89 : index
    %692 = memref.load %arg2[%c89] : memref<250xf32, #tpu.memory_space<smem>>
    %c14_461 = arith.constant 14 : index
    %c0_462 = arith.constant 0 : index
    %c0_463 = arith.constant 0 : index
    %693 = vector.load %arg5[%c14_461, %c0_462, %c0_463] : memref<25x28x124xf32, #tpu.memory_space<vmem>>, vector<1x28x124xf32>
    %694 = vector.shape_cast %693 : vector<1x28x124xf32> to vector<28x124xf32>
    %695 = vector.broadcast %692 : f32 to vector<28x124xf32>
    %696 = arith.mulf %695, %694 : vector<28x124xf32>
    %697 = arith.addf %691, %696 : vector<28x124xf32>
    %c90 = arith.constant 90 : index
    %698 = memref.load %arg2[%c90] : memref<250xf32, #tpu.memory_space<smem>>
    %c15_464 = arith.constant 15 : index
    %c0_465 = arith.constant 0 : index
    %c0_466 = arith.constant 0 : index
    %699 = vector.load %arg5[%c15_464, %c0_465, %c0_466] : memref<25x28x124xf32, #tpu.memory_space<vmem>>, vector<1x28x124xf32>
    %700 = vector.shape_cast %699 : vector<1x28x124xf32> to vector<28x124xf32>
    %701 = vector.broadcast %698 : f32 to vector<28x124xf32>
    %702 = arith.mulf %701, %700 : vector<28x124xf32>
    %703 = arith.addf %697, %702 : vector<28x124xf32>
    %c91 = arith.constant 91 : index
    %704 = memref.load %arg2[%c91] : memref<250xf32, #tpu.memory_space<smem>>
    %c16_467 = arith.constant 16 : index
    %c0_468 = arith.constant 0 : index
    %c0_469 = arith.constant 0 : index
    %705 = vector.load %arg5[%c16_467, %c0_468, %c0_469] : memref<25x28x124xf32, #tpu.memory_space<vmem>>, vector<1x28x124xf32>
    %706 = vector.shape_cast %705 : vector<1x28x124xf32> to vector<28x124xf32>
    %707 = vector.broadcast %704 : f32 to vector<28x124xf32>
    %708 = arith.mulf %707, %706 : vector<28x124xf32>
    %709 = arith.addf %703, %708 : vector<28x124xf32>
    %c92 = arith.constant 92 : index
    %710 = memref.load %arg2[%c92] : memref<250xf32, #tpu.memory_space<smem>>
    %c17_470 = arith.constant 17 : index
    %c0_471 = arith.constant 0 : index
    %c0_472 = arith.constant 0 : index
    %711 = vector.load %arg5[%c17_470, %c0_471, %c0_472] : memref<25x28x124xf32, #tpu.memory_space<vmem>>, vector<1x28x124xf32>
    %712 = vector.shape_cast %711 : vector<1x28x124xf32> to vector<28x124xf32>
    %713 = vector.broadcast %710 : f32 to vector<28x124xf32>
    %714 = arith.mulf %713, %712 : vector<28x124xf32>
    %715 = arith.addf %709, %714 : vector<28x124xf32>
    %c93 = arith.constant 93 : index
    %716 = memref.load %arg2[%c93] : memref<250xf32, #tpu.memory_space<smem>>
    %c18_473 = arith.constant 18 : index
    %c0_474 = arith.constant 0 : index
    %c0_475 = arith.constant 0 : index
    %717 = vector.load %arg5[%c18_473, %c0_474, %c0_475] : memref<25x28x124xf32, #tpu.memory_space<vmem>>, vector<1x28x124xf32>
    %718 = vector.shape_cast %717 : vector<1x28x124xf32> to vector<28x124xf32>
    %719 = vector.broadcast %716 : f32 to vector<28x124xf32>
    %720 = arith.mulf %719, %718 : vector<28x124xf32>
    %721 = arith.addf %715, %720 : vector<28x124xf32>
    %c94 = arith.constant 94 : index
    %722 = memref.load %arg2[%c94] : memref<250xf32, #tpu.memory_space<smem>>
    %c19_476 = arith.constant 19 : index
    %c0_477 = arith.constant 0 : index
    %c0_478 = arith.constant 0 : index
    %723 = vector.load %arg5[%c19_476, %c0_477, %c0_478] : memref<25x28x124xf32, #tpu.memory_space<vmem>>, vector<1x28x124xf32>
    %724 = vector.shape_cast %723 : vector<1x28x124xf32> to vector<28x124xf32>
    %725 = vector.broadcast %722 : f32 to vector<28x124xf32>
    %726 = arith.mulf %725, %724 : vector<28x124xf32>
    %727 = arith.addf %721, %726 : vector<28x124xf32>
    %c95 = arith.constant 95 : index
    %728 = memref.load %arg2[%c95] : memref<250xf32, #tpu.memory_space<smem>>
    %c20_479 = arith.constant 20 : index
    %c0_480 = arith.constant 0 : index
    %c0_481 = arith.constant 0 : index
    %729 = vector.load %arg5[%c20_479, %c0_480, %c0_481] : memref<25x28x124xf32, #tpu.memory_space<vmem>>, vector<1x28x124xf32>
    %730 = vector.shape_cast %729 : vector<1x28x124xf32> to vector<28x124xf32>
    %731 = vector.broadcast %728 : f32 to vector<28x124xf32>
    %732 = arith.mulf %731, %730 : vector<28x124xf32>
    %733 = arith.addf %727, %732 : vector<28x124xf32>
    %c96 = arith.constant 96 : index
    %734 = memref.load %arg2[%c96] : memref<250xf32, #tpu.memory_space<smem>>
    %c21_482 = arith.constant 21 : index
    %c0_483 = arith.constant 0 : index
    %c0_484 = arith.constant 0 : index
    %735 = vector.load %arg5[%c21_482, %c0_483, %c0_484] : memref<25x28x124xf32, #tpu.memory_space<vmem>>, vector<1x28x124xf32>
    %736 = vector.shape_cast %735 : vector<1x28x124xf32> to vector<28x124xf32>
    %737 = vector.broadcast %734 : f32 to vector<28x124xf32>
    %738 = arith.mulf %737, %736 : vector<28x124xf32>
    %739 = arith.addf %733, %738 : vector<28x124xf32>
    %c97 = arith.constant 97 : index
    %740 = memref.load %arg2[%c97] : memref<250xf32, #tpu.memory_space<smem>>
    %c22_485 = arith.constant 22 : index
    %c0_486 = arith.constant 0 : index
    %c0_487 = arith.constant 0 : index
    %741 = vector.load %arg5[%c22_485, %c0_486, %c0_487] : memref<25x28x124xf32, #tpu.memory_space<vmem>>, vector<1x28x124xf32>
    %742 = vector.shape_cast %741 : vector<1x28x124xf32> to vector<28x124xf32>
    %743 = vector.broadcast %740 : f32 to vector<28x124xf32>
    %744 = arith.mulf %743, %742 : vector<28x124xf32>
    %745 = arith.addf %739, %744 : vector<28x124xf32>
    %c98_488 = arith.constant 98 : index
    %746 = memref.load %arg2[%c98_488] : memref<250xf32, #tpu.memory_space<smem>>
    %c23_489 = arith.constant 23 : index
    %c0_490 = arith.constant 0 : index
    %c0_491 = arith.constant 0 : index
    %747 = vector.load %arg5[%c23_489, %c0_490, %c0_491] : memref<25x28x124xf32, #tpu.memory_space<vmem>>, vector<1x28x124xf32>
    %748 = vector.shape_cast %747 : vector<1x28x124xf32> to vector<28x124xf32>
    %749 = vector.broadcast %746 : f32 to vector<28x124xf32>
    %750 = arith.mulf %749, %748 : vector<28x124xf32>
    %751 = arith.addf %745, %750 : vector<28x124xf32>
    %c99 = arith.constant 99 : index
    %752 = memref.load %arg2[%c99] : memref<250xf32, #tpu.memory_space<smem>>
    %c24_492 = arith.constant 24 : index
    %c0_493 = arith.constant 0 : index
    %c0_494 = arith.constant 0 : index
    %753 = vector.load %arg5[%c24_492, %c0_493, %c0_494] : memref<25x28x124xf32, #tpu.memory_space<vmem>>, vector<1x28x124xf32>
    %754 = vector.shape_cast %753 : vector<1x28x124xf32> to vector<28x124xf32>
    %755 = vector.broadcast %752 : f32 to vector<28x124xf32>
    %756 = arith.mulf %755, %754 : vector<28x124xf32>
    %757 = arith.addf %751, %756 : vector<28x124xf32>
    %758 = vector.extract_strided_slice %757 {offsets = [0, 0], sizes = [28, 28], strides = [1, 1]} : vector<28x124xf32> to vector<28x28xf32>
    %c0_495 = arith.constant 0 : index
    %c3_496 = arith.constant 3 : index
    %c0_497 = arith.constant 0 : index
    %c0_498 = arith.constant 0 : index
    %759 = vector.load %arg3[%c0_495, %c3_496, %c0_497, %c0_498] : memref<4x10x28x28xf32, #tpu.memory_space<vmem>>, vector<1x1x28x28xf32>
    %760 = vector.shape_cast %759 : vector<1x1x28x28xf32> to vector<28x28xf32>
    %761 = vector.shape_cast %758 : vector<28x28xf32> to vector<1x1x28x28xf32>
    tpu.vector_store %arg3[%c0_495, %c3_496, %c0_497, %c0_498], %761 {strides = array<i32>} : memref<4x10x28x28xf32, #tpu.memory_space<vmem>>, vector<1x1x28x28xf32>,
    %762 = vector.extract_strided_slice %757 {offsets = [0, 32], sizes = [28, 28], strides = [1, 1]} : vector<28x124xf32> to vector<28x28xf32>
    %c1_499 = arith.constant 1 : index
    %c3_500 = arith.constant 3 : index
    %c0_501 = arith.constant 0 : index
    %c0_502 = arith.constant 0 : index
    %763 = vector.load %arg3[%c1_499, %c3_500, %c0_501, %c0_502] : memref<4x10x28x28xf32, #tpu.memory_space<vmem>>, vector<1x1x28x28xf32>
    %764 = vector.shape_cast %763 : vector<1x1x28x28xf32> to vector<28x28xf32>
    %765 = vector.shape_cast %762 : vector<28x28xf32> to vector<1x1x28x28xf32>
    tpu.vector_store %arg3[%c1_499, %c3_500, %c0_501, %c0_502], %765 {strides = array<i32>} : memref<4x10x28x28xf32, #tpu.memory_space<vmem>>, vector<1x1x28x28xf32>,
    %766 = vector.extract_strided_slice %757 {offsets = [0, 64], sizes = [28, 28], strides = [1, 1]} : vector<28x124xf32> to vector<28x28xf32>
    %c2_503 = arith.constant 2 : index
    %c3_504 = arith.constant 3 : index
    %c0_505 = arith.constant 0 : index
    %c0_506 = arith.constant 0 : index
    %767 = vector.load %arg3[%c2_503, %c3_504, %c0_505, %c0_506] : memref<4x10x28x28xf32, #tpu.memory_space<vmem>>, vector<1x1x28x28xf32>
    %768 = vector.shape_cast %767 : vector<1x1x28x28xf32> to vector<28x28xf32>
    %769 = vector.shape_cast %766 : vector<28x28xf32> to vector<1x1x28x28xf32>
    tpu.vector_store %arg3[%c2_503, %c3_504, %c0_505, %c0_506], %769 {strides = array<i32>} : memref<4x10x28x28xf32, #tpu.memory_space<vmem>>, vector<1x1x28x28xf32>,
    %770 = vector.extract_strided_slice %757 {offsets = [0, 96], sizes = [28, 28], strides = [1, 1]} : vector<28x124xf32> to vector<28x28xf32>
    %c3_507 = arith.constant 3 : index
    %c3_508 = arith.constant 3 : index
    %c0_509 = arith.constant 0 : index
    %c0_510 = arith.constant 0 : index
    %771 = vector.load %arg3[%c3_507, %c3_508, %c0_509, %c0_510] : memref<4x10x28x28xf32, #tpu.memory_space<vmem>>, vector<1x1x28x28xf32>
    %772 = vector.shape_cast %771 : vector<1x1x28x28xf32> to vector<28x28xf32>
    %773 = vector.shape_cast %770 : vector<28x28xf32> to vector<1x1x28x28xf32>
    tpu.vector_store %arg3[%c3_507, %c3_508, %c0_509, %c0_510], %773 {strides = array<i32>} : memref<4x10x28x28xf32, #tpu.memory_space<vmem>>, vector<1x1x28x28xf32>,
    %c100 = arith.constant 100 : index
    %774 = memref.load %arg2[%c100] : memref<250xf32, #tpu.memory_space<smem>>
    %c0_511 = arith.constant 0 : index
    %c0_512 = arith.constant 0 : index
    %c0_513 = arith.constant 0 : index
    %775 = vector.load %arg5[%c0_511, %c0_512, %c0_513] : memref<25x28x124xf32, #tpu.memory_space<vmem>>, vector<1x28x124xf32>
    %776 = vector.shape_cast %775 : vector<1x28x124xf32> to vector<28x124xf32>
    %777 = vector.broadcast %774 : f32 to vector<28x124xf32>
    %778 = arith.mulf %777, %776 : vector<28x124xf32>
    %c101 = arith.constant 101 : index
    %779 = memref.load %arg2[%c101] : memref<250xf32, #tpu.memory_space<smem>>
    %c1_514 = arith.constant 1 : index
    %c0_515 = arith.constant 0 : index
    %c0_516 = arith.constant 0 : index
    %780 = vector.load %arg5[%c1_514, %c0_515, %c0_516] : memref<25x28x124xf32, #tpu.memory_space<vmem>>, vector<1x28x124xf32>
    %781 = vector.shape_cast %780 : vector<1x28x124xf32> to vector<28x124xf32>
    %782 = vector.broadcast %779 : f32 to vector<28x124xf32>
    %783 = arith.mulf %782, %781 : vector<28x124xf32>
    %784 = arith.addf %778, %783 : vector<28x124xf32>
    %c102 = arith.constant 102 : index
    %785 = memref.load %arg2[%c102] : memref<250xf32, #tpu.memory_space<smem>>
    %c2_517 = arith.constant 2 : index
    %c0_518 = arith.constant 0 : index
    %c0_519 = arith.constant 0 : index
    %786 = vector.load %arg5[%c2_517, %c0_518, %c0_519] : memref<25x28x124xf32, #tpu.memory_space<vmem>>, vector<1x28x124xf32>
    %787 = vector.shape_cast %786 : vector<1x28x124xf32> to vector<28x124xf32>
    %788 = vector.broadcast %785 : f32 to vector<28x124xf32>
    %789 = arith.mulf %788, %787 : vector<28x124xf32>
    %790 = arith.addf %784, %789 : vector<28x124xf32>
    %c103 = arith.constant 103 : index
    %791 = memref.load %arg2[%c103] : memref<250xf32, #tpu.memory_space<smem>>
    %c3_520 = arith.constant 3 : index
    %c0_521 = arith.constant 0 : index
    %c0_522 = arith.constant 0 : index
    %792 = vector.load %arg5[%c3_520, %c0_521, %c0_522] : memref<25x28x124xf32, #tpu.memory_space<vmem>>, vector<1x28x124xf32>
    %793 = vector.shape_cast %792 : vector<1x28x124xf32> to vector<28x124xf32>
    %794 = vector.broadcast %791 : f32 to vector<28x124xf32>
    %795 = arith.mulf %794, %793 : vector<28x124xf32>
    %796 = arith.addf %790, %795 : vector<28x124xf32>
    %c104 = arith.constant 104 : index
    %797 = memref.load %arg2[%c104] : memref<250xf32, #tpu.memory_space<smem>>
    %c4_523 = arith.constant 4 : index
    %c0_524 = arith.constant 0 : index
    %c0_525 = arith.constant 0 : index
    %798 = vector.load %arg5[%c4_523, %c0_524, %c0_525] : memref<25x28x124xf32, #tpu.memory_space<vmem>>, vector<1x28x124xf32>
    %799 = vector.shape_cast %798 : vector<1x28x124xf32> to vector<28x124xf32>
    %800 = vector.broadcast %797 : f32 to vector<28x124xf32>
    %801 = arith.mulf %800, %799 : vector<28x124xf32>
    %802 = arith.addf %796, %801 : vector<28x124xf32>
    %c105 = arith.constant 105 : index
    %803 = memref.load %arg2[%c105] : memref<250xf32, #tpu.memory_space<smem>>
    %c5_526 = arith.constant 5 : index
    %c0_527 = arith.constant 0 : index
    %c0_528 = arith.constant 0 : index
    %804 = vector.load %arg5[%c5_526, %c0_527, %c0_528] : memref<25x28x124xf32, #tpu.memory_space<vmem>>, vector<1x28x124xf32>
    %805 = vector.shape_cast %804 : vector<1x28x124xf32> to vector<28x124xf32>
    %806 = vector.broadcast %803 : f32 to vector<28x124xf32>
    %807 = arith.mulf %806, %805 : vector<28x124xf32>
    %808 = arith.addf %802, %807 : vector<28x124xf32>
    %c106 = arith.constant 106 : index
    %809 = memref.load %arg2[%c106] : memref<250xf32, #tpu.memory_space<smem>>
    %c6_529 = arith.constant 6 : index
    %c0_530 = arith.constant 0 : index
    %c0_531 = arith.constant 0 : index
    %810 = vector.load %arg5[%c6_529, %c0_530, %c0_531] : memref<25x28x124xf32, #tpu.memory_space<vmem>>, vector<1x28x124xf32>
    %811 = vector.shape_cast %810 : vector<1x28x124xf32> to vector<28x124xf32>
    %812 = vector.broadcast %809 : f32 to vector<28x124xf32>
    %813 = arith.mulf %812, %811 : vector<28x124xf32>
    %814 = arith.addf %808, %813 : vector<28x124xf32>
    %c107 = arith.constant 107 : index
    %815 = memref.load %arg2[%c107] : memref<250xf32, #tpu.memory_space<smem>>
    %c7_532 = arith.constant 7 : index
    %c0_533 = arith.constant 0 : index
    %c0_534 = arith.constant 0 : index
    %816 = vector.load %arg5[%c7_532, %c0_533, %c0_534] : memref<25x28x124xf32, #tpu.memory_space<vmem>>, vector<1x28x124xf32>
    %817 = vector.shape_cast %816 : vector<1x28x124xf32> to vector<28x124xf32>
    %818 = vector.broadcast %815 : f32 to vector<28x124xf32>
    %819 = arith.mulf %818, %817 : vector<28x124xf32>
    %820 = arith.addf %814, %819 : vector<28x124xf32>
    %c108 = arith.constant 108 : index
    %821 = memref.load %arg2[%c108] : memref<250xf32, #tpu.memory_space<smem>>
    %c8_535 = arith.constant 8 : index
    %c0_536 = arith.constant 0 : index
    %c0_537 = arith.constant 0 : index
    %822 = vector.load %arg5[%c8_535, %c0_536, %c0_537] : memref<25x28x124xf32, #tpu.memory_space<vmem>>, vector<1x28x124xf32>
    %823 = vector.shape_cast %822 : vector<1x28x124xf32> to vector<28x124xf32>
    %824 = vector.broadcast %821 : f32 to vector<28x124xf32>
    %825 = arith.mulf %824, %823 : vector<28x124xf32>
    %826 = arith.addf %820, %825 : vector<28x124xf32>
    %c109 = arith.constant 109 : index
    %827 = memref.load %arg2[%c109] : memref<250xf32, #tpu.memory_space<smem>>
    %c9_538 = arith.constant 9 : index
    %c0_539 = arith.constant 0 : index
    %c0_540 = arith.constant 0 : index
    %828 = vector.load %arg5[%c9_538, %c0_539, %c0_540] : memref<25x28x124xf32, #tpu.memory_space<vmem>>, vector<1x28x124xf32>
    %829 = vector.shape_cast %828 : vector<1x28x124xf32> to vector<28x124xf32>
    %830 = vector.broadcast %827 : f32 to vector<28x124xf32>
    %831 = arith.mulf %830, %829 : vector<28x124xf32>
    %832 = arith.addf %826, %831 : vector<28x124xf32>
    %c110 = arith.constant 110 : index
    %833 = memref.load %arg2[%c110] : memref<250xf32, #tpu.memory_space<smem>>
    %c10_541 = arith.constant 10 : index
    %c0_542 = arith.constant 0 : index
    %c0_543 = arith.constant 0 : index
    %834 = vector.load %arg5[%c10_541, %c0_542, %c0_543] : memref<25x28x124xf32, #tpu.memory_space<vmem>>, vector<1x28x124xf32>
    %835 = vector.shape_cast %834 : vector<1x28x124xf32> to vector<28x124xf32>
    %836 = vector.broadcast %833 : f32 to vector<28x124xf32>
    %837 = arith.mulf %836, %835 : vector<28x124xf32>
    %838 = arith.addf %832, %837 : vector<28x124xf32>
    %c111 = arith.constant 111 : index
    %839 = memref.load %arg2[%c111] : memref<250xf32, #tpu.memory_space<smem>>
    %c11_544 = arith.constant 11 : index
    %c0_545 = arith.constant 0 : index
    %c0_546 = arith.constant 0 : index
    %840 = vector.load %arg5[%c11_544, %c0_545, %c0_546] : memref<25x28x124xf32, #tpu.memory_space<vmem>>, vector<1x28x124xf32>
    %841 = vector.shape_cast %840 : vector<1x28x124xf32> to vector<28x124xf32>
    %842 = vector.broadcast %839 : f32 to vector<28x124xf32>
    %843 = arith.mulf %842, %841 : vector<28x124xf32>
    %844 = arith.addf %838, %843 : vector<28x124xf32>
    %c112 = arith.constant 112 : index
    %845 = memref.load %arg2[%c112] : memref<250xf32, #tpu.memory_space<smem>>
    %c12_547 = arith.constant 12 : index
    %c0_548 = arith.constant 0 : index
    %c0_549 = arith.constant 0 : index
    %846 = vector.load %arg5[%c12_547, %c0_548, %c0_549] : memref<25x28x124xf32, #tpu.memory_space<vmem>>, vector<1x28x124xf32>
    %847 = vector.shape_cast %846 : vector<1x28x124xf32> to vector<28x124xf32>
    %848 = vector.broadcast %845 : f32 to vector<28x124xf32>
    %849 = arith.mulf %848, %847 : vector<28x124xf32>
    %850 = arith.addf %844, %849 : vector<28x124xf32>
    %c113 = arith.constant 113 : index
    %851 = memref.load %arg2[%c113] : memref<250xf32, #tpu.memory_space<smem>>
    %c13_550 = arith.constant 13 : index
    %c0_551 = arith.constant 0 : index
    %c0_552 = arith.constant 0 : index
    %852 = vector.load %arg5[%c13_550, %c0_551, %c0_552] : memref<25x28x124xf32, #tpu.memory_space<vmem>>, vector<1x28x124xf32>
    %853 = vector.shape_cast %852 : vector<1x28x124xf32> to vector<28x124xf32>
    %854 = vector.broadcast %851 : f32 to vector<28x124xf32>
    %855 = arith.mulf %854, %853 : vector<28x124xf32>
    %856 = arith.addf %850, %855 : vector<28x124xf32>
    %c114 = arith.constant 114 : index
    %857 = memref.load %arg2[%c114] : memref<250xf32, #tpu.memory_space<smem>>
    %c14_553 = arith.constant 14 : index
    %c0_554 = arith.constant 0 : index
    %c0_555 = arith.constant 0 : index
    %858 = vector.load %arg5[%c14_553, %c0_554, %c0_555] : memref<25x28x124xf32, #tpu.memory_space<vmem>>, vector<1x28x124xf32>
    %859 = vector.shape_cast %858 : vector<1x28x124xf32> to vector<28x124xf32>
    %860 = vector.broadcast %857 : f32 to vector<28x124xf32>
    %861 = arith.mulf %860, %859 : vector<28x124xf32>
    %862 = arith.addf %856, %861 : vector<28x124xf32>
    %c115 = arith.constant 115 : index
    %863 = memref.load %arg2[%c115] : memref<250xf32, #tpu.memory_space<smem>>
    %c15_556 = arith.constant 15 : index
    %c0_557 = arith.constant 0 : index
    %c0_558 = arith.constant 0 : index
    %864 = vector.load %arg5[%c15_556, %c0_557, %c0_558] : memref<25x28x124xf32, #tpu.memory_space<vmem>>, vector<1x28x124xf32>
    %865 = vector.shape_cast %864 : vector<1x28x124xf32> to vector<28x124xf32>
    %866 = vector.broadcast %863 : f32 to vector<28x124xf32>
    %867 = arith.mulf %866, %865 : vector<28x124xf32>
    %868 = arith.addf %862, %867 : vector<28x124xf32>
    %c116 = arith.constant 116 : index
    %869 = memref.load %arg2[%c116] : memref<250xf32, #tpu.memory_space<smem>>
    %c16_559 = arith.constant 16 : index
    %c0_560 = arith.constant 0 : index
    %c0_561 = arith.constant 0 : index
    %870 = vector.load %arg5[%c16_559, %c0_560, %c0_561] : memref<25x28x124xf32, #tpu.memory_space<vmem>>, vector<1x28x124xf32>
    %871 = vector.shape_cast %870 : vector<1x28x124xf32> to vector<28x124xf32>
    %872 = vector.broadcast %869 : f32 to vector<28x124xf32>
    %873 = arith.mulf %872, %871 : vector<28x124xf32>
    %874 = arith.addf %868, %873 : vector<28x124xf32>
    %c117 = arith.constant 117 : index
    %875 = memref.load %arg2[%c117] : memref<250xf32, #tpu.memory_space<smem>>
    %c17_562 = arith.constant 17 : index
    %c0_563 = arith.constant 0 : index
    %c0_564 = arith.constant 0 : index
    %876 = vector.load %arg5[%c17_562, %c0_563, %c0_564] : memref<25x28x124xf32, #tpu.memory_space<vmem>>, vector<1x28x124xf32>
    %877 = vector.shape_cast %876 : vector<1x28x124xf32> to vector<28x124xf32>
    %878 = vector.broadcast %875 : f32 to vector<28x124xf32>
    %879 = arith.mulf %878, %877 : vector<28x124xf32>
    %880 = arith.addf %874, %879 : vector<28x124xf32>
    %c118 = arith.constant 118 : index
    %881 = memref.load %arg2[%c118] : memref<250xf32, #tpu.memory_space<smem>>
    %c18_565 = arith.constant 18 : index
    %c0_566 = arith.constant 0 : index
    %c0_567 = arith.constant 0 : index
    %882 = vector.load %arg5[%c18_565, %c0_566, %c0_567] : memref<25x28x124xf32, #tpu.memory_space<vmem>>, vector<1x28x124xf32>
    %883 = vector.shape_cast %882 : vector<1x28x124xf32> to vector<28x124xf32>
    %884 = vector.broadcast %881 : f32 to vector<28x124xf32>
    %885 = arith.mulf %884, %883 : vector<28x124xf32>
    %886 = arith.addf %880, %885 : vector<28x124xf32>
    %c119 = arith.constant 119 : index
    %887 = memref.load %arg2[%c119] : memref<250xf32, #tpu.memory_space<smem>>
    %c19_568 = arith.constant 19 : index
    %c0_569 = arith.constant 0 : index
    %c0_570 = arith.constant 0 : index
    %888 = vector.load %arg5[%c19_568, %c0_569, %c0_570] : memref<25x28x124xf32, #tpu.memory_space<vmem>>, vector<1x28x124xf32>
    %889 = vector.shape_cast %888 : vector<1x28x124xf32> to vector<28x124xf32>
    %890 = vector.broadcast %887 : f32 to vector<28x124xf32>
    %891 = arith.mulf %890, %889 : vector<28x124xf32>
    %892 = arith.addf %886, %891 : vector<28x124xf32>
    %c120 = arith.constant 120 : index
    %893 = memref.load %arg2[%c120] : memref<250xf32, #tpu.memory_space<smem>>
    %c20_571 = arith.constant 20 : index
    %c0_572 = arith.constant 0 : index
    %c0_573 = arith.constant 0 : index
    %894 = vector.load %arg5[%c20_571, %c0_572, %c0_573] : memref<25x28x124xf32, #tpu.memory_space<vmem>>, vector<1x28x124xf32>
    %895 = vector.shape_cast %894 : vector<1x28x124xf32> to vector<28x124xf32>
    %896 = vector.broadcast %893 : f32 to vector<28x124xf32>
    %897 = arith.mulf %896, %895 : vector<28x124xf32>
    %898 = arith.addf %892, %897 : vector<28x124xf32>
    %c121 = arith.constant 121 : index
    %899 = memref.load %arg2[%c121] : memref<250xf32, #tpu.memory_space<smem>>
    %c21_574 = arith.constant 21 : index
    %c0_575 = arith.constant 0 : index
    %c0_576 = arith.constant 0 : index
    %900 = vector.load %arg5[%c21_574, %c0_575, %c0_576] : memref<25x28x124xf32, #tpu.memory_space<vmem>>, vector<1x28x124xf32>
    %901 = vector.shape_cast %900 : vector<1x28x124xf32> to vector<28x124xf32>
    %902 = vector.broadcast %899 : f32 to vector<28x124xf32>
    %903 = arith.mulf %902, %901 : vector<28x124xf32>
    %904 = arith.addf %898, %903 : vector<28x124xf32>
    %c122 = arith.constant 122 : index
    %905 = memref.load %arg2[%c122] : memref<250xf32, #tpu.memory_space<smem>>
    %c22_577 = arith.constant 22 : index
    %c0_578 = arith.constant 0 : index
    %c0_579 = arith.constant 0 : index
    %906 = vector.load %arg5[%c22_577, %c0_578, %c0_579] : memref<25x28x124xf32, #tpu.memory_space<vmem>>, vector<1x28x124xf32>
    %907 = vector.shape_cast %906 : vector<1x28x124xf32> to vector<28x124xf32>
    %908 = vector.broadcast %905 : f32 to vector<28x124xf32>
    %909 = arith.mulf %908, %907 : vector<28x124xf32>
    %910 = arith.addf %904, %909 : vector<28x124xf32>
    %c123 = arith.constant 123 : index
    %911 = memref.load %arg2[%c123] : memref<250xf32, #tpu.memory_space<smem>>
    %c23_580 = arith.constant 23 : index
    %c0_581 = arith.constant 0 : index
    %c0_582 = arith.constant 0 : index
    %912 = vector.load %arg5[%c23_580, %c0_581, %c0_582] : memref<25x28x124xf32, #tpu.memory_space<vmem>>, vector<1x28x124xf32>
    %913 = vector.shape_cast %912 : vector<1x28x124xf32> to vector<28x124xf32>
    %914 = vector.broadcast %911 : f32 to vector<28x124xf32>
    %915 = arith.mulf %914, %913 : vector<28x124xf32>
    %916 = arith.addf %910, %915 : vector<28x124xf32>
    %c124 = arith.constant 124 : index
    %917 = memref.load %arg2[%c124] : memref<250xf32, #tpu.memory_space<smem>>
    %c24_583 = arith.constant 24 : index
    %c0_584 = arith.constant 0 : index
    %c0_585 = arith.constant 0 : index
    %918 = vector.load %arg5[%c24_583, %c0_584, %c0_585] : memref<25x28x124xf32, #tpu.memory_space<vmem>>, vector<1x28x124xf32>
    %919 = vector.shape_cast %918 : vector<1x28x124xf32> to vector<28x124xf32>
    %920 = vector.broadcast %917 : f32 to vector<28x124xf32>
    %921 = arith.mulf %920, %919 : vector<28x124xf32>
    %922 = arith.addf %916, %921 : vector<28x124xf32>
    %923 = vector.extract_strided_slice %922 {offsets = [0, 0], sizes = [28, 28], strides = [1, 1]} : vector<28x124xf32> to vector<28x28xf32>
    %c0_586 = arith.constant 0 : index
    %c4_587 = arith.constant 4 : index
    %c0_588 = arith.constant 0 : index
    %c0_589 = arith.constant 0 : index
    %924 = vector.load %arg3[%c0_586, %c4_587, %c0_588, %c0_589] : memref<4x10x28x28xf32, #tpu.memory_space<vmem>>, vector<1x1x28x28xf32>
    %925 = vector.shape_cast %924 : vector<1x1x28x28xf32> to vector<28x28xf32>
    %926 = vector.shape_cast %923 : vector<28x28xf32> to vector<1x1x28x28xf32>
    tpu.vector_store %arg3[%c0_586, %c4_587, %c0_588, %c0_589], %926 {strides = array<i32>} : memref<4x10x28x28xf32, #tpu.memory_space<vmem>>, vector<1x1x28x28xf32>,
    %927 = vector.extract_strided_slice %922 {offsets = [0, 32], sizes = [28, 28], strides = [1, 1]} : vector<28x124xf32> to vector<28x28xf32>
    %c1_590 = arith.constant 1 : index
    %c4_591 = arith.constant 4 : index
    %c0_592 = arith.constant 0 : index
    %c0_593 = arith.constant 0 : index
    %928 = vector.load %arg3[%c1_590, %c4_591, %c0_592, %c0_593] : memref<4x10x28x28xf32, #tpu.memory_space<vmem>>, vector<1x1x28x28xf32>
    %929 = vector.shape_cast %928 : vector<1x1x28x28xf32> to vector<28x28xf32>
    %930 = vector.shape_cast %927 : vector<28x28xf32> to vector<1x1x28x28xf32>
    tpu.vector_store %arg3[%c1_590, %c4_591, %c0_592, %c0_593], %930 {strides = array<i32>} : memref<4x10x28x28xf32, #tpu.memory_space<vmem>>, vector<1x1x28x28xf32>,
    %931 = vector.extract_strided_slice %922 {offsets = [0, 64], sizes = [28, 28], strides = [1, 1]} : vector<28x124xf32> to vector<28x28xf32>
    %c2_594 = arith.constant 2 : index
    %c4_595 = arith.constant 4 : index
    %c0_596 = arith.constant 0 : index
    %c0_597 = arith.constant 0 : index
    %932 = vector.load %arg3[%c2_594, %c4_595, %c0_596, %c0_597] : memref<4x10x28x28xf32, #tpu.memory_space<vmem>>, vector<1x1x28x28xf32>
    %933 = vector.shape_cast %932 : vector<1x1x28x28xf32> to vector<28x28xf32>
    %934 = vector.shape_cast %931 : vector<28x28xf32> to vector<1x1x28x28xf32>
    tpu.vector_store %arg3[%c2_594, %c4_595, %c0_596, %c0_597], %934 {strides = array<i32>} : memref<4x10x28x28xf32, #tpu.memory_space<vmem>>, vector<1x1x28x28xf32>,
    %935 = vector.extract_strided_slice %922 {offsets = [0, 96], sizes = [28, 28], strides = [1, 1]} : vector<28x124xf32> to vector<28x28xf32>
    %c3_598 = arith.constant 3 : index
    %c4_599 = arith.constant 4 : index
    %c0_600 = arith.constant 0 : index
    %c0_601 = arith.constant 0 : index
    %936 = vector.load %arg3[%c3_598, %c4_599, %c0_600, %c0_601] : memref<4x10x28x28xf32, #tpu.memory_space<vmem>>, vector<1x1x28x28xf32>
    %937 = vector.shape_cast %936 : vector<1x1x28x28xf32> to vector<28x28xf32>
    %938 = vector.shape_cast %935 : vector<28x28xf32> to vector<1x1x28x28xf32>
    tpu.vector_store %arg3[%c3_598, %c4_599, %c0_600, %c0_601], %938 {strides = array<i32>} : memref<4x10x28x28xf32, #tpu.memory_space<vmem>>, vector<1x1x28x28xf32>,
    %c125 = arith.constant 125 : index
    %939 = memref.load %arg2[%c125] : memref<250xf32, #tpu.memory_space<smem>>
    %c0_602 = arith.constant 0 : index
    %c0_603 = arith.constant 0 : index
    %c0_604 = arith.constant 0 : index
    %940 = vector.load %arg5[%c0_602, %c0_603, %c0_604] : memref<25x28x124xf32, #tpu.memory_space<vmem>>, vector<1x28x124xf32>
    %941 = vector.shape_cast %940 : vector<1x28x124xf32> to vector<28x124xf32>
    %942 = vector.broadcast %939 : f32 to vector<28x124xf32>
    %943 = arith.mulf %942, %941 : vector<28x124xf32>
    %c126 = arith.constant 126 : index
    %944 = memref.load %arg2[%c126] : memref<250xf32, #tpu.memory_space<smem>>
    %c1_605 = arith.constant 1 : index
    %c0_606 = arith.constant 0 : index
    %c0_607 = arith.constant 0 : index
    %945 = vector.load %arg5[%c1_605, %c0_606, %c0_607] : memref<25x28x124xf32, #tpu.memory_space<vmem>>, vector<1x28x124xf32>
    %946 = vector.shape_cast %945 : vector<1x28x124xf32> to vector<28x124xf32>
    %947 = vector.broadcast %944 : f32 to vector<28x124xf32>
    %948 = arith.mulf %947, %946 : vector<28x124xf32>
    %949 = arith.addf %943, %948 : vector<28x124xf32>
    %c127 = arith.constant 127 : index
    %950 = memref.load %arg2[%c127] : memref<250xf32, #tpu.memory_space<smem>>
    %c2_608 = arith.constant 2 : index
    %c0_609 = arith.constant 0 : index
    %c0_610 = arith.constant 0 : index
    %951 = vector.load %arg5[%c2_608, %c0_609, %c0_610] : memref<25x28x124xf32, #tpu.memory_space<vmem>>, vector<1x28x124xf32>
    %952 = vector.shape_cast %951 : vector<1x28x124xf32> to vector<28x124xf32>
    %953 = vector.broadcast %950 : f32 to vector<28x124xf32>
    %954 = arith.mulf %953, %952 : vector<28x124xf32>
    %955 = arith.addf %949, %954 : vector<28x124xf32>
    %c128 = arith.constant 128 : index
    %956 = memref.load %arg2[%c128] : memref<250xf32, #tpu.memory_space<smem>>
    %c3_611 = arith.constant 3 : index
    %c0_612 = arith.constant 0 : index
    %c0_613 = arith.constant 0 : index
    %957 = vector.load %arg5[%c3_611, %c0_612, %c0_613] : memref<25x28x124xf32, #tpu.memory_space<vmem>>, vector<1x28x124xf32>
    %958 = vector.shape_cast %957 : vector<1x28x124xf32> to vector<28x124xf32>
    %959 = vector.broadcast %956 : f32 to vector<28x124xf32>
    %960 = arith.mulf %959, %958 : vector<28x124xf32>
    %961 = arith.addf %955, %960 : vector<28x124xf32>
    %c129 = arith.constant 129 : index
    %962 = memref.load %arg2[%c129] : memref<250xf32, #tpu.memory_space<smem>>
    %c4_614 = arith.constant 4 : index
    %c0_615 = arith.constant 0 : index
    %c0_616 = arith.constant 0 : index
    %963 = vector.load %arg5[%c4_614, %c0_615, %c0_616] : memref<25x28x124xf32, #tpu.memory_space<vmem>>, vector<1x28x124xf32>
    %964 = vector.shape_cast %963 : vector<1x28x124xf32> to vector<28x124xf32>
    %965 = vector.broadcast %962 : f32 to vector<28x124xf32>
    %966 = arith.mulf %965, %964 : vector<28x124xf32>
    %967 = arith.addf %961, %966 : vector<28x124xf32>
    %c130 = arith.constant 130 : index
    %968 = memref.load %arg2[%c130] : memref<250xf32, #tpu.memory_space<smem>>
    %c5_617 = arith.constant 5 : index
    %c0_618 = arith.constant 0 : index
    %c0_619 = arith.constant 0 : index
    %969 = vector.load %arg5[%c5_617, %c0_618, %c0_619] : memref<25x28x124xf32, #tpu.memory_space<vmem>>, vector<1x28x124xf32>
    %970 = vector.shape_cast %969 : vector<1x28x124xf32> to vector<28x124xf32>
    %971 = vector.broadcast %968 : f32 to vector<28x124xf32>
    %972 = arith.mulf %971, %970 : vector<28x124xf32>
    %973 = arith.addf %967, %972 : vector<28x124xf32>
    %c131 = arith.constant 131 : index
    %974 = memref.load %arg2[%c131] : memref<250xf32, #tpu.memory_space<smem>>
    %c6_620 = arith.constant 6 : index
    %c0_621 = arith.constant 0 : index
    %c0_622 = arith.constant 0 : index
    %975 = vector.load %arg5[%c6_620, %c0_621, %c0_622] : memref<25x28x124xf32, #tpu.memory_space<vmem>>, vector<1x28x124xf32>
    %976 = vector.shape_cast %975 : vector<1x28x124xf32> to vector<28x124xf32>
    %977 = vector.broadcast %974 : f32 to vector<28x124xf32>
    %978 = arith.mulf %977, %976 : vector<28x124xf32>
    %979 = arith.addf %973, %978 : vector<28x124xf32>
    %c132 = arith.constant 132 : index
    %980 = memref.load %arg2[%c132] : memref<250xf32, #tpu.memory_space<smem>>
    %c7_623 = arith.constant 7 : index
    %c0_624 = arith.constant 0 : index
    %c0_625 = arith.constant 0 : index
    %981 = vector.load %arg5[%c7_623, %c0_624, %c0_625] : memref<25x28x124xf32, #tpu.memory_space<vmem>>, vector<1x28x124xf32>
    %982 = vector.shape_cast %981 : vector<1x28x124xf32> to vector<28x124xf32>
    %983 = vector.broadcast %980 : f32 to vector<28x124xf32>
    %984 = arith.mulf %983, %982 : vector<28x124xf32>
    %985 = arith.addf %979, %984 : vector<28x124xf32>
    %c133 = arith.constant 133 : index
    %986 = memref.load %arg2[%c133] : memref<250xf32, #tpu.memory_space<smem>>
    %c8_626 = arith.constant 8 : index
    %c0_627 = arith.constant 0 : index
    %c0_628 = arith.constant 0 : index
    %987 = vector.load %arg5[%c8_626, %c0_627, %c0_628] : memref<25x28x124xf32, #tpu.memory_space<vmem>>, vector<1x28x124xf32>
    %988 = vector.shape_cast %987 : vector<1x28x124xf32> to vector<28x124xf32>
    %989 = vector.broadcast %986 : f32 to vector<28x124xf32>
    %990 = arith.mulf %989, %988 : vector<28x124xf32>
    %991 = arith.addf %985, %990 : vector<28x124xf32>
    %c134 = arith.constant 134 : index
    %992 = memref.load %arg2[%c134] : memref<250xf32, #tpu.memory_space<smem>>
    %c9_629 = arith.constant 9 : index
    %c0_630 = arith.constant 0 : index
    %c0_631 = arith.constant 0 : index
    %993 = vector.load %arg5[%c9_629, %c0_630, %c0_631] : memref<25x28x124xf32, #tpu.memory_space<vmem>>, vector<1x28x124xf32>
    %994 = vector.shape_cast %993 : vector<1x28x124xf32> to vector<28x124xf32>
    %995 = vector.broadcast %992 : f32 to vector<28x124xf32>
    %996 = arith.mulf %995, %994 : vector<28x124xf32>
    %997 = arith.addf %991, %996 : vector<28x124xf32>
    %c135 = arith.constant 135 : index
    %998 = memref.load %arg2[%c135] : memref<250xf32, #tpu.memory_space<smem>>
    %c10_632 = arith.constant 10 : index
    %c0_633 = arith.constant 0 : index
    %c0_634 = arith.constant 0 : index
    %999 = vector.load %arg5[%c10_632, %c0_633, %c0_634] : memref<25x28x124xf32, #tpu.memory_space<vmem>>, vector<1x28x124xf32>
    %1000 = vector.shape_cast %999 : vector<1x28x124xf32> to vector<28x124xf32>
    %1001 = vector.broadcast %998 : f32 to vector<28x124xf32>
    %1002 = arith.mulf %1001, %1000 : vector<28x124xf32>
    %1003 = arith.addf %997, %1002 : vector<28x124xf32>
    %c136 = arith.constant 136 : index
    %1004 = memref.load %arg2[%c136] : memref<250xf32, #tpu.memory_space<smem>>
    %c11_635 = arith.constant 11 : index
    %c0_636 = arith.constant 0 : index
    %c0_637 = arith.constant 0 : index
    %1005 = vector.load %arg5[%c11_635, %c0_636, %c0_637] : memref<25x28x124xf32, #tpu.memory_space<vmem>>, vector<1x28x124xf32>
    %1006 = vector.shape_cast %1005 : vector<1x28x124xf32> to vector<28x124xf32>
    %1007 = vector.broadcast %1004 : f32 to vector<28x124xf32>
    %1008 = arith.mulf %1007, %1006 : vector<28x124xf32>
    %1009 = arith.addf %1003, %1008 : vector<28x124xf32>
    %c137 = arith.constant 137 : index
    %1010 = memref.load %arg2[%c137] : memref<250xf32, #tpu.memory_space<smem>>
    %c12_638 = arith.constant 12 : index
    %c0_639 = arith.constant 0 : index
    %c0_640 = arith.constant 0 : index
    %1011 = vector.load %arg5[%c12_638, %c0_639, %c0_640] : memref<25x28x124xf32, #tpu.memory_space<vmem>>, vector<1x28x124xf32>
    %1012 = vector.shape_cast %1011 : vector<1x28x124xf32> to vector<28x124xf32>
    %1013 = vector.broadcast %1010 : f32 to vector<28x124xf32>
    %1014 = arith.mulf %1013, %1012 : vector<28x124xf32>
    %1015 = arith.addf %1009, %1014 : vector<28x124xf32>
    %c138 = arith.constant 138 : index
    %1016 = memref.load %arg2[%c138] : memref<250xf32, #tpu.memory_space<smem>>
    %c13_641 = arith.constant 13 : index
    %c0_642 = arith.constant 0 : index
    %c0_643 = arith.constant 0 : index
    %1017 = vector.load %arg5[%c13_641, %c0_642, %c0_643] : memref<25x28x124xf32, #tpu.memory_space<vmem>>, vector<1x28x124xf32>
    %1018 = vector.shape_cast %1017 : vector<1x28x124xf32> to vector<28x124xf32>
    %1019 = vector.broadcast %1016 : f32 to vector<28x124xf32>
    %1020 = arith.mulf %1019, %1018 : vector<28x124xf32>
    %1021 = arith.addf %1015, %1020 : vector<28x124xf32>
    %c139 = arith.constant 139 : index
    %1022 = memref.load %arg2[%c139] : memref<250xf32, #tpu.memory_space<smem>>
    %c14_644 = arith.constant 14 : index
    %c0_645 = arith.constant 0 : index
    %c0_646 = arith.constant 0 : index
    %1023 = vector.load %arg5[%c14_644, %c0_645, %c0_646] : memref<25x28x124xf32, #tpu.memory_space<vmem>>, vector<1x28x124xf32>
    %1024 = vector.shape_cast %1023 : vector<1x28x124xf32> to vector<28x124xf32>
    %1025 = vector.broadcast %1022 : f32 to vector<28x124xf32>
    %1026 = arith.mulf %1025, %1024 : vector<28x124xf32>
    %1027 = arith.addf %1021, %1026 : vector<28x124xf32>
    %c140 = arith.constant 140 : index
    %1028 = memref.load %arg2[%c140] : memref<250xf32, #tpu.memory_space<smem>>
    %c15_647 = arith.constant 15 : index
    %c0_648 = arith.constant 0 : index
    %c0_649 = arith.constant 0 : index
    %1029 = vector.load %arg5[%c15_647, %c0_648, %c0_649] : memref<25x28x124xf32, #tpu.memory_space<vmem>>, vector<1x28x124xf32>
    %1030 = vector.shape_cast %1029 : vector<1x28x124xf32> to vector<28x124xf32>
    %1031 = vector.broadcast %1028 : f32 to vector<28x124xf32>
    %1032 = arith.mulf %1031, %1030 : vector<28x124xf32>
    %1033 = arith.addf %1027, %1032 : vector<28x124xf32>
    %c141 = arith.constant 141 : index
    %1034 = memref.load %arg2[%c141] : memref<250xf32, #tpu.memory_space<smem>>
    %c16_650 = arith.constant 16 : index
    %c0_651 = arith.constant 0 : index
    %c0_652 = arith.constant 0 : index
    %1035 = vector.load %arg5[%c16_650, %c0_651, %c0_652] : memref<25x28x124xf32, #tpu.memory_space<vmem>>, vector<1x28x124xf32>
    %1036 = vector.shape_cast %1035 : vector<1x28x124xf32> to vector<28x124xf32>
    %1037 = vector.broadcast %1034 : f32 to vector<28x124xf32>
    %1038 = arith.mulf %1037, %1036 : vector<28x124xf32>
    %1039 = arith.addf %1033, %1038 : vector<28x124xf32>
    %c142 = arith.constant 142 : index
    %1040 = memref.load %arg2[%c142] : memref<250xf32, #tpu.memory_space<smem>>
    %c17_653 = arith.constant 17 : index
    %c0_654 = arith.constant 0 : index
    %c0_655 = arith.constant 0 : index
    %1041 = vector.load %arg5[%c17_653, %c0_654, %c0_655] : memref<25x28x124xf32, #tpu.memory_space<vmem>>, vector<1x28x124xf32>
    %1042 = vector.shape_cast %1041 : vector<1x28x124xf32> to vector<28x124xf32>
    %1043 = vector.broadcast %1040 : f32 to vector<28x124xf32>
    %1044 = arith.mulf %1043, %1042 : vector<28x124xf32>
    %1045 = arith.addf %1039, %1044 : vector<28x124xf32>
    %c143 = arith.constant 143 : index
    %1046 = memref.load %arg2[%c143] : memref<250xf32, #tpu.memory_space<smem>>
    %c18_656 = arith.constant 18 : index
    %c0_657 = arith.constant 0 : index
    %c0_658 = arith.constant 0 : index
    %1047 = vector.load %arg5[%c18_656, %c0_657, %c0_658] : memref<25x28x124xf32, #tpu.memory_space<vmem>>, vector<1x28x124xf32>
    %1048 = vector.shape_cast %1047 : vector<1x28x124xf32> to vector<28x124xf32>
    %1049 = vector.broadcast %1046 : f32 to vector<28x124xf32>
    %1050 = arith.mulf %1049, %1048 : vector<28x124xf32>
    %1051 = arith.addf %1045, %1050 : vector<28x124xf32>
    %c144 = arith.constant 144 : index
    %1052 = memref.load %arg2[%c144] : memref<250xf32, #tpu.memory_space<smem>>
    %c19_659 = arith.constant 19 : index
    %c0_660 = arith.constant 0 : index
    %c0_661 = arith.constant 0 : index
    %1053 = vector.load %arg5[%c19_659, %c0_660, %c0_661] : memref<25x28x124xf32, #tpu.memory_space<vmem>>, vector<1x28x124xf32>
    %1054 = vector.shape_cast %1053 : vector<1x28x124xf32> to vector<28x124xf32>
    %1055 = vector.broadcast %1052 : f32 to vector<28x124xf32>
    %1056 = arith.mulf %1055, %1054 : vector<28x124xf32>
    %1057 = arith.addf %1051, %1056 : vector<28x124xf32>
    %c145 = arith.constant 145 : index
    %1058 = memref.load %arg2[%c145] : memref<250xf32, #tpu.memory_space<smem>>
    %c20_662 = arith.constant 20 : index
    %c0_663 = arith.constant 0 : index
    %c0_664 = arith.constant 0 : index
    %1059 = vector.load %arg5[%c20_662, %c0_663, %c0_664] : memref<25x28x124xf32, #tpu.memory_space<vmem>>, vector<1x28x124xf32>
    %1060 = vector.shape_cast %1059 : vector<1x28x124xf32> to vector<28x124xf32>
    %1061 = vector.broadcast %1058 : f32 to vector<28x124xf32>
    %1062 = arith.mulf %1061, %1060 : vector<28x124xf32>
    %1063 = arith.addf %1057, %1062 : vector<28x124xf32>
    %c146 = arith.constant 146 : index
    %1064 = memref.load %arg2[%c146] : memref<250xf32, #tpu.memory_space<smem>>
    %c21_665 = arith.constant 21 : index
    %c0_666 = arith.constant 0 : index
    %c0_667 = arith.constant 0 : index
    %1065 = vector.load %arg5[%c21_665, %c0_666, %c0_667] : memref<25x28x124xf32, #tpu.memory_space<vmem>>, vector<1x28x124xf32>
    %1066 = vector.shape_cast %1065 : vector<1x28x124xf32> to vector<28x124xf32>
    %1067 = vector.broadcast %1064 : f32 to vector<28x124xf32>
    %1068 = arith.mulf %1067, %1066 : vector<28x124xf32>
    %1069 = arith.addf %1063, %1068 : vector<28x124xf32>
    %c147 = arith.constant 147 : index
    %1070 = memref.load %arg2[%c147] : memref<250xf32, #tpu.memory_space<smem>>
    %c22_668 = arith.constant 22 : index
    %c0_669 = arith.constant 0 : index
    %c0_670 = arith.constant 0 : index
    %1071 = vector.load %arg5[%c22_668, %c0_669, %c0_670] : memref<25x28x124xf32, #tpu.memory_space<vmem>>, vector<1x28x124xf32>
    %1072 = vector.shape_cast %1071 : vector<1x28x124xf32> to vector<28x124xf32>
    %1073 = vector.broadcast %1070 : f32 to vector<28x124xf32>
    %1074 = arith.mulf %1073, %1072 : vector<28x124xf32>
    %1075 = arith.addf %1069, %1074 : vector<28x124xf32>
    %c148 = arith.constant 148 : index
    %1076 = memref.load %arg2[%c148] : memref<250xf32, #tpu.memory_space<smem>>
    %c23_671 = arith.constant 23 : index
    %c0_672 = arith.constant 0 : index
    %c0_673 = arith.constant 0 : index
    %1077 = vector.load %arg5[%c23_671, %c0_672, %c0_673] : memref<25x28x124xf32, #tpu.memory_space<vmem>>, vector<1x28x124xf32>
    %1078 = vector.shape_cast %1077 : vector<1x28x124xf32> to vector<28x124xf32>
    %1079 = vector.broadcast %1076 : f32 to vector<28x124xf32>
    %1080 = arith.mulf %1079, %1078 : vector<28x124xf32>
    %1081 = arith.addf %1075, %1080 : vector<28x124xf32>
    %c149 = arith.constant 149 : index
    %1082 = memref.load %arg2[%c149] : memref<250xf32, #tpu.memory_space<smem>>
    %c24_674 = arith.constant 24 : index
    %c0_675 = arith.constant 0 : index
    %c0_676 = arith.constant 0 : index
    %1083 = vector.load %arg5[%c24_674, %c0_675, %c0_676] : memref<25x28x124xf32, #tpu.memory_space<vmem>>, vector<1x28x124xf32>
    %1084 = vector.shape_cast %1083 : vector<1x28x124xf32> to vector<28x124xf32>
    %1085 = vector.broadcast %1082 : f32 to vector<28x124xf32>
    %1086 = arith.mulf %1085, %1084 : vector<28x124xf32>
    %1087 = arith.addf %1081, %1086 : vector<28x124xf32>
    %1088 = vector.extract_strided_slice %1087 {offsets = [0, 0], sizes = [28, 28], strides = [1, 1]} : vector<28x124xf32> to vector<28x28xf32>
    %c0_677 = arith.constant 0 : index
    %c5_678 = arith.constant 5 : index
    %c0_679 = arith.constant 0 : index
    %c0_680 = arith.constant 0 : index
    %1089 = vector.load %arg3[%c0_677, %c5_678, %c0_679, %c0_680] : memref<4x10x28x28xf32, #tpu.memory_space<vmem>>, vector<1x1x28x28xf32>
    %1090 = vector.shape_cast %1089 : vector<1x1x28x28xf32> to vector<28x28xf32>
    %1091 = vector.shape_cast %1088 : vector<28x28xf32> to vector<1x1x28x28xf32>
    tpu.vector_store %arg3[%c0_677, %c5_678, %c0_679, %c0_680], %1091 {strides = array<i32>} : memref<4x10x28x28xf32, #tpu.memory_space<vmem>>, vector<1x1x28x28xf32>,
    %1092 = vector.extract_strided_slice %1087 {offsets = [0, 32], sizes = [28, 28], strides = [1, 1]} : vector<28x124xf32> to vector<28x28xf32>
    %c1_681 = arith.constant 1 : index
    %c5_682 = arith.constant 5 : index
    %c0_683 = arith.constant 0 : index
    %c0_684 = arith.constant 0 : index
    %1093 = vector.load %arg3[%c1_681, %c5_682, %c0_683, %c0_684] : memref<4x10x28x28xf32, #tpu.memory_space<vmem>>, vector<1x1x28x28xf32>
    %1094 = vector.shape_cast %1093 : vector<1x1x28x28xf32> to vector<28x28xf32>
    %1095 = vector.shape_cast %1092 : vector<28x28xf32> to vector<1x1x28x28xf32>
    tpu.vector_store %arg3[%c1_681, %c5_682, %c0_683, %c0_684], %1095 {strides = array<i32>} : memref<4x10x28x28xf32, #tpu.memory_space<vmem>>, vector<1x1x28x28xf32>,
    %1096 = vector.extract_strided_slice %1087 {offsets = [0, 64], sizes = [28, 28], strides = [1, 1]} : vector<28x124xf32> to vector<28x28xf32>
    %c2_685 = arith.constant 2 : index
    %c5_686 = arith.constant 5 : index
    %c0_687 = arith.constant 0 : index
    %c0_688 = arith.constant 0 : index
    %1097 = vector.load %arg3[%c2_685, %c5_686, %c0_687, %c0_688] : memref<4x10x28x28xf32, #tpu.memory_space<vmem>>, vector<1x1x28x28xf32>
    %1098 = vector.shape_cast %1097 : vector<1x1x28x28xf32> to vector<28x28xf32>
    %1099 = vector.shape_cast %1096 : vector<28x28xf32> to vector<1x1x28x28xf32>
    tpu.vector_store %arg3[%c2_685, %c5_686, %c0_687, %c0_688], %1099 {strides = array<i32>} : memref<4x10x28x28xf32, #tpu.memory_space<vmem>>, vector<1x1x28x28xf32>,
    %1100 = vector.extract_strided_slice %1087 {offsets = [0, 96], sizes = [28, 28], strides = [1, 1]} : vector<28x124xf32> to vector<28x28xf32>
    %c3_689 = arith.constant 3 : index
    %c5_690 = arith.constant 5 : index
    %c0_691 = arith.constant 0 : index
    %c0_692 = arith.constant 0 : index
    %1101 = vector.load %arg3[%c3_689, %c5_690, %c0_691, %c0_692] : memref<4x10x28x28xf32, #tpu.memory_space<vmem>>, vector<1x1x28x28xf32>
    %1102 = vector.shape_cast %1101 : vector<1x1x28x28xf32> to vector<28x28xf32>
    %1103 = vector.shape_cast %1100 : vector<28x28xf32> to vector<1x1x28x28xf32>
    tpu.vector_store %arg3[%c3_689, %c5_690, %c0_691, %c0_692], %1103 {strides = array<i32>} : memref<4x10x28x28xf32, #tpu.memory_space<vmem>>, vector<1x1x28x28xf32>,
    %c150 = arith.constant 150 : index
    %1104 = memref.load %arg2[%c150] : memref<250xf32, #tpu.memory_space<smem>>
    %c0_693 = arith.constant 0 : index
    %c0_694 = arith.constant 0 : index
    %c0_695 = arith.constant 0 : index
    %1105 = vector.load %arg5[%c0_693, %c0_694, %c0_695] : memref<25x28x124xf32, #tpu.memory_space<vmem>>, vector<1x28x124xf32>
    %1106 = vector.shape_cast %1105 : vector<1x28x124xf32> to vector<28x124xf32>
    %1107 = vector.broadcast %1104 : f32 to vector<28x124xf32>
    %1108 = arith.mulf %1107, %1106 : vector<28x124xf32>
    %c151 = arith.constant 151 : index
    %1109 = memref.load %arg2[%c151] : memref<250xf32, #tpu.memory_space<smem>>
    %c1_696 = arith.constant 1 : index
    %c0_697 = arith.constant 0 : index
    %c0_698 = arith.constant 0 : index
    %1110 = vector.load %arg5[%c1_696, %c0_697, %c0_698] : memref<25x28x124xf32, #tpu.memory_space<vmem>>, vector<1x28x124xf32>
    %1111 = vector.shape_cast %1110 : vector<1x28x124xf32> to vector<28x124xf32>
    %1112 = vector.broadcast %1109 : f32 to vector<28x124xf32>
    %1113 = arith.mulf %1112, %1111 : vector<28x124xf32>
    %1114 = arith.addf %1108, %1113 : vector<28x124xf32>
    %c152 = arith.constant 152 : index
    %1115 = memref.load %arg2[%c152] : memref<250xf32, #tpu.memory_space<smem>>
    %c2_699 = arith.constant 2 : index
    %c0_700 = arith.constant 0 : index
    %c0_701 = arith.constant 0 : index
    %1116 = vector.load %arg5[%c2_699, %c0_700, %c0_701] : memref<25x28x124xf32, #tpu.memory_space<vmem>>, vector<1x28x124xf32>
    %1117 = vector.shape_cast %1116 : vector<1x28x124xf32> to vector<28x124xf32>
    %1118 = vector.broadcast %1115 : f32 to vector<28x124xf32>
    %1119 = arith.mulf %1118, %1117 : vector<28x124xf32>
    %1120 = arith.addf %1114, %1119 : vector<28x124xf32>
    %c153 = arith.constant 153 : index
    %1121 = memref.load %arg2[%c153] : memref<250xf32, #tpu.memory_space<smem>>
    %c3_702 = arith.constant 3 : index
    %c0_703 = arith.constant 0 : index
    %c0_704 = arith.constant 0 : index
    %1122 = vector.load %arg5[%c3_702, %c0_703, %c0_704] : memref<25x28x124xf32, #tpu.memory_space<vmem>>, vector<1x28x124xf32>
    %1123 = vector.shape_cast %1122 : vector<1x28x124xf32> to vector<28x124xf32>
    %1124 = vector.broadcast %1121 : f32 to vector<28x124xf32>
    %1125 = arith.mulf %1124, %1123 : vector<28x124xf32>
    %1126 = arith.addf %1120, %1125 : vector<28x124xf32>
    %c154 = arith.constant 154 : index
    %1127 = memref.load %arg2[%c154] : memref<250xf32, #tpu.memory_space<smem>>
    %c4_705 = arith.constant 4 : index
    %c0_706 = arith.constant 0 : index
    %c0_707 = arith.constant 0 : index
    %1128 = vector.load %arg5[%c4_705, %c0_706, %c0_707] : memref<25x28x124xf32, #tpu.memory_space<vmem>>, vector<1x28x124xf32>
    %1129 = vector.shape_cast %1128 : vector<1x28x124xf32> to vector<28x124xf32>
    %1130 = vector.broadcast %1127 : f32 to vector<28x124xf32>
    %1131 = arith.mulf %1130, %1129 : vector<28x124xf32>
    %1132 = arith.addf %1126, %1131 : vector<28x124xf32>
    %c155 = arith.constant 155 : index
    %1133 = memref.load %arg2[%c155] : memref<250xf32, #tpu.memory_space<smem>>
    %c5_708 = arith.constant 5 : index
    %c0_709 = arith.constant 0 : index
    %c0_710 = arith.constant 0 : index
    %1134 = vector.load %arg5[%c5_708, %c0_709, %c0_710] : memref<25x28x124xf32, #tpu.memory_space<vmem>>, vector<1x28x124xf32>
    %1135 = vector.shape_cast %1134 : vector<1x28x124xf32> to vector<28x124xf32>
    %1136 = vector.broadcast %1133 : f32 to vector<28x124xf32>
    %1137 = arith.mulf %1136, %1135 : vector<28x124xf32>
    %1138 = arith.addf %1132, %1137 : vector<28x124xf32>
    %c156 = arith.constant 156 : index
    %1139 = memref.load %arg2[%c156] : memref<250xf32, #tpu.memory_space<smem>>
    %c6_711 = arith.constant 6 : index
    %c0_712 = arith.constant 0 : index
    %c0_713 = arith.constant 0 : index
    %1140 = vector.load %arg5[%c6_711, %c0_712, %c0_713] : memref<25x28x124xf32, #tpu.memory_space<vmem>>, vector<1x28x124xf32>
    %1141 = vector.shape_cast %1140 : vector<1x28x124xf32> to vector<28x124xf32>
    %1142 = vector.broadcast %1139 : f32 to vector<28x124xf32>
    %1143 = arith.mulf %1142, %1141 : vector<28x124xf32>
    %1144 = arith.addf %1138, %1143 : vector<28x124xf32>
    %c157 = arith.constant 157 : index
    %1145 = memref.load %arg2[%c157] : memref<250xf32, #tpu.memory_space<smem>>
    %c7_714 = arith.constant 7 : index
    %c0_715 = arith.constant 0 : index
    %c0_716 = arith.constant 0 : index
    %1146 = vector.load %arg5[%c7_714, %c0_715, %c0_716] : memref<25x28x124xf32, #tpu.memory_space<vmem>>, vector<1x28x124xf32>
    %1147 = vector.shape_cast %1146 : vector<1x28x124xf32> to vector<28x124xf32>
    %1148 = vector.broadcast %1145 : f32 to vector<28x124xf32>
    %1149 = arith.mulf %1148, %1147 : vector<28x124xf32>
    %1150 = arith.addf %1144, %1149 : vector<28x124xf32>
    %c158 = arith.constant 158 : index
    %1151 = memref.load %arg2[%c158] : memref<250xf32, #tpu.memory_space<smem>>
    %c8_717 = arith.constant 8 : index
    %c0_718 = arith.constant 0 : index
    %c0_719 = arith.constant 0 : index
    %1152 = vector.load %arg5[%c8_717, %c0_718, %c0_719] : memref<25x28x124xf32, #tpu.memory_space<vmem>>, vector<1x28x124xf32>
    %1153 = vector.shape_cast %1152 : vector<1x28x124xf32> to vector<28x124xf32>
    %1154 = vector.broadcast %1151 : f32 to vector<28x124xf32>
    %1155 = arith.mulf %1154, %1153 : vector<28x124xf32>
    %1156 = arith.addf %1150, %1155 : vector<28x124xf32>
    %c159 = arith.constant 159 : index
    %1157 = memref.load %arg2[%c159] : memref<250xf32, #tpu.memory_space<smem>>
    %c9_720 = arith.constant 9 : index
    %c0_721 = arith.constant 0 : index
    %c0_722 = arith.constant 0 : index
    %1158 = vector.load %arg5[%c9_720, %c0_721, %c0_722] : memref<25x28x124xf32, #tpu.memory_space<vmem>>, vector<1x28x124xf32>
    %1159 = vector.shape_cast %1158 : vector<1x28x124xf32> to vector<28x124xf32>
    %1160 = vector.broadcast %1157 : f32 to vector<28x124xf32>
    %1161 = arith.mulf %1160, %1159 : vector<28x124xf32>
    %1162 = arith.addf %1156, %1161 : vector<28x124xf32>
    %c160 = arith.constant 160 : index
    %1163 = memref.load %arg2[%c160] : memref<250xf32, #tpu.memory_space<smem>>
    %c10_723 = arith.constant 10 : index
    %c0_724 = arith.constant 0 : index
    %c0_725 = arith.constant 0 : index
    %1164 = vector.load %arg5[%c10_723, %c0_724, %c0_725] : memref<25x28x124xf32, #tpu.memory_space<vmem>>, vector<1x28x124xf32>
    %1165 = vector.shape_cast %1164 : vector<1x28x124xf32> to vector<28x124xf32>
    %1166 = vector.broadcast %1163 : f32 to vector<28x124xf32>
    %1167 = arith.mulf %1166, %1165 : vector<28x124xf32>
    %1168 = arith.addf %1162, %1167 : vector<28x124xf32>
    %c161 = arith.constant 161 : index
    %1169 = memref.load %arg2[%c161] : memref<250xf32, #tpu.memory_space<smem>>
    %c11_726 = arith.constant 11 : index
    %c0_727 = arith.constant 0 : index
    %c0_728 = arith.constant 0 : index
    %1170 = vector.load %arg5[%c11_726, %c0_727, %c0_728] : memref<25x28x124xf32, #tpu.memory_space<vmem>>, vector<1x28x124xf32>
    %1171 = vector.shape_cast %1170 : vector<1x28x124xf32> to vector<28x124xf32>
    %1172 = vector.broadcast %1169 : f32 to vector<28x124xf32>
    %1173 = arith.mulf %1172, %1171 : vector<28x124xf32>
    %1174 = arith.addf %1168, %1173 : vector<28x124xf32>
    %c162 = arith.constant 162 : index
    %1175 = memref.load %arg2[%c162] : memref<250xf32, #tpu.memory_space<smem>>
    %c12_729 = arith.constant 12 : index
    %c0_730 = arith.constant 0 : index
    %c0_731 = arith.constant 0 : index
    %1176 = vector.load %arg5[%c12_729, %c0_730, %c0_731] : memref<25x28x124xf32, #tpu.memory_space<vmem>>, vector<1x28x124xf32>
    %1177 = vector.shape_cast %1176 : vector<1x28x124xf32> to vector<28x124xf32>
    %1178 = vector.broadcast %1175 : f32 to vector<28x124xf32>
    %1179 = arith.mulf %1178, %1177 : vector<28x124xf32>
    %1180 = arith.addf %1174, %1179 : vector<28x124xf32>
    %c163 = arith.constant 163 : index
    %1181 = memref.load %arg2[%c163] : memref<250xf32, #tpu.memory_space<smem>>
    %c13_732 = arith.constant 13 : index
    %c0_733 = arith.constant 0 : index
    %c0_734 = arith.constant 0 : index
    %1182 = vector.load %arg5[%c13_732, %c0_733, %c0_734] : memref<25x28x124xf32, #tpu.memory_space<vmem>>, vector<1x28x124xf32>
    %1183 = vector.shape_cast %1182 : vector<1x28x124xf32> to vector<28x124xf32>
    %1184 = vector.broadcast %1181 : f32 to vector<28x124xf32>
    %1185 = arith.mulf %1184, %1183 : vector<28x124xf32>
    %1186 = arith.addf %1180, %1185 : vector<28x124xf32>
    %c164 = arith.constant 164 : index
    %1187 = memref.load %arg2[%c164] : memref<250xf32, #tpu.memory_space<smem>>
    %c14_735 = arith.constant 14 : index
    %c0_736 = arith.constant 0 : index
    %c0_737 = arith.constant 0 : index
    %1188 = vector.load %arg5[%c14_735, %c0_736, %c0_737] : memref<25x28x124xf32, #tpu.memory_space<vmem>>, vector<1x28x124xf32>
    %1189 = vector.shape_cast %1188 : vector<1x28x124xf32> to vector<28x124xf32>
    %1190 = vector.broadcast %1187 : f32 to vector<28x124xf32>
    %1191 = arith.mulf %1190, %1189 : vector<28x124xf32>
    %1192 = arith.addf %1186, %1191 : vector<28x124xf32>
    %c165 = arith.constant 165 : index
    %1193 = memref.load %arg2[%c165] : memref<250xf32, #tpu.memory_space<smem>>
    %c15_738 = arith.constant 15 : index
    %c0_739 = arith.constant 0 : index
    %c0_740 = arith.constant 0 : index
    %1194 = vector.load %arg5[%c15_738, %c0_739, %c0_740] : memref<25x28x124xf32, #tpu.memory_space<vmem>>, vector<1x28x124xf32>
    %1195 = vector.shape_cast %1194 : vector<1x28x124xf32> to vector<28x124xf32>
    %1196 = vector.broadcast %1193 : f32 to vector<28x124xf32>
    %1197 = arith.mulf %1196, %1195 : vector<28x124xf32>
    %1198 = arith.addf %1192, %1197 : vector<28x124xf32>
    %c166 = arith.constant 166 : index
    %1199 = memref.load %arg2[%c166] : memref<250xf32, #tpu.memory_space<smem>>
    %c16_741 = arith.constant 16 : index
    %c0_742 = arith.constant 0 : index
    %c0_743 = arith.constant 0 : index
    %1200 = vector.load %arg5[%c16_741, %c0_742, %c0_743] : memref<25x28x124xf32, #tpu.memory_space<vmem>>, vector<1x28x124xf32>
    %1201 = vector.shape_cast %1200 : vector<1x28x124xf32> to vector<28x124xf32>
    %1202 = vector.broadcast %1199 : f32 to vector<28x124xf32>
    %1203 = arith.mulf %1202, %1201 : vector<28x124xf32>
    %1204 = arith.addf %1198, %1203 : vector<28x124xf32>
    %c167 = arith.constant 167 : index
    %1205 = memref.load %arg2[%c167] : memref<250xf32, #tpu.memory_space<smem>>
    %c17_744 = arith.constant 17 : index
    %c0_745 = arith.constant 0 : index
    %c0_746 = arith.constant 0 : index
    %1206 = vector.load %arg5[%c17_744, %c0_745, %c0_746] : memref<25x28x124xf32, #tpu.memory_space<vmem>>, vector<1x28x124xf32>
    %1207 = vector.shape_cast %1206 : vector<1x28x124xf32> to vector<28x124xf32>
    %1208 = vector.broadcast %1205 : f32 to vector<28x124xf32>
    %1209 = arith.mulf %1208, %1207 : vector<28x124xf32>
    %1210 = arith.addf %1204, %1209 : vector<28x124xf32>
    %c168 = arith.constant 168 : index
    %1211 = memref.load %arg2[%c168] : memref<250xf32, #tpu.memory_space<smem>>
    %c18_747 = arith.constant 18 : index
    %c0_748 = arith.constant 0 : index
    %c0_749 = arith.constant 0 : index
    %1212 = vector.load %arg5[%c18_747, %c0_748, %c0_749] : memref<25x28x124xf32, #tpu.memory_space<vmem>>, vector<1x28x124xf32>
    %1213 = vector.shape_cast %1212 : vector<1x28x124xf32> to vector<28x124xf32>
    %1214 = vector.broadcast %1211 : f32 to vector<28x124xf32>
    %1215 = arith.mulf %1214, %1213 : vector<28x124xf32>
    %1216 = arith.addf %1210, %1215 : vector<28x124xf32>
    %c169 = arith.constant 169 : index
    %1217 = memref.load %arg2[%c169] : memref<250xf32, #tpu.memory_space<smem>>
    %c19_750 = arith.constant 19 : index
    %c0_751 = arith.constant 0 : index
    %c0_752 = arith.constant 0 : index
    %1218 = vector.load %arg5[%c19_750, %c0_751, %c0_752] : memref<25x28x124xf32, #tpu.memory_space<vmem>>, vector<1x28x124xf32>
    %1219 = vector.shape_cast %1218 : vector<1x28x124xf32> to vector<28x124xf32>
    %1220 = vector.broadcast %1217 : f32 to vector<28x124xf32>
    %1221 = arith.mulf %1220, %1219 : vector<28x124xf32>
    %1222 = arith.addf %1216, %1221 : vector<28x124xf32>
    %c170 = arith.constant 170 : index
    %1223 = memref.load %arg2[%c170] : memref<250xf32, #tpu.memory_space<smem>>
    %c20_753 = arith.constant 20 : index
    %c0_754 = arith.constant 0 : index
    %c0_755 = arith.constant 0 : index
    %1224 = vector.load %arg5[%c20_753, %c0_754, %c0_755] : memref<25x28x124xf32, #tpu.memory_space<vmem>>, vector<1x28x124xf32>
    %1225 = vector.shape_cast %1224 : vector<1x28x124xf32> to vector<28x124xf32>
    %1226 = vector.broadcast %1223 : f32 to vector<28x124xf32>
    %1227 = arith.mulf %1226, %1225 : vector<28x124xf32>
    %1228 = arith.addf %1222, %1227 : vector<28x124xf32>
    %c171 = arith.constant 171 : index
    %1229 = memref.load %arg2[%c171] : memref<250xf32, #tpu.memory_space<smem>>
    %c21_756 = arith.constant 21 : index
    %c0_757 = arith.constant 0 : index
    %c0_758 = arith.constant 0 : index
    %1230 = vector.load %arg5[%c21_756, %c0_757, %c0_758] : memref<25x28x124xf32, #tpu.memory_space<vmem>>, vector<1x28x124xf32>
    %1231 = vector.shape_cast %1230 : vector<1x28x124xf32> to vector<28x124xf32>
    %1232 = vector.broadcast %1229 : f32 to vector<28x124xf32>
    %1233 = arith.mulf %1232, %1231 : vector<28x124xf32>
    %1234 = arith.addf %1228, %1233 : vector<28x124xf32>
    %c172 = arith.constant 172 : index
    %1235 = memref.load %arg2[%c172] : memref<250xf32, #tpu.memory_space<smem>>
    %c22_759 = arith.constant 22 : index
    %c0_760 = arith.constant 0 : index
    %c0_761 = arith.constant 0 : index
    %1236 = vector.load %arg5[%c22_759, %c0_760, %c0_761] : memref<25x28x124xf32, #tpu.memory_space<vmem>>, vector<1x28x124xf32>
    %1237 = vector.shape_cast %1236 : vector<1x28x124xf32> to vector<28x124xf32>
    %1238 = vector.broadcast %1235 : f32 to vector<28x124xf32>
    %1239 = arith.mulf %1238, %1237 : vector<28x124xf32>
    %1240 = arith.addf %1234, %1239 : vector<28x124xf32>
    %c173 = arith.constant 173 : index
    %1241 = memref.load %arg2[%c173] : memref<250xf32, #tpu.memory_space<smem>>
    %c23_762 = arith.constant 23 : index
    %c0_763 = arith.constant 0 : index
    %c0_764 = arith.constant 0 : index
    %1242 = vector.load %arg5[%c23_762, %c0_763, %c0_764] : memref<25x28x124xf32, #tpu.memory_space<vmem>>, vector<1x28x124xf32>
    %1243 = vector.shape_cast %1242 : vector<1x28x124xf32> to vector<28x124xf32>
    %1244 = vector.broadcast %1241 : f32 to vector<28x124xf32>
    %1245 = arith.mulf %1244, %1243 : vector<28x124xf32>
    %1246 = arith.addf %1240, %1245 : vector<28x124xf32>
    %c174 = arith.constant 174 : index
    %1247 = memref.load %arg2[%c174] : memref<250xf32, #tpu.memory_space<smem>>
    %c24_765 = arith.constant 24 : index
    %c0_766 = arith.constant 0 : index
    %c0_767 = arith.constant 0 : index
    %1248 = vector.load %arg5[%c24_765, %c0_766, %c0_767] : memref<25x28x124xf32, #tpu.memory_space<vmem>>, vector<1x28x124xf32>
    %1249 = vector.shape_cast %1248 : vector<1x28x124xf32> to vector<28x124xf32>
    %1250 = vector.broadcast %1247 : f32 to vector<28x124xf32>
    %1251 = arith.mulf %1250, %1249 : vector<28x124xf32>
    %1252 = arith.addf %1246, %1251 : vector<28x124xf32>
    %1253 = vector.extract_strided_slice %1252 {offsets = [0, 0], sizes = [28, 28], strides = [1, 1]} : vector<28x124xf32> to vector<28x28xf32>
    %c0_768 = arith.constant 0 : index
    %c6_769 = arith.constant 6 : index
    %c0_770 = arith.constant 0 : index
    %c0_771 = arith.constant 0 : index
    %1254 = vector.load %arg3[%c0_768, %c6_769, %c0_770, %c0_771] : memref<4x10x28x28xf32, #tpu.memory_space<vmem>>, vector<1x1x28x28xf32>
    %1255 = vector.shape_cast %1254 : vector<1x1x28x28xf32> to vector<28x28xf32>
    %1256 = vector.shape_cast %1253 : vector<28x28xf32> to vector<1x1x28x28xf32>
    tpu.vector_store %arg3[%c0_768, %c6_769, %c0_770, %c0_771], %1256 {strides = array<i32>} : memref<4x10x28x28xf32, #tpu.memory_space<vmem>>, vector<1x1x28x28xf32>,
    %1257 = vector.extract_strided_slice %1252 {offsets = [0, 32], sizes = [28, 28], strides = [1, 1]} : vector<28x124xf32> to vector<28x28xf32>
    %c1_772 = arith.constant 1 : index
    %c6_773 = arith.constant 6 : index
    %c0_774 = arith.constant 0 : index
    %c0_775 = arith.constant 0 : index
    %1258 = vector.load %arg3[%c1_772, %c6_773, %c0_774, %c0_775] : memref<4x10x28x28xf32, #tpu.memory_space<vmem>>, vector<1x1x28x28xf32>
    %1259 = vector.shape_cast %1258 : vector<1x1x28x28xf32> to vector<28x28xf32>
    %1260 = vector.shape_cast %1257 : vector<28x28xf32> to vector<1x1x28x28xf32>
    tpu.vector_store %arg3[%c1_772, %c6_773, %c0_774, %c0_775], %1260 {strides = array<i32>} : memref<4x10x28x28xf32, #tpu.memory_space<vmem>>, vector<1x1x28x28xf32>,
    %1261 = vector.extract_strided_slice %1252 {offsets = [0, 64], sizes = [28, 28], strides = [1, 1]} : vector<28x124xf32> to vector<28x28xf32>
    %c2_776 = arith.constant 2 : index
    %c6_777 = arith.constant 6 : index
    %c0_778 = arith.constant 0 : index
    %c0_779 = arith.constant 0 : index
    %1262 = vector.load %arg3[%c2_776, %c6_777, %c0_778, %c0_779] : memref<4x10x28x28xf32, #tpu.memory_space<vmem>>, vector<1x1x28x28xf32>
    %1263 = vector.shape_cast %1262 : vector<1x1x28x28xf32> to vector<28x28xf32>
    %1264 = vector.shape_cast %1261 : vector<28x28xf32> to vector<1x1x28x28xf32>
    tpu.vector_store %arg3[%c2_776, %c6_777, %c0_778, %c0_779], %1264 {strides = array<i32>} : memref<4x10x28x28xf32, #tpu.memory_space<vmem>>, vector<1x1x28x28xf32>,
    %1265 = vector.extract_strided_slice %1252 {offsets = [0, 96], sizes = [28, 28], strides = [1, 1]} : vector<28x124xf32> to vector<28x28xf32>
    %c3_780 = arith.constant 3 : index
    %c6_781 = arith.constant 6 : index
    %c0_782 = arith.constant 0 : index
    %c0_783 = arith.constant 0 : index
    %1266 = vector.load %arg3[%c3_780, %c6_781, %c0_782, %c0_783] : memref<4x10x28x28xf32, #tpu.memory_space<vmem>>, vector<1x1x28x28xf32>
    %1267 = vector.shape_cast %1266 : vector<1x1x28x28xf32> to vector<28x28xf32>
    %1268 = vector.shape_cast %1265 : vector<28x28xf32> to vector<1x1x28x28xf32>
    tpu.vector_store %arg3[%c3_780, %c6_781, %c0_782, %c0_783], %1268 {strides = array<i32>} : memref<4x10x28x28xf32, #tpu.memory_space<vmem>>, vector<1x1x28x28xf32>,
    %c175 = arith.constant 175 : index
    %1269 = memref.load %arg2[%c175] : memref<250xf32, #tpu.memory_space<smem>>
    %c0_784 = arith.constant 0 : index
    %c0_785 = arith.constant 0 : index
    %c0_786 = arith.constant 0 : index
    %1270 = vector.load %arg5[%c0_784, %c0_785, %c0_786] : memref<25x28x124xf32, #tpu.memory_space<vmem>>, vector<1x28x124xf32>
    %1271 = vector.shape_cast %1270 : vector<1x28x124xf32> to vector<28x124xf32>
    %1272 = vector.broadcast %1269 : f32 to vector<28x124xf32>
    %1273 = arith.mulf %1272, %1271 : vector<28x124xf32>
    %c176 = arith.constant 176 : index
    %1274 = memref.load %arg2[%c176] : memref<250xf32, #tpu.memory_space<smem>>
    %c1_787 = arith.constant 1 : index
    %c0_788 = arith.constant 0 : index
    %c0_789 = arith.constant 0 : index
    %1275 = vector.load %arg5[%c1_787, %c0_788, %c0_789] : memref<25x28x124xf32, #tpu.memory_space<vmem>>, vector<1x28x124xf32>
    %1276 = vector.shape_cast %1275 : vector<1x28x124xf32> to vector<28x124xf32>
    %1277 = vector.broadcast %1274 : f32 to vector<28x124xf32>
    %1278 = arith.mulf %1277, %1276 : vector<28x124xf32>
    %1279 = arith.addf %1273, %1278 : vector<28x124xf32>
    %c177 = arith.constant 177 : index
    %1280 = memref.load %arg2[%c177] : memref<250xf32, #tpu.memory_space<smem>>
    %c2_790 = arith.constant 2 : index
    %c0_791 = arith.constant 0 : index
    %c0_792 = arith.constant 0 : index
    %1281 = vector.load %arg5[%c2_790, %c0_791, %c0_792] : memref<25x28x124xf32, #tpu.memory_space<vmem>>, vector<1x28x124xf32>
    %1282 = vector.shape_cast %1281 : vector<1x28x124xf32> to vector<28x124xf32>
    %1283 = vector.broadcast %1280 : f32 to vector<28x124xf32>
    %1284 = arith.mulf %1283, %1282 : vector<28x124xf32>
    %1285 = arith.addf %1279, %1284 : vector<28x124xf32>
    %c178 = arith.constant 178 : index
    %1286 = memref.load %arg2[%c178] : memref<250xf32, #tpu.memory_space<smem>>
    %c3_793 = arith.constant 3 : index
    %c0_794 = arith.constant 0 : index
    %c0_795 = arith.constant 0 : index
    %1287 = vector.load %arg5[%c3_793, %c0_794, %c0_795] : memref<25x28x124xf32, #tpu.memory_space<vmem>>, vector<1x28x124xf32>
    %1288 = vector.shape_cast %1287 : vector<1x28x124xf32> to vector<28x124xf32>
    %1289 = vector.broadcast %1286 : f32 to vector<28x124xf32>
    %1290 = arith.mulf %1289, %1288 : vector<28x124xf32>
    %1291 = arith.addf %1285, %1290 : vector<28x124xf32>
    %c179 = arith.constant 179 : index
    %1292 = memref.load %arg2[%c179] : memref<250xf32, #tpu.memory_space<smem>>
    %c4_796 = arith.constant 4 : index
    %c0_797 = arith.constant 0 : index
    %c0_798 = arith.constant 0 : index
    %1293 = vector.load %arg5[%c4_796, %c0_797, %c0_798] : memref<25x28x124xf32, #tpu.memory_space<vmem>>, vector<1x28x124xf32>
    %1294 = vector.shape_cast %1293 : vector<1x28x124xf32> to vector<28x124xf32>
    %1295 = vector.broadcast %1292 : f32 to vector<28x124xf32>
    %1296 = arith.mulf %1295, %1294 : vector<28x124xf32>
    %1297 = arith.addf %1291, %1296 : vector<28x124xf32>
    %c180 = arith.constant 180 : index
    %1298 = memref.load %arg2[%c180] : memref<250xf32, #tpu.memory_space<smem>>
    %c5_799 = arith.constant 5 : index
    %c0_800 = arith.constant 0 : index
    %c0_801 = arith.constant 0 : index
    %1299 = vector.load %arg5[%c5_799, %c0_800, %c0_801] : memref<25x28x124xf32, #tpu.memory_space<vmem>>, vector<1x28x124xf32>
    %1300 = vector.shape_cast %1299 : vector<1x28x124xf32> to vector<28x124xf32>
    %1301 = vector.broadcast %1298 : f32 to vector<28x124xf32>
    %1302 = arith.mulf %1301, %1300 : vector<28x124xf32>
    %1303 = arith.addf %1297, %1302 : vector<28x124xf32>
    %c181 = arith.constant 181 : index
    %1304 = memref.load %arg2[%c181] : memref<250xf32, #tpu.memory_space<smem>>
    %c6_802 = arith.constant 6 : index
    %c0_803 = arith.constant 0 : index
    %c0_804 = arith.constant 0 : index
    %1305 = vector.load %arg5[%c6_802, %c0_803, %c0_804] : memref<25x28x124xf32, #tpu.memory_space<vmem>>, vector<1x28x124xf32>
    %1306 = vector.shape_cast %1305 : vector<1x28x124xf32> to vector<28x124xf32>
    %1307 = vector.broadcast %1304 : f32 to vector<28x124xf32>
    %1308 = arith.mulf %1307, %1306 : vector<28x124xf32>
    %1309 = arith.addf %1303, %1308 : vector<28x124xf32>
    %c182 = arith.constant 182 : index
    %1310 = memref.load %arg2[%c182] : memref<250xf32, #tpu.memory_space<smem>>
    %c7_805 = arith.constant 7 : index
    %c0_806 = arith.constant 0 : index
    %c0_807 = arith.constant 0 : index
    %1311 = vector.load %arg5[%c7_805, %c0_806, %c0_807] : memref<25x28x124xf32, #tpu.memory_space<vmem>>, vector<1x28x124xf32>
    %1312 = vector.shape_cast %1311 : vector<1x28x124xf32> to vector<28x124xf32>
    %1313 = vector.broadcast %1310 : f32 to vector<28x124xf32>
    %1314 = arith.mulf %1313, %1312 : vector<28x124xf32>
    %1315 = arith.addf %1309, %1314 : vector<28x124xf32>
    %c183 = arith.constant 183 : index
    %1316 = memref.load %arg2[%c183] : memref<250xf32, #tpu.memory_space<smem>>
    %c8_808 = arith.constant 8 : index
    %c0_809 = arith.constant 0 : index
    %c0_810 = arith.constant 0 : index
    %1317 = vector.load %arg5[%c8_808, %c0_809, %c0_810] : memref<25x28x124xf32, #tpu.memory_space<vmem>>, vector<1x28x124xf32>
    %1318 = vector.shape_cast %1317 : vector<1x28x124xf32> to vector<28x124xf32>
    %1319 = vector.broadcast %1316 : f32 to vector<28x124xf32>
    %1320 = arith.mulf %1319, %1318 : vector<28x124xf32>
    %1321 = arith.addf %1315, %1320 : vector<28x124xf32>
    %c184 = arith.constant 184 : index
    %1322 = memref.load %arg2[%c184] : memref<250xf32, #tpu.memory_space<smem>>
    %c9_811 = arith.constant 9 : index
    %c0_812 = arith.constant 0 : index
    %c0_813 = arith.constant 0 : index
    %1323 = vector.load %arg5[%c9_811, %c0_812, %c0_813] : memref<25x28x124xf32, #tpu.memory_space<vmem>>, vector<1x28x124xf32>
    %1324 = vector.shape_cast %1323 : vector<1x28x124xf32> to vector<28x124xf32>
    %1325 = vector.broadcast %1322 : f32 to vector<28x124xf32>
    %1326 = arith.mulf %1325, %1324 : vector<28x124xf32>
    %1327 = arith.addf %1321, %1326 : vector<28x124xf32>
    %c185 = arith.constant 185 : index
    %1328 = memref.load %arg2[%c185] : memref<250xf32, #tpu.memory_space<smem>>
    %c10_814 = arith.constant 10 : index
    %c0_815 = arith.constant 0 : index
    %c0_816 = arith.constant 0 : index
    %1329 = vector.load %arg5[%c10_814, %c0_815, %c0_816] : memref<25x28x124xf32, #tpu.memory_space<vmem>>, vector<1x28x124xf32>
    %1330 = vector.shape_cast %1329 : vector<1x28x124xf32> to vector<28x124xf32>
    %1331 = vector.broadcast %1328 : f32 to vector<28x124xf32>
    %1332 = arith.mulf %1331, %1330 : vector<28x124xf32>
    %1333 = arith.addf %1327, %1332 : vector<28x124xf32>
    %c186 = arith.constant 186 : index
    %1334 = memref.load %arg2[%c186] : memref<250xf32, #tpu.memory_space<smem>>
    %c11_817 = arith.constant 11 : index
    %c0_818 = arith.constant 0 : index
    %c0_819 = arith.constant 0 : index
    %1335 = vector.load %arg5[%c11_817, %c0_818, %c0_819] : memref<25x28x124xf32, #tpu.memory_space<vmem>>, vector<1x28x124xf32>
    %1336 = vector.shape_cast %1335 : vector<1x28x124xf32> to vector<28x124xf32>
    %1337 = vector.broadcast %1334 : f32 to vector<28x124xf32>
    %1338 = arith.mulf %1337, %1336 : vector<28x124xf32>
    %1339 = arith.addf %1333, %1338 : vector<28x124xf32>
    %c187 = arith.constant 187 : index
    %1340 = memref.load %arg2[%c187] : memref<250xf32, #tpu.memory_space<smem>>
    %c12_820 = arith.constant 12 : index
    %c0_821 = arith.constant 0 : index
    %c0_822 = arith.constant 0 : index
    %1341 = vector.load %arg5[%c12_820, %c0_821, %c0_822] : memref<25x28x124xf32, #tpu.memory_space<vmem>>, vector<1x28x124xf32>
    %1342 = vector.shape_cast %1341 : vector<1x28x124xf32> to vector<28x124xf32>
    %1343 = vector.broadcast %1340 : f32 to vector<28x124xf32>
    %1344 = arith.mulf %1343, %1342 : vector<28x124xf32>
    %1345 = arith.addf %1339, %1344 : vector<28x124xf32>
    %c188 = arith.constant 188 : index
    %1346 = memref.load %arg2[%c188] : memref<250xf32, #tpu.memory_space<smem>>
    %c13_823 = arith.constant 13 : index
    %c0_824 = arith.constant 0 : index
    %c0_825 = arith.constant 0 : index
    %1347 = vector.load %arg5[%c13_823, %c0_824, %c0_825] : memref<25x28x124xf32, #tpu.memory_space<vmem>>, vector<1x28x124xf32>
    %1348 = vector.shape_cast %1347 : vector<1x28x124xf32> to vector<28x124xf32>
    %1349 = vector.broadcast %1346 : f32 to vector<28x124xf32>
    %1350 = arith.mulf %1349, %1348 : vector<28x124xf32>
    %1351 = arith.addf %1345, %1350 : vector<28x124xf32>
    %c189 = arith.constant 189 : index
    %1352 = memref.load %arg2[%c189] : memref<250xf32, #tpu.memory_space<smem>>
    %c14_826 = arith.constant 14 : index
    %c0_827 = arith.constant 0 : index
    %c0_828 = arith.constant 0 : index
    %1353 = vector.load %arg5[%c14_826, %c0_827, %c0_828] : memref<25x28x124xf32, #tpu.memory_space<vmem>>, vector<1x28x124xf32>
    %1354 = vector.shape_cast %1353 : vector<1x28x124xf32> to vector<28x124xf32>
    %1355 = vector.broadcast %1352 : f32 to vector<28x124xf32>
    %1356 = arith.mulf %1355, %1354 : vector<28x124xf32>
    %1357 = arith.addf %1351, %1356 : vector<28x124xf32>
    %c190 = arith.constant 190 : index
    %1358 = memref.load %arg2[%c190] : memref<250xf32, #tpu.memory_space<smem>>
    %c15_829 = arith.constant 15 : index
    %c0_830 = arith.constant 0 : index
    %c0_831 = arith.constant 0 : index
    %1359 = vector.load %arg5[%c15_829, %c0_830, %c0_831] : memref<25x28x124xf32, #tpu.memory_space<vmem>>, vector<1x28x124xf32>
    %1360 = vector.shape_cast %1359 : vector<1x28x124xf32> to vector<28x124xf32>
    %1361 = vector.broadcast %1358 : f32 to vector<28x124xf32>
    %1362 = arith.mulf %1361, %1360 : vector<28x124xf32>
    %1363 = arith.addf %1357, %1362 : vector<28x124xf32>
    %c191 = arith.constant 191 : index
    %1364 = memref.load %arg2[%c191] : memref<250xf32, #tpu.memory_space<smem>>
    %c16_832 = arith.constant 16 : index
    %c0_833 = arith.constant 0 : index
    %c0_834 = arith.constant 0 : index
    %1365 = vector.load %arg5[%c16_832, %c0_833, %c0_834] : memref<25x28x124xf32, #tpu.memory_space<vmem>>, vector<1x28x124xf32>
    %1366 = vector.shape_cast %1365 : vector<1x28x124xf32> to vector<28x124xf32>
    %1367 = vector.broadcast %1364 : f32 to vector<28x124xf32>
    %1368 = arith.mulf %1367, %1366 : vector<28x124xf32>
    %1369 = arith.addf %1363, %1368 : vector<28x124xf32>
    %c192 = arith.constant 192 : index
    %1370 = memref.load %arg2[%c192] : memref<250xf32, #tpu.memory_space<smem>>
    %c17_835 = arith.constant 17 : index
    %c0_836 = arith.constant 0 : index
    %c0_837 = arith.constant 0 : index
    %1371 = vector.load %arg5[%c17_835, %c0_836, %c0_837] : memref<25x28x124xf32, #tpu.memory_space<vmem>>, vector<1x28x124xf32>
    %1372 = vector.shape_cast %1371 : vector<1x28x124xf32> to vector<28x124xf32>
    %1373 = vector.broadcast %1370 : f32 to vector<28x124xf32>
    %1374 = arith.mulf %1373, %1372 : vector<28x124xf32>
    %1375 = arith.addf %1369, %1374 : vector<28x124xf32>
    %c193 = arith.constant 193 : index
    %1376 = memref.load %arg2[%c193] : memref<250xf32, #tpu.memory_space<smem>>
    %c18_838 = arith.constant 18 : index
    %c0_839 = arith.constant 0 : index
    %c0_840 = arith.constant 0 : index
    %1377 = vector.load %arg5[%c18_838, %c0_839, %c0_840] : memref<25x28x124xf32, #tpu.memory_space<vmem>>, vector<1x28x124xf32>
    %1378 = vector.shape_cast %1377 : vector<1x28x124xf32> to vector<28x124xf32>
    %1379 = vector.broadcast %1376 : f32 to vector<28x124xf32>
    %1380 = arith.mulf %1379, %1378 : vector<28x124xf32>
    %1381 = arith.addf %1375, %1380 : vector<28x124xf32>
    %c194 = arith.constant 194 : index
    %1382 = memref.load %arg2[%c194] : memref<250xf32, #tpu.memory_space<smem>>
    %c19_841 = arith.constant 19 : index
    %c0_842 = arith.constant 0 : index
    %c0_843 = arith.constant 0 : index
    %1383 = vector.load %arg5[%c19_841, %c0_842, %c0_843] : memref<25x28x124xf32, #tpu.memory_space<vmem>>, vector<1x28x124xf32>
    %1384 = vector.shape_cast %1383 : vector<1x28x124xf32> to vector<28x124xf32>
    %1385 = vector.broadcast %1382 : f32 to vector<28x124xf32>
    %1386 = arith.mulf %1385, %1384 : vector<28x124xf32>
    %1387 = arith.addf %1381, %1386 : vector<28x124xf32>
    %c195 = arith.constant 195 : index
    %1388 = memref.load %arg2[%c195] : memref<250xf32, #tpu.memory_space<smem>>
    %c20_844 = arith.constant 20 : index
    %c0_845 = arith.constant 0 : index
    %c0_846 = arith.constant 0 : index
    %1389 = vector.load %arg5[%c20_844, %c0_845, %c0_846] : memref<25x28x124xf32, #tpu.memory_space<vmem>>, vector<1x28x124xf32>
    %1390 = vector.shape_cast %1389 : vector<1x28x124xf32> to vector<28x124xf32>
    %1391 = vector.broadcast %1388 : f32 to vector<28x124xf32>
    %1392 = arith.mulf %1391, %1390 : vector<28x124xf32>
    %1393 = arith.addf %1387, %1392 : vector<28x124xf32>
    %c196 = arith.constant 196 : index
    %1394 = memref.load %arg2[%c196] : memref<250xf32, #tpu.memory_space<smem>>
    %c21_847 = arith.constant 21 : index
    %c0_848 = arith.constant 0 : index
    %c0_849 = arith.constant 0 : index
    %1395 = vector.load %arg5[%c21_847, %c0_848, %c0_849] : memref<25x28x124xf32, #tpu.memory_space<vmem>>, vector<1x28x124xf32>
    %1396 = vector.shape_cast %1395 : vector<1x28x124xf32> to vector<28x124xf32>
    %1397 = vector.broadcast %1394 : f32 to vector<28x124xf32>
    %1398 = arith.mulf %1397, %1396 : vector<28x124xf32>
    %1399 = arith.addf %1393, %1398 : vector<28x124xf32>
    %c197 = arith.constant 197 : index
    %1400 = memref.load %arg2[%c197] : memref<250xf32, #tpu.memory_space<smem>>
    %c22_850 = arith.constant 22 : index
    %c0_851 = arith.constant 0 : index
    %c0_852 = arith.constant 0 : index
    %1401 = vector.load %arg5[%c22_850, %c0_851, %c0_852] : memref<25x28x124xf32, #tpu.memory_space<vmem>>, vector<1x28x124xf32>
    %1402 = vector.shape_cast %1401 : vector<1x28x124xf32> to vector<28x124xf32>
    %1403 = vector.broadcast %1400 : f32 to vector<28x124xf32>
    %1404 = arith.mulf %1403, %1402 : vector<28x124xf32>
    %1405 = arith.addf %1399, %1404 : vector<28x124xf32>
    %c198 = arith.constant 198 : index
    %1406 = memref.load %arg2[%c198] : memref<250xf32, #tpu.memory_space<smem>>
    %c23_853 = arith.constant 23 : index
    %c0_854 = arith.constant 0 : index
    %c0_855 = arith.constant 0 : index
    %1407 = vector.load %arg5[%c23_853, %c0_854, %c0_855] : memref<25x28x124xf32, #tpu.memory_space<vmem>>, vector<1x28x124xf32>
    %1408 = vector.shape_cast %1407 : vector<1x28x124xf32> to vector<28x124xf32>
    %1409 = vector.broadcast %1406 : f32 to vector<28x124xf32>
    %1410 = arith.mulf %1409, %1408 : vector<28x124xf32>
    %1411 = arith.addf %1405, %1410 : vector<28x124xf32>
    %c199 = arith.constant 199 : index
    %1412 = memref.load %arg2[%c199] : memref<250xf32, #tpu.memory_space<smem>>
    %c24_856 = arith.constant 24 : index
    %c0_857 = arith.constant 0 : index
    %c0_858 = arith.constant 0 : index
    %1413 = vector.load %arg5[%c24_856, %c0_857, %c0_858] : memref<25x28x124xf32, #tpu.memory_space<vmem>>, vector<1x28x124xf32>
    %1414 = vector.shape_cast %1413 : vector<1x28x124xf32> to vector<28x124xf32>
    %1415 = vector.broadcast %1412 : f32 to vector<28x124xf32>
    %1416 = arith.mulf %1415, %1414 : vector<28x124xf32>
    %1417 = arith.addf %1411, %1416 : vector<28x124xf32>
    %1418 = vector.extract_strided_slice %1417 {offsets = [0, 0], sizes = [28, 28], strides = [1, 1]} : vector<28x124xf32> to vector<28x28xf32>
    %c0_859 = arith.constant 0 : index
    %c7_860 = arith.constant 7 : index
    %c0_861 = arith.constant 0 : index
    %c0_862 = arith.constant 0 : index
    %1419 = vector.load %arg3[%c0_859, %c7_860, %c0_861, %c0_862] : memref<4x10x28x28xf32, #tpu.memory_space<vmem>>, vector<1x1x28x28xf32>
    %1420 = vector.shape_cast %1419 : vector<1x1x28x28xf32> to vector<28x28xf32>
    %1421 = vector.shape_cast %1418 : vector<28x28xf32> to vector<1x1x28x28xf32>
    tpu.vector_store %arg3[%c0_859, %c7_860, %c0_861, %c0_862], %1421 {strides = array<i32>} : memref<4x10x28x28xf32, #tpu.memory_space<vmem>>, vector<1x1x28x28xf32>,
    %1422 = vector.extract_strided_slice %1417 {offsets = [0, 32], sizes = [28, 28], strides = [1, 1]} : vector<28x124xf32> to vector<28x28xf32>
    %c1_863 = arith.constant 1 : index
    %c7_864 = arith.constant 7 : index
    %c0_865 = arith.constant 0 : index
    %c0_866 = arith.constant 0 : index
    %1423 = vector.load %arg3[%c1_863, %c7_864, %c0_865, %c0_866] : memref<4x10x28x28xf32, #tpu.memory_space<vmem>>, vector<1x1x28x28xf32>
    %1424 = vector.shape_cast %1423 : vector<1x1x28x28xf32> to vector<28x28xf32>
    %1425 = vector.shape_cast %1422 : vector<28x28xf32> to vector<1x1x28x28xf32>
    tpu.vector_store %arg3[%c1_863, %c7_864, %c0_865, %c0_866], %1425 {strides = array<i32>} : memref<4x10x28x28xf32, #tpu.memory_space<vmem>>, vector<1x1x28x28xf32>,
    %1426 = vector.extract_strided_slice %1417 {offsets = [0, 64], sizes = [28, 28], strides = [1, 1]} : vector<28x124xf32> to vector<28x28xf32>
    %c2_867 = arith.constant 2 : index
    %c7_868 = arith.constant 7 : index
    %c0_869 = arith.constant 0 : index
    %c0_870 = arith.constant 0 : index
    %1427 = vector.load %arg3[%c2_867, %c7_868, %c0_869, %c0_870] : memref<4x10x28x28xf32, #tpu.memory_space<vmem>>, vector<1x1x28x28xf32>
    %1428 = vector.shape_cast %1427 : vector<1x1x28x28xf32> to vector<28x28xf32>
    %1429 = vector.shape_cast %1426 : vector<28x28xf32> to vector<1x1x28x28xf32>
    tpu.vector_store %arg3[%c2_867, %c7_868, %c0_869, %c0_870], %1429 {strides = array<i32>} : memref<4x10x28x28xf32, #tpu.memory_space<vmem>>, vector<1x1x28x28xf32>,
    %1430 = vector.extract_strided_slice %1417 {offsets = [0, 96], sizes = [28, 28], strides = [1, 1]} : vector<28x124xf32> to vector<28x28xf32>
    %c3_871 = arith.constant 3 : index
    %c7_872 = arith.constant 7 : index
    %c0_873 = arith.constant 0 : index
    %c0_874 = arith.constant 0 : index
    %1431 = vector.load %arg3[%c3_871, %c7_872, %c0_873, %c0_874] : memref<4x10x28x28xf32, #tpu.memory_space<vmem>>, vector<1x1x28x28xf32>
    %1432 = vector.shape_cast %1431 : vector<1x1x28x28xf32> to vector<28x28xf32>
    %1433 = vector.shape_cast %1430 : vector<28x28xf32> to vector<1x1x28x28xf32>
    tpu.vector_store %arg3[%c3_871, %c7_872, %c0_873, %c0_874], %1433 {strides = array<i32>} : memref<4x10x28x28xf32, #tpu.memory_space<vmem>>, vector<1x1x28x28xf32>,
    %c200 = arith.constant 200 : index
    %1434 = memref.load %arg2[%c200] : memref<250xf32, #tpu.memory_space<smem>>
    %c0_875 = arith.constant 0 : index
    %c0_876 = arith.constant 0 : index
    %c0_877 = arith.constant 0 : index
    %1435 = vector.load %arg5[%c0_875, %c0_876, %c0_877] : memref<25x28x124xf32, #tpu.memory_space<vmem>>, vector<1x28x124xf32>
    %1436 = vector.shape_cast %1435 : vector<1x28x124xf32> to vector<28x124xf32>
    %1437 = vector.broadcast %1434 : f32 to vector<28x124xf32>
    %1438 = arith.mulf %1437, %1436 : vector<28x124xf32>
    %c201 = arith.constant 201 : index
    %1439 = memref.load %arg2[%c201] : memref<250xf32, #tpu.memory_space<smem>>
    %c1_878 = arith.constant 1 : index
    %c0_879 = arith.constant 0 : index
    %c0_880 = arith.constant 0 : index
    %1440 = vector.load %arg5[%c1_878, %c0_879, %c0_880] : memref<25x28x124xf32, #tpu.memory_space<vmem>>, vector<1x28x124xf32>
    %1441 = vector.shape_cast %1440 : vector<1x28x124xf32> to vector<28x124xf32>
    %1442 = vector.broadcast %1439 : f32 to vector<28x124xf32>
    %1443 = arith.mulf %1442, %1441 : vector<28x124xf32>
    %1444 = arith.addf %1438, %1443 : vector<28x124xf32>
    %c202 = arith.constant 202 : index
    %1445 = memref.load %arg2[%c202] : memref<250xf32, #tpu.memory_space<smem>>
    %c2_881 = arith.constant 2 : index
    %c0_882 = arith.constant 0 : index
    %c0_883 = arith.constant 0 : index
    %1446 = vector.load %arg5[%c2_881, %c0_882, %c0_883] : memref<25x28x124xf32, #tpu.memory_space<vmem>>, vector<1x28x124xf32>
    %1447 = vector.shape_cast %1446 : vector<1x28x124xf32> to vector<28x124xf32>
    %1448 = vector.broadcast %1445 : f32 to vector<28x124xf32>
    %1449 = arith.mulf %1448, %1447 : vector<28x124xf32>
    %1450 = arith.addf %1444, %1449 : vector<28x124xf32>
    %c203 = arith.constant 203 : index
    %1451 = memref.load %arg2[%c203] : memref<250xf32, #tpu.memory_space<smem>>
    %c3_884 = arith.constant 3 : index
    %c0_885 = arith.constant 0 : index
    %c0_886 = arith.constant 0 : index
    %1452 = vector.load %arg5[%c3_884, %c0_885, %c0_886] : memref<25x28x124xf32, #tpu.memory_space<vmem>>, vector<1x28x124xf32>
    %1453 = vector.shape_cast %1452 : vector<1x28x124xf32> to vector<28x124xf32>
    %1454 = vector.broadcast %1451 : f32 to vector<28x124xf32>
    %1455 = arith.mulf %1454, %1453 : vector<28x124xf32>
    %1456 = arith.addf %1450, %1455 : vector<28x124xf32>
    %c204 = arith.constant 204 : index
    %1457 = memref.load %arg2[%c204] : memref<250xf32, #tpu.memory_space<smem>>
    %c4_887 = arith.constant 4 : index
    %c0_888 = arith.constant 0 : index
    %c0_889 = arith.constant 0 : index
    %1458 = vector.load %arg5[%c4_887, %c0_888, %c0_889] : memref<25x28x124xf32, #tpu.memory_space<vmem>>, vector<1x28x124xf32>
    %1459 = vector.shape_cast %1458 : vector<1x28x124xf32> to vector<28x124xf32>
    %1460 = vector.broadcast %1457 : f32 to vector<28x124xf32>
    %1461 = arith.mulf %1460, %1459 : vector<28x124xf32>
    %1462 = arith.addf %1456, %1461 : vector<28x124xf32>
    %c205 = arith.constant 205 : index
    %1463 = memref.load %arg2[%c205] : memref<250xf32, #tpu.memory_space<smem>>
    %c5_890 = arith.constant 5 : index
    %c0_891 = arith.constant 0 : index
    %c0_892 = arith.constant 0 : index
    %1464 = vector.load %arg5[%c5_890, %c0_891, %c0_892] : memref<25x28x124xf32, #tpu.memory_space<vmem>>, vector<1x28x124xf32>
    %1465 = vector.shape_cast %1464 : vector<1x28x124xf32> to vector<28x124xf32>
    %1466 = vector.broadcast %1463 : f32 to vector<28x124xf32>
    %1467 = arith.mulf %1466, %1465 : vector<28x124xf32>
    %1468 = arith.addf %1462, %1467 : vector<28x124xf32>
    %c206 = arith.constant 206 : index
    %1469 = memref.load %arg2[%c206] : memref<250xf32, #tpu.memory_space<smem>>
    %c6_893 = arith.constant 6 : index
    %c0_894 = arith.constant 0 : index
    %c0_895 = arith.constant 0 : index
    %1470 = vector.load %arg5[%c6_893, %c0_894, %c0_895] : memref<25x28x124xf32, #tpu.memory_space<vmem>>, vector<1x28x124xf32>
    %1471 = vector.shape_cast %1470 : vector<1x28x124xf32> to vector<28x124xf32>
    %1472 = vector.broadcast %1469 : f32 to vector<28x124xf32>
    %1473 = arith.mulf %1472, %1471 : vector<28x124xf32>
    %1474 = arith.addf %1468, %1473 : vector<28x124xf32>
    %c207 = arith.constant 207 : index
    %1475 = memref.load %arg2[%c207] : memref<250xf32, #tpu.memory_space<smem>>
    %c7_896 = arith.constant 7 : index
    %c0_897 = arith.constant 0 : index
    %c0_898 = arith.constant 0 : index
    %1476 = vector.load %arg5[%c7_896, %c0_897, %c0_898] : memref<25x28x124xf32, #tpu.memory_space<vmem>>, vector<1x28x124xf32>
    %1477 = vector.shape_cast %1476 : vector<1x28x124xf32> to vector<28x124xf32>
    %1478 = vector.broadcast %1475 : f32 to vector<28x124xf32>
    %1479 = arith.mulf %1478, %1477 : vector<28x124xf32>
    %1480 = arith.addf %1474, %1479 : vector<28x124xf32>
    %c208 = arith.constant 208 : index
    %1481 = memref.load %arg2[%c208] : memref<250xf32, #tpu.memory_space<smem>>
    %c8_899 = arith.constant 8 : index
    %c0_900 = arith.constant 0 : index
    %c0_901 = arith.constant 0 : index
    %1482 = vector.load %arg5[%c8_899, %c0_900, %c0_901] : memref<25x28x124xf32, #tpu.memory_space<vmem>>, vector<1x28x124xf32>
    %1483 = vector.shape_cast %1482 : vector<1x28x124xf32> to vector<28x124xf32>
    %1484 = vector.broadcast %1481 : f32 to vector<28x124xf32>
    %1485 = arith.mulf %1484, %1483 : vector<28x124xf32>
    %1486 = arith.addf %1480, %1485 : vector<28x124xf32>
    %c209 = arith.constant 209 : index
    %1487 = memref.load %arg2[%c209] : memref<250xf32, #tpu.memory_space<smem>>
    %c9_902 = arith.constant 9 : index
    %c0_903 = arith.constant 0 : index
    %c0_904 = arith.constant 0 : index
    %1488 = vector.load %arg5[%c9_902, %c0_903, %c0_904] : memref<25x28x124xf32, #tpu.memory_space<vmem>>, vector<1x28x124xf32>
    %1489 = vector.shape_cast %1488 : vector<1x28x124xf32> to vector<28x124xf32>
    %1490 = vector.broadcast %1487 : f32 to vector<28x124xf32>
    %1491 = arith.mulf %1490, %1489 : vector<28x124xf32>
    %1492 = arith.addf %1486, %1491 : vector<28x124xf32>
    %c210 = arith.constant 210 : index
    %1493 = memref.load %arg2[%c210] : memref<250xf32, #tpu.memory_space<smem>>
    %c10_905 = arith.constant 10 : index
    %c0_906 = arith.constant 0 : index
    %c0_907 = arith.constant 0 : index
    %1494 = vector.load %arg5[%c10_905, %c0_906, %c0_907] : memref<25x28x124xf32, #tpu.memory_space<vmem>>, vector<1x28x124xf32>
    %1495 = vector.shape_cast %1494 : vector<1x28x124xf32> to vector<28x124xf32>
    %1496 = vector.broadcast %1493 : f32 to vector<28x124xf32>
    %1497 = arith.mulf %1496, %1495 : vector<28x124xf32>
    %1498 = arith.addf %1492, %1497 : vector<28x124xf32>
    %c211 = arith.constant 211 : index
    %1499 = memref.load %arg2[%c211] : memref<250xf32, #tpu.memory_space<smem>>
    %c11_908 = arith.constant 11 : index
    %c0_909 = arith.constant 0 : index
    %c0_910 = arith.constant 0 : index
    %1500 = vector.load %arg5[%c11_908, %c0_909, %c0_910] : memref<25x28x124xf32, #tpu.memory_space<vmem>>, vector<1x28x124xf32>
    %1501 = vector.shape_cast %1500 : vector<1x28x124xf32> to vector<28x124xf32>
    %1502 = vector.broadcast %1499 : f32 to vector<28x124xf32>
    %1503 = arith.mulf %1502, %1501 : vector<28x124xf32>
    %1504 = arith.addf %1498, %1503 : vector<28x124xf32>
    %c212 = arith.constant 212 : index
    %1505 = memref.load %arg2[%c212] : memref<250xf32, #tpu.memory_space<smem>>
    %c12_911 = arith.constant 12 : index
    %c0_912 = arith.constant 0 : index
    %c0_913 = arith.constant 0 : index
    %1506 = vector.load %arg5[%c12_911, %c0_912, %c0_913] : memref<25x28x124xf32, #tpu.memory_space<vmem>>, vector<1x28x124xf32>
    %1507 = vector.shape_cast %1506 : vector<1x28x124xf32> to vector<28x124xf32>
    %1508 = vector.broadcast %1505 : f32 to vector<28x124xf32>
    %1509 = arith.mulf %1508, %1507 : vector<28x124xf32>
    %1510 = arith.addf %1504, %1509 : vector<28x124xf32>
    %c213 = arith.constant 213 : index
    %1511 = memref.load %arg2[%c213] : memref<250xf32, #tpu.memory_space<smem>>
    %c13_914 = arith.constant 13 : index
    %c0_915 = arith.constant 0 : index
    %c0_916 = arith.constant 0 : index
    %1512 = vector.load %arg5[%c13_914, %c0_915, %c0_916] : memref<25x28x124xf32, #tpu.memory_space<vmem>>, vector<1x28x124xf32>
    %1513 = vector.shape_cast %1512 : vector<1x28x124xf32> to vector<28x124xf32>
    %1514 = vector.broadcast %1511 : f32 to vector<28x124xf32>
    %1515 = arith.mulf %1514, %1513 : vector<28x124xf32>
    %1516 = arith.addf %1510, %1515 : vector<28x124xf32>
    %c214 = arith.constant 214 : index
    %1517 = memref.load %arg2[%c214] : memref<250xf32, #tpu.memory_space<smem>>
    %c14_917 = arith.constant 14 : index
    %c0_918 = arith.constant 0 : index
    %c0_919 = arith.constant 0 : index
    %1518 = vector.load %arg5[%c14_917, %c0_918, %c0_919] : memref<25x28x124xf32, #tpu.memory_space<vmem>>, vector<1x28x124xf32>
    %1519 = vector.shape_cast %1518 : vector<1x28x124xf32> to vector<28x124xf32>
    %1520 = vector.broadcast %1517 : f32 to vector<28x124xf32>
    %1521 = arith.mulf %1520, %1519 : vector<28x124xf32>
    %1522 = arith.addf %1516, %1521 : vector<28x124xf32>
    %c215 = arith.constant 215 : index
    %1523 = memref.load %arg2[%c215] : memref<250xf32, #tpu.memory_space<smem>>
    %c15_920 = arith.constant 15 : index
    %c0_921 = arith.constant 0 : index
    %c0_922 = arith.constant 0 : index
    %1524 = vector.load %arg5[%c15_920, %c0_921, %c0_922] : memref<25x28x124xf32, #tpu.memory_space<vmem>>, vector<1x28x124xf32>
    %1525 = vector.shape_cast %1524 : vector<1x28x124xf32> to vector<28x124xf32>
    %1526 = vector.broadcast %1523 : f32 to vector<28x124xf32>
    %1527 = arith.mulf %1526, %1525 : vector<28x124xf32>
    %1528 = arith.addf %1522, %1527 : vector<28x124xf32>
    %c216 = arith.constant 216 : index
    %1529 = memref.load %arg2[%c216] : memref<250xf32, #tpu.memory_space<smem>>
    %c16_923 = arith.constant 16 : index
    %c0_924 = arith.constant 0 : index
    %c0_925 = arith.constant 0 : index
    %1530 = vector.load %arg5[%c16_923, %c0_924, %c0_925] : memref<25x28x124xf32, #tpu.memory_space<vmem>>, vector<1x28x124xf32>
    %1531 = vector.shape_cast %1530 : vector<1x28x124xf32> to vector<28x124xf32>
    %1532 = vector.broadcast %1529 : f32 to vector<28x124xf32>
    %1533 = arith.mulf %1532, %1531 : vector<28x124xf32>
    %1534 = arith.addf %1528, %1533 : vector<28x124xf32>
    %c217 = arith.constant 217 : index
    %1535 = memref.load %arg2[%c217] : memref<250xf32, #tpu.memory_space<smem>>
    %c17_926 = arith.constant 17 : index
    %c0_927 = arith.constant 0 : index
    %c0_928 = arith.constant 0 : index
    %1536 = vector.load %arg5[%c17_926, %c0_927, %c0_928] : memref<25x28x124xf32, #tpu.memory_space<vmem>>, vector<1x28x124xf32>
    %1537 = vector.shape_cast %1536 : vector<1x28x124xf32> to vector<28x124xf32>
    %1538 = vector.broadcast %1535 : f32 to vector<28x124xf32>
    %1539 = arith.mulf %1538, %1537 : vector<28x124xf32>
    %1540 = arith.addf %1534, %1539 : vector<28x124xf32>
    %c218 = arith.constant 218 : index
    %1541 = memref.load %arg2[%c218] : memref<250xf32, #tpu.memory_space<smem>>
    %c18_929 = arith.constant 18 : index
    %c0_930 = arith.constant 0 : index
    %c0_931 = arith.constant 0 : index
    %1542 = vector.load %arg5[%c18_929, %c0_930, %c0_931] : memref<25x28x124xf32, #tpu.memory_space<vmem>>, vector<1x28x124xf32>
    %1543 = vector.shape_cast %1542 : vector<1x28x124xf32> to vector<28x124xf32>
    %1544 = vector.broadcast %1541 : f32 to vector<28x124xf32>
    %1545 = arith.mulf %1544, %1543 : vector<28x124xf32>
    %1546 = arith.addf %1540, %1545 : vector<28x124xf32>
    %c219 = arith.constant 219 : index
    %1547 = memref.load %arg2[%c219] : memref<250xf32, #tpu.memory_space<smem>>
    %c19_932 = arith.constant 19 : index
    %c0_933 = arith.constant 0 : index
    %c0_934 = arith.constant 0 : index
    %1548 = vector.load %arg5[%c19_932, %c0_933, %c0_934] : memref<25x28x124xf32, #tpu.memory_space<vmem>>, vector<1x28x124xf32>
    %1549 = vector.shape_cast %1548 : vector<1x28x124xf32> to vector<28x124xf32>
    %1550 = vector.broadcast %1547 : f32 to vector<28x124xf32>
    %1551 = arith.mulf %1550, %1549 : vector<28x124xf32>
    %1552 = arith.addf %1546, %1551 : vector<28x124xf32>
    %c220 = arith.constant 220 : index
    %1553 = memref.load %arg2[%c220] : memref<250xf32, #tpu.memory_space<smem>>
    %c20_935 = arith.constant 20 : index
    %c0_936 = arith.constant 0 : index
    %c0_937 = arith.constant 0 : index
    %1554 = vector.load %arg5[%c20_935, %c0_936, %c0_937] : memref<25x28x124xf32, #tpu.memory_space<vmem>>, vector<1x28x124xf32>
    %1555 = vector.shape_cast %1554 : vector<1x28x124xf32> to vector<28x124xf32>
    %1556 = vector.broadcast %1553 : f32 to vector<28x124xf32>
    %1557 = arith.mulf %1556, %1555 : vector<28x124xf32>
    %1558 = arith.addf %1552, %1557 : vector<28x124xf32>
    %c221 = arith.constant 221 : index
    %1559 = memref.load %arg2[%c221] : memref<250xf32, #tpu.memory_space<smem>>
    %c21_938 = arith.constant 21 : index
    %c0_939 = arith.constant 0 : index
    %c0_940 = arith.constant 0 : index
    %1560 = vector.load %arg5[%c21_938, %c0_939, %c0_940] : memref<25x28x124xf32, #tpu.memory_space<vmem>>, vector<1x28x124xf32>
    %1561 = vector.shape_cast %1560 : vector<1x28x124xf32> to vector<28x124xf32>
    %1562 = vector.broadcast %1559 : f32 to vector<28x124xf32>
    %1563 = arith.mulf %1562, %1561 : vector<28x124xf32>
    %1564 = arith.addf %1558, %1563 : vector<28x124xf32>
    %c222 = arith.constant 222 : index
    %1565 = memref.load %arg2[%c222] : memref<250xf32, #tpu.memory_space<smem>>
    %c22_941 = arith.constant 22 : index
    %c0_942 = arith.constant 0 : index
    %c0_943 = arith.constant 0 : index
    %1566 = vector.load %arg5[%c22_941, %c0_942, %c0_943] : memref<25x28x124xf32, #tpu.memory_space<vmem>>, vector<1x28x124xf32>
    %1567 = vector.shape_cast %1566 : vector<1x28x124xf32> to vector<28x124xf32>
    %1568 = vector.broadcast %1565 : f32 to vector<28x124xf32>
    %1569 = arith.mulf %1568, %1567 : vector<28x124xf32>
    %1570 = arith.addf %1564, %1569 : vector<28x124xf32>
    %c223 = arith.constant 223 : index
    %1571 = memref.load %arg2[%c223] : memref<250xf32, #tpu.memory_space<smem>>
    %c23_944 = arith.constant 23 : index
    %c0_945 = arith.constant 0 : index
    %c0_946 = arith.constant 0 : index
    %1572 = vector.load %arg5[%c23_944, %c0_945, %c0_946] : memref<25x28x124xf32, #tpu.memory_space<vmem>>, vector<1x28x124xf32>
    %1573 = vector.shape_cast %1572 : vector<1x28x124xf32> to vector<28x124xf32>
    %1574 = vector.broadcast %1571 : f32 to vector<28x124xf32>
    %1575 = arith.mulf %1574, %1573 : vector<28x124xf32>
    %1576 = arith.addf %1570, %1575 : vector<28x124xf32>
    %c224 = arith.constant 224 : index
    %1577 = memref.load %arg2[%c224] : memref<250xf32, #tpu.memory_space<smem>>
    %c24_947 = arith.constant 24 : index
    %c0_948 = arith.constant 0 : index
    %c0_949 = arith.constant 0 : index
    %1578 = vector.load %arg5[%c24_947, %c0_948, %c0_949] : memref<25x28x124xf32, #tpu.memory_space<vmem>>, vector<1x28x124xf32>
    %1579 = vector.shape_cast %1578 : vector<1x28x124xf32> to vector<28x124xf32>
    %1580 = vector.broadcast %1577 : f32 to vector<28x124xf32>
    %1581 = arith.mulf %1580, %1579 : vector<28x124xf32>
    %1582 = arith.addf %1576, %1581 : vector<28x124xf32>
    %1583 = vector.extract_strided_slice %1582 {offsets = [0, 0], sizes = [28, 28], strides = [1, 1]} : vector<28x124xf32> to vector<28x28xf32>
    %c0_950 = arith.constant 0 : index
    %c8_951 = arith.constant 8 : index
    %c0_952 = arith.constant 0 : index
    %c0_953 = arith.constant 0 : index
    %1584 = vector.load %arg3[%c0_950, %c8_951, %c0_952, %c0_953] : memref<4x10x28x28xf32, #tpu.memory_space<vmem>>, vector<1x1x28x28xf32>
    %1585 = vector.shape_cast %1584 : vector<1x1x28x28xf32> to vector<28x28xf32>
    %1586 = vector.shape_cast %1583 : vector<28x28xf32> to vector<1x1x28x28xf32>
    tpu.vector_store %arg3[%c0_950, %c8_951, %c0_952, %c0_953], %1586 {strides = array<i32>} : memref<4x10x28x28xf32, #tpu.memory_space<vmem>>, vector<1x1x28x28xf32>,
    %1587 = vector.extract_strided_slice %1582 {offsets = [0, 32], sizes = [28, 28], strides = [1, 1]} : vector<28x124xf32> to vector<28x28xf32>
    %c1_954 = arith.constant 1 : index
    %c8_955 = arith.constant 8 : index
    %c0_956 = arith.constant 0 : index
    %c0_957 = arith.constant 0 : index
    %1588 = vector.load %arg3[%c1_954, %c8_955, %c0_956, %c0_957] : memref<4x10x28x28xf32, #tpu.memory_space<vmem>>, vector<1x1x28x28xf32>
    %1589 = vector.shape_cast %1588 : vector<1x1x28x28xf32> to vector<28x28xf32>
    %1590 = vector.shape_cast %1587 : vector<28x28xf32> to vector<1x1x28x28xf32>
    tpu.vector_store %arg3[%c1_954, %c8_955, %c0_956, %c0_957], %1590 {strides = array<i32>} : memref<4x10x28x28xf32, #tpu.memory_space<vmem>>, vector<1x1x28x28xf32>,
    %1591 = vector.extract_strided_slice %1582 {offsets = [0, 64], sizes = [28, 28], strides = [1, 1]} : vector<28x124xf32> to vector<28x28xf32>
    %c2_958 = arith.constant 2 : index
    %c8_959 = arith.constant 8 : index
    %c0_960 = arith.constant 0 : index
    %c0_961 = arith.constant 0 : index
    %1592 = vector.load %arg3[%c2_958, %c8_959, %c0_960, %c0_961] : memref<4x10x28x28xf32, #tpu.memory_space<vmem>>, vector<1x1x28x28xf32>
    %1593 = vector.shape_cast %1592 : vector<1x1x28x28xf32> to vector<28x28xf32>
    %1594 = vector.shape_cast %1591 : vector<28x28xf32> to vector<1x1x28x28xf32>
    tpu.vector_store %arg3[%c2_958, %c8_959, %c0_960, %c0_961], %1594 {strides = array<i32>} : memref<4x10x28x28xf32, #tpu.memory_space<vmem>>, vector<1x1x28x28xf32>,
    %1595 = vector.extract_strided_slice %1582 {offsets = [0, 96], sizes = [28, 28], strides = [1, 1]} : vector<28x124xf32> to vector<28x28xf32>
    %c3_962 = arith.constant 3 : index
    %c8_963 = arith.constant 8 : index
    %c0_964 = arith.constant 0 : index
    %c0_965 = arith.constant 0 : index
    %1596 = vector.load %arg3[%c3_962, %c8_963, %c0_964, %c0_965] : memref<4x10x28x28xf32, #tpu.memory_space<vmem>>, vector<1x1x28x28xf32>
    %1597 = vector.shape_cast %1596 : vector<1x1x28x28xf32> to vector<28x28xf32>
    %1598 = vector.shape_cast %1595 : vector<28x28xf32> to vector<1x1x28x28xf32>
    tpu.vector_store %arg3[%c3_962, %c8_963, %c0_964, %c0_965], %1598 {strides = array<i32>} : memref<4x10x28x28xf32, #tpu.memory_space<vmem>>, vector<1x1x28x28xf32>,
    %c225 = arith.constant 225 : index
    %1599 = memref.load %arg2[%c225] : memref<250xf32, #tpu.memory_space<smem>>
    %c0_966 = arith.constant 0 : index
    %c0_967 = arith.constant 0 : index
    %c0_968 = arith.constant 0 : index
    %1600 = vector.load %arg5[%c0_966, %c0_967, %c0_968] : memref<25x28x124xf32, #tpu.memory_space<vmem>>, vector<1x28x124xf32>
    %1601 = vector.shape_cast %1600 : vector<1x28x124xf32> to vector<28x124xf32>
    %1602 = vector.broadcast %1599 : f32 to vector<28x124xf32>
    %1603 = arith.mulf %1602, %1601 : vector<28x124xf32>
    %c226 = arith.constant 226 : index
    %1604 = memref.load %arg2[%c226] : memref<250xf32, #tpu.memory_space<smem>>
    %c1_969 = arith.constant 1 : index
    %c0_970 = arith.constant 0 : index
    %c0_971 = arith.constant 0 : index
    %1605 = vector.load %arg5[%c1_969, %c0_970, %c0_971] : memref<25x28x124xf32, #tpu.memory_space<vmem>>, vector<1x28x124xf32>
    %1606 = vector.shape_cast %1605 : vector<1x28x124xf32> to vector<28x124xf32>
    %1607 = vector.broadcast %1604 : f32 to vector<28x124xf32>
    %1608 = arith.mulf %1607, %1606 : vector<28x124xf32>
    %1609 = arith.addf %1603, %1608 : vector<28x124xf32>
    %c227 = arith.constant 227 : index
    %1610 = memref.load %arg2[%c227] : memref<250xf32, #tpu.memory_space<smem>>
    %c2_972 = arith.constant 2 : index
    %c0_973 = arith.constant 0 : index
    %c0_974 = arith.constant 0 : index
    %1611 = vector.load %arg5[%c2_972, %c0_973, %c0_974] : memref<25x28x124xf32, #tpu.memory_space<vmem>>, vector<1x28x124xf32>
    %1612 = vector.shape_cast %1611 : vector<1x28x124xf32> to vector<28x124xf32>
    %1613 = vector.broadcast %1610 : f32 to vector<28x124xf32>
    %1614 = arith.mulf %1613, %1612 : vector<28x124xf32>
    %1615 = arith.addf %1609, %1614 : vector<28x124xf32>
    %c228 = arith.constant 228 : index
    %1616 = memref.load %arg2[%c228] : memref<250xf32, #tpu.memory_space<smem>>
    %c3_975 = arith.constant 3 : index
    %c0_976 = arith.constant 0 : index
    %c0_977 = arith.constant 0 : index
    %1617 = vector.load %arg5[%c3_975, %c0_976, %c0_977] : memref<25x28x124xf32, #tpu.memory_space<vmem>>, vector<1x28x124xf32>
    %1618 = vector.shape_cast %1617 : vector<1x28x124xf32> to vector<28x124xf32>
    %1619 = vector.broadcast %1616 : f32 to vector<28x124xf32>
    %1620 = arith.mulf %1619, %1618 : vector<28x124xf32>
    %1621 = arith.addf %1615, %1620 : vector<28x124xf32>
    %c229 = arith.constant 229 : index
    %1622 = memref.load %arg2[%c229] : memref<250xf32, #tpu.memory_space<smem>>
    %c4_978 = arith.constant 4 : index
    %c0_979 = arith.constant 0 : index
    %c0_980 = arith.constant 0 : index
    %1623 = vector.load %arg5[%c4_978, %c0_979, %c0_980] : memref<25x28x124xf32, #tpu.memory_space<vmem>>, vector<1x28x124xf32>
    %1624 = vector.shape_cast %1623 : vector<1x28x124xf32> to vector<28x124xf32>
    %1625 = vector.broadcast %1622 : f32 to vector<28x124xf32>
    %1626 = arith.mulf %1625, %1624 : vector<28x124xf32>
    %1627 = arith.addf %1621, %1626 : vector<28x124xf32>
    %c230 = arith.constant 230 : index
    %1628 = memref.load %arg2[%c230] : memref<250xf32, #tpu.memory_space<smem>>
    %c5_981 = arith.constant 5 : index
    %c0_982 = arith.constant 0 : index
    %c0_983 = arith.constant 0 : index
    %1629 = vector.load %arg5[%c5_981, %c0_982, %c0_983] : memref<25x28x124xf32, #tpu.memory_space<vmem>>, vector<1x28x124xf32>
    %1630 = vector.shape_cast %1629 : vector<1x28x124xf32> to vector<28x124xf32>
    %1631 = vector.broadcast %1628 : f32 to vector<28x124xf32>
    %1632 = arith.mulf %1631, %1630 : vector<28x124xf32>
    %1633 = arith.addf %1627, %1632 : vector<28x124xf32>
    %c231 = arith.constant 231 : index
    %1634 = memref.load %arg2[%c231] : memref<250xf32, #tpu.memory_space<smem>>
    %c6_984 = arith.constant 6 : index
    %c0_985 = arith.constant 0 : index
    %c0_986 = arith.constant 0 : index
    %1635 = vector.load %arg5[%c6_984, %c0_985, %c0_986] : memref<25x28x124xf32, #tpu.memory_space<vmem>>, vector<1x28x124xf32>
    %1636 = vector.shape_cast %1635 : vector<1x28x124xf32> to vector<28x124xf32>
    %1637 = vector.broadcast %1634 : f32 to vector<28x124xf32>
    %1638 = arith.mulf %1637, %1636 : vector<28x124xf32>
    %1639 = arith.addf %1633, %1638 : vector<28x124xf32>
    %c232 = arith.constant 232 : index
    %1640 = memref.load %arg2[%c232] : memref<250xf32, #tpu.memory_space<smem>>
    %c7_987 = arith.constant 7 : index
    %c0_988 = arith.constant 0 : index
    %c0_989 = arith.constant 0 : index
    %1641 = vector.load %arg5[%c7_987, %c0_988, %c0_989] : memref<25x28x124xf32, #tpu.memory_space<vmem>>, vector<1x28x124xf32>
    %1642 = vector.shape_cast %1641 : vector<1x28x124xf32> to vector<28x124xf32>
    %1643 = vector.broadcast %1640 : f32 to vector<28x124xf32>
    %1644 = arith.mulf %1643, %1642 : vector<28x124xf32>
    %1645 = arith.addf %1639, %1644 : vector<28x124xf32>
    %c233 = arith.constant 233 : index
    %1646 = memref.load %arg2[%c233] : memref<250xf32, #tpu.memory_space<smem>>
    %c8_990 = arith.constant 8 : index
    %c0_991 = arith.constant 0 : index
    %c0_992 = arith.constant 0 : index
    %1647 = vector.load %arg5[%c8_990, %c0_991, %c0_992] : memref<25x28x124xf32, #tpu.memory_space<vmem>>, vector<1x28x124xf32>
    %1648 = vector.shape_cast %1647 : vector<1x28x124xf32> to vector<28x124xf32>
    %1649 = vector.broadcast %1646 : f32 to vector<28x124xf32>
    %1650 = arith.mulf %1649, %1648 : vector<28x124xf32>
    %1651 = arith.addf %1645, %1650 : vector<28x124xf32>
    %c234 = arith.constant 234 : index
    %1652 = memref.load %arg2[%c234] : memref<250xf32, #tpu.memory_space<smem>>
    %c9_993 = arith.constant 9 : index
    %c0_994 = arith.constant 0 : index
    %c0_995 = arith.constant 0 : index
    %1653 = vector.load %arg5[%c9_993, %c0_994, %c0_995] : memref<25x28x124xf32, #tpu.memory_space<vmem>>, vector<1x28x124xf32>
    %1654 = vector.shape_cast %1653 : vector<1x28x124xf32> to vector<28x124xf32>
    %1655 = vector.broadcast %1652 : f32 to vector<28x124xf32>
    %1656 = arith.mulf %1655, %1654 : vector<28x124xf32>
    %1657 = arith.addf %1651, %1656 : vector<28x124xf32>
    %c235 = arith.constant 235 : index
    %1658 = memref.load %arg2[%c235] : memref<250xf32, #tpu.memory_space<smem>>
    %c10_996 = arith.constant 10 : index
    %c0_997 = arith.constant 0 : index
    %c0_998 = arith.constant 0 : index
    %1659 = vector.load %arg5[%c10_996, %c0_997, %c0_998] : memref<25x28x124xf32, #tpu.memory_space<vmem>>, vector<1x28x124xf32>
    %1660 = vector.shape_cast %1659 : vector<1x28x124xf32> to vector<28x124xf32>
    %1661 = vector.broadcast %1658 : f32 to vector<28x124xf32>
    %1662 = arith.mulf %1661, %1660 : vector<28x124xf32>
    %1663 = arith.addf %1657, %1662 : vector<28x124xf32>
    %c236 = arith.constant 236 : index
    %1664 = memref.load %arg2[%c236] : memref<250xf32, #tpu.memory_space<smem>>
    %c11_999 = arith.constant 11 : index
    %c0_1000 = arith.constant 0 : index
    %c0_1001 = arith.constant 0 : index
    %1665 = vector.load %arg5[%c11_999, %c0_1000, %c0_1001] : memref<25x28x124xf32, #tpu.memory_space<vmem>>, vector<1x28x124xf32>
    %1666 = vector.shape_cast %1665 : vector<1x28x124xf32> to vector<28x124xf32>
    %1667 = vector.broadcast %1664 : f32 to vector<28x124xf32>
    %1668 = arith.mulf %1667, %1666 : vector<28x124xf32>
    %1669 = arith.addf %1663, %1668 : vector<28x124xf32>
    %c237 = arith.constant 237 : index
    %1670 = memref.load %arg2[%c237] : memref<250xf32, #tpu.memory_space<smem>>
    %c12_1002 = arith.constant 12 : index
    %c0_1003 = arith.constant 0 : index
    %c0_1004 = arith.constant 0 : index
    %1671 = vector.load %arg5[%c12_1002, %c0_1003, %c0_1004] : memref<25x28x124xf32, #tpu.memory_space<vmem>>, vector<1x28x124xf32>
    %1672 = vector.shape_cast %1671 : vector<1x28x124xf32> to vector<28x124xf32>
    %1673 = vector.broadcast %1670 : f32 to vector<28x124xf32>
    %1674 = arith.mulf %1673, %1672 : vector<28x124xf32>
    %1675 = arith.addf %1669, %1674 : vector<28x124xf32>
    %c238 = arith.constant 238 : index
    %1676 = memref.load %arg2[%c238] : memref<250xf32, #tpu.memory_space<smem>>
    %c13_1005 = arith.constant 13 : index
    %c0_1006 = arith.constant 0 : index
    %c0_1007 = arith.constant 0 : index
    %1677 = vector.load %arg5[%c13_1005, %c0_1006, %c0_1007] : memref<25x28x124xf32, #tpu.memory_space<vmem>>, vector<1x28x124xf32>
    %1678 = vector.shape_cast %1677 : vector<1x28x124xf32> to vector<28x124xf32>
    %1679 = vector.broadcast %1676 : f32 to vector<28x124xf32>
    %1680 = arith.mulf %1679, %1678 : vector<28x124xf32>
    %1681 = arith.addf %1675, %1680 : vector<28x124xf32>
    %c239 = arith.constant 239 : index
    %1682 = memref.load %arg2[%c239] : memref<250xf32, #tpu.memory_space<smem>>
    %c14_1008 = arith.constant 14 : index
    %c0_1009 = arith.constant 0 : index
    %c0_1010 = arith.constant 0 : index
    %1683 = vector.load %arg5[%c14_1008, %c0_1009, %c0_1010] : memref<25x28x124xf32, #tpu.memory_space<vmem>>, vector<1x28x124xf32>
    %1684 = vector.shape_cast %1683 : vector<1x28x124xf32> to vector<28x124xf32>
    %1685 = vector.broadcast %1682 : f32 to vector<28x124xf32>
    %1686 = arith.mulf %1685, %1684 : vector<28x124xf32>
    %1687 = arith.addf %1681, %1686 : vector<28x124xf32>
    %c240 = arith.constant 240 : index
    %1688 = memref.load %arg2[%c240] : memref<250xf32, #tpu.memory_space<smem>>
    %c15_1011 = arith.constant 15 : index
    %c0_1012 = arith.constant 0 : index
    %c0_1013 = arith.constant 0 : index
    %1689 = vector.load %arg5[%c15_1011, %c0_1012, %c0_1013] : memref<25x28x124xf32, #tpu.memory_space<vmem>>, vector<1x28x124xf32>
    %1690 = vector.shape_cast %1689 : vector<1x28x124xf32> to vector<28x124xf32>
    %1691 = vector.broadcast %1688 : f32 to vector<28x124xf32>
    %1692 = arith.mulf %1691, %1690 : vector<28x124xf32>
    %1693 = arith.addf %1687, %1692 : vector<28x124xf32>
    %c241 = arith.constant 241 : index
    %1694 = memref.load %arg2[%c241] : memref<250xf32, #tpu.memory_space<smem>>
    %c16_1014 = arith.constant 16 : index
    %c0_1015 = arith.constant 0 : index
    %c0_1016 = arith.constant 0 : index
    %1695 = vector.load %arg5[%c16_1014, %c0_1015, %c0_1016] : memref<25x28x124xf32, #tpu.memory_space<vmem>>, vector<1x28x124xf32>
    %1696 = vector.shape_cast %1695 : vector<1x28x124xf32> to vector<28x124xf32>
    %1697 = vector.broadcast %1694 : f32 to vector<28x124xf32>
    %1698 = arith.mulf %1697, %1696 : vector<28x124xf32>
    %1699 = arith.addf %1693, %1698 : vector<28x124xf32>
    %c242 = arith.constant 242 : index
    %1700 = memref.load %arg2[%c242] : memref<250xf32, #tpu.memory_space<smem>>
    %c17_1017 = arith.constant 17 : index
    %c0_1018 = arith.constant 0 : index
    %c0_1019 = arith.constant 0 : index
    %1701 = vector.load %arg5[%c17_1017, %c0_1018, %c0_1019] : memref<25x28x124xf32, #tpu.memory_space<vmem>>, vector<1x28x124xf32>
    %1702 = vector.shape_cast %1701 : vector<1x28x124xf32> to vector<28x124xf32>
    %1703 = vector.broadcast %1700 : f32 to vector<28x124xf32>
    %1704 = arith.mulf %1703, %1702 : vector<28x124xf32>
    %1705 = arith.addf %1699, %1704 : vector<28x124xf32>
    %c243 = arith.constant 243 : index
    %1706 = memref.load %arg2[%c243] : memref<250xf32, #tpu.memory_space<smem>>
    %c18_1020 = arith.constant 18 : index
    %c0_1021 = arith.constant 0 : index
    %c0_1022 = arith.constant 0 : index
    %1707 = vector.load %arg5[%c18_1020, %c0_1021, %c0_1022] : memref<25x28x124xf32, #tpu.memory_space<vmem>>, vector<1x28x124xf32>
    %1708 = vector.shape_cast %1707 : vector<1x28x124xf32> to vector<28x124xf32>
    %1709 = vector.broadcast %1706 : f32 to vector<28x124xf32>
    %1710 = arith.mulf %1709, %1708 : vector<28x124xf32>
    %1711 = arith.addf %1705, %1710 : vector<28x124xf32>
    %c244 = arith.constant 244 : index
    %1712 = memref.load %arg2[%c244] : memref<250xf32, #tpu.memory_space<smem>>
    %c19_1023 = arith.constant 19 : index
    %c0_1024 = arith.constant 0 : index
    %c0_1025 = arith.constant 0 : index
    %1713 = vector.load %arg5[%c19_1023, %c0_1024, %c0_1025] : memref<25x28x124xf32, #tpu.memory_space<vmem>>, vector<1x28x124xf32>
    %1714 = vector.shape_cast %1713 : vector<1x28x124xf32> to vector<28x124xf32>
    %1715 = vector.broadcast %1712 : f32 to vector<28x124xf32>
    %1716 = arith.mulf %1715, %1714 : vector<28x124xf32>
    %1717 = arith.addf %1711, %1716 : vector<28x124xf32>
    %c245 = arith.constant 245 : index
    %1718 = memref.load %arg2[%c245] : memref<250xf32, #tpu.memory_space<smem>>
    %c20_1026 = arith.constant 20 : index
    %c0_1027 = arith.constant 0 : index
    %c0_1028 = arith.constant 0 : index
    %1719 = vector.load %arg5[%c20_1026, %c0_1027, %c0_1028] : memref<25x28x124xf32, #tpu.memory_space<vmem>>, vector<1x28x124xf32>
    %1720 = vector.shape_cast %1719 : vector<1x28x124xf32> to vector<28x124xf32>
    %1721 = vector.broadcast %1718 : f32 to vector<28x124xf32>
    %1722 = arith.mulf %1721, %1720 : vector<28x124xf32>
    %1723 = arith.addf %1717, %1722 : vector<28x124xf32>
    %c246 = arith.constant 246 : index
    %1724 = memref.load %arg2[%c246] : memref<250xf32, #tpu.memory_space<smem>>
    %c21_1029 = arith.constant 21 : index
    %c0_1030 = arith.constant 0 : index
    %c0_1031 = arith.constant 0 : index
    %1725 = vector.load %arg5[%c21_1029, %c0_1030, %c0_1031] : memref<25x28x124xf32, #tpu.memory_space<vmem>>, vector<1x28x124xf32>
    %1726 = vector.shape_cast %1725 : vector<1x28x124xf32> to vector<28x124xf32>
    %1727 = vector.broadcast %1724 : f32 to vector<28x124xf32>
    %1728 = arith.mulf %1727, %1726 : vector<28x124xf32>
    %1729 = arith.addf %1723, %1728 : vector<28x124xf32>
    %c247 = arith.constant 247 : index
    %1730 = memref.load %arg2[%c247] : memref<250xf32, #tpu.memory_space<smem>>
    %c22_1032 = arith.constant 22 : index
    %c0_1033 = arith.constant 0 : index
    %c0_1034 = arith.constant 0 : index
    %1731 = vector.load %arg5[%c22_1032, %c0_1033, %c0_1034] : memref<25x28x124xf32, #tpu.memory_space<vmem>>, vector<1x28x124xf32>
    %1732 = vector.shape_cast %1731 : vector<1x28x124xf32> to vector<28x124xf32>
    %1733 = vector.broadcast %1730 : f32 to vector<28x124xf32>
    %1734 = arith.mulf %1733, %1732 : vector<28x124xf32>
    %1735 = arith.addf %1729, %1734 : vector<28x124xf32>
    %c248 = arith.constant 248 : index
    %1736 = memref.load %arg2[%c248] : memref<250xf32, #tpu.memory_space<smem>>
    %c23_1035 = arith.constant 23 : index
    %c0_1036 = arith.constant 0 : index
    %c0_1037 = arith.constant 0 : index
    %1737 = vector.load %arg5[%c23_1035, %c0_1036, %c0_1037] : memref<25x28x124xf32, #tpu.memory_space<vmem>>, vector<1x28x124xf32>
    %1738 = vector.shape_cast %1737 : vector<1x28x124xf32> to vector<28x124xf32>
    %1739 = vector.broadcast %1736 : f32 to vector<28x124xf32>
    %1740 = arith.mulf %1739, %1738 : vector<28x124xf32>
    %1741 = arith.addf %1735, %1740 : vector<28x124xf32>
    %c249 = arith.constant 249 : index
    %1742 = memref.load %arg2[%c249] : memref<250xf32, #tpu.memory_space<smem>>
    %c24_1038 = arith.constant 24 : index
    %c0_1039 = arith.constant 0 : index
    %c0_1040 = arith.constant 0 : index
    %1743 = vector.load %arg5[%c24_1038, %c0_1039, %c0_1040] : memref<25x28x124xf32, #tpu.memory_space<vmem>>, vector<1x28x124xf32>
    %1744 = vector.shape_cast %1743 : vector<1x28x124xf32> to vector<28x124xf32>
    %1745 = vector.broadcast %1742 : f32 to vector<28x124xf32>
    %1746 = arith.mulf %1745, %1744 : vector<28x124xf32>
    %1747 = arith.addf %1741, %1746 : vector<28x124xf32>
    %1748 = vector.extract_strided_slice %1747 {offsets = [0, 0], sizes = [28, 28], strides = [1, 1]} : vector<28x124xf32> to vector<28x28xf32>
    %c0_1041 = arith.constant 0 : index
    %c9_1042 = arith.constant 9 : index
    %c0_1043 = arith.constant 0 : index
    %c0_1044 = arith.constant 0 : index
    %1749 = vector.load %arg3[%c0_1041, %c9_1042, %c0_1043, %c0_1044] : memref<4x10x28x28xf32, #tpu.memory_space<vmem>>, vector<1x1x28x28xf32>
    %1750 = vector.shape_cast %1749 : vector<1x1x28x28xf32> to vector<28x28xf32>
    %1751 = vector.shape_cast %1748 : vector<28x28xf32> to vector<1x1x28x28xf32>
    tpu.vector_store %arg3[%c0_1041, %c9_1042, %c0_1043, %c0_1044], %1751 {strides = array<i32>} : memref<4x10x28x28xf32, #tpu.memory_space<vmem>>, vector<1x1x28x28xf32>,
    %1752 = vector.extract_strided_slice %1747 {offsets = [0, 32], sizes = [28, 28], strides = [1, 1]} : vector<28x124xf32> to vector<28x28xf32>
    %c1_1045 = arith.constant 1 : index
    %c9_1046 = arith.constant 9 : index
    %c0_1047 = arith.constant 0 : index
    %c0_1048 = arith.constant 0 : index
    %1753 = vector.load %arg3[%c1_1045, %c9_1046, %c0_1047, %c0_1048] : memref<4x10x28x28xf32, #tpu.memory_space<vmem>>, vector<1x1x28x28xf32>
    %1754 = vector.shape_cast %1753 : vector<1x1x28x28xf32> to vector<28x28xf32>
    %1755 = vector.shape_cast %1752 : vector<28x28xf32> to vector<1x1x28x28xf32>
    tpu.vector_store %arg3[%c1_1045, %c9_1046, %c0_1047, %c0_1048], %1755 {strides = array<i32>} : memref<4x10x28x28xf32, #tpu.memory_space<vmem>>, vector<1x1x28x28xf32>,
    %1756 = vector.extract_strided_slice %1747 {offsets = [0, 64], sizes = [28, 28], strides = [1, 1]} : vector<28x124xf32> to vector<28x28xf32>
    %c2_1049 = arith.constant 2 : index
    %c9_1050 = arith.constant 9 : index
    %c0_1051 = arith.constant 0 : index
    %c0_1052 = arith.constant 0 : index
    %1757 = vector.load %arg3[%c2_1049, %c9_1050, %c0_1051, %c0_1052] : memref<4x10x28x28xf32, #tpu.memory_space<vmem>>, vector<1x1x28x28xf32>
    %1758 = vector.shape_cast %1757 : vector<1x1x28x28xf32> to vector<28x28xf32>
    %1759 = vector.shape_cast %1756 : vector<28x28xf32> to vector<1x1x28x28xf32>
    tpu.vector_store %arg3[%c2_1049, %c9_1050, %c0_1051, %c0_1052], %1759 {strides = array<i32>} : memref<4x10x28x28xf32, #tpu.memory_space<vmem>>, vector<1x1x28x28xf32>,
    %1760 = vector.extract_strided_slice %1747 {offsets = [0, 96], sizes = [28, 28], strides = [1, 1]} : vector<28x124xf32> to vector<28x28xf32>
    %c3_1053 = arith.constant 3 : index
    %c9_1054 = arith.constant 9 : index
    %c0_1055 = arith.constant 0 : index
    %c0_1056 = arith.constant 0 : index
    %1761 = vector.load %arg3[%c3_1053, %c9_1054, %c0_1055, %c0_1056] : memref<4x10x28x28xf32, #tpu.memory_space<vmem>>, vector<1x1x28x28xf32>
    %1762 = vector.shape_cast %1761 : vector<1x1x28x28xf32> to vector<28x28xf32>
    %1763 = vector.shape_cast %1760 : vector<28x28xf32> to vector<1x1x28x28xf32>
    tpu.vector_store %arg3[%c3_1053, %c9_1054, %c0_1055, %c0_1056], %1763 {strides = array<i32>} : memref<4x10x28x28xf32, #tpu.memory_space<vmem>>, vector<1x1x28x28xf32>,
    return
  }
  func.func @transform_0(%arg0: i32) -> (i32, i32, i32) {
    %c0_i32 = arith.constant 0 : i32
    %c0_i32_0 = arith.constant 0 : i32
    %c0_i32_1 = arith.constant 0 : i32
    return %arg0, %c0_i32, %c0_i32_0 : i32, i32, i32
  }
  func.func @transform_1(%arg0: i32) -> i32 {
    %c0_i32 = arith.constant 0 : i32
    %c0_i32_0 = arith.constant 0 : i32
    return %c0_i32 : i32
  }
  func.func @transform_2(%arg0: i32) -> (i32, i32, i32, i32) {
    %c0_i32 = arith.constant 0 : i32
    %c0_i32_0 = arith.constant 0 : i32
    %c0_i32_1 = arith.constant 0 : i32
    %c0_i32_2 = arith.constant 0 : i32
    return %arg0, %c0_i32, %c0_i32_0, %c0_i32_1 : i32, i32, i32, i32
  }
}

</mosaic_0001>

<llo_original>
// kernel: tpu_custom_call.1
$region0: #{tpu_custom_call.1}
  #allocation0 [shape = 'u32[]', space=smem, size = 0x4, offset = 0x4, fixed_abs, tag = 'smem constant byte address 0x4 - core index']
  #allocation1 [shape = 'u32[144,128]{1,0:T(1,128)}', space=vmem, size = 0x12000, scoped, tag = 'internal scratch']
  #allocation2 [shape = 'f32[32,128]{1,0:T(8,128)}', space=vmem, size = 0x4000, scoped, tag = 'scratch operand']
  #allocation3 [shape = 'f32[25,28,124]{2,1,0:T(8,128)}', space=vmem, size = 0x64000, scoped, tag = 'scratch operand']
  %s0 = inlined_call_operand.vmem [shape: f32[8,28,28], index: 0, kind: input, shape index: {}]
  %s1 = inlined_call_operand.hbm [shape: f32[250], index: 1, kind: input, shape index: {}]
  %s2 = inlined_call_operand.vmem [shape: f32[8,10,28,28], index: 2, kind: output, shape index: {}]
  %s3 = sld [smem:[#allocation0]]
  $region45: #{tpu_custom_call.1} parent=0
    _
  %s5 = ssub.s32 1, %s3
  %s6 = scalar_select 0, %s5, %s3
  $region1: #{tpu_custom_call.1} parent=0
    #allocation4 [shape = 'u8[1024]{0}', space=smem, size = 0x400, scoped, tag = 'input window, operand 1, single buffered']
    #allocation5 [shape = 's32[2]{0}', space=sflag, size = 0x8, scoped, tag = 'scoped memory for tpu_custom_call.1']
    %7 = vsyncpa [#allocation5], 0
    loop: start=0, step=1, limit=4
    $region2: #{tpu_custom_call.1} parent=1 // loop_pre_header
      _
    $region3: #{tpu_custom_call.1} parent=1 // loop_header
      %s9 = sphi 0, %s13
      %p10 = scmp.ge.s32.totalorder %s9, 4
      %s19 = sphi 0, %s21
      %s22 = sphi 0, %s19
      %s23 = sphi 0, %s22
      %s39 = sphi 0, %s23
      %s43 = sphi 0, %s43
      %s45 = sphi 0, %s43
      %s46 = sphi 0, %s45
      %s60 = sphi 0, %s46
      %s66 = sphi 0, %s68
      %s69 = sphi 0, %s66
      %s70 = sphi 0, %s69
      %s86 = sphi 0, %s70
    $region4: #{tpu_custom_call.1} parent=1 // loop_header_branch
      %12 = sbr.rel (%p10) target = $region8
    $region5: #{tpu_custom_call.1} parent=1 // loop_body
      %s14 = ssub.s32 %s9, 1
      %s15 = ssub.s32 %s9, 2
      %s16 = sadd.s32 %s9, 1
      %s17 = ssub.s32 %s9, %s16
      %p18 = scmp.eq.s32.totalorder %s17, 0
      %s20 = sadd.s32 %s19, 1
      %s21 = scalar_select %p18, %s19, %s20
      %p24 = pneg %p18
      %p25 = scmp.eq.s32.totalorder %s9, 1
      %p26 = por %p24, %p25
      %p27 = scmp.ne.s32.totalorder %s19, %s22
      %p28 = scmp.eq.s32.totalorder %s9, 0
      %p29 = por %p27, %p28
      %p30 = scmp.ne.s32.totalorder %s19, %s22
      %p31 = scmp.eq.s32.totalorder %s14, 1
      %p32 = por %p30, %p31
      %p33 = scmp.ne.s32.totalorder %s22, %s23
      %p34 = scmp.eq.s32.totalorder %s14, 0
      %p35 = por %p33, %p34
      %p36 = scmp.ne.s32.totalorder %s22, %s23
      %p37 = scmp.eq.s32.totalorder %s15, 1
      %p38 = por %p36, %p37
      %p40 = scmp.ne.s32.totalorder %s23, %s39
      %p41 = scmp.eq.s32.totalorder %s15, 0
      %p42 = por %p40, %p41
      %s44 = sadd.s32 %s43, 1
      %p47 = scmp.eq.s32.totalorder %s9, 1
      %p48 = scmp.ne.s32.totalorder %s43, %s45
      %p49 = scmp.eq.s32.totalorder %s9, 0
      %p50 = por %p48, %p49
      %p51 = scmp.ne.s32.totalorder %s43, %s45
      %p52 = scmp.eq.s32.totalorder %s14, 1
      %p53 = por %p51, %p52
      %p54 = scmp.ne.s32.totalorder %s45, %s46
      %p55 = scmp.eq.s32.totalorder %s14, 0
      %p56 = por %p54, %p55
      %p57 = scmp.ne.s32.totalorder %s45, %s46
      %p58 = scmp.eq.s32.totalorder %s15, 1
      %p59 = por %p57, %p58
      %p61 = scmp.ne.s32.totalorder %s46, %s60
      %p62 = scmp.eq.s32.totalorder %s15, 0
      %p63 = por %p61, %p62
      %s64 = ssub.s32 %s9, %s16
      %p65 = scmp.eq.s32.totalorder %s64, 0
      %s67 = sadd.s32 %s66, 1
      %s68 = scalar_select %p65, %s66, %s67
      %p71 = pneg %p65
      %p72 = scmp.eq.s32.totalorder %s9, 1
      %p73 = por %p71, %p72
      %p74 = scmp.ne.s32.totalorder %s66, %s69
      %p75 = scmp.eq.s32.totalorder %s9, 0
      %p76 = por %p74, %p75
      %p77 = scmp.ne.s32.totalorder %s66, %s69
      %p78 = scmp.eq.s32.totalorder %s14, 1
      %p79 = por %p77, %p78
      %p80 = scmp.ne.s32.totalorder %s69, %s70
      %p81 = scmp.eq.s32.totalorder %s14, 0
      %p82 = por %p80, %p81
      %p83 = scmp.ne.s32.totalorder %s69, %s70
      %p84 = scmp.eq.s32.totalorder %s15, 1
      %p85 = por %p83, %p84
      %p87 = scmp.ne.s32.totalorder %s70, %s86
      %p88 = scmp.eq.s32.totalorder %s15, 0
      %p89 = por %p87, %p88
      %p90 = scmp.le.s32.totalorder 1, %s9
      %p91 = scmp.lt.s32.totalorder %s9, 3
      %p92 = pnand %p90, %p91
      %p93 = pneg %p92
      // Predicated region
      $region9: #{tpu_custom_call.1} parent=5 // pred_check
        _
      $region10: #{tpu_custom_call.1} parent=5 // pred_check_branch
        %95 = sbr.rel (%p92) target = $region12
      $region11: #{tpu_custom_call.1} parent=5 // pred_region
        %s96 = ssub.s32 %s9, 1
        // Predicated region
        $region13: #{tpu_custom_call.1} parent=11 // pred_check
          %p97 = pneg %p56
        $region14: #{tpu_custom_call.1} parent=11 // pred_check_branch
          %99 = sbr.rel (%p97) target = $region16
        $region15: #{tpu_custom_call.1} parent=11 // pred_region
          %s101 = ssub.s32 32, 32
          %102 = vsyncadd [#allocation5], %s101
          %105 = dma.hbm_to_smem %s1, 32, [#allocation4], [#allocation5]
        $region16: #{tpu_custom_call.1} parent=11 // pred_fallthru
          _
      $region12: #{tpu_custom_call.1} parent=5 // pred_fallthru
        _
      %p106 = scmp.lt.s32.totalorder %s9, 2
      // Predicated region
      $region17: #{tpu_custom_call.1} parent=5 // pred_check
        %p107 = pneg %p106
      $region18: #{tpu_custom_call.1} parent=5 // pred_check_branch
        %109 = sbr.rel (%p107) target = $region20
      $region19: #{tpu_custom_call.1} parent=5 // pred_region
        // Predicated region
        $region21: #{tpu_custom_call.1} parent=19 // pred_check
          %p110 = pneg %p29
        $region22: #{tpu_custom_call.1} parent=19 // pred_check_branch
          %112 = sbr.rel (%p110) target = $region24
        $region23: #{tpu_custom_call.1} parent=19 // pred_region
          %s113 = smul.u32 4, %s9
          %p114 = scmp.lt.s32.totalorder %s113, 7
          %s115 = scalar_select %p114, %s113, 7
          %s116 = smul.addr %s115, 4
          %s117 = smul.addr %s116, 8
          %s118 = scalar_lea.vmem %s0, %s117
          %s119 = smul.u32 4, %s9
        $region24: #{tpu_custom_call.1} parent=19 // pred_fallthru
          _
      $region20: #{tpu_custom_call.1} parent=5 // pred_fallthru
        _
      %p120 = scmp.le.s32.totalorder 1, %s9
      %p121 = scmp.lt.s32.totalorder %s9, 3
      %p122 = pnand %p120, %p121
      %p123 = pneg %p122
      // Predicated region
      $region25: #{tpu_custom_call.1} parent=5 // pred_check
        _
      $region26: #{tpu_custom_call.1} parent=5 // pred_check_branch
        %125 = sbr.rel (%p122) target = $region28
      $region27: #{tpu_custom_call.1} parent=5 // pred_region
        %s126 = ssub.s32 %s9, 1
        // Predicated region
        $region29: #{tpu_custom_call.1} parent=27 // pred_check
          %p127 = pneg %p56
        $region30: #{tpu_custom_call.1} parent=27 // pred_check_branch
          %129 = sbr.rel (%p127) target = $region32
        $region31: #{tpu_custom_call.1} parent=27 // pred_region
          %130 = dma.done [#allocation5], 32
        $region32: #{tpu_custom_call.1} parent=27 // pred_fallthru
          _
        %131 = sfence
        %s132 = smul.u32 4, %s14
        %p133 = scmp.lt.s32.totalorder %s132, 7
        %s134 = scalar_select %p133, %s132, 7
        %s135 = smul.addr %s134, 4
        %s136 = smul.addr %s135, 8
        %s137 = scalar_lea.vmem %s0, %s136
        %p138 = pneg %p35
        %p139 = pneg %p32
        %p140 = pneg %p56
        %p141 = pneg %p53
        %p142 = pneg %p82
        %p143 = pneg %p79
        %s144 = smul.u32 4, %s14
        %p145 = scmp.lt.s32.totalorder %s144, 7
        %s146 = scalar_select %p145, %s144, 7
        %s147 = smul.addr %s146, 40
        %s148 = smul.addr %s147, 8
        %s149 = scalar_lea.vmem %s2, %s148
        %s150 = smul.u32 4, %s14
        %p151 = scmp.lt.s32.totalorder %s150, 7
        %s152 = scalar_select %p151, %s150, 7
        %s153 = smul.addr %s152, 4
        %s154 = smul.addr %s153, 8
        %s155 = scalar_lea.vmem %s0, %s154
        %s156 = smul.u32 4, %s14
        %s157 = smul.u32 4, %s14
        %p158 = scmp.lt.s32.totalorder %s157, 7
        %s159 = scalar_select %p158, %s157, 7
        %s160 = smul.addr %s159, 40
        %s161 = smul.addr %s160, 8
        %s162 = scalar_lea.vmem %s2, %s161
        %s163 = smul.u32 4, %s14
        %164 = vst [vmem:[#allocation2] sm:$0xff] 0.0
        %165 = vst [vmem:[#allocation2 + $0x8] sm:$0xff] 0.0
        %166 = vst [vmem:[#allocation2 + $0x10] sm:$0xff] 0.0
        %167 = vst [vmem:[#allocation2 + $0x18] sm:$0xff] 0.0
        %v168 = vld [vmem:[%s155] sm:$0xff]
        %v169 = vld [vmem:[%s155 + $0x8] sm:$0xff]
        %v170 = vld [vmem:[%s155 + $0x10] sm:$0xff]
        %v171 = vld [vmem:[%s155 + $0x18] sm:$0xf]
        %176 = vrot.lane.b32.xlu0 %v168, 2
        %v177 = vpop.permute.xlu0 %176
        %178 = vrot.lane.b32.xlu0 %v169, 2
        %v179 = vpop.permute.xlu0 %178
        %180 = vrot.lane.b32.xlu0 %v170, 2
        %v181 = vpop.permute.xlu0 %180
        %182 = vrot.lane.b32.xlu0 %v171, 2
        %v183 = vpop.permute.xlu0 %182
        %vm188 = vcmask 244752
        %189 = vst.msk [vmem:[#allocation2 + $0x2] sm:$0xff] %vm188, %v177
        %190 = vst.msk [vmem:[#allocation2 + $0xa] sm:$0xff] %vm188, %v179
        %191 = vst.msk [vmem:[#allocation2 + $0x12] sm:$0xff] %vm188, %v181
        %vm192 = vcmask 240656
        %193 = vst.msk [vmem:[#allocation2 + $0x1a] sm:$0xf] %vm192, %v183
        %s194 = scalar_lea.vmem %s155, 32
        %v195 = vld [vmem:[%s194] sm:$0xff]
        %v196 = vld [vmem:[%s194 + $0x8] sm:$0xff]
        %v197 = vld [vmem:[%s194 + $0x10] sm:$0xff]
        %v198 = vld [vmem:[%s194 + $0x18] sm:$0xf]
        %203 = vrot.lane.b32.xlu0 %v195, 34
        %v204 = vpop.permute.xlu0 %203
        %205 = vrot.lane.b32.xlu0 %v196, 34
        %v206 = vpop.permute.xlu0 %205
        %207 = vrot.lane.b32.xlu0 %v197, 34
        %v208 = vpop.permute.xlu0 %207
        %209 = vrot.lane.b32.xlu0 %v198, 34
        %v210 = vpop.permute.xlu0 %209
        %vm215 = vcmask 507152
        %216 = vst.msk [vmem:[#allocation2 + $0x2] sm:$0xff] %vm215, %v204
        %217 = vst.msk [vmem:[#allocation2 + $0xa] sm:$0xff] %vm215, %v206
        %218 = vst.msk [vmem:[#allocation2 + $0x12] sm:$0xff] %vm215, %v208
        %vm219 = vcmask 503056
        %220 = vst.msk [vmem:[#allocation2 + $0x1a] sm:$0xf] %vm219, %v210
        %s221 = scalar_lea.vmem %s155, 64
        %v222 = vld [vmem:[%s221] sm:$0xff]
        %v223 = vld [vmem:[%s221 + $0x8] sm:$0xff]
        %v224 = vld [vmem:[%s221 + $0x10] sm:$0xff]
        %v225 = vld [vmem:[%s221 + $0x18] sm:$0xf]
        %230 = vrot.lane.b32.xlu0 %v222, 66
        %v231 = vpop.permute.xlu0 %230
        %232 = vrot.lane.b32.xlu0 %v223, 66
        %v233 = vpop.permute.xlu0 %232
        %234 = vrot.lane.b32.xlu0 %v224, 66
        %v235 = vpop.permute.xlu0 %234
        %236 = vrot.lane.b32.xlu0 %v225, 66
        %v237 = vpop.permute.xlu0 %236
        %vm242 = vcmask 769552
        %243 = vst.msk [vmem:[#allocation2 + $0x2] sm:$0xff] %vm242, %v231
        %244 = vst.msk [vmem:[#allocation2 + $0xa] sm:$0xff] %vm242, %v233
        %245 = vst.msk [vmem:[#allocation2 + $0x12] sm:$0xff] %vm242, %v235
        %vm246 = vcmask 765456
        %247 = vst.msk [vmem:[#allocation2 + $0x1a] sm:$0xf] %vm246, %v237
        %s248 = scalar_lea.vmem %s155, 96
        %v249 = vld [vmem:[%s248] sm:$0xff]
        %v250 = vld [vmem:[%s248 + $0x8] sm:$0xff]
        %v251 = vld [vmem:[%s248 + $0x10] sm:$0xff]
        %v252 = vld [vmem:[%s248 + $0x18] sm:$0xf]
        %257 = vrot.lane.b32.xlu0 %v249, 98
        %v258 = vpop.permute.xlu0 %257
        %259 = vrot.lane.b32.xlu0 %v250, 98
        %v260 = vpop.permute.xlu0 %259
        %261 = vrot.lane.b32.xlu0 %v251, 98
        %v262 = vpop.permute.xlu0 %261
        %263 = vrot.lane.b32.xlu0 %v252, 98
        %v264 = vpop.permute.xlu0 %263
        %vm269 = vcmask 1031952
        %270 = vst.msk [vmem:[#allocation2 + $0x2] sm:$0xff] %vm269, %v258
        %271 = vst.msk [vmem:[#allocation2 + $0xa] sm:$0xff] %vm269, %v260
        %272 = vst.msk [vmem:[#allocation2 + $0x12] sm:$0xff] %vm269, %v262
        %vm273 = vcmask 1027856
        %274 = vst.msk [vmem:[#allocation2 + $0x1a] sm:$0xf] %vm273, %v264
        %v275 = vld [vmem:[#allocation2] sm:$0xff]
        %v276 = vld [vmem:[#allocation2 + $0x8] sm:$0xff]
        %v277 = vld [vmem:[#allocation2 + $0x10] sm:$0xff]
        %v278 = vld [vmem:[#allocation2 + $0x18] sm:$0xf]
        %vm279 = vcmask 1014784
        %280 = vst.msk [vmem:[#allocation3] sm:$0xff] %vm279, %v275
        %281 = vst.msk [vmem:[#allocation3 + $0x8] sm:$0xff] %vm279, %v276
        %282 = vst.msk [vmem:[#allocation3 + $0x10] sm:$0xff] %vm279, %v277
        %vm283 = vcmask 1010688
        %284 = vst.msk [vmem:[#allocation3 + $0x18] sm:$0xf] %vm283, %v278
        %v285 = vld [vmem:[#allocation2] sm:$0xff]
        %v286 = vld [vmem:[#allocation2 + $0x8] sm:$0xff]
        %v287 = vld [vmem:[#allocation2 + $0x10] sm:$0xff]
        %v288 = vld [vmem:[#allocation2 + $0x18] sm:$0xf]
        %293 = vrot.lane.b32.xlu0 %v285, 127
        %v294 = vpop.permute.xlu0 %293
        %295 = vrot.lane.b32.xlu0 %v286, 127
        %v296 = vpop.permute.xlu0 %295
        %297 = vrot.lane.b32.xlu0 %v287, 127
        %v298 = vpop.permute.xlu0 %297
        %299 = vrot.lane.b32.xlu0 %v288, 127
        %v300 = vpop.permute.xlu0 %299
        %s305 = scalar_lea.vmem [#allocation3], 32
        %306 = vst.msk [vmem:[%s305] sm:$0xff] %vm279, %v294
        %307 = vst.msk [vmem:[%s305 + $0x8] sm:$0xff] %vm279, %v296
        %308 = vst.msk [vmem:[%s305 + $0x10] sm:$0xff] %vm279, %v298
        %309 = vst.msk [vmem:[%s305 + $0x18] sm:$0xf] %vm283, %v300
        %v310 = vld [vmem:[#allocation2] sm:$0xff]
        %v311 = vld [vmem:[#allocation2 + $0x8] sm:$0xff]
        %v312 = vld [vmem:[#allocation2 + $0x10] sm:$0xff]
        %v313 = vld [vmem:[#allocation2 + $0x18] sm:$0xf]
        %318 = vrot.lane.b32.xlu0 %v310, 126
        %v319 = vpop.permute.xlu0 %318
        %320 = vrot.lane.b32.xlu0 %v311, 126
        %v321 = vpop.permute.xlu0 %320
        %322 = vrot.lane.b32.xlu0 %v312, 126
        %v323 = vpop.permute.xlu0 %322
        %324 = vrot.lane.b32.xlu0 %v313, 126
        %v325 = vpop.permute.xlu0 %324
        %s330 = scalar_lea.vmem [#allocation3], 64
        %331 = vst.msk [vmem:[%s330] sm:$0xff] %vm279, %v319
        %332 = vst.msk [vmem:[%s330 + $0x8] sm:$0xff] %vm279, %v321
        %333 = vst.msk [vmem:[%s330 + $0x10] sm:$0xff] %vm279, %v323
        %334 = vst.msk [vmem:[%s330 + $0x18] sm:$0xf] %vm283, %v325
        %v335 = vld [vmem:[#allocation2] sm:$0xff]
        %v336 = vld [vmem:[#allocation2 + $0x8] sm:$0xff]
        %v337 = vld [vmem:[#allocation2 + $0x10] sm:$0xff]
        %v338 = vld [vmem:[#allocation2 + $0x18] sm:$0xf]
        %343 = vrot.lane.b32.xlu0 %v335, 125
        %v344 = vpop.permute.xlu0 %343
        %345 = vrot.lane.b32.xlu0 %v336, 125
        %v346 = vpop.permute.xlu0 %345
        %347 = vrot.lane.b32.xlu0 %v337, 125
        %v348 = vpop.permute.xlu0 %347
        %349 = vrot.lane.b32.xlu0 %v338, 125
        %v350 = vpop.permute.xlu0 %349
        %s355 = scalar_lea.vmem [#allocation3], 96
        %356 = vst.msk [vmem:[%s355] sm:$0xff] %vm279, %v344
        %357 = vst.msk [vmem:[%s355 + $0x8] sm:$0xff] %vm279, %v346
        %358 = vst.msk [vmem:[%s355 + $0x10] sm:$0xff] %vm279, %v348
        %359 = vst.msk [vmem:[%s355 + $0x18] sm:$0xf] %vm283, %v350
        %v360 = vld [vmem:[#allocation2] sm:$0xff]
        %v361 = vld [vmem:[#allocation2 + $0x8] sm:$0xff]
        %v362 = vld [vmem:[#allocation2 + $0x10] sm:$0xff]
        %v363 = vld [vmem:[#allocation2 + $0x18] sm:$0xf]
        %368 = vrot.lane.b32.xlu0 %v360, 124
        %v369 = vpop.permute.xlu0 %368
        %370 = vrot.lane.b32.xlu0 %v361, 124
        %v371 = vpop.permute.xlu0 %370
        %372 = vrot.lane.b32.xlu0 %v362, 124
        %v373 = vpop.permute.xlu0 %372
        %374 = vrot.lane.b32.xlu0 %v363, 124
        %v375 = vpop.permute.xlu0 %374
        %s380 = scalar_lea.vmem [#allocation3], 128
        %381 = vst.msk [vmem:[%s380] sm:$0xff] %vm279, %v369
        %382 = vst.msk [vmem:[%s380 + $0x8] sm:$0xff] %vm279, %v371
        %383 = vst.msk [vmem:[%s380 + $0x10] sm:$0xff] %vm279, %v373
        %384 = vst.msk [vmem:[%s380 + $0x18] sm:$0xf] %vm283, %v375
        %v385 = vld [vmem:[#allocation2 + $0x1] sm:$0xff]
        %v386 = vld [vmem:[#allocation2 + $0x9] sm:$0xff]
        %v387 = vld [vmem:[#allocation2 + $0x11] sm:$0xff]
        %v388 = vld [vmem:[#allocation2 + $0x19] sm:$0xf]
        %s389 = scalar_lea.vmem [#allocation3], 160
        %390 = vst.msk [vmem:[%s389] sm:$0xff] %vm279, %v385
        %391 = vst.msk [vmem:[%s389 + $0x8] sm:$0xff] %vm279, %v386
        %392 = vst.msk [vmem:[%s389 + $0x10] sm:$0xff] %vm279, %v387
        %393 = vst.msk [vmem:[%s389 + $0x18] sm:$0xf] %vm283, %v388
        %v394 = vld [vmem:[#allocation2 + $0x1] sm:$0xff]
        %v395 = vld [vmem:[#allocation2 + $0x9] sm:$0xff]
        %v396 = vld [vmem:[#allocation2 + $0x11] sm:$0xff]
        %v397 = vld [vmem:[#allocation2 + $0x19] sm:$0xf]
        %402 = vrot.lane.b32.xlu0 %v394, 127
        %v403 = vpop.permute.xlu0 %402
        %404 = vrot.lane.b32.xlu0 %v395, 127
        %v405 = vpop.permute.xlu0 %404
        %406 = vrot.lane.b32.xlu0 %v396, 127
        %v407 = vpop.permute.xlu0 %406
        %408 = vrot.lane.b32.xlu0 %v397, 127
        %v409 = vpop.permute.xlu0 %408
        %s414 = scalar_lea.vmem [#allocation3], 192
        %415 = vst.msk [vmem:[%s414] sm:$0xff] %vm279, %v403
        %416 = vst.msk [vmem:[%s414 + $0x8] sm:$0xff] %vm279, %v405
        %417 = vst.msk [vmem:[%s414 + $0x10] sm:$0xff] %vm279, %v407
        %418 = vst.msk [vmem:[%s414 + $0x18] sm:$0xf] %vm283, %v409
        %v419 = vld [vmem:[#allocation2 + $0x1] sm:$0xff]
        %v420 = vld [vmem:[#allocation2 + $0x9] sm:$0xff]
        %v421 = vld [vmem:[#allocation2 + $0x11] sm:$0xff]
        %v422 = vld [vmem:[#allocation2 + $0x19] sm:$0xf]
        %427 = vrot.lane.b32.xlu0 %v419, 126
        %v428 = vpop.permute.xlu0 %427
        %429 = vrot.lane.b32.xlu0 %v420, 126
        %v430 = vpop.permute.xlu0 %429
        %431 = vrot.lane.b32.xlu0 %v421, 126
        %v432 = vpop.permute.xlu0 %431
        %433 = vrot.lane.b32.xlu0 %v422, 126
        %v434 = vpop.permute.xlu0 %433
        %s439 = scalar_lea.vmem [#allocation3], 224
        %440 = vst.msk [vmem:[%s439] sm:$0xff] %vm279, %v428
        %441 = vst.msk [vmem:[%s439 + $0x8] sm:$0xff] %vm279, %v430
        %442 = vst.msk [vmem:[%s439 + $0x10] sm:$0xff] %vm279, %v432
        %443 = vst.msk [vmem:[%s439 + $0x18] sm:$0xf] %vm283, %v434
        %v444 = vld [vmem:[#allocation2 + $0x1] sm:$0xff]
        %v445 = vld [vmem:[#allocation2 + $0x9] sm:$0xff]
        %v446 = vld [vmem:[#allocation2 + $0x11] sm:$0xff]
        %v447 = vld [vmem:[#allocation2 + $0x19] sm:$0xf]
        %452 = vrot.lane.b32.xlu0 %v444, 125
        %v453 = vpop.permute.xlu0 %452
        %454 = vrot.lane.b32.xlu0 %v445, 125
        %v455 = vpop.permute.xlu0 %454
        %456 = vrot.lane.b32.xlu0 %v446, 125
        %v457 = vpop.permute.xlu0 %456
        %458 = vrot.lane.b32.xlu0 %v447, 125
        %v459 = vpop.permute.xlu0 %458
        %s464 = scalar_lea.vmem [#allocation3], 256
        %465 = vst.msk [vmem:[%s464] sm:$0xff] %vm279, %v453
        %466 = vst.msk [vmem:[%s464 + $0x8] sm:$0xff] %vm279, %v455
        %467 = vst.msk [vmem:[%s464 + $0x10] sm:$0xff] %vm279, %v457
        %468 = vst.msk [vmem:[%s464 + $0x18] sm:$0xf] %vm283, %v459
        %v469 = vld [vmem:[#allocation2 + $0x1] sm:$0xff]
        %v470 = vld [vmem:[#allocation2 + $0x9] sm:$0xff]
        %v471 = vld [vmem:[#allocation2 + $0x11] sm:$0xff]
        %v472 = vld [vmem:[#allocation2 + $0x19] sm:$0xf]
        %477 = vrot.lane.b32.xlu0 %v469, 124
        %v478 = vpop.permute.xlu0 %477
        %479 = vrot.lane.b32.xlu0 %v470, 124
        %v480 = vpop.permute.xlu0 %479
        %481 = vrot.lane.b32.xlu0 %v471, 124
        %v482 = vpop.permute.xlu0 %481
        %483 = vrot.lane.b32.xlu0 %v472, 124
        %v484 = vpop.permute.xlu0 %483
        %s489 = scalar_lea.vmem [#allocation3], 288
        %490 = vst.msk [vmem:[%s489] sm:$0xff] %vm279, %v478
        %491 = vst.msk [vmem:[%s489 + $0x8] sm:$0xff] %vm279, %v480
        %492 = vst.msk [vmem:[%s489 + $0x10] sm:$0xff] %vm279, %v482
        %493 = vst.msk [vmem:[%s489 + $0x18] sm:$0xf] %vm283, %v484
        %v494 = vld [vmem:[#allocation2 + $0x2] sm:$0xff]
        %v495 = vld [vmem:[#allocation2 + $0xa] sm:$0xff]
        %v496 = vld [vmem:[#allocation2 + $0x12] sm:$0xff]
        %v497 = vld [vmem:[#allocation2 + $0x1a] sm:$0xf]
        %s498 = scalar_lea.vmem [#allocation3], 320
        %499 = vst.msk [vmem:[%s498] sm:$0xff] %vm279, %v494
        %500 = vst.msk [vmem:[%s498 + $0x8] sm:$0xff] %vm279, %v495
        %501 = vst.msk [vmem:[%s498 + $0x10] sm:$0xff] %vm279, %v496
        %502 = vst.msk [vmem:[%s498 + $0x18] sm:$0xf] %vm283, %v497
        %v503 = vld [vmem:[#allocation2 + $0x2] sm:$0xff]
        %v504 = vld [vmem:[#allocation2 + $0xa] sm:$0xff]
        %v505 = vld [vmem:[#allocation2 + $0x12] sm:$0xff]
        %v506 = vld [vmem:[#allocation2 + $0x1a] sm:$0xf]
        %511 = vrot.lane.b32.xlu0 %v503, 127
        %v512 = vpop.permute.xlu0 %511
        %513 = vrot.lane.b32.xlu0 %v504, 127
        %v514 = vpop.permute.xlu0 %513
        %515 = vrot.lane.b32.xlu0 %v505, 127
        %v516 = vpop.permute.xlu0 %515
        %517 = vrot.lane.b32.xlu0 %v506, 127
        %v518 = vpop.permute.xlu0 %517
        %s523 = scalar_lea.vmem [#allocation3], 352
        %524 = vst.msk [vmem:[%s523] sm:$0xff] %vm279, %v512
        %525 = vst.msk [vmem:[%s523 + $0x8] sm:$0xff] %vm279, %v514
        %526 = vst.msk [vmem:[%s523 + $0x10] sm:$0xff] %vm279, %v516
        %527 = vst.msk [vmem:[%s523 + $0x18] sm:$0xf] %vm283, %v518
        %v528 = vld [vmem:[#allocation2 + $0x2] sm:$0xff]
        %v529 = vld [vmem:[#allocation2 + $0xa] sm:$0xff]
        %v530 = vld [vmem:[#allocation2 + $0x12] sm:$0xff]
        %v531 = vld [vmem:[#allocation2 + $0x1a] sm:$0xf]
        %536 = vrot.lane.b32.xlu0 %v528, 126
        %v537 = vpop.permute.xlu0 %536
        %538 = vrot.lane.b32.xlu0 %v529, 126
        %v539 = vpop.permute.xlu0 %538
        %540 = vrot.lane.b32.xlu0 %v530, 126
        %v541 = vpop.permute.xlu0 %540
        %542 = vrot.lane.b32.xlu0 %v531, 126
        %v543 = vpop.permute.xlu0 %542
        %s548 = scalar_lea.vmem [#allocation3], 384
        %549 = vst.msk [vmem:[%s548] sm:$0xff] %vm279, %v537
        %550 = vst.msk [vmem:[%s548 + $0x8] sm:$0xff] %vm279, %v539
        %551 = vst.msk [vmem:[%s548 + $0x10] sm:$0xff] %vm279, %v541
        %552 = vst.msk [vmem:[%s548 + $0x18] sm:$0xf] %vm283, %v543
        %v553 = vld [vmem:[#allocation2 + $0x2] sm:$0xff]
        %v554 = vld [vmem:[#allocation2 + $0xa] sm:$0xff]
        %v555 = vld [vmem:[#allocation2 + $0x12] sm:$0xff]
        %v556 = vld [vmem:[#allocation2 + $0x1a] sm:$0xf]
        %561 = vrot.lane.b32.xlu0 %v553, 125
        %v562 = vpop.permute.xlu0 %561
        %563 = vrot.lane.b32.xlu0 %v554, 125
        %v564 = vpop.permute.xlu0 %563
        %565 = vrot.lane.b32.xlu0 %v555, 125
        %v566 = vpop.permute.xlu0 %565
        %567 = vrot.lane.b32.xlu0 %v556, 125
        %v568 = vpop.permute.xlu0 %567
        %s573 = scalar_lea.vmem [#allocation3], 416
        %574 = vst.msk [vmem:[%s573] sm:$0xff] %vm279, %v562
        %575 = vst.msk [vmem:[%s573 + $0x8] sm:$0xff] %vm279, %v564
        %576 = vst.msk [vmem:[%s573 + $0x10] sm:$0xff] %vm279, %v566
        %577 = vst.msk [vmem:[%s573 + $0x18] sm:$0xf] %vm283, %v568
        %v578 = vld [vmem:[#allocation2 + $0x2] sm:$0xff]
        %v579 = vld [vmem:[#allocation2 + $0xa] sm:$0xff]
        %v580 = vld [vmem:[#allocation2 + $0x12] sm:$0xff]
        %v581 = vld [vmem:[#allocation2 + $0x1a] sm:$0xf]
        %586 = vrot.lane.b32.xlu0 %v578, 124
        %v587 = vpop.permute.xlu0 %586
        %588 = vrot.lane.b32.xlu0 %v579, 124
        %v589 = vpop.permute.xlu0 %588
        %590 = vrot.lane.b32.xlu0 %v580, 124
        %v591 = vpop.permute.xlu0 %590
        %592 = vrot.lane.b32.xlu0 %v581, 124
        %v593 = vpop.permute.xlu0 %592
        %s598 = scalar_lea.vmem [#allocation3], 448
        %599 = vst.msk [vmem:[%s598] sm:$0xff] %vm279, %v587
        %600 = vst.msk [vmem:[%s598 + $0x8] sm:$0xff] %vm279, %v589
        %601 = vst.msk [vmem:[%s598 + $0x10] sm:$0xff] %vm279, %v591
        %602 = vst.msk [vmem:[%s598 + $0x18] sm:$0xf] %vm283, %v593
        %v603 = vld [vmem:[#allocation2 + $0x3] sm:$0xff]
        %v604 = vld [vmem:[#allocation2 + $0xb] sm:$0xff]
        %v605 = vld [vmem:[#allocation2 + $0x13] sm:$0xff]
        %v606 = vld [vmem:[#allocation2 + $0x1b] sm:$0xf]
        %s607 = scalar_lea.vmem [#allocation3], 480
        %608 = vst.msk [vmem:[%s607] sm:$0xff] %vm279, %v603
        %609 = vst.msk [vmem:[%s607 + $0x8] sm:$0xff] %vm279, %v604
        %610 = vst.msk [vmem:[%s607 + $0x10] sm:$0xff] %vm279, %v605
        %611 = vst.msk [vmem:[%s607 + $0x18] sm:$0xf] %vm283, %v606
        %v612 = vld [vmem:[#allocation2 + $0x3] sm:$0xff]
        %v613 = vld [vmem:[#allocation2 + $0xb] sm:$0xff]
        %v614 = vld [vmem:[#allocation2 + $0x13] sm:$0xff]
        %v615 = vld [vmem:[#allocation2 + $0x1b] sm:$0xf]
        %620 = vrot.lane.b32.xlu0 %v612, 127
        %v621 = vpop.permute.xlu0 %620
        %622 = vrot.lane.b32.xlu0 %v613, 127
        %v623 = vpop.permute.xlu0 %622
        %624 = vrot.lane.b32.xlu0 %v614, 127
        %v625 = vpop.permute.xlu0 %624
        %626 = vrot.lane.b32.xlu0 %v615, 127
        %v627 = vpop.permute.xlu0 %626
        %s632 = scalar_lea.vmem [#allocation3], 512
        %633 = vst.msk [vmem:[%s632] sm:$0xff] %vm279, %v621
        %634 = vst.msk [vmem:[%s632 + $0x8] sm:$0xff] %vm279, %v623
        %635 = vst.msk [vmem:[%s632 + $0x10] sm:$0xff] %vm279, %v625
        %636 = vst.msk [vmem:[%s632 + $0x18] sm:$0xf] %vm283, %v627
        %v637 = vld [vmem:[#allocation2 + $0x3] sm:$0xff]
        %v638 = vld [vmem:[#allocation2 + $0xb] sm:$0xff]
        %v639 = vld [vmem:[#allocation2 + $0x13] sm:$0xff]
        %v640 = vld [vmem:[#allocation2 + $0x1b] sm:$0xf]
        %645 = vrot.lane.b32.xlu0 %v637, 126
        %v646 = vpop.permute.xlu0 %645
        %647 = vrot.lane.b32.xlu0 %v638, 126
        %v648 = vpop.permute.xlu0 %647
        %649 = vrot.lane.b32.xlu0 %v639, 126
        %v650 = vpop.permute.xlu0 %649
        %651 = vrot.lane.b32.xlu0 %v640, 126
        %v652 = vpop.permute.xlu0 %651
        %s657 = scalar_lea.vmem [#allocation3], 544
        %658 = vst.msk [vmem:[%s657] sm:$0xff] %vm279, %v646
        %659 = vst.msk [vmem:[%s657 + $0x8] sm:$0xff] %vm279, %v648
        %660 = vst.msk [vmem:[%s657 + $0x10] sm:$0xff] %vm279, %v650
        %661 = vst.msk [vmem:[%s657 + $0x18] sm:$0xf] %vm283, %v652
        %v662 = vld [vmem:[#allocation2 + $0x3] sm:$0xff]
        %v663 = vld [vmem:[#allocation2 + $0xb] sm:$0xff]
        %v664 = vld [vmem:[#allocation2 + $0x13] sm:$0xff]
        %v665 = vld [vmem:[#allocation2 + $0x1b] sm:$0xf]
        %670 = vrot.lane.b32.xlu0 %v662, 125
        %v671 = vpop.permute.xlu0 %670
        %672 = vrot.lane.b32.xlu0 %v663, 125
        %v673 = vpop.permute.xlu0 %672
        %674 = vrot.lane.b32.xlu0 %v664, 125
        %v675 = vpop.permute.xlu0 %674
        %676 = vrot.lane.b32.xlu0 %v665, 125
        %v677 = vpop.permute.xlu0 %676
        %s682 = scalar_lea.vmem [#allocation3], 576
        %683 = vst.msk [vmem:[%s682] sm:$0xff] %vm279, %v671
        %684 = vst.msk [vmem:[%s682 + $0x8] sm:$0xff] %vm279, %v673
        %685 = vst.msk [vmem:[%s682 + $0x10] sm:$0xff] %vm279, %v675
        %686 = vst.msk [vmem:[%s682 + $0x18] sm:$0xf] %vm283, %v677
        %v687 = vld [vmem:[#allocation2 + $0x3] sm:$0xff]
        %v688 = vld [vmem:[#allocation2 + $0xb] sm:$0xff]
        %v689 = vld [vmem:[#allocation2 + $0x13] sm:$0xff]
        %v690 = vld [vmem:[#allocation2 + $0x1b] sm:$0xf]
        %695 = vrot.lane.b32.xlu0 %v687, 124
        %v696 = vpop.permute.xlu0 %695
        %697 = vrot.lane.b32.xlu0 %v688, 124
        %v698 = vpop.permute.xlu0 %697
        %699 = vrot.lane.b32.xlu0 %v689, 124
        %v700 = vpop.permute.xlu0 %699
        %701 = vrot.lane.b32.xlu0 %v690, 124
        %v702 = vpop.permute.xlu0 %701
        %s707 = scalar_lea.vmem [#allocation3], 608
        %708 = vst.msk [vmem:[%s707] sm:$0xff] %vm279, %v696
        %709 = vst.msk [vmem:[%s707 + $0x8] sm:$0xff] %vm279, %v698
        %710 = vst.msk [vmem:[%s707 + $0x10] sm:$0xff] %vm279, %v700
        %711 = vst.msk [vmem:[%s707 + $0x18] sm:$0xf] %vm283, %v702
        %v712 = vld [vmem:[#allocation2 + $0x4] sm:$0xff]
        %v713 = vld [vmem:[#allocation2 + $0xc] sm:$0xff]
        %v714 = vld [vmem:[#allocation2 + $0x14] sm:$0xff]
        %v715 = vld [vmem:[#allocation2 + $0x1c] sm:$0xf]
        %s716 = scalar_lea.vmem [#allocation3], 640
        %717 = vst.msk [vmem:[%s716] sm:$0xff] %vm279, %v712
        %718 = vst.msk [vmem:[%s716 + $0x8] sm:$0xff] %vm279, %v713
        %719 = vst.msk [vmem:[%s716 + $0x10] sm:$0xff] %vm279, %v714
        %720 = vst.msk [vmem:[%s716 + $0x18] sm:$0xf] %vm283, %v715
        %v721 = vld [vmem:[#allocation2 + $0x4] sm:$0xff]
        %v722 = vld [vmem:[#allocation2 + $0xc] sm:$0xff]
        %v723 = vld [vmem:[#allocation2 + $0x14] sm:$0xff]
        %v724 = vld [vmem:[#allocation2 + $0x1c] sm:$0xf]
        %729 = vrot.lane.b32.xlu0 %v721, 127
        %v730 = vpop.permute.xlu0 %729
        %731 = vrot.lane.b32.xlu0 %v722, 127
        %v732 = vpop.permute.xlu0 %731
        %733 = vrot.lane.b32.xlu0 %v723, 127
        %v734 = vpop.permute.xlu0 %733
        %735 = vrot.lane.b32.xlu0 %v724, 127
        %v736 = vpop.permute.xlu0 %735
        %s741 = scalar_lea.vmem [#allocation3], 672
        %742 = vst.msk [vmem:[%s741] sm:$0xff] %vm279, %v730
        %743 = vst.msk [vmem:[%s741 + $0x8] sm:$0xff] %vm279, %v732
        %744 = vst.msk [vmem:[%s741 + $0x10] sm:$0xff] %vm279, %v734
        %745 = vst.msk [vmem:[%s741 + $0x18] sm:$0xf] %vm283, %v736
        %v746 = vld [vmem:[#allocation2 + $0x4] sm:$0xff]
        %v747 = vld [vmem:[#allocation2 + $0xc] sm:$0xff]
        %v748 = vld [vmem:[#allocation2 + $0x14] sm:$0xff]
        %v749 = vld [vmem:[#allocation2 + $0x1c] sm:$0xf]
        %754 = vrot.lane.b32.xlu0 %v746, 126
        %v755 = vpop.permute.xlu0 %754
        %756 = vrot.lane.b32.xlu0 %v747, 126
        %v757 = vpop.permute.xlu0 %756
        %758 = vrot.lane.b32.xlu0 %v748, 126
        %v759 = vpop.permute.xlu0 %758
        %760 = vrot.lane.b32.xlu0 %v749, 126
        %v761 = vpop.permute.xlu0 %760
        %s766 = scalar_lea.vmem [#allocation3], 704
        %767 = vst.msk [vmem:[%s766] sm:$0xff] %vm279, %v755
        %768 = vst.msk [vmem:[%s766 + $0x8] sm:$0xff] %vm279, %v757
        %769 = vst.msk [vmem:[%s766 + $0x10] sm:$0xff] %vm279, %v759
        %770 = vst.msk [vmem:[%s766 + $0x18] sm:$0xf] %vm283, %v761
        %v771 = vld [vmem:[#allocation2 + $0x4] sm:$0xff]
        %v772 = vld [vmem:[#allocation2 + $0xc] sm:$0xff]
        %v773 = vld [vmem:[#allocation2 + $0x14] sm:$0xff]
        %v774 = vld [vmem:[#allocation2 + $0x1c] sm:$0xf]
        %779 = vrot.lane.b32.xlu0 %v771, 125
        %v780 = vpop.permute.xlu0 %779
        %781 = vrot.lane.b32.xlu0 %v772, 125
        %v782 = vpop.permute.xlu0 %781
        %783 = vrot.lane.b32.xlu0 %v773, 125
        %v784 = vpop.permute.xlu0 %783
        %785 = vrot.lane.b32.xlu0 %v774, 125
        %v786 = vpop.permute.xlu0 %785
        %s791 = scalar_lea.vmem [#allocation3], 736
        %792 = vst.msk [vmem:[%s791] sm:$0xff] %vm279, %v780
        %793 = vst.msk [vmem:[%s791 + $0x8] sm:$0xff] %vm279, %v782
        %794 = vst.msk [vmem:[%s791 + $0x10] sm:$0xff] %vm279, %v784
        %795 = vst.msk [vmem:[%s791 + $0x18] sm:$0xf] %vm283, %v786
        %v796 = vld [vmem:[#allocation2 + $0x4] sm:$0xff]
        %v797 = vld [vmem:[#allocation2 + $0xc] sm:$0xff]
        %v798 = vld [vmem:[#allocation2 + $0x14] sm:$0xff]
        %v799 = vld [vmem:[#allocation2 + $0x1c] sm:$0xf]
        %804 = vrot.lane.b32.xlu0 %v796, 124
        %v805 = vpop.permute.xlu0 %804
        %806 = vrot.lane.b32.xlu0 %v797, 124
        %v807 = vpop.permute.xlu0 %806
        %808 = vrot.lane.b32.xlu0 %v798, 124
        %v809 = vpop.permute.xlu0 %808
        %810 = vrot.lane.b32.xlu0 %v799, 124
        %v811 = vpop.permute.xlu0 %810
        %s816 = scalar_lea.vmem [#allocation3], 768
        %817 = vst.msk [vmem:[%s816] sm:$0xff] %vm279, %v805
        %818 = vst.msk [vmem:[%s816 + $0x8] sm:$0xff] %vm279, %v807
        %819 = vst.msk [vmem:[%s816 + $0x10] sm:$0xff] %vm279, %v809
        %820 = vst.msk [vmem:[%s816 + $0x18] sm:$0xf] %vm283, %v811
        %s821 = sld [smem:[#allocation4]]
        %v822 = vld [vmem:[#allocation3] sm:$0xff]
        %v823 = vld [vmem:[#allocation3 + $0x8] sm:$0xff]
        %v824 = vld [vmem:[#allocation3 + $0x10] sm:$0xff]
        %v825 = vld [vmem:[#allocation3 + $0x18] sm:$0xf]
        %v826 = vstv %s821
        %v827 = vmul.f32 %v826, %v822
        %v828 = vmul.f32 %v826, %v823
        %v829 = vmul.f32 %v826, %v824
        %v830 = vmul.f32 %v826, %v825
        %s831 = sld [smem:[#allocation4 + $0x1]]
        %v832 = vld [vmem:[%s305] sm:$0xff]
        %v833 = vld [vmem:[%s305 + $0x8] sm:$0xff]
        %v834 = vld [vmem:[%s305 + $0x10] sm:$0xff]
        %v835 = vld [vmem:[%s305 + $0x18] sm:$0xf]
        %v836 = vstv %s831
        %v837 = vmul.f32 %v836, %v832
        %v838 = vmul.f32 %v836, %v833
        %v839 = vmul.f32 %v836, %v834
        %v840 = vmul.f32 %v836, %v835
        %v841 = vadd.f32 %v827, %v837
        %v842 = vadd.f32 %v828, %v838
        %v843 = vadd.f32 %v829, %v839
        %v844 = vadd.f32 %v830, %v840
        %s845 = sld [smem:[#allocation4 + $0x2]]
        %v846 = vld [vmem:[%s330] sm:$0xff]
        %v847 = vld [vmem:[%s330 + $0x8] sm:$0xff]
        %v848 = vld [vmem:[%s330 + $0x10] sm:$0xff]
        %v849 = vld [vmem:[%s330 + $0x18] sm:$0xf]
        %v850 = vstv %s845
        %v851 = vmul.f32 %v850, %v846
        %v852 = vmul.f32 %v850, %v847
        %v853 = vmul.f32 %v850, %v848
        %v854 = vmul.f32 %v850, %v849
        %v855 = vadd.f32 %v841, %v851
        %v856 = vadd.f32 %v842, %v852
        %v857 = vadd.f32 %v843, %v853
        %v858 = vadd.f32 %v844, %v854
        %s859 = sld [smem:[#allocation4 + $0x3]]
        %v860 = vld [vmem:[%s355] sm:$0xff]
        %v861 = vld [vmem:[%s355 + $0x8] sm:$0xff]
        %v862 = vld [vmem:[%s355 + $0x10] sm:$0xff]
        %v863 = vld [vmem:[%s355 + $0x18] sm:$0xf]
        %v864 = vstv %s859
        %v865 = vmul.f32 %v864, %v860
        %v866 = vmul.f32 %v864, %v861
        %v867 = vmul.f32 %v864, %v862
        %v868 = vmul.f32 %v864, %v863
        %v869 = vadd.f32 %v855, %v865
        %v870 = vadd.f32 %v856, %v866
        %v871 = vadd.f32 %v857, %v867
        %v872 = vadd.f32 %v858, %v868
        %s873 = sld [smem:[#allocation4 + $0x4]]
        %v874 = vld [vmem:[%s380] sm:$0xff]
        %v875 = vld [vmem:[%s380 + $0x8] sm:$0xff]
        %v876 = vld [vmem:[%s380 + $0x10] sm:$0xff]
        %v877 = vld [vmem:[%s380 + $0x18] sm:$0xf]
        %v878 = vstv %s873
        %v879 = vmul.f32 %v878, %v874
        %v880 = vmul.f32 %v878, %v875
        %v881 = vmul.f32 %v878, %v876
        %v882 = vmul.f32 %v878, %v877
        %v883 = vadd.f32 %v869, %v879
        %v884 = vadd.f32 %v870, %v880
        %v885 = vadd.f32 %v871, %v881
        %v886 = vadd.f32 %v872, %v882
        %s887 = sld [smem:[#allocation4 + $0x5]]
        %v888 = vld [vmem:[%s389] sm:$0xff]
        %v889 = vld [vmem:[%s389 + $0x8] sm:$0xff]
        %v890 = vld [vmem:[%s389 + $0x10] sm:$0xff]
        %v891 = vld [vmem:[%s389 + $0x18] sm:$0xf]
        %v892 = vstv %s887
        %v893 = vmul.f32 %v892, %v888
        %v894 = vmul.f32 %v892, %v889
        %v895 = vmul.f32 %v892, %v890
        %v896 = vmul.f32 %v892, %v891
        %v897 = vadd.f32 %v883, %v893
        %v898 = vadd.f32 %v884, %v894
        %v899 = vadd.f32 %v885, %v895
        %v900 = vadd.f32 %v886, %v896
        %s901 = sld [smem:[#allocation4 + $0x6]]
        %v902 = vld [vmem:[%s414] sm:$0xff]
        %v903 = vld [vmem:[%s414 + $0x8] sm:$0xff]
        %v904 = vld [vmem:[%s414 + $0x10] sm:$0xff]
        %v905 = vld [vmem:[%s414 + $0x18] sm:$0xf]
        %v906 = vstv %s901
        %v907 = vmul.f32 %v906, %v902
        %v908 = vmul.f32 %v906, %v903
        %v909 = vmul.f32 %v906, %v904
        %v910 = vmul.f32 %v906, %v905
        %v911 = vadd.f32 %v897, %v907
        %v912 = vadd.f32 %v898, %v908
        %v913 = vadd.f32 %v899, %v909
        %v914 = vadd.f32 %v900, %v910
        %s915 = sld [smem:[#allocation4 + $0x7]]
        %v916 = vld [vmem:[%s439] sm:$0xff]
        %v917 = vld [vmem:[%s439 + $0x8] sm:$0xff]
        %v918 = vld [vmem:[%s439 + $0x10] sm:$0xff]
        %v919 = vld [vmem:[%s439 + $0x18] sm:$0xf]
        %v920 = vstv %s915
        %v921 = vmul.f32 %v920, %v916
        %v922 = vmul.f32 %v920, %v917
        %v923 = vmul.f32 %v920, %v918
        %v924 = vmul.f32 %v920, %v919
        %v925 = vadd.f32 %v911, %v921
        %v926 = vadd.f32 %v912, %v922
        %v927 = vadd.f32 %v913, %v923
        %v928 = vadd.f32 %v914, %v924
        %s929 = sld [smem:[#allocation4 + $0x8]]
        %v930 = vld [vmem:[%s464] sm:$0xff]
        %v931 = vld [vmem:[%s464 + $0x8] sm:$0xff]
        %v932 = vld [vmem:[%s464 + $0x10] sm:$0xff]
        %v933 = vld [vmem:[%s464 + $0x18] sm:$0xf]
        %v934 = vstv %s929
        %v935 = vmul.f32 %v934, %v930
        %v936 = vmul.f32 %v934, %v931
        %v937 = vmul.f32 %v934, %v932
        %v938 = vmul.f32 %v934, %v933
        %v939 = vadd.f32 %v925, %v935
        %v940 = vadd.f32 %v926, %v936
        %v941 = vadd.f32 %v927, %v937
        %v942 = vadd.f32 %v928, %v938
        %s943 = sld [smem:[#allocation4 + $0x9]]
        %v944 = vld [vmem:[%s489] sm:$0xff]
        %v945 = vld [vmem:[%s489 + $0x8] sm:$0xff]
        %v946 = vld [vmem:[%s489 + $0x10] sm:$0xff]
        %v947 = vld [vmem:[%s489 + $0x18] sm:$0xf]
        %v948 = vstv %s943
        %v949 = vmul.f32 %v948, %v944
        %v950 = vmul.f32 %v948, %v945
        %v951 = vmul.f32 %v948, %v946
        %v952 = vmul.f32 %v948, %v947
        %v953 = vadd.f32 %v939, %v949
        %v954 = vadd.f32 %v940, %v950
        %v955 = vadd.f32 %v941, %v951
        %v956 = vadd.f32 %v942, %v952
        %s957 = sld [smem:[#allocation4 + $0xa]]
        %v958 = vld [vmem:[%s498] sm:$0xff]
        %v959 = vld [vmem:[%s498 + $0x8] sm:$0xff]
        %v960 = vld [vmem:[%s498 + $0x10] sm:$0xff]
        %v961 = vld [vmem:[%s498 + $0x18] sm:$0xf]
        %v962 = vstv %s957
        %v963 = vmul.f32 %v962, %v958
        %v964 = vmul.f32 %v962, %v959
        %v965 = vmul.f32 %v962, %v960
        %v966 = vmul.f32 %v962, %v961
        %v967 = vadd.f32 %v953, %v963
        %v968 = vadd.f32 %v954, %v964
        %v969 = vadd.f32 %v955, %v965
        %v970 = vadd.f32 %v956, %v966
        %s971 = sld [smem:[#allocation4 + $0xb]]
        %v972 = vld [vmem:[%s523] sm:$0xff]
        %v973 = vld [vmem:[%s523 + $0x8] sm:$0xff]
        %v974 = vld [vmem:[%s523 + $0x10] sm:$0xff]
        %v975 = vld [vmem:[%s523 + $0x18] sm:$0xf]
        %v976 = vstv %s971
        %v977 = vmul.f32 %v976, %v972
        %v978 = vmul.f32 %v976, %v973
        %v979 = vmul.f32 %v976, %v974
        %v980 = vmul.f32 %v976, %v975
        %v981 = vadd.f32 %v967, %v977
        %v982 = vadd.f32 %v968, %v978
        %v983 = vadd.f32 %v969, %v979
        %v984 = vadd.f32 %v970, %v980
        %s985 = sld [smem:[#allocation4 + $0xc]]
        %v986 = vld [vmem:[%s548] sm:$0xff]
        %v987 = vld [vmem:[%s548 + $0x8] sm:$0xff]
        %v988 = vld [vmem:[%s548 + $0x10] sm:$0xff]
        %v989 = vld [vmem:[%s548 + $0x18] sm:$0xf]
        %v990 = vstv %s985
        %v991 = vmul.f32 %v990, %v986
        %v992 = vmul.f32 %v990, %v987
        %v993 = vmul.f32 %v990, %v988
        %v994 = vmul.f32 %v990, %v989
        %v995 = vadd.f32 %v981, %v991
        %v996 = vadd.f32 %v982, %v992
        %v997 = vadd.f32 %v983, %v993
        %v998 = vadd.f32 %v984, %v994
        %s999 = sld [smem:[#allocation4 + $0xd]]
        %v1000 = vld [vmem:[%s573] sm:$0xff]
        %v1001 = vld [vmem:[%s573 + $0x8] sm:$0xff]
        %v1002 = vld [vmem:[%s573 + $0x10] sm:$0xff]
        %v1003 = vld [vmem:[%s573 + $0x18] sm:$0xf]
        %v1004 = vstv %s999
        %v1005 = vmul.f32 %v1004, %v1000
        %v1006 = vmul.f32 %v1004, %v1001
        %v1007 = vmul.f32 %v1004, %v1002
        %v1008 = vmul.f32 %v1004, %v1003
        %v1009 = vadd.f32 %v995, %v1005
        %v1010 = vadd.f32 %v996, %v1006
        %v1011 = vadd.f32 %v997, %v1007
        %v1012 = vadd.f32 %v998, %v1008
        %s1013 = sld [smem:[#allocation4 + $0xe]]
        %v1014 = vld [vmem:[%s598] sm:$0xff]
        %v1015 = vld [vmem:[%s598 + $0x8] sm:$0xff]
        %v1016 = vld [vmem:[%s598 + $0x10] sm:$0xff]
        %v1017 = vld [vmem:[%s598 + $0x18] sm:$0xf]
        %v1018 = vstv %s1013
        %v1019 = vmul.f32 %v1018, %v1014
        %v1020 = vmul.f32 %v1018, %v1015
        %v1021 = vmul.f32 %v1018, %v1016
        %v1022 = vmul.f32 %v1018, %v1017
        %v1023 = vadd.f32 %v1009, %v1019
        %v1024 = vadd.f32 %v1010, %v1020
        %v1025 = vadd.f32 %v1011, %v1021
        %v1026 = vadd.f32 %v1012, %v1022
        %s1027 = sld [smem:[#allocation4 + $0xf]]
        %v1028 = vld [vmem:[%s607] sm:$0xff]
        %v1029 = vld [vmem:[%s607 + $0x8] sm:$0xff]
        %v1030 = vld [vmem:[%s607 + $0x10] sm:$0xff]
        %v1031 = vld [vmem:[%s607 + $0x18] sm:$0xf]
        %v1032 = vstv %s1027
        %v1033 = vmul.f32 %v1032, %v1028
        %v1034 = vmul.f32 %v1032, %v1029
        %v1035 = vmul.f32 %v1032, %v1030
        %v1036 = vmul.f32 %v1032, %v1031
        %v1037 = vadd.f32 %v1023, %v1033
        %v1038 = vadd.f32 %v1024, %v1034
        %v1039 = vadd.f32 %v1025, %v1035
        %v1040 = vadd.f32 %v1026, %v1036
        %s1041 = sld [smem:[#allocation4 + $0x10]]
        %v1042 = vld [vmem:[%s632] sm:$0xff]
        %v1043 = vld [vmem:[%s632 + $0x8] sm:$0xff]
        %v1044 = vld [vmem:[%s632 + $0x10] sm:$0xff]
        %v1045 = vld [vmem:[%s632 + $0x18] sm:$0xf]
        %v1046 = vstv %s1041
        %v1047 = vmul.f32 %v1046, %v1042
        %v1048 = vmul.f32 %v1046, %v1043
        %v1049 = vmul.f32 %v1046, %v1044
        %v1050 = vmul.f32 %v1046, %v1045
        %v1051 = vadd.f32 %v1037, %v1047
        %v1052 = vadd.f32 %v1038, %v1048
        %v1053 = vadd.f32 %v1039, %v1049
        %v1054 = vadd.f32 %v1040, %v1050
        %s1055 = sld [smem:[#allocation4 + $0x11]]
        %v1056 = vld [vmem:[%s657] sm:$0xff]
        %v1057 = vld [vmem:[%s657 + $0x8] sm:$0xff]
        %v1058 = vld [vmem:[%s657 + $0x10] sm:$0xff]
        %v1059 = vld [vmem:[%s657 + $0x18] sm:$0xf]
        %v1060 = vstv %s1055
        %v1061 = vmul.f32 %v1060, %v1056
        %v1062 = vmul.f32 %v1060, %v1057
        %v1063 = vmul.f32 %v1060, %v1058
        %v1064 = vmul.f32 %v1060, %v1059
        %v1065 = vadd.f32 %v1051, %v1061
        %v1066 = vadd.f32 %v1052, %v1062
        %v1067 = vadd.f32 %v1053, %v1063
        %v1068 = vadd.f32 %v1054, %v1064
        %s1069 = sld [smem:[#allocation4 + $0x12]]
        %v1070 = vld [vmem:[%s682] sm:$0xff]
        %v1071 = vld [vmem:[%s682 + $0x8] sm:$0xff]
        %v1072 = vld [vmem:[%s682 + $0x10] sm:$0xff]
        %v1073 = vld [vmem:[%s682 + $0x18] sm:$0xf]
        %v1074 = vstv %s1069
        %v1075 = vmul.f32 %v1074, %v1070
        %v1076 = vmul.f32 %v1074, %v1071
        %v1077 = vmul.f32 %v1074, %v1072
        %v1078 = vmul.f32 %v1074, %v1073
        %v1079 = vadd.f32 %v1065, %v1075
        %v1080 = vadd.f32 %v1066, %v1076
        %v1081 = vadd.f32 %v1067, %v1077
        %v1082 = vadd.f32 %v1068, %v1078
        %s1083 = sld [smem:[#allocation4 + $0x13]]
        %v1084 = vld [vmem:[%s707] sm:$0xff]
        %v1085 = vld [vmem:[%s707 + $0x8] sm:$0xff]
        %v1086 = vld [vmem:[%s707 + $0x10] sm:$0xff]
        %v1087 = vld [vmem:[%s707 + $0x18] sm:$0xf]
        %v1088 = vstv %s1083
        %v1089 = vmul.f32 %v1088, %v1084
        %v1090 = vmul.f32 %v1088, %v1085
        %v1091 = vmul.f32 %v1088, %v1086
        %v1092 = vmul.f32 %v1088, %v1087
        %v1093 = vadd.f32 %v1079, %v1089
        %v1094 = vadd.f32 %v1080, %v1090
        %v1095 = vadd.f32 %v1081, %v1091
        %v1096 = vadd.f32 %v1082, %v1092
        %s1097 = sld [smem:[#allocation4 + $0x14]]
        %v1098 = vld [vmem:[%s716] sm:$0xff]
        %v1099 = vld [vmem:[%s716 + $0x8] sm:$0xff]
        %v1100 = vld [vmem:[%s716 + $0x10] sm:$0xff]
        %v1101 = vld [vmem:[%s716 + $0x18] sm:$0xf]
        %v1102 = vstv %s1097
        %v1103 = vmul.f32 %v1102, %v1098
        %v1104 = vmul.f32 %v1102, %v1099
        %v1105 = vmul.f32 %v1102, %v1100
        %v1106 = vmul.f32 %v1102, %v1101
        %v1107 = vadd.f32 %v1093, %v1103
        %v1108 = vadd.f32 %v1094, %v1104
        %v1109 = vadd.f32 %v1095, %v1105
        %v1110 = vadd.f32 %v1096, %v1106
        %s1111 = sld [smem:[#allocation4 + $0x15]]
        %v1112 = vld [vmem:[%s741] sm:$0xff]
        %v1113 = vld [vmem:[%s741 + $0x8] sm:$0xff]
        %v1114 = vld [vmem:[%s741 + $0x10] sm:$0xff]
        %v1115 = vld [vmem:[%s741 + $0x18] sm:$0xf]
        %v1116 = vstv %s1111
        %v1117 = vmul.f32 %v1116, %v1112
        %v1118 = vmul.f32 %v1116, %v1113
        %v1119 = vmul.f32 %v1116, %v1114
        %v1120 = vmul.f32 %v1116, %v1115
        %v1121 = vadd.f32 %v1107, %v1117
        %v1122 = vadd.f32 %v1108, %v1118
        %v1123 = vadd.f32 %v1109, %v1119
        %v1124 = vadd.f32 %v1110, %v1120
        %s1125 = sld [smem:[#allocation4 + $0x16]]
        %v1126 = vld [vmem:[%s766] sm:$0xff]
        %v1127 = vld [vmem:[%s766 + $0x8] sm:$0xff]
        %v1128 = vld [vmem:[%s766 + $0x10] sm:$0xff]
        %v1129 = vld [vmem:[%s766 + $0x18] sm:$0xf]
        %v1130 = vstv %s1125
        %v1131 = vmul.f32 %v1130, %v1126
        %v1132 = vmul.f32 %v1130, %v1127
        %v1133 = vmul.f32 %v1130, %v1128
        %v1134 = vmul.f32 %v1130, %v1129
        %v1135 = vadd.f32 %v1121, %v1131
        %v1136 = vadd.f32 %v1122, %v1132
        %v1137 = vadd.f32 %v1123, %v1133
        %v1138 = vadd.f32 %v1124, %v1134
        %s1139 = sld [smem:[#allocation4 + $0x17]]
        %v1140 = vld [vmem:[%s791] sm:$0xff]
        %v1141 = vld [vmem:[%s791 + $0x8] sm:$0xff]
        %v1142 = vld [vmem:[%s791 + $0x10] sm:$0xff]
        %v1143 = vld [vmem:[%s791 + $0x18] sm:$0xf]
        %v1144 = vstv %s1139
        %v1145 = vmul.f32 %v1144, %v1140
        %v1146 = vmul.f32 %v1144, %v1141
        %v1147 = vmul.f32 %v1144, %v1142
        %v1148 = vmul.f32 %v1144, %v1143
        %v1149 = vadd.f32 %v1135, %v1145
        %v1150 = vadd.f32 %v1136, %v1146
        %v1151 = vadd.f32 %v1137, %v1147
        %v1152 = vadd.f32 %v1138, %v1148
        %s1153 = sld [smem:[#allocation4 + $0x18]]
        %v1154 = vld [vmem:[%s816] sm:$0xff]
        %v1155 = vld [vmem:[%s816 + $0x8] sm:$0xff]
        %v1156 = vld [vmem:[%s816 + $0x10] sm:$0xff]
        %v1157 = vld [vmem:[%s816 + $0x18] sm:$0xf]
        %v1158 = vstv %s1153
        %v1159 = vmul.f32 %v1158, %v1154
        %v1160 = vmul.f32 %v1158, %v1155
        %v1161 = vmul.f32 %v1158, %v1156
        %v1162 = vmul.f32 %v1158, %v1157
        %v1163 = vadd.f32 %v1149, %v1159
        %v1164 = vadd.f32 %v1150, %v1160
        %v1165 = vadd.f32 %v1151, %v1161
        %v1166 = vadd.f32 %v1152, %v1162
        %vm1167 = vcmask 228352
        %1168 = vst.msk [vmem:[%s162] sm:$0xff] %vm1167, %v1163
        %1169 = vst.msk [vmem:[%s162 + $0x8] sm:$0xff] %vm1167, %v1164
        %1170 = vst.msk [vmem:[%s162 + $0x10] sm:$0xff] %vm1167, %v1165
        %vm1171 = vcmask 224256
        %1172 = vst.msk [vmem:[%s162 + $0x18] sm:$0xf] %vm1171, %v1166
        %1177 = vrot.lane.b32.xlu0 %v1163, 96
        %v1178 = vpop.permute.xlu0 %1177
        %1179 = vrot.lane.b32.xlu0 %v1164, 96
        %v1180 = vpop.permute.xlu0 %1179
        %1181 = vrot.lane.b32.xlu0 %v1165, 96
        %v1182 = vpop.permute.xlu0 %1181
        %1183 = vrot.lane.b32.xlu0 %v1166, 96
        %v1184 = vpop.permute.xlu0 %1183
        %s1189 = scalar_lea.vmem %s162, 320
        %1190 = vst.msk [vmem:[%s1189] sm:$0xff] %vm1167, %v1178
        %1191 = vst.msk [vmem:[%s1189 + $0x8] sm:$0xff] %vm1167, %v1180
        %1192 = vst.msk [vmem:[%s1189 + $0x10] sm:$0xff] %vm1167, %v1182
        %1193 = vst.msk [vmem:[%s1189 + $0x18] sm:$0xf] %vm1171, %v1184
        %1194 = vrot.lane.b32.xlu0 %v1163, 64
        %v1195 = vpop.permute.xlu0 %1194
        %1196 = vrot.lane.b32.xlu0 %v1164, 64
        %v1197 = vpop.permute.xlu0 %1196
        %1198 = vrot.lane.b32.xlu0 %v1165, 64
        %v1199 = vpop.permute.xlu0 %1198
        %1200 = vrot.lane.b32.xlu0 %v1166, 64
        %v1201 = vpop.permute.xlu0 %1200
        %s1206 = scalar_lea.vmem %s162, 640
        %1207 = vst.msk [vmem:[%s1206] sm:$0xff] %vm1167, %v1195
        %1208 = vst.msk [vmem:[%s1206 + $0x8] sm:$0xff] %vm1167, %v1197
        %1209 = vst.msk [vmem:[%s1206 + $0x10] sm:$0xff] %vm1167, %v1199
        %1210 = vst.msk [vmem:[%s1206 + $0x18] sm:$0xf] %vm1171, %v1201
        %1211 = vrot.lane.b32.xlu0 %v1163, 32
        %v1212 = vpop.permute.xlu0 %1211
        %1213 = vrot.lane.b32.xlu0 %v1164, 32
        %v1214 = vpop.permute.xlu0 %1213
        %1215 = vrot.lane.b32.xlu0 %v1165, 32
        %v1216 = vpop.permute.xlu0 %1215
        %1217 = vrot.lane.b32.xlu0 %v1166, 32
        %v1218 = vpop.permute.xlu0 %1217
        %s1223 = scalar_lea.vmem %s162, 960
        %1224 = vst.msk [vmem:[%s1223] sm:$0xff] %vm1167, %v1212
        %1225 = vst.msk [vmem:[%s1223 + $0x8] sm:$0xff] %vm1167, %v1214
        %1226 = vst.msk [vmem:[%s1223 + $0x10] sm:$0xff] %vm1167, %v1216
        %1227 = vst.msk [vmem:[%s1223 + $0x18] sm:$0xf] %vm1171, %v1218
        %s1228 = sld [smem:[#allocation4 + $0x19]]
        %v1229 = vld [vmem:[#allocation3] sm:$0xff]
        %v1230 = vld [vmem:[#allocation3 + $0x8] sm:$0xff]
        %v1231 = vld [vmem:[#allocation3 + $0x10] sm:$0xff]
        %v1232 = vld [vmem:[#allocation3 + $0x18] sm:$0xf]
        %v1233 = vstv %s1228
        %v1234 = vmul.f32 %v1233, %v1229
        %v1235 = vmul.f32 %v1233, %v1230
        %v1236 = vmul.f32 %v1233, %v1231
        %v1237 = vmul.f32 %v1233, %v1232
        %s1238 = sld [smem:[#allocation4 + $0x1a]]
        %v1239 = vld [vmem:[%s305] sm:$0xff]
        %v1240 = vld [vmem:[%s305 + $0x8] sm:$0xff]
        %v1241 = vld [vmem:[%s305 + $0x10] sm:$0xff]
        %v1242 = vld [vmem:[%s305 + $0x18] sm:$0xf]
        %v1243 = vstv %s1238
        %v1244 = vmul.f32 %v1243, %v1239
        %v1245 = vmul.f32 %v1243, %v1240
        %v1246 = vmul.f32 %v1243, %v1241
        %v1247 = vmul.f32 %v1243, %v1242
        %v1248 = vadd.f32 %v1234, %v1244
        %v1249 = vadd.f32 %v1235, %v1245
        %v1250 = vadd.f32 %v1236, %v1246
        %v1251 = vadd.f32 %v1237, %v1247
        %s1252 = sld [smem:[#allocation4 + $0x1b]]
        %v1253 = vld [vmem:[%s330] sm:$0xff]
        %v1254 = vld [vmem:[%s330 + $0x8] sm:$0xff]
        %v1255 = vld [vmem:[%s330 + $0x10] sm:$0xff]
        %v1256 = vld [vmem:[%s330 + $0x18] sm:$0xf]
        %v1257 = vstv %s1252
        %v1258 = vmul.f32 %v1257, %v1253
        %v1259 = vmul.f32 %v1257, %v1254
        %v1260 = vmul.f32 %v1257, %v1255
        %v1261 = vmul.f32 %v1257, %v1256
        %v1262 = vadd.f32 %v1248, %v1258
        %v1263 = vadd.f32 %v1249, %v1259
        %v1264 = vadd.f32 %v1250, %v1260
        %v1265 = vadd.f32 %v1251, %v1261
        %s1266 = sld [smem:[#allocation4 + $0x1c]]
        %v1267 = vld [vmem:[%s355] sm:$0xff]
        %v1268 = vld [vmem:[%s355 + $0x8] sm:$0xff]
        %v1269 = vld [vmem:[%s355 + $0x10] sm:$0xff]
        %v1270 = vld [vmem:[%s355 + $0x18] sm:$0xf]
        %v1271 = vstv %s1266
        %v1272 = vmul.f32 %v1271, %v1267
        %v1273 = vmul.f32 %v1271, %v1268
        %v1274 = vmul.f32 %v1271, %v1269
        %v1275 = vmul.f32 %v1271, %v1270
        %v1276 = vadd.f32 %v1262, %v1272
        %v1277 = vadd.f32 %v1263, %v1273
        %v1278 = vadd.f32 %v1264, %v1274
        %v1279 = vadd.f32 %v1265, %v1275
        %s1280 = sld [smem:[#allocation4 + $0x1d]]
        %v1281 = vld [vmem:[%s380] sm:$0xff]
        %v1282 = vld [vmem:[%s380 + $0x8] sm:$0xff]
        %v1283 = vld [vmem:[%s380 + $0x10] sm:$0xff]
        %v1284 = vld [vmem:[%s380 + $0x18] sm:$0xf]
        %v1285 = vstv %s1280
        %v1286 = vmul.f32 %v1285, %v1281
        %v1287 = vmul.f32 %v1285, %v1282
        %v1288 = vmul.f32 %v1285, %v1283
        %v1289 = vmul.f32 %v1285, %v1284
        %v1290 = vadd.f32 %v1276, %v1286
        %v1291 = vadd.f32 %v1277, %v1287
        %v1292 = vadd.f32 %v1278, %v1288
        %v1293 = vadd.f32 %v1279, %v1289
        %s1294 = sld [smem:[#allocation4 + $0x1e]]
        %v1295 = vld [vmem:[%s389] sm:$0xff]
        %v1296 = vld [vmem:[%s389 + $0x8] sm:$0xff]
        %v1297 = vld [vmem:[%s389 + $0x10] sm:$0xff]
        %v1298 = vld [vmem:[%s389 + $0x18] sm:$0xf]
        %v1299 = vstv %s1294
        %v1300 = vmul.f32 %v1299, %v1295
        %v1301 = vmul.f32 %v1299, %v1296
        %v1302 = vmul.f32 %v1299, %v1297
        %v1303 = vmul.f32 %v1299, %v1298
        %v1304 = vadd.f32 %v1290, %v1300
        %v1305 = vadd.f32 %v1291, %v1301
        %v1306 = vadd.f32 %v1292, %v1302
        %v1307 = vadd.f32 %v1293, %v1303
        %s1308 = sld [smem:[#allocation4 + $0x1f]]
        %v1309 = vld [vmem:[%s414] sm:$0xff]
        %v1310 = vld [vmem:[%s414 + $0x8] sm:$0xff]
        %v1311 = vld [vmem:[%s414 + $0x10] sm:$0xff]
        %v1312 = vld [vmem:[%s414 + $0x18] sm:$0xf]
        %v1313 = vstv %s1308
        %v1314 = vmul.f32 %v1313, %v1309
        %v1315 = vmul.f32 %v1313, %v1310
        %v1316 = vmul.f32 %v1313, %v1311
        %v1317 = vmul.f32 %v1313, %v1312
        %v1318 = vadd.f32 %v1304, %v1314
        %v1319 = vadd.f32 %v1305, %v1315
        %v1320 = vadd.f32 %v1306, %v1316
        %v1321 = vadd.f32 %v1307, %v1317
        %s1322 = sld [smem:[#allocation4 + $0x20]]
        %v1323 = vld [vmem:[%s439] sm:$0xff]
        %v1324 = vld [vmem:[%s439 + $0x8] sm:$0xff]
        %v1325 = vld [vmem:[%s439 + $0x10] sm:$0xff]
        %v1326 = vld [vmem:[%s439 + $0x18] sm:$0xf]
        %v1327 = vstv %s1322
        %v1328 = vmul.f32 %v1327, %v1323
        %v1329 = vmul.f32 %v1327, %v1324
        %v1330 = vmul.f32 %v1327, %v1325
        %v1331 = vmul.f32 %v1327, %v1326
        %v1332 = vadd.f32 %v1318, %v1328
        %v1333 = vadd.f32 %v1319, %v1329
        %v1334 = vadd.f32 %v1320, %v1330
        %v1335 = vadd.f32 %v1321, %v1331
        %s1336 = sld [smem:[#allocation4 + $0x21]]
        %v1337 = vld [vmem:[%s464] sm:$0xff]
        %v1338 = vld [vmem:[%s464 + $0x8] sm:$0xff]
        %v1339 = vld [vmem:[%s464 + $0x10] sm:$0xff]
        %v1340 = vld [vmem:[%s464 + $0x18] sm:$0xf]
        %v1341 = vstv %s1336
        %v1342 = vmul.f32 %v1341, %v1337
        %v1343 = vmul.f32 %v1341, %v1338
        %v1344 = vmul.f32 %v1341, %v1339
        %v1345 = vmul.f32 %v1341, %v1340
        %v1346 = vadd.f32 %v1332, %v1342
        %v1347 = vadd.f32 %v1333, %v1343
        %v1348 = vadd.f32 %v1334, %v1344
        %v1349 = vadd.f32 %v1335, %v1345
        %s1350 = sld [smem:[#allocation4 + $0x22]]
        %v1351 = vld [vmem:[%s489] sm:$0xff]
        %v1352 = vld [vmem:[%s489 + $0x8] sm:$0xff]
        %v1353 = vld [vmem:[%s489 + $0x10] sm:$0xff]
        %v1354 = vld [vmem:[%s489 + $0x18] sm:$0xf]
        %v1355 = vstv %s1350
        %v1356 = vmul.f32 %v1355, %v1351
        %v1357 = vmul.f32 %v1355, %v1352
        %v1358 = vmul.f32 %v1355, %v1353
        %v1359 = vmul.f32 %v1355, %v1354
        %v1360 = vadd.f32 %v1346, %v1356
        %v1361 = vadd.f32 %v1347, %v1357
        %v1362 = vadd.f32 %v1348, %v1358
        %v1363 = vadd.f32 %v1349, %v1359
        %s1364 = sld [smem:[#allocation4 + $0x23]]
        %v1365 = vld [vmem:[%s498] sm:$0xff]
        %v1366 = vld [vmem:[%s498 + $0x8] sm:$0xff]
        %v1367 = vld [vmem:[%s498 + $0x10] sm:$0xff]
        %v1368 = vld [vmem:[%s498 + $0x18] sm:$0xf]
        %v1369 = vstv %s1364
        %v1370 = vmul.f32 %v1369, %v1365
        %v1371 = vmul.f32 %v1369, %v1366
        %v1372 = vmul.f32 %v1369, %v1367
        %v1373 = vmul.f32 %v1369, %v1368
        %v1374 = vadd.f32 %v1360, %v1370
        %v1375 = vadd.f32 %v1361, %v1371
        %v1376 = vadd.f32 %v1362, %v1372
        %v1377 = vadd.f32 %v1363, %v1373
        %s1378 = sld [smem:[#allocation4 + $0x24]]
        %v1379 = vld [vmem:[%s523] sm:$0xff]
        %v1380 = vld [vmem:[%s523 + $0x8] sm:$0xff]
        %v1381 = vld [vmem:[%s523 + $0x10] sm:$0xff]
        %v1382 = vld [vmem:[%s523 + $0x18] sm:$0xf]
        %v1383 = vstv %s1378
        %v1384 = vmul.f32 %v1383, %v1379
        %v1385 = vmul.f32 %v1383, %v1380
        %v1386 = vmul.f32 %v1383, %v1381
        %v1387 = vmul.f32 %v1383, %v1382
        %v1388 = vadd.f32 %v1374, %v1384
        %v1389 = vadd.f32 %v1375, %v1385
        %v1390 = vadd.f32 %v1376, %v1386
        %v1391 = vadd.f32 %v1377, %v1387
        %s1392 = sld [smem:[#allocation4 + $0x25]]
        %v1393 = vld [vmem:[%s548] sm:$0xff]
        %v1394 = vld [vmem:[%s548 + $0x8] sm:$0xff]
        %v1395 = vld [vmem:[%s548 + $0x10] sm:$0xff]
        %v1396 = vld [vmem:[%s548 + $0x18] sm:$0xf]
        %v1397 = vstv %s1392
        %v1398 = vmul.f32 %v1397, %v1393
        %v1399 = vmul.f32 %v1397, %v1394
        %v1400 = vmul.f32 %v1397, %v1395
        %v1401 = vmul.f32 %v1397, %v1396
        %v1402 = vadd.f32 %v1388, %v1398
        %v1403 = vadd.f32 %v1389, %v1399
        %v1404 = vadd.f32 %v1390, %v1400
        %v1405 = vadd.f32 %v1391, %v1401
        %s1406 = sld [smem:[#allocation4 + $0x26]]
        %v1407 = vld [vmem:[%s573] sm:$0xff]
        %v1408 = vld [vmem:[%s573 + $0x8] sm:$0xff]
        %v1409 = vld [vmem:[%s573 + $0x10] sm:$0xff]
        %v1410 = vld [vmem:[%s573 + $0x18] sm:$0xf]
        %v1411 = vstv %s1406
        %v1412 = vmul.f32 %v1411, %v1407
        %v1413 = vmul.f32 %v1411, %v1408
        %v1414 = vmul.f32 %v1411, %v1409
        %v1415 = vmul.f32 %v1411, %v1410
        %v1416 = vadd.f32 %v1402, %v1412
        %v1417 = vadd.f32 %v1403, %v1413
        %v1418 = vadd.f32 %v1404, %v1414
        %v1419 = vadd.f32 %v1405, %v1415
        %s1420 = sld [smem:[#allocation4 + $0x27]]
        %v1421 = vld [vmem:[%s598] sm:$0xff]
        %v1422 = vld [vmem:[%s598 + $0x8] sm:$0xff]
        %v1423 = vld [vmem:[%s598 + $0x10] sm:$0xff]
        %v1424 = vld [vmem:[%s598 + $0x18] sm:$0xf]
        %v1425 = vstv %s1420
        %v1426 = vmul.f32 %v1425, %v1421
        %v1427 = vmul.f32 %v1425, %v1422
        %v1428 = vmul.f32 %v1425, %v1423
        %v1429 = vmul.f32 %v1425, %v1424
        %v1430 = vadd.f32 %v1416, %v1426
        %v1431 = vadd.f32 %v1417, %v1427
        %v1432 = vadd.f32 %v1418, %v1428
        %v1433 = vadd.f32 %v1419, %v1429
        %s1434 = sld [smem:[#allocation4 + $0x28]]
        %v1435 = vld [vmem:[%s607] sm:$0xff]
        %v1436 = vld [vmem:[%s607 + $0x8] sm:$0xff]
        %v1437 = vld [vmem:[%s607 + $0x10] sm:$0xff]
        %v1438 = vld [vmem:[%s607 + $0x18] sm:$0xf]
        %v1439 = vstv %s1434
        %v1440 = vmul.f32 %v1439, %v1435
        %v1441 = vmul.f32 %v1439, %v1436
        %v1442 = vmul.f32 %v1439, %v1437
        %v1443 = vmul.f32 %v1439, %v1438
        %v1444 = vadd.f32 %v1430, %v1440
        %v1445 = vadd.f32 %v1431, %v1441
        %v1446 = vadd.f32 %v1432, %v1442
        %v1447 = vadd.f32 %v1433, %v1443
        %s1448 = sld [smem:[#allocation4 + $0x29]]
        %v1449 = vld [vmem:[%s632] sm:$0xff]
        %v1450 = vld [vmem:[%s632 + $0x8] sm:$0xff]
        %v1451 = vld [vmem:[%s632 + $0x10] sm:$0xff]
        %v1452 = vld [vmem:[%s632 + $0x18] sm:$0xf]
        %v1453 = vstv %s1448
        %v1454 = vmul.f32 %v1453, %v1449
        %v1455 = vmul.f32 %v1453, %v1450
        %v1456 = vmul.f32 %v1453, %v1451
        %v1457 = vmul.f32 %v1453, %v1452
        %v1458 = vadd.f32 %v1444, %v1454
        %v1459 = vadd.f32 %v1445, %v1455
        %v1460 = vadd.f32 %v1446, %v1456
        %v1461 = vadd.f32 %v1447, %v1457
        %s1462 = sld [smem:[#allocation4 + $0x2a]]
        %v1463 = vld [vmem:[%s657] sm:$0xff]
        %v1464 = vld [vmem:[%s657 + $0x8] sm:$0xff]
        %v1465 = vld [vmem:[%s657 + $0x10] sm:$0xff]
        %v1466 = vld [vmem:[%s657 + $0x18] sm:$0xf]
        %v1467 = vstv %s1462
        %v1468 = vmul.f32 %v1467, %v1463
        %v1469 = vmul.f32 %v1467, %v1464
        %v1470 = vmul.f32 %v1467, %v1465
        %v1471 = vmul.f32 %v1467, %v1466
        %v1472 = vadd.f32 %v1458, %v1468
        %v1473 = vadd.f32 %v1459, %v1469
        %v1474 = vadd.f32 %v1460, %v1470
        %v1475 = vadd.f32 %v1461, %v1471
        %s1476 = sld [smem:[#allocation4 + $0x2b]]
        %v1477 = vld [vmem:[%s682] sm:$0xff]
        %v1478 = vld [vmem:[%s682 + $0x8] sm:$0xff]
        %v1479 = vld [vmem:[%s682 + $0x10] sm:$0xff]
        %v1480 = vld [vmem:[%s682 + $0x18] sm:$0xf]
        %v1481 = vstv %s1476
        %v1482 = vmul.f32 %v1481, %v1477
        %v1483 = vmul.f32 %v1481, %v1478
        %v1484 = vmul.f32 %v1481, %v1479
        %v1485 = vmul.f32 %v1481, %v1480
        %v1486 = vadd.f32 %v1472, %v1482
        %v1487 = vadd.f32 %v1473, %v1483
        %v1488 = vadd.f32 %v1474, %v1484
        %v1489 = vadd.f32 %v1475, %v1485
        %s1490 = sld [smem:[#allocation4 + $0x2c]]
        %v1491 = vld [vmem:[%s707] sm:$0xff]
        %v1492 = vld [vmem:[%s707 + $0x8] sm:$0xff]
        %v1493 = vld [vmem:[%s707 + $0x10] sm:$0xff]
        %v1494 = vld [vmem:[%s707 + $0x18] sm:$0xf]
        %v1495 = vstv %s1490
        %v1496 = vmul.f32 %v1495, %v1491
        %v1497 = vmul.f32 %v1495, %v1492
        %v1498 = vmul.f32 %v1495, %v1493
        %v1499 = vmul.f32 %v1495, %v1494
        %v1500 = vadd.f32 %v1486, %v1496
        %v1501 = vadd.f32 %v1487, %v1497
        %v1502 = vadd.f32 %v1488, %v1498
        %v1503 = vadd.f32 %v1489, %v1499
        %s1504 = sld [smem:[#allocation4 + $0x2d]]
        %v1505 = vld [vmem:[%s716] sm:$0xff]
        %v1506 = vld [vmem:[%s716 + $0x8] sm:$0xff]
        %v1507 = vld [vmem:[%s716 + $0x10] sm:$0xff]
        %v1508 = vld [vmem:[%s716 + $0x18] sm:$0xf]
        %v1509 = vstv %s1504
        %v1510 = vmul.f32 %v1509, %v1505
        %v1511 = vmul.f32 %v1509, %v1506
        %v1512 = vmul.f32 %v1509, %v1507
        %v1513 = vmul.f32 %v1509, %v1508
        %v1514 = vadd.f32 %v1500, %v1510
        %v1515 = vadd.f32 %v1501, %v1511
        %v1516 = vadd.f32 %v1502, %v1512
        %v1517 = vadd.f32 %v1503, %v1513
        %s1518 = sld [smem:[#allocation4 + $0x2e]]
        %v1519 = vld [vmem:[%s741] sm:$0xff]
        %v1520 = vld [vmem:[%s741 + $0x8] sm:$0xff]
        %v1521 = vld [vmem:[%s741 + $0x10] sm:$0xff]
        %v1522 = vld [vmem:[%s741 + $0x18] sm:$0xf]
        %v1523 = vstv %s1518
        %v1524 = vmul.f32 %v1523, %v1519
        %v1525 = vmul.f32 %v1523, %v1520
        %v1526 = vmul.f32 %v1523, %v1521
        %v1527 = vmul.f32 %v1523, %v1522
        %v1528 = vadd.f32 %v1514, %v1524
        %v1529 = vadd.f32 %v1515, %v1525
        %v1530 = vadd.f32 %v1516, %v1526
        %v1531 = vadd.f32 %v1517, %v1527
        %s1532 = sld [smem:[#allocation4 + $0x2f]]
        %v1533 = vld [vmem:[%s766] sm:$0xff]
        %v1534 = vld [vmem:[%s766 + $0x8] sm:$0xff]
        %v1535 = vld [vmem:[%s766 + $0x10] sm:$0xff]
        %v1536 = vld [vmem:[%s766 + $0x18] sm:$0xf]
        %v1537 = vstv %s1532
        %v1538 = vmul.f32 %v1537, %v1533
        %v1539 = vmul.f32 %v1537, %v1534
        %v1540 = vmul.f32 %v1537, %v1535
        %v1541 = vmul.f32 %v1537, %v1536
        %v1542 = vadd.f32 %v1528, %v1538
        %v1543 = vadd.f32 %v1529, %v1539
        %v1544 = vadd.f32 %v1530, %v1540
        %v1545 = vadd.f32 %v1531, %v1541
        %s1546 = sld [smem:[#allocation4 + $0x30]]
        %v1547 = vld [vmem:[%s791] sm:$0xff]
        %v1548 = vld [vmem:[%s791 + $0x8] sm:$0xff]
        %v1549 = vld [vmem:[%s791 + $0x10] sm:$0xff]
        %v1550 = vld [vmem:[%s791 + $0x18] sm:$0xf]
        %v1551 = vstv %s1546
        %v1552 = vmul.f32 %v1551, %v1547
        %v1553 = vmul.f32 %v1551, %v1548
        %v1554 = vmul.f32 %v1551, %v1549
        %v1555 = vmul.f32 %v1551, %v1550
        %v1556 = vadd.f32 %v1542, %v1552
        %v1557 = vadd.f32 %v1543, %v1553
        %v1558 = vadd.f32 %v1544, %v1554
        %v1559 = vadd.f32 %v1545, %v1555
        %s1560 = sld [smem:[#allocation4 + $0x31]]
        %v1561 = vld [vmem:[%s816] sm:$0xff]
        %v1562 = vld [vmem:[%s816 + $0x8] sm:$0xff]
        %v1563 = vld [vmem:[%s816 + $0x10] sm:$0xff]
        %v1564 = vld [vmem:[%s816 + $0x18] sm:$0xf]
        %v1565 = vstv %s1560
        %v1566 = vmul.f32 %v1565, %v1561
        %v1567 = vmul.f32 %v1565, %v1562
        %v1568 = vmul.f32 %v1565, %v1563
        %v1569 = vmul.f32 %v1565, %v1564
        %v1570 = vadd.f32 %v1556, %v1566
        %v1571 = vadd.f32 %v1557, %v1567
        %v1572 = vadd.f32 %v1558, %v1568
        %v1573 = vadd.f32 %v1559, %v1569
        %s1574 = scalar_lea.vmem %s162, 32
        %1575 = vst.msk [vmem:[%s1574] sm:$0xff] %vm1167, %v1570
        %1576 = vst.msk [vmem:[%s1574 + $0x8] sm:$0xff] %vm1167, %v1571
        %1577 = vst.msk [vmem:[%s1574 + $0x10] sm:$0xff] %vm1167, %v1572
        %1578 = vst.msk [vmem:[%s1574 + $0x18] sm:$0xf] %vm1171, %v1573
        %1583 = vrot.lane.b32.xlu0 %v1570, 96
        %v1584 = vpop.permute.xlu0 %1583
        %1585 = vrot.lane.b32.xlu0 %v1571, 96
        %v1586 = vpop.permute.xlu0 %1585
        %1587 = vrot.lane.b32.xlu0 %v1572, 96
        %v1588 = vpop.permute.xlu0 %1587
        %1589 = vrot.lane.b32.xlu0 %v1573, 96
        %v1590 = vpop.permute.xlu0 %1589
        %s1595 = scalar_lea.vmem %s162, 352
        %1596 = vst.msk [vmem:[%s1595] sm:$0xff] %vm1167, %v1584
        %1597 = vst.msk [vmem:[%s1595 + $0x8] sm:$0xff] %vm1167, %v1586
        %1598 = vst.msk [vmem:[%s1595 + $0x10] sm:$0xff] %vm1167, %v1588
        %1599 = vst.msk [vmem:[%s1595 + $0x18] sm:$0xf] %vm1171, %v1590
        %1600 = vrot.lane.b32.xlu0 %v1570, 64
        %v1601 = vpop.permute.xlu0 %1600
        %1602 = vrot.lane.b32.xlu0 %v1571, 64
        %v1603 = vpop.permute.xlu0 %1602
        %1604 = vrot.lane.b32.xlu0 %v1572, 64
        %v1605 = vpop.permute.xlu0 %1604
        %1606 = vrot.lane.b32.xlu0 %v1573, 64
        %v1607 = vpop.permute.xlu0 %1606
        %s1612 = scalar_lea.vmem %s162, 672
        %1613 = vst.msk [vmem:[%s1612] sm:$0xff] %vm1167, %v1601
        %1614 = vst.msk [vmem:[%s1612 + $0x8] sm:$0xff] %vm1167, %v1603
        %1615 = vst.msk [vmem:[%s1612 + $0x10] sm:$0xff] %vm1167, %v1605
        %1616 = vst.msk [vmem:[%s1612 + $0x18] sm:$0xf] %vm1171, %v1607
        %1617 = vrot.lane.b32.xlu0 %v1570, 32
        %v1618 = vpop.permute.xlu0 %1617
        %1619 = vrot.lane.b32.xlu0 %v1571, 32
        %v1620 = vpop.permute.xlu0 %1619
        %1621 = vrot.lane.b32.xlu0 %v1572, 32
        %v1622 = vpop.permute.xlu0 %1621
        %1623 = vrot.lane.b32.xlu0 %v1573, 32
        %v1624 = vpop.permute.xlu0 %1623
        %s1629 = scalar_lea.vmem %s162, 992
        %1630 = vst.msk [vmem:[%s1629] sm:$0xff] %vm1167, %v1618
        %1631 = vst.msk [vmem:[%s1629 + $0x8] sm:$0xff] %vm1167, %v1620
        %1632 = vst.msk [vmem:[%s1629 + $0x10] sm:$0xff] %vm1167, %v1622
        %1633 = vst.msk [vmem:[%s1629 + $0x18] sm:$0xf] %vm1171, %v1624
        %s1634 = sld [smem:[#allocation4 + $0x32]]
        %v1635 = vld [vmem:[#allocation3] sm:$0xff]
        %v1636 = vld [vmem:[#allocation3 + $0x8] sm:$0xff]
        %v1637 = vld [vmem:[#allocation3 + $0x10] sm:$0xff]
        %v1638 = vld [vmem:[#allocation3 + $0x18] sm:$0xf]
        %v1639 = vstv %s1634
        %v1640 = vmul.f32 %v1639, %v1635
        %v1641 = vmul.f32 %v1639, %v1636
        %v1642 = vmul.f32 %v1639, %v1637
        %v1643 = vmul.f32 %v1639, %v1638
        %s1644 = sld [smem:[#allocation4 + $0x33]]
        %v1645 = vld [vmem:[%s305] sm:$0xff]
        %v1646 = vld [vmem:[%s305 + $0x8] sm:$0xff]
        %v1647 = vld [vmem:[%s305 + $0x10] sm:$0xff]
        %v1648 = vld [vmem:[%s305 + $0x18] sm:$0xf]
        %v1649 = vstv %s1644
        %v1650 = vmul.f32 %v1649, %v1645
        %v1651 = vmul.f32 %v1649, %v1646
        %v1652 = vmul.f32 %v1649, %v1647
        %v1653 = vmul.f32 %v1649, %v1648
        %v1654 = vadd.f32 %v1640, %v1650
        %v1655 = vadd.f32 %v1641, %v1651
        %v1656 = vadd.f32 %v1642, %v1652
        %v1657 = vadd.f32 %v1643, %v1653
        %s1658 = sld [smem:[#allocation4 + $0x34]]
        %v1659 = vld [vmem:[%s330] sm:$0xff]
        %v1660 = vld [vmem:[%s330 + $0x8] sm:$0xff]
        %v1661 = vld [vmem:[%s330 + $0x10] sm:$0xff]
        %v1662 = vld [vmem:[%s330 + $0x18] sm:$0xf]
        %v1663 = vstv %s1658
        %v1664 = vmul.f32 %v1663, %v1659
        %v1665 = vmul.f32 %v1663, %v1660
        %v1666 = vmul.f32 %v1663, %v1661
        %v1667 = vmul.f32 %v1663, %v1662
        %v1668 = vadd.f32 %v1654, %v1664
        %v1669 = vadd.f32 %v1655, %v1665
        %v1670 = vadd.f32 %v1656, %v1666
        %v1671 = vadd.f32 %v1657, %v1667
        %s1672 = sld [smem:[#allocation4 + $0x35]]
        %v1673 = vld [vmem:[%s355] sm:$0xff]
        %v1674 = vld [vmem:[%s355 + $0x8] sm:$0xff]
        %v1675 = vld [vmem:[%s355 + $0x10] sm:$0xff]
        %v1676 = vld [vmem:[%s355 + $0x18] sm:$0xf]
        %v1677 = vstv %s1672
        %v1678 = vmul.f32 %v1677, %v1673
        %v1679 = vmul.f32 %v1677, %v1674
        %v1680 = vmul.f32 %v1677, %v1675
        %v1681 = vmul.f32 %v1677, %v1676
        %v1682 = vadd.f32 %v1668, %v1678
        %v1683 = vadd.f32 %v1669, %v1679
        %v1684 = vadd.f32 %v1670, %v1680
        %v1685 = vadd.f32 %v1671, %v1681
        %s1686 = sld [smem:[#allocation4 + $0x36]]
        %v1687 = vld [vmem:[%s380] sm:$0xff]
        %v1688 = vld [vmem:[%s380 + $0x8] sm:$0xff]
        %v1689 = vld [vmem:[%s380 + $0x10] sm:$0xff]
        %v1690 = vld [vmem:[%s380 + $0x18] sm:$0xf]
        %v1691 = vstv %s1686
        %v1692 = vmul.f32 %v1691, %v1687
        %v1693 = vmul.f32 %v1691, %v1688
        %v1694 = vmul.f32 %v1691, %v1689
        %v1695 = vmul.f32 %v1691, %v1690
        %v1696 = vadd.f32 %v1682, %v1692
        %v1697 = vadd.f32 %v1683, %v1693
        %v1698 = vadd.f32 %v1684, %v1694
        %v1699 = vadd.f32 %v1685, %v1695
        %s1700 = sld [smem:[#allocation4 + $0x37]]
        %v1701 = vld [vmem:[%s389] sm:$0xff]
        %v1702 = vld [vmem:[%s389 + $0x8] sm:$0xff]
        %v1703 = vld [vmem:[%s389 + $0x10] sm:$0xff]
        %v1704 = vld [vmem:[%s389 + $0x18] sm:$0xf]
        %v1705 = vstv %s1700
        %v1706 = vmul.f32 %v1705, %v1701
        %v1707 = vmul.f32 %v1705, %v1702
        %v1708 = vmul.f32 %v1705, %v1703
        %v1709 = vmul.f32 %v1705, %v1704
        %v1710 = vadd.f32 %v1696, %v1706
        %v1711 = vadd.f32 %v1697, %v1707
        %v1712 = vadd.f32 %v1698, %v1708
        %v1713 = vadd.f32 %v1699, %v1709
        %s1714 = sld [smem:[#allocation4 + $0x38]]
        %v1715 = vld [vmem:[%s414] sm:$0xff]
        %v1716 = vld [vmem:[%s414 + $0x8] sm:$0xff]
        %v1717 = vld [vmem:[%s414 + $0x10] sm:$0xff]
        %v1718 = vld [vmem:[%s414 + $0x18] sm:$0xf]
        %v1719 = vstv %s1714
        %v1720 = vmul.f32 %v1719, %v1715
        %v1721 = vmul.f32 %v1719, %v1716
        %v1722 = vmul.f32 %v1719, %v1717
        %v1723 = vmul.f32 %v1719, %v1718
        %v1724 = vadd.f32 %v1710, %v1720
        %v1725 = vadd.f32 %v1711, %v1721
        %v1726 = vadd.f32 %v1712, %v1722
        %v1727 = vadd.f32 %v1713, %v1723
        %s1728 = sld [smem:[#allocation4 + $0x39]]
        %v1729 = vld [vmem:[%s439] sm:$0xff]
        %v1730 = vld [vmem:[%s439 + $0x8] sm:$0xff]
        %v1731 = vld [vmem:[%s439 + $0x10] sm:$0xff]
        %v1732 = vld [vmem:[%s439 + $0x18] sm:$0xf]
        %v1733 = vstv %s1728
        %v1734 = vmul.f32 %v1733, %v1729
        %v1735 = vmul.f32 %v1733, %v1730
        %v1736 = vmul.f32 %v1733, %v1731
        %v1737 = vmul.f32 %v1733, %v1732
        %v1738 = vadd.f32 %v1724, %v1734
        %v1739 = vadd.f32 %v1725, %v1735
        %v1740 = vadd.f32 %v1726, %v1736
        %v1741 = vadd.f32 %v1727, %v1737
        %s1742 = sld [smem:[#allocation4 + $0x3a]]
        %v1743 = vld [vmem:[%s464] sm:$0xff]
        %v1744 = vld [vmem:[%s464 + $0x8] sm:$0xff]
        %v1745 = vld [vmem:[%s464 + $0x10] sm:$0xff]
        %v1746 = vld [vmem:[%s464 + $0x18] sm:$0xf]
        %v1747 = vstv %s1742
        %v1748 = vmul.f32 %v1747, %v1743
        %v1749 = vmul.f32 %v1747, %v1744
        %v1750 = vmul.f32 %v1747, %v1745
        %v1751 = vmul.f32 %v1747, %v1746
        %v1752 = vadd.f32 %v1738, %v1748
        %v1753 = vadd.f32 %v1739, %v1749
        %v1754 = vadd.f32 %v1740, %v1750
        %v1755 = vadd.f32 %v1741, %v1751
        %s1756 = sld [smem:[#allocation4 + $0x3b]]
        %v1757 = vld [vmem:[%s489] sm:$0xff]
        %v1758 = vld [vmem:[%s489 + $0x8] sm:$0xff]
        %v1759 = vld [vmem:[%s489 + $0x10] sm:$0xff]
        %v1760 = vld [vmem:[%s489 + $0x18] sm:$0xf]
        %v1761 = vstv %s1756
        %v1762 = vmul.f32 %v1761, %v1757
        %v1763 = vmul.f32 %v1761, %v1758
        %v1764 = vmul.f32 %v1761, %v1759
        %v1765 = vmul.f32 %v1761, %v1760
        %v1766 = vadd.f32 %v1752, %v1762
        %v1767 = vadd.f32 %v1753, %v1763
        %v1768 = vadd.f32 %v1754, %v1764
        %v1769 = vadd.f32 %v1755, %v1765
        %s1770 = sld [smem:[#allocation4 + $0x3c]]
        %v1771 = vld [vmem:[%s498] sm:$0xff]
        %v1772 = vld [vmem:[%s498 + $0x8] sm:$0xff]
        %v1773 = vld [vmem:[%s498 + $0x10] sm:$0xff]
        %v1774 = vld [vmem:[%s498 + $0x18] sm:$0xf]
        %v1775 = vstv %s1770
        %v1776 = vmul.f32 %v1775, %v1771
        %v1777 = vmul.f32 %v1775, %v1772
        %v1778 = vmul.f32 %v1775, %v1773
        %v1779 = vmul.f32 %v1775, %v1774
        %v1780 = vadd.f32 %v1766, %v1776
        %v1781 = vadd.f32 %v1767, %v1777
        %v1782 = vadd.f32 %v1768, %v1778
        %v1783 = vadd.f32 %v1769, %v1779
        %s1784 = sld [smem:[#allocation4 + $0x3d]]
        %v1785 = vld [vmem:[%s523] sm:$0xff]
        %v1786 = vld [vmem:[%s523 + $0x8] sm:$0xff]
        %v1787 = vld [vmem:[%s523 + $0x10] sm:$0xff]
        %v1788 = vld [vmem:[%s523 + $0x18] sm:$0xf]
        %v1789 = vstv %s1784
        %v1790 = vmul.f32 %v1789, %v1785
        %v1791 = vmul.f32 %v1789, %v1786
        %v1792 = vmul.f32 %v1789, %v1787
        %v1793 = vmul.f32 %v1789, %v1788
        %v1794 = vadd.f32 %v1780, %v1790
        %v1795 = vadd.f32 %v1781, %v1791
        %v1796 = vadd.f32 %v1782, %v1792
        %v1797 = vadd.f32 %v1783, %v1793
        %s1798 = sld [smem:[#allocation4 + $0x3e]]
        %v1799 = vld [vmem:[%s548] sm:$0xff]
        %v1800 = vld [vmem:[%s548 + $0x8] sm:$0xff]
        %v1801 = vld [vmem:[%s548 + $0x10] sm:$0xff]
        %v1802 = vld [vmem:[%s548 + $0x18] sm:$0xf]
        %v1803 = vstv %s1798
        %v1804 = vmul.f32 %v1803, %v1799
        %v1805 = vmul.f32 %v1803, %v1800
        %v1806 = vmul.f32 %v1803, %v1801
        %v1807 = vmul.f32 %v1803, %v1802
        %v1808 = vadd.f32 %v1794, %v1804
        %v1809 = vadd.f32 %v1795, %v1805
        %v1810 = vadd.f32 %v1796, %v1806
        %v1811 = vadd.f32 %v1797, %v1807
        %s1812 = sld [smem:[#allocation4 + $0x3f]]
        %v1813 = vld [vmem:[%s573] sm:$0xff]
        %v1814 = vld [vmem:[%s573 + $0x8] sm:$0xff]
        %v1815 = vld [vmem:[%s573 + $0x10] sm:$0xff]
        %v1816 = vld [vmem:[%s573 + $0x18] sm:$0xf]
        %v1817 = vstv %s1812
        %v1818 = vmul.f32 %v1817, %v1813
        %v1819 = vmul.f32 %v1817, %v1814
        %v1820 = vmul.f32 %v1817, %v1815
        %v1821 = vmul.f32 %v1817, %v1816
        %v1822 = vadd.f32 %v1808, %v1818
        %v1823 = vadd.f32 %v1809, %v1819
        %v1824 = vadd.f32 %v1810, %v1820
        %v1825 = vadd.f32 %v1811, %v1821
        %s1826 = sld [smem:[#allocation4 + $0x40]]
        %v1827 = vld [vmem:[%s598] sm:$0xff]
        %v1828 = vld [vmem:[%s598 + $0x8] sm:$0xff]
        %v1829 = vld [vmem:[%s598 + $0x10] sm:$0xff]
        %v1830 = vld [vmem:[%s598 + $0x18] sm:$0xf]
        %v1831 = vstv %s1826
        %v1832 = vmul.f32 %v1831, %v1827
        %v1833 = vmul.f32 %v1831, %v1828
        %v1834 = vmul.f32 %v1831, %v1829
        %v1835 = vmul.f32 %v1831, %v1830
        %v1836 = vadd.f32 %v1822, %v1832
        %v1837 = vadd.f32 %v1823, %v1833
        %v1838 = vadd.f32 %v1824, %v1834
        %v1839 = vadd.f32 %v1825, %v1835
        %s1840 = sld [smem:[#allocation4 + $0x41]]
        %v1841 = vld [vmem:[%s607] sm:$0xff]
        %v1842 = vld [vmem:[%s607 + $0x8] sm:$0xff]
        %v1843 = vld [vmem:[%s607 + $0x10] sm:$0xff]
        %v1844 = vld [vmem:[%s607 + $0x18] sm:$0xf]
        %v1845 = vstv %s1840
        %v1846 = vmul.f32 %v1845, %v1841
        %v1847 = vmul.f32 %v1845, %v1842
        %v1848 = vmul.f32 %v1845, %v1843
        %v1849 = vmul.f32 %v1845, %v1844
        %v1850 = vadd.f32 %v1836, %v1846
        %v1851 = vadd.f32 %v1837, %v1847
        %v1852 = vadd.f32 %v1838, %v1848
        %v1853 = vadd.f32 %v1839, %v1849
        %s1854 = sld [smem:[#allocation4 + $0x42]]
        %v1855 = vld [vmem:[%s632] sm:$0xff]
        %v1856 = vld [vmem:[%s632 + $0x8] sm:$0xff]
        %v1857 = vld [vmem:[%s632 + $0x10] sm:$0xff]
        %v1858 = vld [vmem:[%s632 + $0x18] sm:$0xf]
        %v1859 = vstv %s1854
        %v1860 = vmul.f32 %v1859, %v1855
        %v1861 = vmul.f32 %v1859, %v1856
        %v1862 = vmul.f32 %v1859, %v1857
        %v1863 = vmul.f32 %v1859, %v1858
        %v1864 = vadd.f32 %v1850, %v1860
        %v1865 = vadd.f32 %v1851, %v1861
        %v1866 = vadd.f32 %v1852, %v1862
        %v1867 = vadd.f32 %v1853, %v1863
        %s1868 = sld [smem:[#allocation4 + $0x43]]
        %v1869 = vld [vmem:[%s657] sm:$0xff]
        %v1870 = vld [vmem:[%s657 + $0x8] sm:$0xff]
        %v1871 = vld [vmem:[%s657 + $0x10] sm:$0xff]
        %v1872 = vld [vmem:[%s657 + $0x18] sm:$0xf]
        %v1873 = vstv %s1868
        %v1874 = vmul.f32 %v1873, %v1869
        %v1875 = vmul.f32 %v1873, %v1870
        %v1876 = vmul.f32 %v1873, %v1871
        %v1877 = vmul.f32 %v1873, %v1872
        %v1878 = vadd.f32 %v1864, %v1874
        %v1879 = vadd.f32 %v1865, %v1875
        %v1880 = vadd.f32 %v1866, %v1876
        %v1881 = vadd.f32 %v1867, %v1877
        %s1882 = sld [smem:[#allocation4 + $0x44]]
        %v1883 = vld [vmem:[%s682] sm:$0xff]
        %v1884 = vld [vmem:[%s682 + $0x8] sm:$0xff]
        %v1885 = vld [vmem:[%s682 + $0x10] sm:$0xff]
        %v1886 = vld [vmem:[%s682 + $0x18] sm:$0xf]
        %v1887 = vstv %s1882
        %v1888 = vmul.f32 %v1887, %v1883
        %v1889 = vmul.f32 %v1887, %v1884
        %v1890 = vmul.f32 %v1887, %v1885
        %v1891 = vmul.f32 %v1887, %v1886
        %v1892 = vadd.f32 %v1878, %v1888
        %v1893 = vadd.f32 %v1879, %v1889
        %v1894 = vadd.f32 %v1880, %v1890
        %v1895 = vadd.f32 %v1881, %v1891
        %s1896 = sld [smem:[#allocation4 + $0x45]]
        %v1897 = vld [vmem:[%s707] sm:$0xff]
        %v1898 = vld [vmem:[%s707 + $0x8] sm:$0xff]
        %v1899 = vld [vmem:[%s707 + $0x10] sm:$0xff]
        %v1900 = vld [vmem:[%s707 + $0x18] sm:$0xf]
        %v1901 = vstv %s1896
        %v1902 = vmul.f32 %v1901, %v1897
        %v1903 = vmul.f32 %v1901, %v1898
        %v1904 = vmul.f32 %v1901, %v1899
        %v1905 = vmul.f32 %v1901, %v1900
        %v1906 = vadd.f32 %v1892, %v1902
        %v1907 = vadd.f32 %v1893, %v1903
        %v1908 = vadd.f32 %v1894, %v1904
        %v1909 = vadd.f32 %v1895, %v1905
        %s1910 = sld [smem:[#allocation4 + $0x46]]
        %v1911 = vld [vmem:[%s716] sm:$0xff]
        %v1912 = vld [vmem:[%s716 + $0x8] sm:$0xff]
        %v1913 = vld [vmem:[%s716 + $0x10] sm:$0xff]
        %v1914 = vld [vmem:[%s716 + $0x18] sm:$0xf]
        %v1915 = vstv %s1910
        %v1916 = vmul.f32 %v1915, %v1911
        %v1917 = vmul.f32 %v1915, %v1912
        %v1918 = vmul.f32 %v1915, %v1913
        %v1919 = vmul.f32 %v1915, %v1914
        %v1920 = vadd.f32 %v1906, %v1916
        %v1921 = vadd.f32 %v1907, %v1917
        %v1922 = vadd.f32 %v1908, %v1918
        %v1923 = vadd.f32 %v1909, %v1919
        %s1924 = sld [smem:[#allocation4 + $0x47]]
        %v1925 = vld [vmem:[%s741] sm:$0xff]
        %v1926 = vld [vmem:[%s741 + $0x8] sm:$0xff]
        %v1927 = vld [vmem:[%s741 + $0x10] sm:$0xff]
        %v1928 = vld [vmem:[%s741 + $0x18] sm:$0xf]
        %v1929 = vstv %s1924
        %v1930 = vmul.f32 %v1929, %v1925
        %v1931 = vmul.f32 %v1929, %v1926
        %v1932 = vmul.f32 %v1929, %v1927
        %v1933 = vmul.f32 %v1929, %v1928
        %v1934 = vadd.f32 %v1920, %v1930
        %v1935 = vadd.f32 %v1921, %v1931
        %v1936 = vadd.f32 %v1922, %v1932
        %v1937 = vadd.f32 %v1923, %v1933
        %s1938 = sld [smem:[#allocation4 + $0x48]]
        %v1939 = vld [vmem:[%s766] sm:$0xff]
        %v1940 = vld [vmem:[%s766 + $0x8] sm:$0xff]
        %v1941 = vld [vmem:[%s766 + $0x10] sm:$0xff]
        %v1942 = vld [vmem:[%s766 + $0x18] sm:$0xf]
        %v1943 = vstv %s1938
        %v1944 = vmul.f32 %v1943, %v1939
        %v1945 = vmul.f32 %v1943, %v1940
        %v1946 = vmul.f32 %v1943, %v1941
        %v1947 = vmul.f32 %v1943, %v1942
        %v1948 = vadd.f32 %v1934, %v1944
        %v1949 = vadd.f32 %v1935, %v1945
        %v1950 = vadd.f32 %v1936, %v1946
        %v1951 = vadd.f32 %v1937, %v1947
        %s1952 = sld [smem:[#allocation4 + $0x49]]
        %v1953 = vld [vmem:[%s791] sm:$0xff]
        %v1954 = vld [vmem:[%s791 + $0x8] sm:$0xff]
        %v1955 = vld [vmem:[%s791 + $0x10] sm:$0xff]
        %v1956 = vld [vmem:[%s791 + $0x18] sm:$0xf]
        %v1957 = vstv %s1952
        %v1958 = vmul.f32 %v1957, %v1953
        %v1959 = vmul.f32 %v1957, %v1954
        %v1960 = vmul.f32 %v1957, %v1955
        %v1961 = vmul.f32 %v1957, %v1956
        %v1962 = vadd.f32 %v1948, %v1958
        %v1963 = vadd.f32 %v1949, %v1959
        %v1964 = vadd.f32 %v1950, %v1960
        %v1965 = vadd.f32 %v1951, %v1961
        %s1966 = sld [smem:[#allocation4 + $0x4a]]
        %v1967 = vld [vmem:[%s816] sm:$0xff]
        %v1968 = vld [vmem:[%s816 + $0x8] sm:$0xff]
        %v1969 = vld [vmem:[%s816 + $0x10] sm:$0xff]
        %v1970 = vld [vmem:[%s816 + $0x18] sm:$0xf]
        %v1971 = vstv %s1966
        %v1972 = vmul.f32 %v1971, %v1967
        %v1973 = vmul.f32 %v1971, %v1968
        %v1974 = vmul.f32 %v1971, %v1969
        %v1975 = vmul.f32 %v1971, %v1970
        %v1976 = vadd.f32 %v1962, %v1972
        %v1977 = vadd.f32 %v1963, %v1973
        %v1978 = vadd.f32 %v1964, %v1974
        %v1979 = vadd.f32 %v1965, %v1975
        %s1980 = scalar_lea.vmem %s162, 64
        %1981 = vst.msk [vmem:[%s1980] sm:$0xff] %vm1167, %v1976
        %1982 = vst.msk [vmem:[%s1980 + $0x8] sm:$0xff] %vm1167, %v1977
        %1983 = vst.msk [vmem:[%s1980 + $0x10] sm:$0xff] %vm1167, %v1978
        %1984 = vst.msk [vmem:[%s1980 + $0x18] sm:$0xf] %vm1171, %v1979
        %1989 = vrot.lane.b32.xlu0 %v1976, 96
        %v1990 = vpop.permute.xlu0 %1989
        %1991 = vrot.lane.b32.xlu0 %v1977, 96
        %v1992 = vpop.permute.xlu0 %1991
        %1993 = vrot.lane.b32.xlu0 %v1978, 96
        %v1994 = vpop.permute.xlu0 %1993
        %1995 = vrot.lane.b32.xlu0 %v1979, 96
        %v1996 = vpop.permute.xlu0 %1995
        %s2001 = scalar_lea.vmem %s162, 384
        %2002 = vst.msk [vmem:[%s2001] sm:$0xff] %vm1167, %v1990
        %2003 = vst.msk [vmem:[%s2001 + $0x8] sm:$0xff] %vm1167, %v1992
        %2004 = vst.msk [vmem:[%s2001 + $0x10] sm:$0xff] %vm1167, %v1994
        %2005 = vst.msk [vmem:[%s2001 + $0x18] sm:$0xf] %vm1171, %v1996
        %2006 = vrot.lane.b32.xlu0 %v1976, 64
        %v2007 = vpop.permute.xlu0 %2006
        %2008 = vrot.lane.b32.xlu0 %v1977, 64
        %v2009 = vpop.permute.xlu0 %2008
        %2010 = vrot.lane.b32.xlu0 %v1978, 64
        %v2011 = vpop.permute.xlu0 %2010
        %2012 = vrot.lane.b32.xlu0 %v1979, 64
        %v2013 = vpop.permute.xlu0 %2012
        %s2018 = scalar_lea.vmem %s162, 704
        %2019 = vst.msk [vmem:[%s2018] sm:$0xff] %vm1167, %v2007
        %2020 = vst.msk [vmem:[%s2018 + $0x8] sm:$0xff] %vm1167, %v2009
        %2021 = vst.msk [vmem:[%s2018 + $0x10] sm:$0xff] %vm1167, %v2011
        %2022 = vst.msk [vmem:[%s2018 + $0x18] sm:$0xf] %vm1171, %v2013
        %2023 = vrot.lane.b32.xlu0 %v1976, 32
        %v2024 = vpop.permute.xlu0 %2023
        %2025 = vrot.lane.b32.xlu0 %v1977, 32
        %v2026 = vpop.permute.xlu0 %2025
        %2027 = vrot.lane.b32.xlu0 %v1978, 32
        %v2028 = vpop.permute.xlu0 %2027
        %2029 = vrot.lane.b32.xlu0 %v1979, 32
        %v2030 = vpop.permute.xlu0 %2029
        %s2035 = scalar_lea.vmem %s162, 1024
        %2036 = vst.msk [vmem:[%s2035] sm:$0xff] %vm1167, %v2024
        %2037 = vst.msk [vmem:[%s2035 + $0x8] sm:$0xff] %vm1167, %v2026
        %2038 = vst.msk [vmem:[%s2035 + $0x10] sm:$0xff] %vm1167, %v2028
        %2039 = vst.msk [vmem:[%s2035 + $0x18] sm:$0xf] %vm1171, %v2030
        %s2040 = sld [smem:[#allocation4 + $0x4b]]
        %v2041 = vld [vmem:[#allocation3] sm:$0xff]
        %v2042 = vld [vmem:[#allocation3 + $0x8] sm:$0xff]
        %v2043 = vld [vmem:[#allocation3 + $0x10] sm:$0xff]
        %v2044 = vld [vmem:[#allocation3 + $0x18] sm:$0xf]
        %v2045 = vstv %s2040
        %v2046 = vmul.f32 %v2045, %v2041
        %v2047 = vmul.f32 %v2045, %v2042
        %v2048 = vmul.f32 %v2045, %v2043
        %v2049 = vmul.f32 %v2045, %v2044
        %s2050 = sld [smem:[#allocation4 + $0x4c]]
        %v2051 = vld [vmem:[%s305] sm:$0xff]
        %v2052 = vld [vmem:[%s305 + $0x8] sm:$0xff]
        %v2053 = vld [vmem:[%s305 + $0x10] sm:$0xff]
        %v2054 = vld [vmem:[%s305 + $0x18] sm:$0xf]
        %v2055 = vstv %s2050
        %v2056 = vmul.f32 %v2055, %v2051
        %v2057 = vmul.f32 %v2055, %v2052
        %v2058 = vmul.f32 %v2055, %v2053
        %v2059 = vmul.f32 %v2055, %v2054
        %v2060 = vadd.f32 %v2046, %v2056
        %v2061 = vadd.f32 %v2047, %v2057
        %v2062 = vadd.f32 %v2048, %v2058
        %v2063 = vadd.f32 %v2049, %v2059
        %s2064 = sld [smem:[#allocation4 + $0x4d]]
        %v2065 = vld [vmem:[%s330] sm:$0xff]
        %v2066 = vld [vmem:[%s330 + $0x8] sm:$0xff]
        %v2067 = vld [vmem:[%s330 + $0x10] sm:$0xff]
        %v2068 = vld [vmem:[%s330 + $0x18] sm:$0xf]
        %v2069 = vstv %s2064
        %v2070 = vmul.f32 %v2069, %v2065
        %v2071 = vmul.f32 %v2069, %v2066
        %v2072 = vmul.f32 %v2069, %v2067
        %v2073 = vmul.f32 %v2069, %v2068
        %v2074 = vadd.f32 %v2060, %v2070
        %v2075 = vadd.f32 %v2061, %v2071
        %v2076 = vadd.f32 %v2062, %v2072
        %v2077 = vadd.f32 %v2063, %v2073
        %s2078 = sld [smem:[#allocation4 + $0x4e]]
        %v2079 = vld [vmem:[%s355] sm:$0xff]
        %v2080 = vld [vmem:[%s355 + $0x8] sm:$0xff]
        %v2081 = vld [vmem:[%s355 + $0x10] sm:$0xff]
        %v2082 = vld [vmem:[%s355 + $0x18] sm:$0xf]
        %v2083 = vstv %s2078
        %v2084 = vmul.f32 %v2083, %v2079
        %v2085 = vmul.f32 %v2083, %v2080
        %v2086 = vmul.f32 %v2083, %v2081
        %v2087 = vmul.f32 %v2083, %v2082
        %v2088 = vadd.f32 %v2074, %v2084
        %v2089 = vadd.f32 %v2075, %v2085
        %v2090 = vadd.f32 %v2076, %v2086
        %v2091 = vadd.f32 %v2077, %v2087
        %s2092 = sld [smem:[#allocation4 + $0x4f]]
        %v2093 = vld [vmem:[%s380] sm:$0xff]
        %v2094 = vld [vmem:[%s380 + $0x8] sm:$0xff]
        %v2095 = vld [vmem:[%s380 + $0x10] sm:$0xff]
        %v2096 = vld [vmem:[%s380 + $0x18] sm:$0xf]
        %v2097 = vstv %s2092
        %v2098 = vmul.f32 %v2097, %v2093
        %v2099 = vmul.f32 %v2097, %v2094
        %v2100 = vmul.f32 %v2097, %v2095
        %v2101 = vmul.f32 %v2097, %v2096
        %v2102 = vadd.f32 %v2088, %v2098
        %v2103 = vadd.f32 %v2089, %v2099
        %v2104 = vadd.f32 %v2090, %v2100
        %v2105 = vadd.f32 %v2091, %v2101
        %s2106 = sld [smem:[#allocation4 + $0x50]]
        %v2107 = vld [vmem:[%s389] sm:$0xff]
        %v2108 = vld [vmem:[%s389 + $0x8] sm:$0xff]
        %v2109 = vld [vmem:[%s389 + $0x10] sm:$0xff]
        %v2110 = vld [vmem:[%s389 + $0x18] sm:$0xf]
        %v2111 = vstv %s2106
        %v2112 = vmul.f32 %v2111, %v2107
        %v2113 = vmul.f32 %v2111, %v2108
        %v2114 = vmul.f32 %v2111, %v2109
        %v2115 = vmul.f32 %v2111, %v2110
        %v2116 = vadd.f32 %v2102, %v2112
        %v2117 = vadd.f32 %v2103, %v2113
        %v2118 = vadd.f32 %v2104, %v2114
        %v2119 = vadd.f32 %v2105, %v2115
        %s2120 = sld [smem:[#allocation4 + $0x51]]
        %v2121 = vld [vmem:[%s414] sm:$0xff]
        %v2122 = vld [vmem:[%s414 + $0x8] sm:$0xff]
        %v2123 = vld [vmem:[%s414 + $0x10] sm:$0xff]
        %v2124 = vld [vmem:[%s414 + $0x18] sm:$0xf]
        %v2125 = vstv %s2120
        %v2126 = vmul.f32 %v2125, %v2121
        %v2127 = vmul.f32 %v2125, %v2122
        %v2128 = vmul.f32 %v2125, %v2123
        %v2129 = vmul.f32 %v2125, %v2124
        %v2130 = vadd.f32 %v2116, %v2126
        %v2131 = vadd.f32 %v2117, %v2127
        %v2132 = vadd.f32 %v2118, %v2128
        %v2133 = vadd.f32 %v2119, %v2129
        %s2134 = sld [smem:[#allocation4 + $0x52]]
        %v2135 = vld [vmem:[%s439] sm:$0xff]
        %v2136 = vld [vmem:[%s439 + $0x8] sm:$0xff]
        %v2137 = vld [vmem:[%s439 + $0x10] sm:$0xff]
        %v2138 = vld [vmem:[%s439 + $0x18] sm:$0xf]
        %v2139 = vstv %s2134
        %v2140 = vmul.f32 %v2139, %v2135
        %v2141 = vmul.f32 %v2139, %v2136
        %v2142 = vmul.f32 %v2139, %v2137
        %v2143 = vmul.f32 %v2139, %v2138
        %v2144 = vadd.f32 %v2130, %v2140
        %v2145 = vadd.f32 %v2131, %v2141
        %v2146 = vadd.f32 %v2132, %v2142
        %v2147 = vadd.f32 %v2133, %v2143
        %s2148 = sld [smem:[#allocation4 + $0x53]]
        %v2149 = vld [vmem:[%s464] sm:$0xff]
        %v2150 = vld [vmem:[%s464 + $0x8] sm:$0xff]
        %v2151 = vld [vmem:[%s464 + $0x10] sm:$0xff]
        %v2152 = vld [vmem:[%s464 + $0x18] sm:$0xf]
        %v2153 = vstv %s2148
        %v2154 = vmul.f32 %v2153, %v2149
        %v2155 = vmul.f32 %v2153, %v2150
        %v2156 = vmul.f32 %v2153, %v2151
        %v2157 = vmul.f32 %v2153, %v2152
        %v2158 = vadd.f32 %v2144, %v2154
        %v2159 = vadd.f32 %v2145, %v2155
        %v2160 = vadd.f32 %v2146, %v2156
        %v2161 = vadd.f32 %v2147, %v2157
        %s2162 = sld [smem:[#allocation4 + $0x54]]
        %v2163 = vld [vmem:[%s489] sm:$0xff]
        %v2164 = vld [vmem:[%s489 + $0x8] sm:$0xff]
        %v2165 = vld [vmem:[%s489 + $0x10] sm:$0xff]
        %v2166 = vld [vmem:[%s489 + $0x18] sm:$0xf]
        %v2167 = vstv %s2162
        %v2168 = vmul.f32 %v2167, %v2163
        %v2169 = vmul.f32 %v2167, %v2164
        %v2170 = vmul.f32 %v2167, %v2165
        %v2171 = vmul.f32 %v2167, %v2166
        %v2172 = vadd.f32 %v2158, %v2168
        %v2173 = vadd.f32 %v2159, %v2169
        %v2174 = vadd.f32 %v2160, %v2170
        %v2175 = vadd.f32 %v2161, %v2171
        %s2176 = sld [smem:[#allocation4 + $0x55]]
        %v2177 = vld [vmem:[%s498] sm:$0xff]
        %v2178 = vld [vmem:[%s498 + $0x8] sm:$0xff]
        %v2179 = vld [vmem:[%s498 + $0x10] sm:$0xff]
        %v2180 = vld [vmem:[%s498 + $0x18] sm:$0xf]
        %v2181 = vstv %s2176
        %v2182 = vmul.f32 %v2181, %v2177
        %v2183 = vmul.f32 %v2181, %v2178
        %v2184 = vmul.f32 %v2181, %v2179
        %v2185 = vmul.f32 %v2181, %v2180
        %v2186 = vadd.f32 %v2172, %v2182
        %v2187 = vadd.f32 %v2173, %v2183
        %v2188 = vadd.f32 %v2174, %v2184
        %v2189 = vadd.f32 %v2175, %v2185
        %s2190 = sld [smem:[#allocation4 + $0x56]]
        %v2191 = vld [vmem:[%s523] sm:$0xff]
        %v2192 = vld [vmem:[%s523 + $0x8] sm:$0xff]
        %v2193 = vld [vmem:[%s523 + $0x10] sm:$0xff]
        %v2194 = vld [vmem:[%s523 + $0x18] sm:$0xf]
        %v2195 = vstv %s2190
        %v2196 = vmul.f32 %v2195, %v2191
        %v2197 = vmul.f32 %v2195, %v2192
        %v2198 = vmul.f32 %v2195, %v2193
        %v2199 = vmul.f32 %v2195, %v2194
        %v2200 = vadd.f32 %v2186, %v2196
        %v2201 = vadd.f32 %v2187, %v2197
        %v2202 = vadd.f32 %v2188, %v2198
        %v2203 = vadd.f32 %v2189, %v2199
        %s2204 = sld [smem:[#allocation4 + $0x57]]
        %v2205 = vld [vmem:[%s548] sm:$0xff]
        %v2206 = vld [vmem:[%s548 + $0x8] sm:$0xff]
        %v2207 = vld [vmem:[%s548 + $0x10] sm:$0xff]
        %v2208 = vld [vmem:[%s548 + $0x18] sm:$0xf]
        %v2209 = vstv %s2204
        %v2210 = vmul.f32 %v2209, %v2205
        %v2211 = vmul.f32 %v2209, %v2206
        %v2212 = vmul.f32 %v2209, %v2207
        %v2213 = vmul.f32 %v2209, %v2208
        %v2214 = vadd.f32 %v2200, %v2210
        %v2215 = vadd.f32 %v2201, %v2211
        %v2216 = vadd.f32 %v2202, %v2212
        %v2217 = vadd.f32 %v2203, %v2213
        %s2218 = sld [smem:[#allocation4 + $0x58]]
        %v2219 = vld [vmem:[%s573] sm:$0xff]
        %v2220 = vld [vmem:[%s573 + $0x8] sm:$0xff]
        %v2221 = vld [vmem:[%s573 + $0x10] sm:$0xff]
        %v2222 = vld [vmem:[%s573 + $0x18] sm:$0xf]
        %v2223 = vstv %s2218
        %v2224 = vmul.f32 %v2223, %v2219
        %v2225 = vmul.f32 %v2223, %v2220
        %v2226 = vmul.f32 %v2223, %v2221
        %v2227 = vmul.f32 %v2223, %v2222
        %v2228 = vadd.f32 %v2214, %v2224
        %v2229 = vadd.f32 %v2215, %v2225
        %v2230 = vadd.f32 %v2216, %v2226
        %v2231 = vadd.f32 %v2217, %v2227
        %s2232 = sld [smem:[#allocation4 + $0x59]]
        %v2233 = vld [vmem:[%s598] sm:$0xff]
        %v2234 = vld [vmem:[%s598 + $0x8] sm:$0xff]
        %v2235 = vld [vmem:[%s598 + $0x10] sm:$0xff]
        %v2236 = vld [vmem:[%s598 + $0x18] sm:$0xf]
        %v2237 = vstv %s2232
        %v2238 = vmul.f32 %v2237, %v2233
        %v2239 = vmul.f32 %v2237, %v2234
        %v2240 = vmul.f32 %v2237, %v2235
        %v2241 = vmul.f32 %v2237, %v2236
        %v2242 = vadd.f32 %v2228, %v2238
        %v2243 = vadd.f32 %v2229, %v2239
        %v2244 = vadd.f32 %v2230, %v2240
        %v2245 = vadd.f32 %v2231, %v2241
        %s2246 = sld [smem:[#allocation4 + $0x5a]]
        %v2247 = vld [vmem:[%s607] sm:$0xff]
        %v2248 = vld [vmem:[%s607 + $0x8] sm:$0xff]
        %v2249 = vld [vmem:[%s607 + $0x10] sm:$0xff]
        %v2250 = vld [vmem:[%s607 + $0x18] sm:$0xf]
        %v2251 = vstv %s2246
        %v2252 = vmul.f32 %v2251, %v2247
        %v2253 = vmul.f32 %v2251, %v2248
        %v2254 = vmul.f32 %v2251, %v2249
        %v2255 = vmul.f32 %v2251, %v2250
        %v2256 = vadd.f32 %v2242, %v2252
        %v2257 = vadd.f32 %v2243, %v2253
        %v2258 = vadd.f32 %v2244, %v2254
        %v2259 = vadd.f32 %v2245, %v2255
        %s2260 = sld [smem:[#allocation4 + $0x5b]]
        %v2261 = vld [vmem:[%s632] sm:$0xff]
        %v2262 = vld [vmem:[%s632 + $0x8] sm:$0xff]
        %v2263 = vld [vmem:[%s632 + $0x10] sm:$0xff]
        %v2264 = vld [vmem:[%s632 + $0x18] sm:$0xf]
        %v2265 = vstv %s2260
        %v2266 = vmul.f32 %v2265, %v2261
        %v2267 = vmul.f32 %v2265, %v2262
        %v2268 = vmul.f32 %v2265, %v2263
        %v2269 = vmul.f32 %v2265, %v2264
        %v2270 = vadd.f32 %v2256, %v2266
        %v2271 = vadd.f32 %v2257, %v2267
        %v2272 = vadd.f32 %v2258, %v2268
        %v2273 = vadd.f32 %v2259, %v2269
        %s2274 = sld [smem:[#allocation4 + $0x5c]]
        %v2275 = vld [vmem:[%s657] sm:$0xff]
        %v2276 = vld [vmem:[%s657 + $0x8] sm:$0xff]
        %v2277 = vld [vmem:[%s657 + $0x10] sm:$0xff]
        %v2278 = vld [vmem:[%s657 + $0x18] sm:$0xf]
        %v2279 = vstv %s2274
        %v2280 = vmul.f32 %v2279, %v2275
        %v2281 = vmul.f32 %v2279, %v2276
        %v2282 = vmul.f32 %v2279, %v2277
        %v2283 = vmul.f32 %v2279, %v2278
        %v2284 = vadd.f32 %v2270, %v2280
        %v2285 = vadd.f32 %v2271, %v2281
        %v2286 = vadd.f32 %v2272, %v2282
        %v2287 = vadd.f32 %v2273, %v2283
        %s2288 = sld [smem:[#allocation4 + $0x5d]]
        %v2289 = vld [vmem:[%s682] sm:$0xff]
        %v2290 = vld [vmem:[%s682 + $0x8] sm:$0xff]
        %v2291 = vld [vmem:[%s682 + $0x10] sm:$0xff]
        %v2292 = vld [vmem:[%s682 + $0x18] sm:$0xf]
        %v2293 = vstv %s2288
        %v2294 = vmul.f32 %v2293, %v2289
        %v2295 = vmul.f32 %v2293, %v2290
        %v2296 = vmul.f32 %v2293, %v2291
        %v2297 = vmul.f32 %v2293, %v2292
        %v2298 = vadd.f32 %v2284, %v2294
        %v2299 = vadd.f32 %v2285, %v2295
        %v2300 = vadd.f32 %v2286, %v2296
        %v2301 = vadd.f32 %v2287, %v2297
        %s2302 = sld [smem:[#allocation4 + $0x5e]]
        %v2303 = vld [vmem:[%s707] sm:$0xff]
        %v2304 = vld [vmem:[%s707 + $0x8] sm:$0xff]
        %v2305 = vld [vmem:[%s707 + $0x10] sm:$0xff]
        %v2306 = vld [vmem:[%s707 + $0x18] sm:$0xf]
        %v2307 = vstv %s2302
        %v2308 = vmul.f32 %v2307, %v2303
        %v2309 = vmul.f32 %v2307, %v2304
        %v2310 = vmul.f32 %v2307, %v2305
        %v2311 = vmul.f32 %v2307, %v2306
        %v2312 = vadd.f32 %v2298, %v2308
        %v2313 = vadd.f32 %v2299, %v2309
        %v2314 = vadd.f32 %v2300, %v2310
        %v2315 = vadd.f32 %v2301, %v2311
        %s2316 = sld [smem:[#allocation4 + $0x5f]]
        %v2317 = vld [vmem:[%s716] sm:$0xff]
        %v2318 = vld [vmem:[%s716 + $0x8] sm:$0xff]
        %v2319 = vld [vmem:[%s716 + $0x10] sm:$0xff]
        %v2320 = vld [vmem:[%s716 + $0x18] sm:$0xf]
        %v2321 = vstv %s2316
        %v2322 = vmul.f32 %v2321, %v2317
        %v2323 = vmul.f32 %v2321, %v2318
        %v2324 = vmul.f32 %v2321, %v2319
        %v2325 = vmul.f32 %v2321, %v2320
        %v2326 = vadd.f32 %v2312, %v2322
        %v2327 = vadd.f32 %v2313, %v2323
        %v2328 = vadd.f32 %v2314, %v2324
        %v2329 = vadd.f32 %v2315, %v2325
        %s2330 = sld [smem:[#allocation4 + $0x60]]
        %v2331 = vld [vmem:[%s741] sm:$0xff]
        %v2332 = vld [vmem:[%s741 + $0x8] sm:$0xff]
        %v2333 = vld [vmem:[%s741 + $0x10] sm:$0xff]
        %v2334 = vld [vmem:[%s741 + $0x18] sm:$0xf]
        %v2335 = vstv %s2330
        %v2336 = vmul.f32 %v2335, %v2331
        %v2337 = vmul.f32 %v2335, %v2332
        %v2338 = vmul.f32 %v2335, %v2333
        %v2339 = vmul.f32 %v2335, %v2334
        %v2340 = vadd.f32 %v2326, %v2336
        %v2341 = vadd.f32 %v2327, %v2337
        %v2342 = vadd.f32 %v2328, %v2338
        %v2343 = vadd.f32 %v2329, %v2339
        %s2344 = sld [smem:[#allocation4 + $0x61]]
        %v2345 = vld [vmem:[%s766] sm:$0xff]
        %v2346 = vld [vmem:[%s766 + $0x8] sm:$0xff]
        %v2347 = vld [vmem:[%s766 + $0x10] sm:$0xff]
        %v2348 = vld [vmem:[%s766 + $0x18] sm:$0xf]
        %v2349 = vstv %s2344
        %v2350 = vmul.f32 %v2349, %v2345
        %v2351 = vmul.f32 %v2349, %v2346
        %v2352 = vmul.f32 %v2349, %v2347
        %v2353 = vmul.f32 %v2349, %v2348
        %v2354 = vadd.f32 %v2340, %v2350
        %v2355 = vadd.f32 %v2341, %v2351
        %v2356 = vadd.f32 %v2342, %v2352
        %v2357 = vadd.f32 %v2343, %v2353
        %s2358 = sld [smem:[#allocation4 + $0x62]]
        %v2359 = vld [vmem:[%s791] sm:$0xff]
        %v2360 = vld [vmem:[%s791 + $0x8] sm:$0xff]
        %v2361 = vld [vmem:[%s791 + $0x10] sm:$0xff]
        %v2362 = vld [vmem:[%s791 + $0x18] sm:$0xf]
        %v2363 = vstv %s2358
        %v2364 = vmul.f32 %v2363, %v2359
        %v2365 = vmul.f32 %v2363, %v2360
        %v2366 = vmul.f32 %v2363, %v2361
        %v2367 = vmul.f32 %v2363, %v2362
        %v2368 = vadd.f32 %v2354, %v2364
        %v2369 = vadd.f32 %v2355, %v2365
        %v2370 = vadd.f32 %v2356, %v2366
        %v2371 = vadd.f32 %v2357, %v2367
        %s2372 = sld [smem:[#allocation4 + $0x63]]
        %v2373 = vld [vmem:[%s816] sm:$0xff]
        %v2374 = vld [vmem:[%s816 + $0x8] sm:$0xff]
        %v2375 = vld [vmem:[%s816 + $0x10] sm:$0xff]
        %v2376 = vld [vmem:[%s816 + $0x18] sm:$0xf]
        %v2377 = vstv %s2372
        %v2378 = vmul.f32 %v2377, %v2373
        %v2379 = vmul.f32 %v2377, %v2374
        %v2380 = vmul.f32 %v2377, %v2375
        %v2381 = vmul.f32 %v2377, %v2376
        %v2382 = vadd.f32 %v2368, %v2378
        %v2383 = vadd.f32 %v2369, %v2379
        %v2384 = vadd.f32 %v2370, %v2380
        %v2385 = vadd.f32 %v2371, %v2381
        %s2386 = scalar_lea.vmem %s162, 96
        %2387 = vst.msk [vmem:[%s2386] sm:$0xff] %vm1167, %v2382
        %2388 = vst.msk [vmem:[%s2386 + $0x8] sm:$0xff] %vm1167, %v2383
        %2389 = vst.msk [vmem:[%s2386 + $0x10] sm:$0xff] %vm1167, %v2384
        %2390 = vst.msk [vmem:[%s2386 + $0x18] sm:$0xf] %vm1171, %v2385
        %2395 = vrot.lane.b32.xlu0 %v2382, 96
        %v2396 = vpop.permute.xlu0 %2395
        %2397 = vrot.lane.b32.xlu0 %v2383, 96
        %v2398 = vpop.permute.xlu0 %2397
        %2399 = vrot.lane.b32.xlu0 %v2384, 96
        %v2400 = vpop.permute.xlu0 %2399
        %2401 = vrot.lane.b32.xlu0 %v2385, 96
        %v2402 = vpop.permute.xlu0 %2401
        %s2407 = scalar_lea.vmem %s162, 416
        %2408 = vst.msk [vmem:[%s2407] sm:$0xff] %vm1167, %v2396
        %2409 = vst.msk [vmem:[%s2407 + $0x8] sm:$0xff] %vm1167, %v2398
        %2410 = vst.msk [vmem:[%s2407 + $0x10] sm:$0xff] %vm1167, %v2400
        %2411 = vst.msk [vmem:[%s2407 + $0x18] sm:$0xf] %vm1171, %v2402
        %2412 = vrot.lane.b32.xlu0 %v2382, 64
        %v2413 = vpop.permute.xlu0 %2412
        %2414 = vrot.lane.b32.xlu0 %v2383, 64
        %v2415 = vpop.permute.xlu0 %2414
        %2416 = vrot.lane.b32.xlu0 %v2384, 64
        %v2417 = vpop.permute.xlu0 %2416
        %2418 = vrot.lane.b32.xlu0 %v2385, 64
        %v2419 = vpop.permute.xlu0 %2418
        %s2424 = scalar_lea.vmem %s162, 736
        %2425 = vst.msk [vmem:[%s2424] sm:$0xff] %vm1167, %v2413
        %2426 = vst.msk [vmem:[%s2424 + $0x8] sm:$0xff] %vm1167, %v2415
        %2427 = vst.msk [vmem:[%s2424 + $0x10] sm:$0xff] %vm1167, %v2417
        %2428 = vst.msk [vmem:[%s2424 + $0x18] sm:$0xf] %vm1171, %v2419
        %2429 = vrot.lane.b32.xlu0 %v2382, 32
        %v2430 = vpop.permute.xlu0 %2429
        %2431 = vrot.lane.b32.xlu0 %v2383, 32
        %v2432 = vpop.permute.xlu0 %2431
        %2433 = vrot.lane.b32.xlu0 %v2384, 32
        %v2434 = vpop.permute.xlu0 %2433
        %2435 = vrot.lane.b32.xlu0 %v2385, 32
        %v2436 = vpop.permute.xlu0 %2435
        %s2441 = scalar_lea.vmem %s162, 1056
        %2442 = vst.msk [vmem:[%s2441] sm:$0xff] %vm1167, %v2430
        %2443 = vst.msk [vmem:[%s2441 + $0x8] sm:$0xff] %vm1167, %v2432
        %2444 = vst.msk [vmem:[%s2441 + $0x10] sm:$0xff] %vm1167, %v2434
        %2445 = vst.msk [vmem:[%s2441 + $0x18] sm:$0xf] %vm1171, %v2436
        %s2446 = sld [smem:[#allocation4 + $0x64]]
        %v2447 = vld [vmem:[#allocation3] sm:$0xff]
        %v2448 = vld [vmem:[#allocation3 + $0x8] sm:$0xff]
        %v2449 = vld [vmem:[#allocation3 + $0x10] sm:$0xff]
        %v2450 = vld [vmem:[#allocation3 + $0x18] sm:$0xf]
        %v2451 = vstv %s2446
        %v2452 = vmul.f32 %v2451, %v2447
        %v2453 = vmul.f32 %v2451, %v2448
        %v2454 = vmul.f32 %v2451, %v2449
        %v2455 = vmul.f32 %v2451, %v2450
        %s2456 = sld [smem:[#allocation4 + $0x65]]
        %v2457 = vld [vmem:[%s305] sm:$0xff]
        %v2458 = vld [vmem:[%s305 + $0x8] sm:$0xff]
        %v2459 = vld [vmem:[%s305 + $0x10] sm:$0xff]
        %v2460 = vld [vmem:[%s305 + $0x18] sm:$0xf]
        %v2461 = vstv %s2456
        %v2462 = vmul.f32 %v2461, %v2457
        %v2463 = vmul.f32 %v2461, %v2458
        %v2464 = vmul.f32 %v2461, %v2459
        %v2465 = vmul.f32 %v2461, %v2460
        %v2466 = vadd.f32 %v2452, %v2462
        %v2467 = vadd.f32 %v2453, %v2463
        %v2468 = vadd.f32 %v2454, %v2464
        %v2469 = vadd.f32 %v2455, %v2465
        %s2470 = sld [smem:[#allocation4 + $0x66]]
        %v2471 = vld [vmem:[%s330] sm:$0xff]
        %v2472 = vld [vmem:[%s330 + $0x8] sm:$0xff]
        %v2473 = vld [vmem:[%s330 + $0x10] sm:$0xff]
        %v2474 = vld [vmem:[%s330 + $0x18] sm:$0xf]
        %v2475 = vstv %s2470
        %v2476 = vmul.f32 %v2475, %v2471
        %v2477 = vmul.f32 %v2475, %v2472
        %v2478 = vmul.f32 %v2475, %v2473
        %v2479 = vmul.f32 %v2475, %v2474
        %v2480 = vadd.f32 %v2466, %v2476
        %v2481 = vadd.f32 %v2467, %v2477
        %v2482 = vadd.f32 %v2468, %v2478
        %v2483 = vadd.f32 %v2469, %v2479
        %s2484 = sld [smem:[#allocation4 + $0x67]]
        %v2485 = vld [vmem:[%s355] sm:$0xff]
        %v2486 = vld [vmem:[%s355 + $0x8] sm:$0xff]
        %v2487 = vld [vmem:[%s355 + $0x10] sm:$0xff]
        %v2488 = vld [vmem:[%s355 + $0x18] sm:$0xf]
        %v2489 = vstv %s2484
        %v2490 = vmul.f32 %v2489, %v2485
        %v2491 = vmul.f32 %v2489, %v2486
        %v2492 = vmul.f32 %v2489, %v2487
        %v2493 = vmul.f32 %v2489, %v2488
        %v2494 = vadd.f32 %v2480, %v2490
        %v2495 = vadd.f32 %v2481, %v2491
        %v2496 = vadd.f32 %v2482, %v2492
        %v2497 = vadd.f32 %v2483, %v2493
        %s2498 = sld [smem:[#allocation4 + $0x68]]
        %v2499 = vld [vmem:[%s380] sm:$0xff]
        %v2500 = vld [vmem:[%s380 + $0x8] sm:$0xff]
        %v2501 = vld [vmem:[%s380 + $0x10] sm:$0xff]
        %v2502 = vld [vmem:[%s380 + $0x18] sm:$0xf]
        %v2503 = vstv %s2498
        %v2504 = vmul.f32 %v2503, %v2499
        %v2505 = vmul.f32 %v2503, %v2500
        %v2506 = vmul.f32 %v2503, %v2501
        %v2507 = vmul.f32 %v2503, %v2502
        %v2508 = vadd.f32 %v2494, %v2504
        %v2509 = vadd.f32 %v2495, %v2505
        %v2510 = vadd.f32 %v2496, %v2506
        %v2511 = vadd.f32 %v2497, %v2507
        %s2512 = sld [smem:[#allocation4 + $0x69]]
        %v2513 = vld [vmem:[%s389] sm:$0xff]
        %v2514 = vld [vmem:[%s389 + $0x8] sm:$0xff]
        %v2515 = vld [vmem:[%s389 + $0x10] sm:$0xff]
        %v2516 = vld [vmem:[%s389 + $0x18] sm:$0xf]
        %v2517 = vstv %s2512
        %v2518 = vmul.f32 %v2517, %v2513
        %v2519 = vmul.f32 %v2517, %v2514
        %v2520 = vmul.f32 %v2517, %v2515
        %v2521 = vmul.f32 %v2517, %v2516
        %v2522 = vadd.f32 %v2508, %v2518
        %v2523 = vadd.f32 %v2509, %v2519
        %v2524 = vadd.f32 %v2510, %v2520
        %v2525 = vadd.f32 %v2511, %v2521
        %s2526 = sld [smem:[#allocation4 + $0x6a]]
        %v2527 = vld [vmem:[%s414] sm:$0xff]
        %v2528 = vld [vmem:[%s414 + $0x8] sm:$0xff]
        %v2529 = vld [vmem:[%s414 + $0x10] sm:$0xff]
        %v2530 = vld [vmem:[%s414 + $0x18] sm:$0xf]
        %v2531 = vstv %s2526
        %v2532 = vmul.f32 %v2531, %v2527
        %v2533 = vmul.f32 %v2531, %v2528
        %v2534 = vmul.f32 %v2531, %v2529
        %v2535 = vmul.f32 %v2531, %v2530
        %v2536 = vadd.f32 %v2522, %v2532
        %v2537 = vadd.f32 %v2523, %v2533
        %v2538 = vadd.f32 %v2524, %v2534
        %v2539 = vadd.f32 %v2525, %v2535
        %s2540 = sld [smem:[#allocation4 + $0x6b]]
        %v2541 = vld [vmem:[%s439] sm:$0xff]
        %v2542 = vld [vmem:[%s439 + $0x8] sm:$0xff]
        %v2543 = vld [vmem:[%s439 + $0x10] sm:$0xff]
        %v2544 = vld [vmem:[%s439 + $0x18] sm:$0xf]
        %v2545 = vstv %s2540
        %v2546 = vmul.f32 %v2545, %v2541
        %v2547 = vmul.f32 %v2545, %v2542
        %v2548 = vmul.f32 %v2545, %v2543
        %v2549 = vmul.f32 %v2545, %v2544
        %v2550 = vadd.f32 %v2536, %v2546
        %v2551 = vadd.f32 %v2537, %v2547
        %v2552 = vadd.f32 %v2538, %v2548
        %v2553 = vadd.f32 %v2539, %v2549
        %s2554 = sld [smem:[#allocation4 + $0x6c]]
        %v2555 = vld [vmem:[%s464] sm:$0xff]
        %v2556 = vld [vmem:[%s464 + $0x8] sm:$0xff]
        %v2557 = vld [vmem:[%s464 + $0x10] sm:$0xff]
        %v2558 = vld [vmem:[%s464 + $0x18] sm:$0xf]
        %v2559 = vstv %s2554
        %v2560 = vmul.f32 %v2559, %v2555
        %v2561 = vmul.f32 %v2559, %v2556
        %v2562 = vmul.f32 %v2559, %v2557
        %v2563 = vmul.f32 %v2559, %v2558
        %v2564 = vadd.f32 %v2550, %v2560
        %v2565 = vadd.f32 %v2551, %v2561
        %v2566 = vadd.f32 %v2552, %v2562
        %v2567 = vadd.f32 %v2553, %v2563
        %s2568 = sld [smem:[#allocation4 + $0x6d]]
        %v2569 = vld [vmem:[%s489] sm:$0xff]
        %v2570 = vld [vmem:[%s489 + $0x8] sm:$0xff]
        %v2571 = vld [vmem:[%s489 + $0x10] sm:$0xff]
        %v2572 = vld [vmem:[%s489 + $0x18] sm:$0xf]
        %v2573 = vstv %s2568
        %v2574 = vmul.f32 %v2573, %v2569
        %v2575 = vmul.f32 %v2573, %v2570
        %v2576 = vmul.f32 %v2573, %v2571
        %v2577 = vmul.f32 %v2573, %v2572
        %v2578 = vadd.f32 %v2564, %v2574
        %v2579 = vadd.f32 %v2565, %v2575
        %v2580 = vadd.f32 %v2566, %v2576
        %v2581 = vadd.f32 %v2567, %v2577
        %s2582 = sld [smem:[#allocation4 + $0x6e]]
        %v2583 = vld [vmem:[%s498] sm:$0xff]
        %v2584 = vld [vmem:[%s498 + $0x8] sm:$0xff]
        %v2585 = vld [vmem:[%s498 + $0x10] sm:$0xff]
        %v2586 = vld [vmem:[%s498 + $0x18] sm:$0xf]
        %v2587 = vstv %s2582
        %v2588 = vmul.f32 %v2587, %v2583
        %v2589 = vmul.f32 %v2587, %v2584
        %v2590 = vmul.f32 %v2587, %v2585
        %v2591 = vmul.f32 %v2587, %v2586
        %v2592 = vadd.f32 %v2578, %v2588
        %v2593 = vadd.f32 %v2579, %v2589
        %v2594 = vadd.f32 %v2580, %v2590
        %v2595 = vadd.f32 %v2581, %v2591
        %s2596 = sld [smem:[#allocation4 + $0x6f]]
        %v2597 = vld [vmem:[%s523] sm:$0xff]
        %v2598 = vld [vmem:[%s523 + $0x8] sm:$0xff]
        %v2599 = vld [vmem:[%s523 + $0x10] sm:$0xff]
        %v2600 = vld [vmem:[%s523 + $0x18] sm:$0xf]
        %v2601 = vstv %s2596
        %v2602 = vmul.f32 %v2601, %v2597
        %v2603 = vmul.f32 %v2601, %v2598
        %v2604 = vmul.f32 %v2601, %v2599
        %v2605 = vmul.f32 %v2601, %v2600
        %v2606 = vadd.f32 %v2592, %v2602
        %v2607 = vadd.f32 %v2593, %v2603
        %v2608 = vadd.f32 %v2594, %v2604
        %v2609 = vadd.f32 %v2595, %v2605
        %s2610 = sld [smem:[#allocation4 + $0x70]]
        %v2611 = vld [vmem:[%s548] sm:$0xff]
        %v2612 = vld [vmem:[%s548 + $0x8] sm:$0xff]
        %v2613 = vld [vmem:[%s548 + $0x10] sm:$0xff]
        %v2614 = vld [vmem:[%s548 + $0x18] sm:$0xf]
        %v2615 = vstv %s2610
        %v2616 = vmul.f32 %v2615, %v2611
        %v2617 = vmul.f32 %v2615, %v2612
        %v2618 = vmul.f32 %v2615, %v2613
        %v2619 = vmul.f32 %v2615, %v2614
        %v2620 = vadd.f32 %v2606, %v2616
        %v2621 = vadd.f32 %v2607, %v2617
        %v2622 = vadd.f32 %v2608, %v2618
        %v2623 = vadd.f32 %v2609, %v2619
        %s2624 = sld [smem:[#allocation4 + $0x71]]
        %v2625 = vld [vmem:[%s573] sm:$0xff]
        %v2626 = vld [vmem:[%s573 + $0x8] sm:$0xff]
        %v2627 = vld [vmem:[%s573 + $0x10] sm:$0xff]
        %v2628 = vld [vmem:[%s573 + $0x18] sm:$0xf]
        %v2629 = vstv %s2624
        %v2630 = vmul.f32 %v2629, %v2625
        %v2631 = vmul.f32 %v2629, %v2626
        %v2632 = vmul.f32 %v2629, %v2627
        %v2633 = vmul.f32 %v2629, %v2628
        %v2634 = vadd.f32 %v2620, %v2630
        %v2635 = vadd.f32 %v2621, %v2631
        %v2636 = vadd.f32 %v2622, %v2632
        %v2637 = vadd.f32 %v2623, %v2633
        %s2638 = sld [smem:[#allocation4 + $0x72]]
        %v2639 = vld [vmem:[%s598] sm:$0xff]
        %v2640 = vld [vmem:[%s598 + $0x8] sm:$0xff]
        %v2641 = vld [vmem:[%s598 + $0x10] sm:$0xff]
        %v2642 = vld [vmem:[%s598 + $0x18] sm:$0xf]
        %v2643 = vstv %s2638
        %v2644 = vmul.f32 %v2643, %v2639
        %v2645 = vmul.f32 %v2643, %v2640
        %v2646 = vmul.f32 %v2643, %v2641
        %v2647 = vmul.f32 %v2643, %v2642
        %v2648 = vadd.f32 %v2634, %v2644
        %v2649 = vadd.f32 %v2635, %v2645
        %v2650 = vadd.f32 %v2636, %v2646
        %v2651 = vadd.f32 %v2637, %v2647
        %s2652 = sld [smem:[#allocation4 + $0x73]]
        %v2653 = vld [vmem:[%s607] sm:$0xff]
        %v2654 = vld [vmem:[%s607 + $0x8] sm:$0xff]
        %v2655 = vld [vmem:[%s607 + $0x10] sm:$0xff]
        %v2656 = vld [vmem:[%s607 + $0x18] sm:$0xf]
        %v2657 = vstv %s2652
        %v2658 = vmul.f32 %v2657, %v2653
        %v2659 = vmul.f32 %v2657, %v2654
        %v2660 = vmul.f32 %v2657, %v2655
        %v2661 = vmul.f32 %v2657, %v2656
        %v2662 = vadd.f32 %v2648, %v2658
        %v2663 = vadd.f32 %v2649, %v2659
        %v2664 = vadd.f32 %v2650, %v2660
        %v2665 = vadd.f32 %v2651, %v2661
        %s2666 = sld [smem:[#allocation4 + $0x74]]
        %v2667 = vld [vmem:[%s632] sm:$0xff]
        %v2668 = vld [vmem:[%s632 + $0x8] sm:$0xff]
        %v2669 = vld [vmem:[%s632 + $0x10] sm:$0xff]
        %v2670 = vld [vmem:[%s632 + $0x18] sm:$0xf]
        %v2671 = vstv %s2666
        %v2672 = vmul.f32 %v2671, %v2667
        %v2673 = vmul.f32 %v2671, %v2668
        %v2674 = vmul.f32 %v2671, %v2669
        %v2675 = vmul.f32 %v2671, %v2670
        %v2676 = vadd.f32 %v2662, %v2672
        %v2677 = vadd.f32 %v2663, %v2673
        %v2678 = vadd.f32 %v2664, %v2674
        %v2679 = vadd.f32 %v2665, %v2675
        %s2680 = sld [smem:[#allocation4 + $0x75]]
        %v2681 = vld [vmem:[%s657] sm:$0xff]
        %v2682 = vld [vmem:[%s657 + $0x8] sm:$0xff]
        %v2683 = vld [vmem:[%s657 + $0x10] sm:$0xff]
        %v2684 = vld [vmem:[%s657 + $0x18] sm:$0xf]
        %v2685 = vstv %s2680
        %v2686 = vmul.f32 %v2685, %v2681
        %v2687 = vmul.f32 %v2685, %v2682
        %v2688 = vmul.f32 %v2685, %v2683
        %v2689 = vmul.f32 %v2685, %v2684
        %v2690 = vadd.f32 %v2676, %v2686
        %v2691 = vadd.f32 %v2677, %v2687
        %v2692 = vadd.f32 %v2678, %v2688
        %v2693 = vadd.f32 %v2679, %v2689
        %s2694 = sld [smem:[#allocation4 + $0x76]]
        %v2695 = vld [vmem:[%s682] sm:$0xff]
        %v2696 = vld [vmem:[%s682 + $0x8] sm:$0xff]
        %v2697 = vld [vmem:[%s682 + $0x10] sm:$0xff]
        %v2698 = vld [vmem:[%s682 + $0x18] sm:$0xf]
        %v2699 = vstv %s2694
        %v2700 = vmul.f32 %v2699, %v2695
        %v2701 = vmul.f32 %v2699, %v2696
        %v2702 = vmul.f32 %v2699, %v2697
        %v2703 = vmul.f32 %v2699, %v2698
        %v2704 = vadd.f32 %v2690, %v2700
        %v2705 = vadd.f32 %v2691, %v2701
        %v2706 = vadd.f32 %v2692, %v2702
        %v2707 = vadd.f32 %v2693, %v2703
        %s2708 = sld [smem:[#allocation4 + $0x77]]
        %v2709 = vld [vmem:[%s707] sm:$0xff]
        %v2710 = vld [vmem:[%s707 + $0x8] sm:$0xff]
        %v2711 = vld [vmem:[%s707 + $0x10] sm:$0xff]
        %v2712 = vld [vmem:[%s707 + $0x18] sm:$0xf]
        %v2713 = vstv %s2708
        %v2714 = vmul.f32 %v2713, %v2709
        %v2715 = vmul.f32 %v2713, %v2710
        %v2716 = vmul.f32 %v2713, %v2711
        %v2717 = vmul.f32 %v2713, %v2712
        %v2718 = vadd.f32 %v2704, %v2714
        %v2719 = vadd.f32 %v2705, %v2715
        %v2720 = vadd.f32 %v2706, %v2716
        %v2721 = vadd.f32 %v2707, %v2717
        %s2722 = sld [smem:[#allocation4 + $0x78]]
        %v2723 = vld [vmem:[%s716] sm:$0xff]
        %v2724 = vld [vmem:[%s716 + $0x8] sm:$0xff]
        %v2725 = vld [vmem:[%s716 + $0x10] sm:$0xff]
        %v2726 = vld [vmem:[%s716 + $0x18] sm:$0xf]
        %v2727 = vstv %s2722
        %v2728 = vmul.f32 %v2727, %v2723
        %v2729 = vmul.f32 %v2727, %v2724
        %v2730 = vmul.f32 %v2727, %v2725
        %v2731 = vmul.f32 %v2727, %v2726
        %v2732 = vadd.f32 %v2718, %v2728
        %v2733 = vadd.f32 %v2719, %v2729
        %v2734 = vadd.f32 %v2720, %v2730
        %v2735 = vadd.f32 %v2721, %v2731
        %s2736 = sld [smem:[#allocation4 + $0x79]]
        %v2737 = vld [vmem:[%s741] sm:$0xff]
        %v2738 = vld [vmem:[%s741 + $0x8] sm:$0xff]
        %v2739 = vld [vmem:[%s741 + $0x10] sm:$0xff]
        %v2740 = vld [vmem:[%s741 + $0x18] sm:$0xf]
        %v2741 = vstv %s2736
        %v2742 = vmul.f32 %v2741, %v2737
        %v2743 = vmul.f32 %v2741, %v2738
        %v2744 = vmul.f32 %v2741, %v2739
        %v2745 = vmul.f32 %v2741, %v2740
        %v2746 = vadd.f32 %v2732, %v2742
        %v2747 = vadd.f32 %v2733, %v2743
        %v2748 = vadd.f32 %v2734, %v2744
        %v2749 = vadd.f32 %v2735, %v2745
        %s2750 = sld [smem:[#allocation4 + $0x7a]]
        %v2751 = vld [vmem:[%s766] sm:$0xff]
        %v2752 = vld [vmem:[%s766 + $0x8] sm:$0xff]
        %v2753 = vld [vmem:[%s766 + $0x10] sm:$0xff]
        %v2754 = vld [vmem:[%s766 + $0x18] sm:$0xf]
        %v2755 = vstv %s2750
        %v2756 = vmul.f32 %v2755, %v2751
        %v2757 = vmul.f32 %v2755, %v2752
        %v2758 = vmul.f32 %v2755, %v2753
        %v2759 = vmul.f32 %v2755, %v2754
        %v2760 = vadd.f32 %v2746, %v2756
        %v2761 = vadd.f32 %v2747, %v2757
        %v2762 = vadd.f32 %v2748, %v2758
        %v2763 = vadd.f32 %v2749, %v2759
        %s2764 = sld [smem:[#allocation4 + $0x7b]]
        %v2765 = vld [vmem:[%s791] sm:$0xff]
        %v2766 = vld [vmem:[%s791 + $0x8] sm:$0xff]
        %v2767 = vld [vmem:[%s791 + $0x10] sm:$0xff]
        %v2768 = vld [vmem:[%s791 + $0x18] sm:$0xf]
        %v2769 = vstv %s2764
        %v2770 = vmul.f32 %v2769, %v2765
        %v2771 = vmul.f32 %v2769, %v2766
        %v2772 = vmul.f32 %v2769, %v2767
        %v2773 = vmul.f32 %v2769, %v2768
        %v2774 = vadd.f32 %v2760, %v2770
        %v2775 = vadd.f32 %v2761, %v2771
        %v2776 = vadd.f32 %v2762, %v2772
        %v2777 = vadd.f32 %v2763, %v2773
        %s2778 = sld [smem:[#allocation4 + $0x7c]]
        %v2779 = vld [vmem:[%s816] sm:$0xff]
        %v2780 = vld [vmem:[%s816 + $0x8] sm:$0xff]
        %v2781 = vld [vmem:[%s816 + $0x10] sm:$0xff]
        %v2782 = vld [vmem:[%s816 + $0x18] sm:$0xf]
        %v2783 = vstv %s2778
        %v2784 = vmul.f32 %v2783, %v2779
        %v2785 = vmul.f32 %v2783, %v2780
        %v2786 = vmul.f32 %v2783, %v2781
        %v2787 = vmul.f32 %v2783, %v2782
        %v2788 = vadd.f32 %v2774, %v2784
        %v2789 = vadd.f32 %v2775, %v2785
        %v2790 = vadd.f32 %v2776, %v2786
        %v2791 = vadd.f32 %v2777, %v2787
        %s2792 = scalar_lea.vmem %s162, 128
        %2793 = vst.msk [vmem:[%s2792] sm:$0xff] %vm1167, %v2788
        %2794 = vst.msk [vmem:[%s2792 + $0x8] sm:$0xff] %vm1167, %v2789
        %2795 = vst.msk [vmem:[%s2792 + $0x10] sm:$0xff] %vm1167, %v2790
        %2796 = vst.msk [vmem:[%s2792 + $0x18] sm:$0xf] %vm1171, %v2791
        %2801 = vrot.lane.b32.xlu0 %v2788, 96
        %v2802 = vpop.permute.xlu0 %2801
        %2803 = vrot.lane.b32.xlu0 %v2789, 96
        %v2804 = vpop.permute.xlu0 %2803
        %2805 = vrot.lane.b32.xlu0 %v2790, 96
        %v2806 = vpop.permute.xlu0 %2805
        %2807 = vrot.lane.b32.xlu0 %v2791, 96
        %v2808 = vpop.permute.xlu0 %2807
        %s2813 = scalar_lea.vmem %s162, 448
        %2814 = vst.msk [vmem:[%s2813] sm:$0xff] %vm1167, %v2802
        %2815 = vst.msk [vmem:[%s2813 + $0x8] sm:$0xff] %vm1167, %v2804
        %2816 = vst.msk [vmem:[%s2813 + $0x10] sm:$0xff] %vm1167, %v2806
        %2817 = vst.msk [vmem:[%s2813 + $0x18] sm:$0xf] %vm1171, %v2808
        %2818 = vrot.lane.b32.xlu0 %v2788, 64
        %v2819 = vpop.permute.xlu0 %2818
        %2820 = vrot.lane.b32.xlu0 %v2789, 64
        %v2821 = vpop.permute.xlu0 %2820
        %2822 = vrot.lane.b32.xlu0 %v2790, 64
        %v2823 = vpop.permute.xlu0 %2822
        %2824 = vrot.lane.b32.xlu0 %v2791, 64
        %v2825 = vpop.permute.xlu0 %2824
        %s2830 = scalar_lea.vmem %s162, 768
        %2831 = vst.msk [vmem:[%s2830] sm:$0xff] %vm1167, %v2819
        %2832 = vst.msk [vmem:[%s2830 + $0x8] sm:$0xff] %vm1167, %v2821
        %2833 = vst.msk [vmem:[%s2830 + $0x10] sm:$0xff] %vm1167, %v2823
        %2834 = vst.msk [vmem:[%s2830 + $0x18] sm:$0xf] %vm1171, %v2825
        %2835 = vrot.lane.b32.xlu0 %v2788, 32
        %v2836 = vpop.permute.xlu0 %2835
        %2837 = vrot.lane.b32.xlu0 %v2789, 32
        %v2838 = vpop.permute.xlu0 %2837
        %2839 = vrot.lane.b32.xlu0 %v2790, 32
        %v2840 = vpop.permute.xlu0 %2839
        %2841 = vrot.lane.b32.xlu0 %v2791, 32
        %v2842 = vpop.permute.xlu0 %2841
        %s2847 = scalar_lea.vmem %s162, 1088
        %2848 = vst.msk [vmem:[%s2847] sm:$0xff] %vm1167, %v2836
        %2849 = vst.msk [vmem:[%s2847 + $0x8] sm:$0xff] %vm1167, %v2838
        %2850 = vst.msk [vmem:[%s2847 + $0x10] sm:$0xff] %vm1167, %v2840
        %2851 = vst.msk [vmem:[%s2847 + $0x18] sm:$0xf] %vm1171, %v2842
        %s2852 = sld [smem:[#allocation4 + $0x7d]]
        %v2853 = vld [vmem:[#allocation3] sm:$0xff]
        %v2854 = vld [vmem:[#allocation3 + $0x8] sm:$0xff]
        %v2855 = vld [vmem:[#allocation3 + $0x10] sm:$0xff]
        %v2856 = vld [vmem:[#allocation3 + $0x18] sm:$0xf]
        %v2857 = vstv %s2852
        %v2858 = vmul.f32 %v2857, %v2853
        %v2859 = vmul.f32 %v2857, %v2854
        %v2860 = vmul.f32 %v2857, %v2855
        %v2861 = vmul.f32 %v2857, %v2856
        %s2862 = sld [smem:[#allocation4 + $0x7e]]
        %v2863 = vld [vmem:[%s305] sm:$0xff]
        %v2864 = vld [vmem:[%s305 + $0x8] sm:$0xff]
        %v2865 = vld [vmem:[%s305 + $0x10] sm:$0xff]
        %v2866 = vld [vmem:[%s305 + $0x18] sm:$0xf]
        %v2867 = vstv %s2862
        %v2868 = vmul.f32 %v2867, %v2863
        %v2869 = vmul.f32 %v2867, %v2864
        %v2870 = vmul.f32 %v2867, %v2865
        %v2871 = vmul.f32 %v2867, %v2866
        %v2872 = vadd.f32 %v2858, %v2868
        %v2873 = vadd.f32 %v2859, %v2869
        %v2874 = vadd.f32 %v2860, %v2870
        %v2875 = vadd.f32 %v2861, %v2871
        %s2876 = sld [smem:[#allocation4 + $0x7f]]
        %v2877 = vld [vmem:[%s330] sm:$0xff]
        %v2878 = vld [vmem:[%s330 + $0x8] sm:$0xff]
        %v2879 = vld [vmem:[%s330 + $0x10] sm:$0xff]
        %v2880 = vld [vmem:[%s330 + $0x18] sm:$0xf]
        %v2881 = vstv %s2876
        %v2882 = vmul.f32 %v2881, %v2877
        %v2883 = vmul.f32 %v2881, %v2878
        %v2884 = vmul.f32 %v2881, %v2879
        %v2885 = vmul.f32 %v2881, %v2880
        %v2886 = vadd.f32 %v2872, %v2882
        %v2887 = vadd.f32 %v2873, %v2883
        %v2888 = vadd.f32 %v2874, %v2884
        %v2889 = vadd.f32 %v2875, %v2885
        %s2890 = sld [smem:[#allocation4 + $0x80]]
        %v2891 = vld [vmem:[%s355] sm:$0xff]
        %v2892 = vld [vmem:[%s355 + $0x8] sm:$0xff]
        %v2893 = vld [vmem:[%s355 + $0x10] sm:$0xff]
        %v2894 = vld [vmem:[%s355 + $0x18] sm:$0xf]
        %v2895 = vstv %s2890
        %v2896 = vmul.f32 %v2895, %v2891
        %v2897 = vmul.f32 %v2895, %v2892
        %v2898 = vmul.f32 %v2895, %v2893
        %v2899 = vmul.f32 %v2895, %v2894
        %v2900 = vadd.f32 %v2886, %v2896
        %v2901 = vadd.f32 %v2887, %v2897
        %v2902 = vadd.f32 %v2888, %v2898
        %v2903 = vadd.f32 %v2889, %v2899
        %s2904 = sld [smem:[#allocation4 + $0x81]]
        %v2905 = vld [vmem:[%s380] sm:$0xff]
        %v2906 = vld [vmem:[%s380 + $0x8] sm:$0xff]
        %v2907 = vld [vmem:[%s380 + $0x10] sm:$0xff]
        %v2908 = vld [vmem:[%s380 + $0x18] sm:$0xf]
        %v2909 = vstv %s2904
        %v2910 = vmul.f32 %v2909, %v2905
        %v2911 = vmul.f32 %v2909, %v2906
        %v2912 = vmul.f32 %v2909, %v2907
        %v2913 = vmul.f32 %v2909, %v2908
        %v2914 = vadd.f32 %v2900, %v2910
        %v2915 = vadd.f32 %v2901, %v2911
        %v2916 = vadd.f32 %v2902, %v2912
        %v2917 = vadd.f32 %v2903, %v2913
        %s2918 = sld [smem:[#allocation4 + $0x82]]
        %v2919 = vld [vmem:[%s389] sm:$0xff]
        %v2920 = vld [vmem:[%s389 + $0x8] sm:$0xff]
        %v2921 = vld [vmem:[%s389 + $0x10] sm:$0xff]
        %v2922 = vld [vmem:[%s389 + $0x18] sm:$0xf]
        %v2923 = vstv %s2918
        %v2924 = vmul.f32 %v2923, %v2919
        %v2925 = vmul.f32 %v2923, %v2920
        %v2926 = vmul.f32 %v2923, %v2921
        %v2927 = vmul.f32 %v2923, %v2922
        %v2928 = vadd.f32 %v2914, %v2924
        %v2929 = vadd.f32 %v2915, %v2925
        %v2930 = vadd.f32 %v2916, %v2926
        %v2931 = vadd.f32 %v2917, %v2927
        %s2932 = sld [smem:[#allocation4 + $0x83]]
        %v2933 = vld [vmem:[%s414] sm:$0xff]
        %v2934 = vld [vmem:[%s414 + $0x8] sm:$0xff]
        %v2935 = vld [vmem:[%s414 + $0x10] sm:$0xff]
        %v2936 = vld [vmem:[%s414 + $0x18] sm:$0xf]
        %v2937 = vstv %s2932
        %v2938 = vmul.f32 %v2937, %v2933
        %v2939 = vmul.f32 %v2937, %v2934
        %v2940 = vmul.f32 %v2937, %v2935
        %v2941 = vmul.f32 %v2937, %v2936
        %v2942 = vadd.f32 %v2928, %v2938
        %v2943 = vadd.f32 %v2929, %v2939
        %v2944 = vadd.f32 %v2930, %v2940
        %v2945 = vadd.f32 %v2931, %v2941
        %s2946 = sld [smem:[#allocation4 + $0x84]]
        %v2947 = vld [vmem:[%s439] sm:$0xff]
        %v2948 = vld [vmem:[%s439 + $0x8] sm:$0xff]
        %v2949 = vld [vmem:[%s439 + $0x10] sm:$0xff]
        %v2950 = vld [vmem:[%s439 + $0x18] sm:$0xf]
        %v2951 = vstv %s2946
        %v2952 = vmul.f32 %v2951, %v2947
        %v2953 = vmul.f32 %v2951, %v2948
        %v2954 = vmul.f32 %v2951, %v2949
        %v2955 = vmul.f32 %v2951, %v2950
        %v2956 = vadd.f32 %v2942, %v2952
        %v2957 = vadd.f32 %v2943, %v2953
        %v2958 = vadd.f32 %v2944, %v2954
        %v2959 = vadd.f32 %v2945, %v2955
        %s2960 = sld [smem:[#allocation4 + $0x85]]
        %v2961 = vld [vmem:[%s464] sm:$0xff]
        %v2962 = vld [vmem:[%s464 + $0x8] sm:$0xff]
        %v2963 = vld [vmem:[%s464 + $0x10] sm:$0xff]
        %v2964 = vld [vmem:[%s464 + $0x18] sm:$0xf]
        %v2965 = vstv %s2960
        %v2966 = vmul.f32 %v2965, %v2961
        %v2967 = vmul.f32 %v2965, %v2962
        %v2968 = vmul.f32 %v2965, %v2963
        %v2969 = vmul.f32 %v2965, %v2964
        %v2970 = vadd.f32 %v2956, %v2966
        %v2971 = vadd.f32 %v2957, %v2967
        %v2972 = vadd.f32 %v2958, %v2968
        %v2973 = vadd.f32 %v2959, %v2969
        %s2974 = sld [smem:[#allocation4 + $0x86]]
        %v2975 = vld [vmem:[%s489] sm:$0xff]
        %v2976 = vld [vmem:[%s489 + $0x8] sm:$0xff]
        %v2977 = vld [vmem:[%s489 + $0x10] sm:$0xff]
        %v2978 = vld [vmem:[%s489 + $0x18] sm:$0xf]
        %v2979 = vstv %s2974
        %v2980 = vmul.f32 %v2979, %v2975
        %v2981 = vmul.f32 %v2979, %v2976
        %v2982 = vmul.f32 %v2979, %v2977
        %v2983 = vmul.f32 %v2979, %v2978
        %v2984 = vadd.f32 %v2970, %v2980
        %v2985 = vadd.f32 %v2971, %v2981
        %v2986 = vadd.f32 %v2972, %v2982
        %v2987 = vadd.f32 %v2973, %v2983
        %s2988 = sld [smem:[#allocation4 + $0x87]]
        %v2989 = vld [vmem:[%s498] sm:$0xff]
        %v2990 = vld [vmem:[%s498 + $0x8] sm:$0xff]
        %v2991 = vld [vmem:[%s498 + $0x10] sm:$0xff]
        %v2992 = vld [vmem:[%s498 + $0x18] sm:$0xf]
        %v2993 = vstv %s2988
        %v2994 = vmul.f32 %v2993, %v2989
        %v2995 = vmul.f32 %v2993, %v2990
        %v2996 = vmul.f32 %v2993, %v2991
        %v2997 = vmul.f32 %v2993, %v2992
        %v2998 = vadd.f32 %v2984, %v2994
        %v2999 = vadd.f32 %v2985, %v2995
        %v3000 = vadd.f32 %v2986, %v2996
        %v3001 = vadd.f32 %v2987, %v2997
        %s3002 = sld [smem:[#allocation4 + $0x88]]
        %v3003 = vld [vmem:[%s523] sm:$0xff]
        %v3004 = vld [vmem:[%s523 + $0x8] sm:$0xff]
        %v3005 = vld [vmem:[%s523 + $0x10] sm:$0xff]
        %v3006 = vld [vmem:[%s523 + $0x18] sm:$0xf]
        %v3007 = vstv %s3002
        %v3008 = vmul.f32 %v3007, %v3003
        %v3009 = vmul.f32 %v3007, %v3004
        %v3010 = vmul.f32 %v3007, %v3005
        %v3011 = vmul.f32 %v3007, %v3006
        %v3012 = vadd.f32 %v2998, %v3008
        %v3013 = vadd.f32 %v2999, %v3009
        %v3014 = vadd.f32 %v3000, %v3010
        %v3015 = vadd.f32 %v3001, %v3011
        %s3016 = sld [smem:[#allocation4 + $0x89]]
        %v3017 = vld [vmem:[%s548] sm:$0xff]
        %v3018 = vld [vmem:[%s548 + $0x8] sm:$0xff]
        %v3019 = vld [vmem:[%s548 + $0x10] sm:$0xff]
        %v3020 = vld [vmem:[%s548 + $0x18] sm:$0xf]
        %v3021 = vstv %s3016
        %v3022 = vmul.f32 %v3021, %v3017
        %v3023 = vmul.f32 %v3021, %v3018
        %v3024 = vmul.f32 %v3021, %v3019
        %v3025 = vmul.f32 %v3021, %v3020
        %v3026 = vadd.f32 %v3012, %v3022
        %v3027 = vadd.f32 %v3013, %v3023
        %v3028 = vadd.f32 %v3014, %v3024
        %v3029 = vadd.f32 %v3015, %v3025
        %s3030 = sld [smem:[#allocation4 + $0x8a]]
        %v3031 = vld [vmem:[%s573] sm:$0xff]
        %v3032 = vld [vmem:[%s573 + $0x8] sm:$0xff]
        %v3033 = vld [vmem:[%s573 + $0x10] sm:$0xff]
        %v3034 = vld [vmem:[%s573 + $0x18] sm:$0xf]
        %v3035 = vstv %s3030
        %v3036 = vmul.f32 %v3035, %v3031
        %v3037 = vmul.f32 %v3035, %v3032
        %v3038 = vmul.f32 %v3035, %v3033
        %v3039 = vmul.f32 %v3035, %v3034
        %v3040 = vadd.f32 %v3026, %v3036
        %v3041 = vadd.f32 %v3027, %v3037
        %v3042 = vadd.f32 %v3028, %v3038
        %v3043 = vadd.f32 %v3029, %v3039
        %s3044 = sld [smem:[#allocation4 + $0x8b]]
        %v3045 = vld [vmem:[%s598] sm:$0xff]
        %v3046 = vld [vmem:[%s598 + $0x8] sm:$0xff]
        %v3047 = vld [vmem:[%s598 + $0x10] sm:$0xff]
        %v3048 = vld [vmem:[%s598 + $0x18] sm:$0xf]
        %v3049 = vstv %s3044
        %v3050 = vmul.f32 %v3049, %v3045
        %v3051 = vmul.f32 %v3049, %v3046
        %v3052 = vmul.f32 %v3049, %v3047
        %v3053 = vmul.f32 %v3049, %v3048
        %v3054 = vadd.f32 %v3040, %v3050
        %v3055 = vadd.f32 %v3041, %v3051
        %v3056 = vadd.f32 %v3042, %v3052
        %v3057 = vadd.f32 %v3043, %v3053
        %s3058 = sld [smem:[#allocation4 + $0x8c]]
        %v3059 = vld [vmem:[%s607] sm:$0xff]
        %v3060 = vld [vmem:[%s607 + $0x8] sm:$0xff]
        %v3061 = vld [vmem:[%s607 + $0x10] sm:$0xff]
        %v3062 = vld [vmem:[%s607 + $0x18] sm:$0xf]
        %v3063 = vstv %s3058
        %v3064 = vmul.f32 %v3063, %v3059
        %v3065 = vmul.f32 %v3063, %v3060
        %v3066 = vmul.f32 %v3063, %v3061
        %v3067 = vmul.f32 %v3063, %v3062
        %v3068 = vadd.f32 %v3054, %v3064
        %v3069 = vadd.f32 %v3055, %v3065
        %v3070 = vadd.f32 %v3056, %v3066
        %v3071 = vadd.f32 %v3057, %v3067
        %s3072 = sld [smem:[#allocation4 + $0x8d]]
        %v3073 = vld [vmem:[%s632] sm:$0xff]
        %v3074 = vld [vmem:[%s632 + $0x8] sm:$0xff]
        %v3075 = vld [vmem:[%s632 + $0x10] sm:$0xff]
        %v3076 = vld [vmem:[%s632 + $0x18] sm:$0xf]
        %v3077 = vstv %s3072
        %v3078 = vmul.f32 %v3077, %v3073
        %v3079 = vmul.f32 %v3077, %v3074
        %v3080 = vmul.f32 %v3077, %v3075
        %v3081 = vmul.f32 %v3077, %v3076
        %v3082 = vadd.f32 %v3068, %v3078
        %v3083 = vadd.f32 %v3069, %v3079
        %v3084 = vadd.f32 %v3070, %v3080
        %v3085 = vadd.f32 %v3071, %v3081
        %s3086 = sld [smem:[#allocation4 + $0x8e]]
        %v3087 = vld [vmem:[%s657] sm:$0xff]
        %v3088 = vld [vmem:[%s657 + $0x8] sm:$0xff]
        %v3089 = vld [vmem:[%s657 + $0x10] sm:$0xff]
        %v3090 = vld [vmem:[%s657 + $0x18] sm:$0xf]
        %v3091 = vstv %s3086
        %v3092 = vmul.f32 %v3091, %v3087
        %v3093 = vmul.f32 %v3091, %v3088
        %v3094 = vmul.f32 %v3091, %v3089
        %v3095 = vmul.f32 %v3091, %v3090
        %v3096 = vadd.f32 %v3082, %v3092
        %v3097 = vadd.f32 %v3083, %v3093
        %v3098 = vadd.f32 %v3084, %v3094
        %v3099 = vadd.f32 %v3085, %v3095
        %s3100 = sld [smem:[#allocation4 + $0x8f]]
        %v3101 = vld [vmem:[%s682] sm:$0xff]
        %v3102 = vld [vmem:[%s682 + $0x8] sm:$0xff]
        %v3103 = vld [vmem:[%s682 + $0x10] sm:$0xff]
        %v3104 = vld [vmem:[%s682 + $0x18] sm:$0xf]
        %v3105 = vstv %s3100
        %v3106 = vmul.f32 %v3105, %v3101
        %v3107 = vmul.f32 %v3105, %v3102
        %v3108 = vmul.f32 %v3105, %v3103
        %v3109 = vmul.f32 %v3105, %v3104
        %v3110 = vadd.f32 %v3096, %v3106
        %v3111 = vadd.f32 %v3097, %v3107
        %v3112 = vadd.f32 %v3098, %v3108
        %v3113 = vadd.f32 %v3099, %v3109
        %s3114 = sld [smem:[#allocation4 + $0x90]]
        %v3115 = vld [vmem:[%s707] sm:$0xff]
        %v3116 = vld [vmem:[%s707 + $0x8] sm:$0xff]
        %v3117 = vld [vmem:[%s707 + $0x10] sm:$0xff]
        %v3118 = vld [vmem:[%s707 + $0x18] sm:$0xf]
        %v3119 = vstv %s3114
        %v3120 = vmul.f32 %v3119, %v3115
        %v3121 = vmul.f32 %v3119, %v3116
        %v3122 = vmul.f32 %v3119, %v3117
        %v3123 = vmul.f32 %v3119, %v3118
        %v3124 = vadd.f32 %v3110, %v3120
        %v3125 = vadd.f32 %v3111, %v3121
        %v3126 = vadd.f32 %v3112, %v3122
        %v3127 = vadd.f32 %v3113, %v3123
        %s3128 = sld [smem:[#allocation4 + $0x91]]
        %v3129 = vld [vmem:[%s716] sm:$0xff]
        %v3130 = vld [vmem:[%s716 + $0x8] sm:$0xff]
        %v3131 = vld [vmem:[%s716 + $0x10] sm:$0xff]
        %v3132 = vld [vmem:[%s716 + $0x18] sm:$0xf]
        %v3133 = vstv %s3128
        %v3134 = vmul.f32 %v3133, %v3129
        %v3135 = vmul.f32 %v3133, %v3130
        %v3136 = vmul.f32 %v3133, %v3131
        %v3137 = vmul.f32 %v3133, %v3132
        %v3138 = vadd.f32 %v3124, %v3134
        %v3139 = vadd.f32 %v3125, %v3135
        %v3140 = vadd.f32 %v3126, %v3136
        %v3141 = vadd.f32 %v3127, %v3137
        %s3142 = sld [smem:[#allocation4 + $0x92]]
        %v3143 = vld [vmem:[%s741] sm:$0xff]
        %v3144 = vld [vmem:[%s741 + $0x8] sm:$0xff]
        %v3145 = vld [vmem:[%s741 + $0x10] sm:$0xff]
        %v3146 = vld [vmem:[%s741 + $0x18] sm:$0xf]
        %v3147 = vstv %s3142
        %v3148 = vmul.f32 %v3147, %v3143
        %v3149 = vmul.f32 %v3147, %v3144
        %v3150 = vmul.f32 %v3147, %v3145
        %v3151 = vmul.f32 %v3147, %v3146
        %v3152 = vadd.f32 %v3138, %v3148
        %v3153 = vadd.f32 %v3139, %v3149
        %v3154 = vadd.f32 %v3140, %v3150
        %v3155 = vadd.f32 %v3141, %v3151
        %s3156 = sld [smem:[#allocation4 + $0x93]]
        %v3157 = vld [vmem:[%s766] sm:$0xff]
        %v3158 = vld [vmem:[%s766 + $0x8] sm:$0xff]
        %v3159 = vld [vmem:[%s766 + $0x10] sm:$0xff]
        %v3160 = vld [vmem:[%s766 + $0x18] sm:$0xf]
        %v3161 = vstv %s3156
        %v3162 = vmul.f32 %v3161, %v3157
        %v3163 = vmul.f32 %v3161, %v3158
        %v3164 = vmul.f32 %v3161, %v3159
        %v3165 = vmul.f32 %v3161, %v3160
        %v3166 = vadd.f32 %v3152, %v3162
        %v3167 = vadd.f32 %v3153, %v3163
        %v3168 = vadd.f32 %v3154, %v3164
        %v3169 = vadd.f32 %v3155, %v3165
        %s3170 = sld [smem:[#allocation4 + $0x94]]
        %v3171 = vld [vmem:[%s791] sm:$0xff]
        %v3172 = vld [vmem:[%s791 + $0x8] sm:$0xff]
        %v3173 = vld [vmem:[%s791 + $0x10] sm:$0xff]
        %v3174 = vld [vmem:[%s791 + $0x18] sm:$0xf]
        %v3175 = vstv %s3170
        %v3176 = vmul.f32 %v3175, %v3171
        %v3177 = vmul.f32 %v3175, %v3172
        %v3178 = vmul.f32 %v3175, %v3173
        %v3179 = vmul.f32 %v3175, %v3174
        %v3180 = vadd.f32 %v3166, %v3176
        %v3181 = vadd.f32 %v3167, %v3177
        %v3182 = vadd.f32 %v3168, %v3178
        %v3183 = vadd.f32 %v3169, %v3179
        %s3184 = sld [smem:[#allocation4 + $0x95]]
        %v3185 = vld [vmem:[%s816] sm:$0xff]
        %v3186 = vld [vmem:[%s816 + $0x8] sm:$0xff]
        %v3187 = vld [vmem:[%s816 + $0x10] sm:$0xff]
        %v3188 = vld [vmem:[%s816 + $0x18] sm:$0xf]
        %v3189 = vstv %s3184
        %v3190 = vmul.f32 %v3189, %v3185
        %v3191 = vmul.f32 %v3189, %v3186
        %v3192 = vmul.f32 %v3189, %v3187
        %v3193 = vmul.f32 %v3189, %v3188
        %v3194 = vadd.f32 %v3180, %v3190
        %v3195 = vadd.f32 %v3181, %v3191
        %v3196 = vadd.f32 %v3182, %v3192
        %v3197 = vadd.f32 %v3183, %v3193
        %s3198 = scalar_lea.vmem %s162, 160
        %3199 = vst.msk [vmem:[%s3198] sm:$0xff] %vm1167, %v3194
        %3200 = vst.msk [vmem:[%s3198 + $0x8] sm:$0xff] %vm1167, %v3195
        %3201 = vst.msk [vmem:[%s3198 + $0x10] sm:$0xff] %vm1167, %v3196
        %3202 = vst.msk [vmem:[%s3198 + $0x18] sm:$0xf] %vm1171, %v3197
        %3207 = vrot.lane.b32.xlu0 %v3194, 96
        %v3208 = vpop.permute.xlu0 %3207
        %3209 = vrot.lane.b32.xlu0 %v3195, 96
        %v3210 = vpop.permute.xlu0 %3209
        %3211 = vrot.lane.b32.xlu0 %v3196, 96
        %v3212 = vpop.permute.xlu0 %3211
        %3213 = vrot.lane.b32.xlu0 %v3197, 96
        %v3214 = vpop.permute.xlu0 %3213
        %s3219 = scalar_lea.vmem %s162, 480
        %3220 = vst.msk [vmem:[%s3219] sm:$0xff] %vm1167, %v3208
        %3221 = vst.msk [vmem:[%s3219 + $0x8] sm:$0xff] %vm1167, %v3210
        %3222 = vst.msk [vmem:[%s3219 + $0x10] sm:$0xff] %vm1167, %v3212
        %3223 = vst.msk [vmem:[%s3219 + $0x18] sm:$0xf] %vm1171, %v3214
        %3224 = vrot.lane.b32.xlu0 %v3194, 64
        %v3225 = vpop.permute.xlu0 %3224
        %3226 = vrot.lane.b32.xlu0 %v3195, 64
        %v3227 = vpop.permute.xlu0 %3226
        %3228 = vrot.lane.b32.xlu0 %v3196, 64
        %v3229 = vpop.permute.xlu0 %3228
        %3230 = vrot.lane.b32.xlu0 %v3197, 64
        %v3231 = vpop.permute.xlu0 %3230
        %s3236 = scalar_lea.vmem %s162, 800
        %3237 = vst.msk [vmem:[%s3236] sm:$0xff] %vm1167, %v3225
        %3238 = vst.msk [vmem:[%s3236 + $0x8] sm:$0xff] %vm1167, %v3227
        %3239 = vst.msk [vmem:[%s3236 + $0x10] sm:$0xff] %vm1167, %v3229
        %3240 = vst.msk [vmem:[%s3236 + $0x18] sm:$0xf] %vm1171, %v3231
        %3241 = vrot.lane.b32.xlu0 %v3194, 32
        %v3242 = vpop.permute.xlu0 %3241
        %3243 = vrot.lane.b32.xlu0 %v3195, 32
        %v3244 = vpop.permute.xlu0 %3243
        %3245 = vrot.lane.b32.xlu0 %v3196, 32
        %v3246 = vpop.permute.xlu0 %3245
        %3247 = vrot.lane.b32.xlu0 %v3197, 32
        %v3248 = vpop.permute.xlu0 %3247
        %s3253 = scalar_lea.vmem %s162, 1120
        %3254 = vst.msk [vmem:[%s3253] sm:$0xff] %vm1167, %v3242
        %3255 = vst.msk [vmem:[%s3253 + $0x8] sm:$0xff] %vm1167, %v3244
        %3256 = vst.msk [vmem:[%s3253 + $0x10] sm:$0xff] %vm1167, %v3246
        %3257 = vst.msk [vmem:[%s3253 + $0x18] sm:$0xf] %vm1171, %v3248
        %s3258 = sld [smem:[#allocation4 + $0x96]]
        %v3259 = vld [vmem:[#allocation3] sm:$0xff]
        %v3260 = vld [vmem:[#allocation3 + $0x8] sm:$0xff]
        %v3261 = vld [vmem:[#allocation3 + $0x10] sm:$0xff]
        %v3262 = vld [vmem:[#allocation3 + $0x18] sm:$0xf]
        %v3263 = vstv %s3258
        %v3264 = vmul.f32 %v3263, %v3259
        %v3265 = vmul.f32 %v3263, %v3260
        %v3266 = vmul.f32 %v3263, %v3261
        %v3267 = vmul.f32 %v3263, %v3262
        %s3268 = sld [smem:[#allocation4 + $0x97]]
        %v3269 = vld [vmem:[%s305] sm:$0xff]
        %v3270 = vld [vmem:[%s305 + $0x8] sm:$0xff]
        %v3271 = vld [vmem:[%s305 + $0x10] sm:$0xff]
        %v3272 = vld [vmem:[%s305 + $0x18] sm:$0xf]
        %v3273 = vstv %s3268
        %v3274 = vmul.f32 %v3273, %v3269
        %v3275 = vmul.f32 %v3273, %v3270
        %v3276 = vmul.f32 %v3273, %v3271
        %v3277 = vmul.f32 %v3273, %v3272
        %v3278 = vadd.f32 %v3264, %v3274
        %v3279 = vadd.f32 %v3265, %v3275
        %v3280 = vadd.f32 %v3266, %v3276
        %v3281 = vadd.f32 %v3267, %v3277
        %s3282 = sld [smem:[#allocation4 + $0x98]]
        %v3283 = vld [vmem:[%s330] sm:$0xff]
        %v3284 = vld [vmem:[%s330 + $0x8] sm:$0xff]
        %v3285 = vld [vmem:[%s330 + $0x10] sm:$0xff]
        %v3286 = vld [vmem:[%s330 + $0x18] sm:$0xf]
        %v3287 = vstv %s3282
        %v3288 = vmul.f32 %v3287, %v3283
        %v3289 = vmul.f32 %v3287, %v3284
        %v3290 = vmul.f32 %v3287, %v3285
        %v3291 = vmul.f32 %v3287, %v3286
        %v3292 = vadd.f32 %v3278, %v3288
        %v3293 = vadd.f32 %v3279, %v3289
        %v3294 = vadd.f32 %v3280, %v3290
        %v3295 = vadd.f32 %v3281, %v3291
        %s3296 = sld [smem:[#allocation4 + $0x99]]
        %v3297 = vld [vmem:[%s355] sm:$0xff]
        %v3298 = vld [vmem:[%s355 + $0x8] sm:$0xff]
        %v3299 = vld [vmem:[%s355 + $0x10] sm:$0xff]
        %v3300 = vld [vmem:[%s355 + $0x18] sm:$0xf]
        %v3301 = vstv %s3296
        %v3302 = vmul.f32 %v3301, %v3297
        %v3303 = vmul.f32 %v3301, %v3298
        %v3304 = vmul.f32 %v3301, %v3299
        %v3305 = vmul.f32 %v3301, %v3300
        %v3306 = vadd.f32 %v3292, %v3302
        %v3307 = vadd.f32 %v3293, %v3303
        %v3308 = vadd.f32 %v3294, %v3304
        %v3309 = vadd.f32 %v3295, %v3305
        %s3310 = sld [smem:[#allocation4 + $0x9a]]
        %v3311 = vld [vmem:[%s380] sm:$0xff]
        %v3312 = vld [vmem:[%s380 + $0x8] sm:$0xff]
        %v3313 = vld [vmem:[%s380 + $0x10] sm:$0xff]
        %v3314 = vld [vmem:[%s380 + $0x18] sm:$0xf]
        %v3315 = vstv %s3310
        %v3316 = vmul.f32 %v3315, %v3311
        %v3317 = vmul.f32 %v3315, %v3312
        %v3318 = vmul.f32 %v3315, %v3313
        %v3319 = vmul.f32 %v3315, %v3314
        %v3320 = vadd.f32 %v3306, %v3316
        %v3321 = vadd.f32 %v3307, %v3317
        %v3322 = vadd.f32 %v3308, %v3318
        %v3323 = vadd.f32 %v3309, %v3319
        %s3324 = sld [smem:[#allocation4 + $0x9b]]
        %v3325 = vld [vmem:[%s389] sm:$0xff]
        %v3326 = vld [vmem:[%s389 + $0x8] sm:$0xff]
        %v3327 = vld [vmem:[%s389 + $0x10] sm:$0xff]
        %v3328 = vld [vmem:[%s389 + $0x18] sm:$0xf]
        %v3329 = vstv %s3324
        %v3330 = vmul.f32 %v3329, %v3325
        %v3331 = vmul.f32 %v3329, %v3326
        %v3332 = vmul.f32 %v3329, %v3327
        %v3333 = vmul.f32 %v3329, %v3328
        %v3334 = vadd.f32 %v3320, %v3330
        %v3335 = vadd.f32 %v3321, %v3331
        %v3336 = vadd.f32 %v3322, %v3332
        %v3337 = vadd.f32 %v3323, %v3333
        %s3338 = sld [smem:[#allocation4 + $0x9c]]
        %v3339 = vld [vmem:[%s414] sm:$0xff]
        %v3340 = vld [vmem:[%s414 + $0x8] sm:$0xff]
        %v3341 = vld [vmem:[%s414 + $0x10] sm:$0xff]
        %v3342 = vld [vmem:[%s414 + $0x18] sm:$0xf]
        %v3343 = vstv %s3338
        %v3344 = vmul.f32 %v3343, %v3339
        %v3345 = vmul.f32 %v3343, %v3340
        %v3346 = vmul.f32 %v3343, %v3341
        %v3347 = vmul.f32 %v3343, %v3342
        %v3348 = vadd.f32 %v3334, %v3344
        %v3349 = vadd.f32 %v3335, %v3345
        %v3350 = vadd.f32 %v3336, %v3346
        %v3351 = vadd.f32 %v3337, %v3347
        %s3352 = sld [smem:[#allocation4 + $0x9d]]
        %v3353 = vld [vmem:[%s439] sm:$0xff]
        %v3354 = vld [vmem:[%s439 + $0x8] sm:$0xff]
        %v3355 = vld [vmem:[%s439 + $0x10] sm:$0xff]
        %v3356 = vld [vmem:[%s439 + $0x18] sm:$0xf]
        %v3357 = vstv %s3352
        %v3358 = vmul.f32 %v3357, %v3353
        %v3359 = vmul.f32 %v3357, %v3354
        %v3360 = vmul.f32 %v3357, %v3355
        %v3361 = vmul.f32 %v3357, %v3356
        %v3362 = vadd.f32 %v3348, %v3358
        %v3363 = vadd.f32 %v3349, %v3359
        %v3364 = vadd.f32 %v3350, %v3360
        %v3365 = vadd.f32 %v3351, %v3361
        %s3366 = sld [smem:[#allocation4 + $0x9e]]
        %v3367 = vld [vmem:[%s464] sm:$0xff]
        %v3368 = vld [vmem:[%s464 + $0x8] sm:$0xff]
        %v3369 = vld [vmem:[%s464 + $0x10] sm:$0xff]
        %v3370 = vld [vmem:[%s464 + $0x18] sm:$0xf]
        %v3371 = vstv %s3366
        %v3372 = vmul.f32 %v3371, %v3367
        %v3373 = vmul.f32 %v3371, %v3368
        %v3374 = vmul.f32 %v3371, %v3369
        %v3375 = vmul.f32 %v3371, %v3370
        %v3376 = vadd.f32 %v3362, %v3372
        %v3377 = vadd.f32 %v3363, %v3373
        %v3378 = vadd.f32 %v3364, %v3374
        %v3379 = vadd.f32 %v3365, %v3375
        %s3380 = sld [smem:[#allocation4 + $0x9f]]
        %v3381 = vld [vmem:[%s489] sm:$0xff]
        %v3382 = vld [vmem:[%s489 + $0x8] sm:$0xff]
        %v3383 = vld [vmem:[%s489 + $0x10] sm:$0xff]
        %v3384 = vld [vmem:[%s489 + $0x18] sm:$0xf]
        %v3385 = vstv %s3380
        %v3386 = vmul.f32 %v3385, %v3381
        %v3387 = vmul.f32 %v3385, %v3382
        %v3388 = vmul.f32 %v3385, %v3383
        %v3389 = vmul.f32 %v3385, %v3384
        %v3390 = vadd.f32 %v3376, %v3386
        %v3391 = vadd.f32 %v3377, %v3387
        %v3392 = vadd.f32 %v3378, %v3388
        %v3393 = vadd.f32 %v3379, %v3389
        %s3394 = sld [smem:[#allocation4 + $0xa0]]
        %v3395 = vld [vmem:[%s498] sm:$0xff]
        %v3396 = vld [vmem:[%s498 + $0x8] sm:$0xff]
        %v3397 = vld [vmem:[%s498 + $0x10] sm:$0xff]
        %v3398 = vld [vmem:[%s498 + $0x18] sm:$0xf]
        %v3399 = vstv %s3394
        %v3400 = vmul.f32 %v3399, %v3395
        %v3401 = vmul.f32 %v3399, %v3396
        %v3402 = vmul.f32 %v3399, %v3397
        %v3403 = vmul.f32 %v3399, %v3398
        %v3404 = vadd.f32 %v3390, %v3400
        %v3405 = vadd.f32 %v3391, %v3401
        %v3406 = vadd.f32 %v3392, %v3402
        %v3407 = vadd.f32 %v3393, %v3403
        %s3408 = sld [smem:[#allocation4 + $0xa1]]
        %v3409 = vld [vmem:[%s523] sm:$0xff]
        %v3410 = vld [vmem:[%s523 + $0x8] sm:$0xff]
        %v3411 = vld [vmem:[%s523 + $0x10] sm:$0xff]
        %v3412 = vld [vmem:[%s523 + $0x18] sm:$0xf]
        %v3413 = vstv %s3408
        %v3414 = vmul.f32 %v3413, %v3409
        %v3415 = vmul.f32 %v3413, %v3410
        %v3416 = vmul.f32 %v3413, %v3411
        %v3417 = vmul.f32 %v3413, %v3412
        %v3418 = vadd.f32 %v3404, %v3414
        %v3419 = vadd.f32 %v3405, %v3415
        %v3420 = vadd.f32 %v3406, %v3416
        %v3421 = vadd.f32 %v3407, %v3417
        %s3422 = sld [smem:[#allocation4 + $0xa2]]
        %v3423 = vld [vmem:[%s548] sm:$0xff]
        %v3424 = vld [vmem:[%s548 + $0x8] sm:$0xff]
        %v3425 = vld [vmem:[%s548 + $0x10] sm:$0xff]
        %v3426 = vld [vmem:[%s548 + $0x18] sm:$0xf]
        %v3427 = vstv %s3422
        %v3428 = vmul.f32 %v3427, %v3423
        %v3429 = vmul.f32 %v3427, %v3424
        %v3430 = vmul.f32 %v3427, %v3425
        %v3431 = vmul.f32 %v3427, %v3426
        %v3432 = vadd.f32 %v3418, %v3428
        %v3433 = vadd.f32 %v3419, %v3429
        %v3434 = vadd.f32 %v3420, %v3430
        %v3435 = vadd.f32 %v3421, %v3431
        %s3436 = sld [smem:[#allocation4 + $0xa3]]
        %v3437 = vld [vmem:[%s573] sm:$0xff]
        %v3438 = vld [vmem:[%s573 + $0x8] sm:$0xff]
        %v3439 = vld [vmem:[%s573 + $0x10] sm:$0xff]
        %v3440 = vld [vmem:[%s573 + $0x18] sm:$0xf]
        %v3441 = vstv %s3436
        %v3442 = vmul.f32 %v3441, %v3437
        %v3443 = vmul.f32 %v3441, %v3438
        %v3444 = vmul.f32 %v3441, %v3439
        %v3445 = vmul.f32 %v3441, %v3440
        %v3446 = vadd.f32 %v3432, %v3442
        %v3447 = vadd.f32 %v3433, %v3443
        %v3448 = vadd.f32 %v3434, %v3444
        %v3449 = vadd.f32 %v3435, %v3445
        %s3450 = sld [smem:[#allocation4 + $0xa4]]
        %v3451 = vld [vmem:[%s598] sm:$0xff]
        %v3452 = vld [vmem:[%s598 + $0x8] sm:$0xff]
        %v3453 = vld [vmem:[%s598 + $0x10] sm:$0xff]
        %v3454 = vld [vmem:[%s598 + $0x18] sm:$0xf]
        %v3455 = vstv %s3450
        %v3456 = vmul.f32 %v3455, %v3451
        %v3457 = vmul.f32 %v3455, %v3452
        %v3458 = vmul.f32 %v3455, %v3453
        %v3459 = vmul.f32 %v3455, %v3454
        %v3460 = vadd.f32 %v3446, %v3456
        %v3461 = vadd.f32 %v3447, %v3457
        %v3462 = vadd.f32 %v3448, %v3458
        %v3463 = vadd.f32 %v3449, %v3459
        %s3464 = sld [smem:[#allocation4 + $0xa5]]
        %v3465 = vld [vmem:[%s607] sm:$0xff]
        %v3466 = vld [vmem:[%s607 + $0x8] sm:$0xff]
        %v3467 = vld [vmem:[%s607 + $0x10] sm:$0xff]
        %v3468 = vld [vmem:[%s607 + $0x18] sm:$0xf]
        %v3469 = vstv %s3464
        %v3470 = vmul.f32 %v3469, %v3465
        %v3471 = vmul.f32 %v3469, %v3466
        %v3472 = vmul.f32 %v3469, %v3467
        %v3473 = vmul.f32 %v3469, %v3468
        %v3474 = vadd.f32 %v3460, %v3470
        %v3475 = vadd.f32 %v3461, %v3471
        %v3476 = vadd.f32 %v3462, %v3472
        %v3477 = vadd.f32 %v3463, %v3473
        %s3478 = sld [smem:[#allocation4 + $0xa6]]
        %v3479 = vld [vmem:[%s632] sm:$0xff]
        %v3480 = vld [vmem:[%s632 + $0x8] sm:$0xff]
        %v3481 = vld [vmem:[%s632 + $0x10] sm:$0xff]
        %v3482 = vld [vmem:[%s632 + $0x18] sm:$0xf]
        %v3483 = vstv %s3478
        %v3484 = vmul.f32 %v3483, %v3479
        %v3485 = vmul.f32 %v3483, %v3480
        %v3486 = vmul.f32 %v3483, %v3481
        %v3487 = vmul.f32 %v3483, %v3482
        %v3488 = vadd.f32 %v3474, %v3484
        %v3489 = vadd.f32 %v3475, %v3485
        %v3490 = vadd.f32 %v3476, %v3486
        %v3491 = vadd.f32 %v3477, %v3487
        %s3492 = sld [smem:[#allocation4 + $0xa7]]
        %v3493 = vld [vmem:[%s657] sm:$0xff]
        %v3494 = vld [vmem:[%s657 + $0x8] sm:$0xff]
        %v3495 = vld [vmem:[%s657 + $0x10] sm:$0xff]
        %v3496 = vld [vmem:[%s657 + $0x18] sm:$0xf]
        %v3497 = vstv %s3492
        %v3498 = vmul.f32 %v3497, %v3493
        %v3499 = vmul.f32 %v3497, %v3494
        %v3500 = vmul.f32 %v3497, %v3495
        %v3501 = vmul.f32 %v3497, %v3496
        %v3502 = vadd.f32 %v3488, %v3498
        %v3503 = vadd.f32 %v3489, %v3499
        %v3504 = vadd.f32 %v3490, %v3500
        %v3505 = vadd.f32 %v3491, %v3501
        %s3506 = sld [smem:[#allocation4 + $0xa8]]
        %v3507 = vld [vmem:[%s682] sm:$0xff]
        %v3508 = vld [vmem:[%s682 + $0x8] sm:$0xff]
        %v3509 = vld [vmem:[%s682 + $0x10] sm:$0xff]
        %v3510 = vld [vmem:[%s682 + $0x18] sm:$0xf]
        %v3511 = vstv %s3506
        %v3512 = vmul.f32 %v3511, %v3507
        %v3513 = vmul.f32 %v3511, %v3508
        %v3514 = vmul.f32 %v3511, %v3509
        %v3515 = vmul.f32 %v3511, %v3510
        %v3516 = vadd.f32 %v3502, %v3512
        %v3517 = vadd.f32 %v3503, %v3513
        %v3518 = vadd.f32 %v3504, %v3514
        %v3519 = vadd.f32 %v3505, %v3515
        %s3520 = sld [smem:[#allocation4 + $0xa9]]
        %v3521 = vld [vmem:[%s707] sm:$0xff]
        %v3522 = vld [vmem:[%s707 + $0x8] sm:$0xff]
        %v3523 = vld [vmem:[%s707 + $0x10] sm:$0xff]
        %v3524 = vld [vmem:[%s707 + $0x18] sm:$0xf]
        %v3525 = vstv %s3520
        %v3526 = vmul.f32 %v3525, %v3521
        %v3527 = vmul.f32 %v3525, %v3522
        %v3528 = vmul.f32 %v3525, %v3523
        %v3529 = vmul.f32 %v3525, %v3524
        %v3530 = vadd.f32 %v3516, %v3526
        %v3531 = vadd.f32 %v3517, %v3527
        %v3532 = vadd.f32 %v3518, %v3528
        %v3533 = vadd.f32 %v3519, %v3529
        %s3534 = sld [smem:[#allocation4 + $0xaa]]
        %v3535 = vld [vmem:[%s716] sm:$0xff]
        %v3536 = vld [vmem:[%s716 + $0x8] sm:$0xff]
        %v3537 = vld [vmem:[%s716 + $0x10] sm:$0xff]
        %v3538 = vld [vmem:[%s716 + $0x18] sm:$0xf]
        %v3539 = vstv %s3534
        %v3540 = vmul.f32 %v3539, %v3535
        %v3541 = vmul.f32 %v3539, %v3536
        %v3542 = vmul.f32 %v3539, %v3537
        %v3543 = vmul.f32 %v3539, %v3538
        %v3544 = vadd.f32 %v3530, %v3540
        %v3545 = vadd.f32 %v3531, %v3541
        %v3546 = vadd.f32 %v3532, %v3542
        %v3547 = vadd.f32 %v3533, %v3543
        %s3548 = sld [smem:[#allocation4 + $0xab]]
        %v3549 = vld [vmem:[%s741] sm:$0xff]
        %v3550 = vld [vmem:[%s741 + $0x8] sm:$0xff]
        %v3551 = vld [vmem:[%s741 + $0x10] sm:$0xff]
        %v3552 = vld [vmem:[%s741 + $0x18] sm:$0xf]
        %v3553 = vstv %s3548
        %v3554 = vmul.f32 %v3553, %v3549
        %v3555 = vmul.f32 %v3553, %v3550
        %v3556 = vmul.f32 %v3553, %v3551
        %v3557 = vmul.f32 %v3553, %v3552
        %v3558 = vadd.f32 %v3544, %v3554
        %v3559 = vadd.f32 %v3545, %v3555
        %v3560 = vadd.f32 %v3546, %v3556
        %v3561 = vadd.f32 %v3547, %v3557
        %s3562 = sld [smem:[#allocation4 + $0xac]]
        %v3563 = vld [vmem:[%s766] sm:$0xff]
        %v3564 = vld [vmem:[%s766 + $0x8] sm:$0xff]
        %v3565 = vld [vmem:[%s766 + $0x10] sm:$0xff]
        %v3566 = vld [vmem:[%s766 + $0x18] sm:$0xf]
        %v3567 = vstv %s3562
        %v3568 = vmul.f32 %v3567, %v3563
        %v3569 = vmul.f32 %v3567, %v3564
        %v3570 = vmul.f32 %v3567, %v3565
        %v3571 = vmul.f32 %v3567, %v3566
        %v3572 = vadd.f32 %v3558, %v3568
        %v3573 = vadd.f32 %v3559, %v3569
        %v3574 = vadd.f32 %v3560, %v3570
        %v3575 = vadd.f32 %v3561, %v3571
        %s3576 = sld [smem:[#allocation4 + $0xad]]
        %v3577 = vld [vmem:[%s791] sm:$0xff]
        %v3578 = vld [vmem:[%s791 + $0x8] sm:$0xff]
        %v3579 = vld [vmem:[%s791 + $0x10] sm:$0xff]
        %v3580 = vld [vmem:[%s791 + $0x18] sm:$0xf]
        %v3581 = vstv %s3576
        %v3582 = vmul.f32 %v3581, %v3577
        %v3583 = vmul.f32 %v3581, %v3578
        %v3584 = vmul.f32 %v3581, %v3579
        %v3585 = vmul.f32 %v3581, %v3580
        %v3586 = vadd.f32 %v3572, %v3582
        %v3587 = vadd.f32 %v3573, %v3583
        %v3588 = vadd.f32 %v3574, %v3584
        %v3589 = vadd.f32 %v3575, %v3585
        %s3590 = sld [smem:[#allocation4 + $0xae]]
        %v3591 = vld [vmem:[%s816] sm:$0xff]
        %v3592 = vld [vmem:[%s816 + $0x8] sm:$0xff]
        %v3593 = vld [vmem:[%s816 + $0x10] sm:$0xff]
        %v3594 = vld [vmem:[%s816 + $0x18] sm:$0xf]
        %v3595 = vstv %s3590
        %v3596 = vmul.f32 %v3595, %v3591
        %v3597 = vmul.f32 %v3595, %v3592
        %v3598 = vmul.f32 %v3595, %v3593
        %v3599 = vmul.f32 %v3595, %v3594
        %v3600 = vadd.f32 %v3586, %v3596
        %v3601 = vadd.f32 %v3587, %v3597
        %v3602 = vadd.f32 %v3588, %v3598
        %v3603 = vadd.f32 %v3589, %v3599
        %s3604 = scalar_lea.vmem %s162, 192
        %3605 = vst.msk [vmem:[%s3604] sm:$0xff] %vm1167, %v3600
        %3606 = vst.msk [vmem:[%s3604 + $0x8] sm:$0xff] %vm1167, %v3601
        %3607 = vst.msk [vmem:[%s3604 + $0x10] sm:$0xff] %vm1167, %v3602
        %3608 = vst.msk [vmem:[%s3604 + $0x18] sm:$0xf] %vm1171, %v3603
        %3613 = vrot.lane.b32.xlu0 %v3600, 96
        %v3614 = vpop.permute.xlu0 %3613
        %3615 = vrot.lane.b32.xlu0 %v3601, 96
        %v3616 = vpop.permute.xlu0 %3615
        %3617 = vrot.lane.b32.xlu0 %v3602, 96
        %v3618 = vpop.permute.xlu0 %3617
        %3619 = vrot.lane.b32.xlu0 %v3603, 96
        %v3620 = vpop.permute.xlu0 %3619
        %s3625 = scalar_lea.vmem %s162, 512
        %3626 = vst.msk [vmem:[%s3625] sm:$0xff] %vm1167, %v3614
        %3627 = vst.msk [vmem:[%s3625 + $0x8] sm:$0xff] %vm1167, %v3616
        %3628 = vst.msk [vmem:[%s3625 + $0x10] sm:$0xff] %vm1167, %v3618
        %3629 = vst.msk [vmem:[%s3625 + $0x18] sm:$0xf] %vm1171, %v3620
        %3630 = vrot.lane.b32.xlu0 %v3600, 64
        %v3631 = vpop.permute.xlu0 %3630
        %3632 = vrot.lane.b32.xlu0 %v3601, 64
        %v3633 = vpop.permute.xlu0 %3632
        %3634 = vrot.lane.b32.xlu0 %v3602, 64
        %v3635 = vpop.permute.xlu0 %3634
        %3636 = vrot.lane.b32.xlu0 %v3603, 64
        %v3637 = vpop.permute.xlu0 %3636
        %s3642 = scalar_lea.vmem %s162, 832
        %3643 = vst.msk [vmem:[%s3642] sm:$0xff] %vm1167, %v3631
        %3644 = vst.msk [vmem:[%s3642 + $0x8] sm:$0xff] %vm1167, %v3633
        %3645 = vst.msk [vmem:[%s3642 + $0x10] sm:$0xff] %vm1167, %v3635
        %3646 = vst.msk [vmem:[%s3642 + $0x18] sm:$0xf] %vm1171, %v3637
        %3647 = vrot.lane.b32.xlu0 %v3600, 32
        %v3648 = vpop.permute.xlu0 %3647
        %3649 = vrot.lane.b32.xlu0 %v3601, 32
        %v3650 = vpop.permute.xlu0 %3649
        %3651 = vrot.lane.b32.xlu0 %v3602, 32
        %v3652 = vpop.permute.xlu0 %3651
        %3653 = vrot.lane.b32.xlu0 %v3603, 32
        %v3654 = vpop.permute.xlu0 %3653
        %s3659 = scalar_lea.vmem %s162, 1152
        %3660 = vst.msk [vmem:[%s3659] sm:$0xff] %vm1167, %v3648
        %3661 = vst.msk [vmem:[%s3659 + $0x8] sm:$0xff] %vm1167, %v3650
        %3662 = vst.msk [vmem:[%s3659 + $0x10] sm:$0xff] %vm1167, %v3652
        %3663 = vst.msk [vmem:[%s3659 + $0x18] sm:$0xf] %vm1171, %v3654
        %s3664 = sld [smem:[#allocation4 + $0xaf]]
        %v3665 = vld [vmem:[#allocation3] sm:$0xff]
        %v3666 = vld [vmem:[#allocation3 + $0x8] sm:$0xff]
        %v3667 = vld [vmem:[#allocation3 + $0x10] sm:$0xff]
        %v3668 = vld [vmem:[#allocation3 + $0x18] sm:$0xf]
        %v3669 = vstv %s3664
        %v3670 = vmul.f32 %v3669, %v3665
        %v3671 = vmul.f32 %v3669, %v3666
        %v3672 = vmul.f32 %v3669, %v3667
        %v3673 = vmul.f32 %v3669, %v3668
        %s3674 = sld [smem:[#allocation4 + $0xb0]]
        %v3675 = vld [vmem:[%s305] sm:$0xff]
        %v3676 = vld [vmem:[%s305 + $0x8] sm:$0xff]
        %v3677 = vld [vmem:[%s305 + $0x10] sm:$0xff]
        %v3678 = vld [vmem:[%s305 + $0x18] sm:$0xf]
        %v3679 = vstv %s3674
        %v3680 = vmul.f32 %v3679, %v3675
        %v3681 = vmul.f32 %v3679, %v3676
        %v3682 = vmul.f32 %v3679, %v3677
        %v3683 = vmul.f32 %v3679, %v3678
        %v3684 = vadd.f32 %v3670, %v3680
        %v3685 = vadd.f32 %v3671, %v3681
        %v3686 = vadd.f32 %v3672, %v3682
        %v3687 = vadd.f32 %v3673, %v3683
        %s3688 = sld [smem:[#allocation4 + $0xb1]]
        %v3689 = vld [vmem:[%s330] sm:$0xff]
        %v3690 = vld [vmem:[%s330 + $0x8] sm:$0xff]
        %v3691 = vld [vmem:[%s330 + $0x10] sm:$0xff]
        %v3692 = vld [vmem:[%s330 + $0x18] sm:$0xf]
        %v3693 = vstv %s3688
        %v3694 = vmul.f32 %v3693, %v3689
        %v3695 = vmul.f32 %v3693, %v3690
        %v3696 = vmul.f32 %v3693, %v3691
        %v3697 = vmul.f32 %v3693, %v3692
        %v3698 = vadd.f32 %v3684, %v3694
        %v3699 = vadd.f32 %v3685, %v3695
        %v3700 = vadd.f32 %v3686, %v3696
        %v3701 = vadd.f32 %v3687, %v3697
        %s3702 = sld [smem:[#allocation4 + $0xb2]]
        %v3703 = vld [vmem:[%s355] sm:$0xff]
        %v3704 = vld [vmem:[%s355 + $0x8] sm:$0xff]
        %v3705 = vld [vmem:[%s355 + $0x10] sm:$0xff]
        %v3706 = vld [vmem:[%s355 + $0x18] sm:$0xf]
        %v3707 = vstv %s3702
        %v3708 = vmul.f32 %v3707, %v3703
        %v3709 = vmul.f32 %v3707, %v3704
        %v3710 = vmul.f32 %v3707, %v3705
        %v3711 = vmul.f32 %v3707, %v3706
        %v3712 = vadd.f32 %v3698, %v3708
        %v3713 = vadd.f32 %v3699, %v3709
        %v3714 = vadd.f32 %v3700, %v3710
        %v3715 = vadd.f32 %v3701, %v3711
        %s3716 = sld [smem:[#allocation4 + $0xb3]]
        %v3717 = vld [vmem:[%s380] sm:$0xff]
        %v3718 = vld [vmem:[%s380 + $0x8] sm:$0xff]
        %v3719 = vld [vmem:[%s380 + $0x10] sm:$0xff]
        %v3720 = vld [vmem:[%s380 + $0x18] sm:$0xf]
        %v3721 = vstv %s3716
        %v3722 = vmul.f32 %v3721, %v3717
        %v3723 = vmul.f32 %v3721, %v3718
        %v3724 = vmul.f32 %v3721, %v3719
        %v3725 = vmul.f32 %v3721, %v3720
        %v3726 = vadd.f32 %v3712, %v3722
        %v3727 = vadd.f32 %v3713, %v3723
        %v3728 = vadd.f32 %v3714, %v3724
        %v3729 = vadd.f32 %v3715, %v3725
        %s3730 = sld [smem:[#allocation4 + $0xb4]]
        %v3731 = vld [vmem:[%s389] sm:$0xff]
        %v3732 = vld [vmem:[%s389 + $0x8] sm:$0xff]
        %v3733 = vld [vmem:[%s389 + $0x10] sm:$0xff]
        %v3734 = vld [vmem:[%s389 + $0x18] sm:$0xf]
        %v3735 = vstv %s3730
        %v3736 = vmul.f32 %v3735, %v3731
        %v3737 = vmul.f32 %v3735, %v3732
        %v3738 = vmul.f32 %v3735, %v3733
        %v3739 = vmul.f32 %v3735, %v3734
        %v3740 = vadd.f32 %v3726, %v3736
        %v3741 = vadd.f32 %v3727, %v3737
        %v3742 = vadd.f32 %v3728, %v3738
        %v3743 = vadd.f32 %v3729, %v3739
        %s3744 = sld [smem:[#allocation4 + $0xb5]]
        %v3745 = vld [vmem:[%s414] sm:$0xff]
        %v3746 = vld [vmem:[%s414 + $0x8] sm:$0xff]
        %v3747 = vld [vmem:[%s414 + $0x10] sm:$0xff]
        %v3748 = vld [vmem:[%s414 + $0x18] sm:$0xf]
        %v3749 = vstv %s3744
        %v3750 = vmul.f32 %v3749, %v3745
        %v3751 = vmul.f32 %v3749, %v3746
        %v3752 = vmul.f32 %v3749, %v3747
        %v3753 = vmul.f32 %v3749, %v3748
        %v3754 = vadd.f32 %v3740, %v3750
        %v3755 = vadd.f32 %v3741, %v3751
        %v3756 = vadd.f32 %v3742, %v3752
        %v3757 = vadd.f32 %v3743, %v3753
        %s3758 = sld [smem:[#allocation4 + $0xb6]]
        %v3759 = vld [vmem:[%s439] sm:$0xff]
        %v3760 = vld [vmem:[%s439 + $0x8] sm:$0xff]
        %v3761 = vld [vmem:[%s439 + $0x10] sm:$0xff]
        %v3762 = vld [vmem:[%s439 + $0x18] sm:$0xf]
        %v3763 = vstv %s3758
        %v3764 = vmul.f32 %v3763, %v3759
        %v3765 = vmul.f32 %v3763, %v3760
        %v3766 = vmul.f32 %v3763, %v3761
        %v3767 = vmul.f32 %v3763, %v3762
        %v3768 = vadd.f32 %v3754, %v3764
        %v3769 = vadd.f32 %v3755, %v3765
        %v3770 = vadd.f32 %v3756, %v3766
        %v3771 = vadd.f32 %v3757, %v3767
        %s3772 = sld [smem:[#allocation4 + $0xb7]]
        %v3773 = vld [vmem:[%s464] sm:$0xff]
        %v3774 = vld [vmem:[%s464 + $0x8] sm:$0xff]
        %v3775 = vld [vmem:[%s464 + $0x10] sm:$0xff]
        %v3776 = vld [vmem:[%s464 + $0x18] sm:$0xf]
        %v3777 = vstv %s3772
        %v3778 = vmul.f32 %v3777, %v3773
        %v3779 = vmul.f32 %v3777, %v3774
        %v3780 = vmul.f32 %v3777, %v3775
        %v3781 = vmul.f32 %v3777, %v3776
        %v3782 = vadd.f32 %v3768, %v3778
        %v3783 = vadd.f32 %v3769, %v3779
        %v3784 = vadd.f32 %v3770, %v3780
        %v3785 = vadd.f32 %v3771, %v3781
        %s3786 = sld [smem:[#allocation4 + $0xb8]]
        %v3787 = vld [vmem:[%s489] sm:$0xff]
        %v3788 = vld [vmem:[%s489 + $0x8] sm:$0xff]
        %v3789 = vld [vmem:[%s489 + $0x10] sm:$0xff]
        %v3790 = vld [vmem:[%s489 + $0x18] sm:$0xf]
        %v3791 = vstv %s3786
        %v3792 = vmul.f32 %v3791, %v3787
        %v3793 = vmul.f32 %v3791, %v3788
        %v3794 = vmul.f32 %v3791, %v3789
        %v3795 = vmul.f32 %v3791, %v3790
        %v3796 = vadd.f32 %v3782, %v3792
        %v3797 = vadd.f32 %v3783, %v3793
        %v3798 = vadd.f32 %v3784, %v3794
        %v3799 = vadd.f32 %v3785, %v3795
        %s3800 = sld [smem:[#allocation4 + $0xb9]]
        %v3801 = vld [vmem:[%s498] sm:$0xff]
        %v3802 = vld [vmem:[%s498 + $0x8] sm:$0xff]
        %v3803 = vld [vmem:[%s498 + $0x10] sm:$0xff]
        %v3804 = vld [vmem:[%s498 + $0x18] sm:$0xf]
        %v3805 = vstv %s3800
        %v3806 = vmul.f32 %v3805, %v3801
        %v3807 = vmul.f32 %v3805, %v3802
        %v3808 = vmul.f32 %v3805, %v3803
        %v3809 = vmul.f32 %v3805, %v3804
        %v3810 = vadd.f32 %v3796, %v3806
        %v3811 = vadd.f32 %v3797, %v3807
        %v3812 = vadd.f32 %v3798, %v3808
        %v3813 = vadd.f32 %v3799, %v3809
        %s3814 = sld [smem:[#allocation4 + $0xba]]
        %v3815 = vld [vmem:[%s523] sm:$0xff]
        %v3816 = vld [vmem:[%s523 + $0x8] sm:$0xff]
        %v3817 = vld [vmem:[%s523 + $0x10] sm:$0xff]
        %v3818 = vld [vmem:[%s523 + $0x18] sm:$0xf]
        %v3819 = vstv %s3814
        %v3820 = vmul.f32 %v3819, %v3815
        %v3821 = vmul.f32 %v3819, %v3816
        %v3822 = vmul.f32 %v3819, %v3817
        %v3823 = vmul.f32 %v3819, %v3818
        %v3824 = vadd.f32 %v3810, %v3820
        %v3825 = vadd.f32 %v3811, %v3821
        %v3826 = vadd.f32 %v3812, %v3822
        %v3827 = vadd.f32 %v3813, %v3823
        %s3828 = sld [smem:[#allocation4 + $0xbb]]
        %v3829 = vld [vmem:[%s548] sm:$0xff]
        %v3830 = vld [vmem:[%s548 + $0x8] sm:$0xff]
        %v3831 = vld [vmem:[%s548 + $0x10] sm:$0xff]
        %v3832 = vld [vmem:[%s548 + $0x18] sm:$0xf]
        %v3833 = vstv %s3828
        %v3834 = vmul.f32 %v3833, %v3829
        %v3835 = vmul.f32 %v3833, %v3830
        %v3836 = vmul.f32 %v3833, %v3831
        %v3837 = vmul.f32 %v3833, %v3832
        %v3838 = vadd.f32 %v3824, %v3834
        %v3839 = vadd.f32 %v3825, %v3835
        %v3840 = vadd.f32 %v3826, %v3836
        %v3841 = vadd.f32 %v3827, %v3837
        %s3842 = sld [smem:[#allocation4 + $0xbc]]
        %v3843 = vld [vmem:[%s573] sm:$0xff]
        %v3844 = vld [vmem:[%s573 + $0x8] sm:$0xff]
        %v3845 = vld [vmem:[%s573 + $0x10] sm:$0xff]
        %v3846 = vld [vmem:[%s573 + $0x18] sm:$0xf]
        %v3847 = vstv %s3842
        %v3848 = vmul.f32 %v3847, %v3843
        %v3849 = vmul.f32 %v3847, %v3844
        %v3850 = vmul.f32 %v3847, %v3845
        %v3851 = vmul.f32 %v3847, %v3846
        %v3852 = vadd.f32 %v3838, %v3848
        %v3853 = vadd.f32 %v3839, %v3849
        %v3854 = vadd.f32 %v3840, %v3850
        %v3855 = vadd.f32 %v3841, %v3851
        %s3856 = sld [smem:[#allocation4 + $0xbd]]
        %v3857 = vld [vmem:[%s598] sm:$0xff]
        %v3858 = vld [vmem:[%s598 + $0x8] sm:$0xff]
        %v3859 = vld [vmem:[%s598 + $0x10] sm:$0xff]
        %v3860 = vld [vmem:[%s598 + $0x18] sm:$0xf]
        %v3861 = vstv %s3856
        %v3862 = vmul.f32 %v3861, %v3857
        %v3863 = vmul.f32 %v3861, %v3858
        %v3864 = vmul.f32 %v3861, %v3859
        %v3865 = vmul.f32 %v3861, %v3860
        %v3866 = vadd.f32 %v3852, %v3862
        %v3867 = vadd.f32 %v3853, %v3863
        %v3868 = vadd.f32 %v3854, %v3864
        %v3869 = vadd.f32 %v3855, %v3865
        %s3870 = sld [smem:[#allocation4 + $0xbe]]
        %v3871 = vld [vmem:[%s607] sm:$0xff]
        %v3872 = vld [vmem:[%s607 + $0x8] sm:$0xff]
        %v3873 = vld [vmem:[%s607 + $0x10] sm:$0xff]
        %v3874 = vld [vmem:[%s607 + $0x18] sm:$0xf]
        %v3875 = vstv %s3870
        %v3876 = vmul.f32 %v3875, %v3871
        %v3877 = vmul.f32 %v3875, %v3872
        %v3878 = vmul.f32 %v3875, %v3873
        %v3879 = vmul.f32 %v3875, %v3874
        %v3880 = vadd.f32 %v3866, %v3876
        %v3881 = vadd.f32 %v3867, %v3877
        %v3882 = vadd.f32 %v3868, %v3878
        %v3883 = vadd.f32 %v3869, %v3879
        %s3884 = sld [smem:[#allocation4 + $0xbf]]
        %v3885 = vld [vmem:[%s632] sm:$0xff]
        %v3886 = vld [vmem:[%s632 + $0x8] sm:$0xff]
        %v3887 = vld [vmem:[%s632 + $0x10] sm:$0xff]
        %v3888 = vld [vmem:[%s632 + $0x18] sm:$0xf]
        %v3889 = vstv %s3884
        %v3890 = vmul.f32 %v3889, %v3885
        %v3891 = vmul.f32 %v3889, %v3886
        %v3892 = vmul.f32 %v3889, %v3887
        %v3893 = vmul.f32 %v3889, %v3888
        %v3894 = vadd.f32 %v3880, %v3890
        %v3895 = vadd.f32 %v3881, %v3891
        %v3896 = vadd.f32 %v3882, %v3892
        %v3897 = vadd.f32 %v3883, %v3893
        %s3898 = sld [smem:[#allocation4 + $0xc0]]
        %v3899 = vld [vmem:[%s657] sm:$0xff]
        %v3900 = vld [vmem:[%s657 + $0x8] sm:$0xff]
        %v3901 = vld [vmem:[%s657 + $0x10] sm:$0xff]
        %v3902 = vld [vmem:[%s657 + $0x18] sm:$0xf]
        %v3903 = vstv %s3898
        %v3904 = vmul.f32 %v3903, %v3899
        %v3905 = vmul.f32 %v3903, %v3900
        %v3906 = vmul.f32 %v3903, %v3901
        %v3907 = vmul.f32 %v3903, %v3902
        %v3908 = vadd.f32 %v3894, %v3904
        %v3909 = vadd.f32 %v3895, %v3905
        %v3910 = vadd.f32 %v3896, %v3906
        %v3911 = vadd.f32 %v3897, %v3907
        %s3912 = sld [smem:[#allocation4 + $0xc1]]
        %v3913 = vld [vmem:[%s682] sm:$0xff]
        %v3914 = vld [vmem:[%s682 + $0x8] sm:$0xff]
        %v3915 = vld [vmem:[%s682 + $0x10] sm:$0xff]
        %v3916 = vld [vmem:[%s682 + $0x18] sm:$0xf]
        %v3917 = vstv %s3912
        %v3918 = vmul.f32 %v3917, %v3913
        %v3919 = vmul.f32 %v3917, %v3914
        %v3920 = vmul.f32 %v3917, %v3915
        %v3921 = vmul.f32 %v3917, %v3916
        %v3922 = vadd.f32 %v3908, %v3918
        %v3923 = vadd.f32 %v3909, %v3919
        %v3924 = vadd.f32 %v3910, %v3920
        %v3925 = vadd.f32 %v3911, %v3921
        %s3926 = sld [smem:[#allocation4 + $0xc2]]
        %v3927 = vld [vmem:[%s707] sm:$0xff]
        %v3928 = vld [vmem:[%s707 + $0x8] sm:$0xff]
        %v3929 = vld [vmem:[%s707 + $0x10] sm:$0xff]
        %v3930 = vld [vmem:[%s707 + $0x18] sm:$0xf]
        %v3931 = vstv %s3926
        %v3932 = vmul.f32 %v3931, %v3927
        %v3933 = vmul.f32 %v3931, %v3928
        %v3934 = vmul.f32 %v3931, %v3929
        %v3935 = vmul.f32 %v3931, %v3930
        %v3936 = vadd.f32 %v3922, %v3932
        %v3937 = vadd.f32 %v3923, %v3933
        %v3938 = vadd.f32 %v3924, %v3934
        %v3939 = vadd.f32 %v3925, %v3935
        %s3940 = sld [smem:[#allocation4 + $0xc3]]
        %v3941 = vld [vmem:[%s716] sm:$0xff]
        %v3942 = vld [vmem:[%s716 + $0x8] sm:$0xff]
        %v3943 = vld [vmem:[%s716 + $0x10] sm:$0xff]
        %v3944 = vld [vmem:[%s716 + $0x18] sm:$0xf]
        %v3945 = vstv %s3940
        %v3946 = vmul.f32 %v3945, %v3941
        %v3947 = vmul.f32 %v3945, %v3942
        %v3948 = vmul.f32 %v3945, %v3943
        %v3949 = vmul.f32 %v3945, %v3944
        %v3950 = vadd.f32 %v3936, %v3946
        %v3951 = vadd.f32 %v3937, %v3947
        %v3952 = vadd.f32 %v3938, %v3948
        %v3953 = vadd.f32 %v3939, %v3949
        %s3954 = sld [smem:[#allocation4 + $0xc4]]
        %v3955 = vld [vmem:[%s741] sm:$0xff]
        %v3956 = vld [vmem:[%s741 + $0x8] sm:$0xff]
        %v3957 = vld [vmem:[%s741 + $0x10] sm:$0xff]
        %v3958 = vld [vmem:[%s741 + $0x18] sm:$0xf]
        %v3959 = vstv %s3954
        %v3960 = vmul.f32 %v3959, %v3955
        %v3961 = vmul.f32 %v3959, %v3956
        %v3962 = vmul.f32 %v3959, %v3957
        %v3963 = vmul.f32 %v3959, %v3958
        %v3964 = vadd.f32 %v3950, %v3960
        %v3965 = vadd.f32 %v3951, %v3961
        %v3966 = vadd.f32 %v3952, %v3962
        %v3967 = vadd.f32 %v3953, %v3963
        %s3968 = sld [smem:[#allocation4 + $0xc5]]
        %v3969 = vld [vmem:[%s766] sm:$0xff]
        %v3970 = vld [vmem:[%s766 + $0x8] sm:$0xff]
        %v3971 = vld [vmem:[%s766 + $0x10] sm:$0xff]
        %v3972 = vld [vmem:[%s766 + $0x18] sm:$0xf]
        %v3973 = vstv %s3968
        %v3974 = vmul.f32 %v3973, %v3969
        %v3975 = vmul.f32 %v3973, %v3970
        %v3976 = vmul.f32 %v3973, %v3971
        %v3977 = vmul.f32 %v3973, %v3972
        %v3978 = vadd.f32 %v3964, %v3974
        %v3979 = vadd.f32 %v3965, %v3975
        %v3980 = vadd.f32 %v3966, %v3976
        %v3981 = vadd.f32 %v3967, %v3977
        %s3982 = sld [smem:[#allocation4 + $0xc6]]
        %v3983 = vld [vmem:[%s791] sm:$0xff]
        %v3984 = vld [vmem:[%s791 + $0x8] sm:$0xff]
        %v3985 = vld [vmem:[%s791 + $0x10] sm:$0xff]
        %v3986 = vld [vmem:[%s791 + $0x18] sm:$0xf]
        %v3987 = vstv %s3982
        %v3988 = vmul.f32 %v3987, %v3983
        %v3989 = vmul.f32 %v3987, %v3984
        %v3990 = vmul.f32 %v3987, %v3985
        %v3991 = vmul.f32 %v3987, %v3986
        %v3992 = vadd.f32 %v3978, %v3988
        %v3993 = vadd.f32 %v3979, %v3989
        %v3994 = vadd.f32 %v3980, %v3990
        %v3995 = vadd.f32 %v3981, %v3991
        %s3996 = sld [smem:[#allocation4 + $0xc7]]
        %v3997 = vld [vmem:[%s816] sm:$0xff]
        %v3998 = vld [vmem:[%s816 + $0x8] sm:$0xff]
        %v3999 = vld [vmem:[%s816 + $0x10] sm:$0xff]
        %v4000 = vld [vmem:[%s816 + $0x18] sm:$0xf]
        %v4001 = vstv %s3996
        %v4002 = vmul.f32 %v4001, %v3997
        %v4003 = vmul.f32 %v4001, %v3998
        %v4004 = vmul.f32 %v4001, %v3999
        %v4005 = vmul.f32 %v4001, %v4000
        %v4006 = vadd.f32 %v3992, %v4002
        %v4007 = vadd.f32 %v3993, %v4003
        %v4008 = vadd.f32 %v3994, %v4004
        %v4009 = vadd.f32 %v3995, %v4005
        %s4010 = scalar_lea.vmem %s162, 224
        %4011 = vst.msk [vmem:[%s4010] sm:$0xff] %vm1167, %v4006
        %4012 = vst.msk [vmem:[%s4010 + $0x8] sm:$0xff] %vm1167, %v4007
        %4013 = vst.msk [vmem:[%s4010 + $0x10] sm:$0xff] %vm1167, %v4008
        %4014 = vst.msk [vmem:[%s4010 + $0x18] sm:$0xf] %vm1171, %v4009
        %4019 = vrot.lane.b32.xlu0 %v4006, 96
        %v4020 = vpop.permute.xlu0 %4019
        %4021 = vrot.lane.b32.xlu0 %v4007, 96
        %v4022 = vpop.permute.xlu0 %4021
        %4023 = vrot.lane.b32.xlu0 %v4008, 96
        %v4024 = vpop.permute.xlu0 %4023
        %4025 = vrot.lane.b32.xlu0 %v4009, 96
        %v4026 = vpop.permute.xlu0 %4025
        %s4031 = scalar_lea.vmem %s162, 544
        %4032 = vst.msk [vmem:[%s4031] sm:$0xff] %vm1167, %v4020
        %4033 = vst.msk [vmem:[%s4031 + $0x8] sm:$0xff] %vm1167, %v4022
        %4034 = vst.msk [vmem:[%s4031 + $0x10] sm:$0xff] %vm1167, %v4024
        %4035 = vst.msk [vmem:[%s4031 + $0x18] sm:$0xf] %vm1171, %v4026
        %4036 = vrot.lane.b32.xlu0 %v4006, 64
        %v4037 = vpop.permute.xlu0 %4036
        %4038 = vrot.lane.b32.xlu0 %v4007, 64
        %v4039 = vpop.permute.xlu0 %4038
        %4040 = vrot.lane.b32.xlu0 %v4008, 64
        %v4041 = vpop.permute.xlu0 %4040
        %4042 = vrot.lane.b32.xlu0 %v4009, 64
        %v4043 = vpop.permute.xlu0 %4042
        %s4048 = scalar_lea.vmem %s162, 864
        %4049 = vst.msk [vmem:[%s4048] sm:$0xff] %vm1167, %v4037
        %4050 = vst.msk [vmem:[%s4048 + $0x8] sm:$0xff] %vm1167, %v4039
        %4051 = vst.msk [vmem:[%s4048 + $0x10] sm:$0xff] %vm1167, %v4041
        %4052 = vst.msk [vmem:[%s4048 + $0x18] sm:$0xf] %vm1171, %v4043
        %4053 = vrot.lane.b32.xlu0 %v4006, 32
        %v4054 = vpop.permute.xlu0 %4053
        %4055 = vrot.lane.b32.xlu0 %v4007, 32
        %v4056 = vpop.permute.xlu0 %4055
        %4057 = vrot.lane.b32.xlu0 %v4008, 32
        %v4058 = vpop.permute.xlu0 %4057
        %4059 = vrot.lane.b32.xlu0 %v4009, 32
        %v4060 = vpop.permute.xlu0 %4059
        %s4065 = scalar_lea.vmem %s162, 1184
        %4066 = vst.msk [vmem:[%s4065] sm:$0xff] %vm1167, %v4054
        %4067 = vst.msk [vmem:[%s4065 + $0x8] sm:$0xff] %vm1167, %v4056
        %4068 = vst.msk [vmem:[%s4065 + $0x10] sm:$0xff] %vm1167, %v4058
        %4069 = vst.msk [vmem:[%s4065 + $0x18] sm:$0xf] %vm1171, %v4060
        %s4070 = sld [smem:[#allocation4 + $0xc8]]
        %v4071 = vld [vmem:[#allocation3] sm:$0xff]
        %v4072 = vld [vmem:[#allocation3 + $0x8] sm:$0xff]
        %v4073 = vld [vmem:[#allocation3 + $0x10] sm:$0xff]
        %v4074 = vld [vmem:[#allocation3 + $0x18] sm:$0xf]
        %v4075 = vstv %s4070
        %v4076 = vmul.f32 %v4075, %v4071
        %v4077 = vmul.f32 %v4075, %v4072
        %v4078 = vmul.f32 %v4075, %v4073
        %v4079 = vmul.f32 %v4075, %v4074
        %s4080 = sld [smem:[#allocation4 + $0xc9]]
        %v4081 = vld [vmem:[%s305] sm:$0xff]
        %v4082 = vld [vmem:[%s305 + $0x8] sm:$0xff]
        %v4083 = vld [vmem:[%s305 + $0x10] sm:$0xff]
        %v4084 = vld [vmem:[%s305 + $0x18] sm:$0xf]
        %v4085 = vstv %s4080
        %v4086 = vmul.f32 %v4085, %v4081
        %v4087 = vmul.f32 %v4085, %v4082
        %v4088 = vmul.f32 %v4085, %v4083
        %v4089 = vmul.f32 %v4085, %v4084
        %v4090 = vadd.f32 %v4076, %v4086
        %v4091 = vadd.f32 %v4077, %v4087
        %v4092 = vadd.f32 %v4078, %v4088
        %v4093 = vadd.f32 %v4079, %v4089
        %s4094 = sld [smem:[#allocation4 + $0xca]]
        %v4095 = vld [vmem:[%s330] sm:$0xff]
        %v4096 = vld [vmem:[%s330 + $0x8] sm:$0xff]
        %v4097 = vld [vmem:[%s330 + $0x10] sm:$0xff]
        %v4098 = vld [vmem:[%s330 + $0x18] sm:$0xf]
        %v4099 = vstv %s4094
        %v4100 = vmul.f32 %v4099, %v4095
        %v4101 = vmul.f32 %v4099, %v4096
        %v4102 = vmul.f32 %v4099, %v4097
        %v4103 = vmul.f32 %v4099, %v4098
        %v4104 = vadd.f32 %v4090, %v4100
        %v4105 = vadd.f32 %v4091, %v4101
        %v4106 = vadd.f32 %v4092, %v4102
        %v4107 = vadd.f32 %v4093, %v4103
        %s4108 = sld [smem:[#allocation4 + $0xcb]]
        %v4109 = vld [vmem:[%s355] sm:$0xff]
        %v4110 = vld [vmem:[%s355 + $0x8] sm:$0xff]
        %v4111 = vld [vmem:[%s355 + $0x10] sm:$0xff]
        %v4112 = vld [vmem:[%s355 + $0x18] sm:$0xf]
        %v4113 = vstv %s4108
        %v4114 = vmul.f32 %v4113, %v4109
        %v4115 = vmul.f32 %v4113, %v4110
        %v4116 = vmul.f32 %v4113, %v4111
        %v4117 = vmul.f32 %v4113, %v4112
        %v4118 = vadd.f32 %v4104, %v4114
        %v4119 = vadd.f32 %v4105, %v4115
        %v4120 = vadd.f32 %v4106, %v4116
        %v4121 = vadd.f32 %v4107, %v4117
        %s4122 = sld [smem:[#allocation4 + $0xcc]]
        %v4123 = vld [vmem:[%s380] sm:$0xff]
        %v4124 = vld [vmem:[%s380 + $0x8] sm:$0xff]
        %v4125 = vld [vmem:[%s380 + $0x10] sm:$0xff]
        %v4126 = vld [vmem:[%s380 + $0x18] sm:$0xf]
        %v4127 = vstv %s4122
        %v4128 = vmul.f32 %v4127, %v4123
        %v4129 = vmul.f32 %v4127, %v4124
        %v4130 = vmul.f32 %v4127, %v4125
        %v4131 = vmul.f32 %v4127, %v4126
        %v4132 = vadd.f32 %v4118, %v4128
        %v4133 = vadd.f32 %v4119, %v4129
        %v4134 = vadd.f32 %v4120, %v4130
        %v4135 = vadd.f32 %v4121, %v4131
        %s4136 = sld [smem:[#allocation4 + $0xcd]]
        %v4137 = vld [vmem:[%s389] sm:$0xff]
        %v4138 = vld [vmem:[%s389 + $0x8] sm:$0xff]
        %v4139 = vld [vmem:[%s389 + $0x10] sm:$0xff]
        %v4140 = vld [vmem:[%s389 + $0x18] sm:$0xf]
        %v4141 = vstv %s4136
        %v4142 = vmul.f32 %v4141, %v4137
        %v4143 = vmul.f32 %v4141, %v4138
        %v4144 = vmul.f32 %v4141, %v4139
        %v4145 = vmul.f32 %v4141, %v4140
        %v4146 = vadd.f32 %v4132, %v4142
        %v4147 = vadd.f32 %v4133, %v4143
        %v4148 = vadd.f32 %v4134, %v4144
        %v4149 = vadd.f32 %v4135, %v4145
        %s4150 = sld [smem:[#allocation4 + $0xce]]
        %v4151 = vld [vmem:[%s414] sm:$0xff]
        %v4152 = vld [vmem:[%s414 + $0x8] sm:$0xff]
        %v4153 = vld [vmem:[%s414 + $0x10] sm:$0xff]
        %v4154 = vld [vmem:[%s414 + $0x18] sm:$0xf]
        %v4155 = vstv %s4150
        %v4156 = vmul.f32 %v4155, %v4151
        %v4157 = vmul.f32 %v4155, %v4152
        %v4158 = vmul.f32 %v4155, %v4153
        %v4159 = vmul.f32 %v4155, %v4154
        %v4160 = vadd.f32 %v4146, %v4156
        %v4161 = vadd.f32 %v4147, %v4157
        %v4162 = vadd.f32 %v4148, %v4158
        %v4163 = vadd.f32 %v4149, %v4159
        %s4164 = sld [smem:[#allocation4 + $0xcf]]
        %v4165 = vld [vmem:[%s439] sm:$0xff]
        %v4166 = vld [vmem:[%s439 + $0x8] sm:$0xff]
        %v4167 = vld [vmem:[%s439 + $0x10] sm:$0xff]
        %v4168 = vld [vmem:[%s439 + $0x18] sm:$0xf]
        %v4169 = vstv %s4164
        %v4170 = vmul.f32 %v4169, %v4165
        %v4171 = vmul.f32 %v4169, %v4166
        %v4172 = vmul.f32 %v4169, %v4167
        %v4173 = vmul.f32 %v4169, %v4168
        %v4174 = vadd.f32 %v4160, %v4170
        %v4175 = vadd.f32 %v4161, %v4171
        %v4176 = vadd.f32 %v4162, %v4172
        %v4177 = vadd.f32 %v4163, %v4173
        %s4178 = sld [smem:[#allocation4 + $0xd0]]
        %v4179 = vld [vmem:[%s464] sm:$0xff]
        %v4180 = vld [vmem:[%s464 + $0x8] sm:$0xff]
        %v4181 = vld [vmem:[%s464 + $0x10] sm:$0xff]
        %v4182 = vld [vmem:[%s464 + $0x18] sm:$0xf]
        %v4183 = vstv %s4178
        %v4184 = vmul.f32 %v4183, %v4179
        %v4185 = vmul.f32 %v4183, %v4180
        %v4186 = vmul.f32 %v4183, %v4181
        %v4187 = vmul.f32 %v4183, %v4182
        %v4188 = vadd.f32 %v4174, %v4184
        %v4189 = vadd.f32 %v4175, %v4185
        %v4190 = vadd.f32 %v4176, %v4186
        %v4191 = vadd.f32 %v4177, %v4187
        %s4192 = sld [smem:[#allocation4 + $0xd1]]
        %v4193 = vld [vmem:[%s489] sm:$0xff]
        %v4194 = vld [vmem:[%s489 + $0x8] sm:$0xff]
        %v4195 = vld [vmem:[%s489 + $0x10] sm:$0xff]
        %v4196 = vld [vmem:[%s489 + $0x18] sm:$0xf]
        %v4197 = vstv %s4192
        %v4198 = vmul.f32 %v4197, %v4193
        %v4199 = vmul.f32 %v4197, %v4194
        %v4200 = vmul.f32 %v4197, %v4195
        %v4201 = vmul.f32 %v4197, %v4196
        %v4202 = vadd.f32 %v4188, %v4198
        %v4203 = vadd.f32 %v4189, %v4199
        %v4204 = vadd.f32 %v4190, %v4200
        %v4205 = vadd.f32 %v4191, %v4201
        %s4206 = sld [smem:[#allocation4 + $0xd2]]
        %v4207 = vld [vmem:[%s498] sm:$0xff]
        %v4208 = vld [vmem:[%s498 + $0x8] sm:$0xff]
        %v4209 = vld [vmem:[%s498 + $0x10] sm:$0xff]
        %v4210 = vld [vmem:[%s498 + $0x18] sm:$0xf]
        %v4211 = vstv %s4206
        %v4212 = vmul.f32 %v4211, %v4207
        %v4213 = vmul.f32 %v4211, %v4208
        %v4214 = vmul.f32 %v4211, %v4209
        %v4215 = vmul.f32 %v4211, %v4210
        %v4216 = vadd.f32 %v4202, %v4212
        %v4217 = vadd.f32 %v4203, %v4213
        %v4218 = vadd.f32 %v4204, %v4214
        %v4219 = vadd.f32 %v4205, %v4215
        %s4220 = sld [smem:[#allocation4 + $0xd3]]
        %v4221 = vld [vmem:[%s523] sm:$0xff]
        %v4222 = vld [vmem:[%s523 + $0x8] sm:$0xff]
        %v4223 = vld [vmem:[%s523 + $0x10] sm:$0xff]
        %v4224 = vld [vmem:[%s523 + $0x18] sm:$0xf]
        %v4225 = vstv %s4220
        %v4226 = vmul.f32 %v4225, %v4221
        %v4227 = vmul.f32 %v4225, %v4222
        %v4228 = vmul.f32 %v4225, %v4223
        %v4229 = vmul.f32 %v4225, %v4224
        %v4230 = vadd.f32 %v4216, %v4226
        %v4231 = vadd.f32 %v4217, %v4227
        %v4232 = vadd.f32 %v4218, %v4228
        %v4233 = vadd.f32 %v4219, %v4229
        %s4234 = sld [smem:[#allocation4 + $0xd4]]
        %v4235 = vld [vmem:[%s548] sm:$0xff]
        %v4236 = vld [vmem:[%s548 + $0x8] sm:$0xff]
        %v4237 = vld [vmem:[%s548 + $0x10] sm:$0xff]
        %v4238 = vld [vmem:[%s548 + $0x18] sm:$0xf]
        %v4239 = vstv %s4234
        %v4240 = vmul.f32 %v4239, %v4235
        %v4241 = vmul.f32 %v4239, %v4236
        %v4242 = vmul.f32 %v4239, %v4237
        %v4243 = vmul.f32 %v4239, %v4238
        %v4244 = vadd.f32 %v4230, %v4240
        %v4245 = vadd.f32 %v4231, %v4241
        %v4246 = vadd.f32 %v4232, %v4242
        %v4247 = vadd.f32 %v4233, %v4243
        %s4248 = sld [smem:[#allocation4 + $0xd5]]
        %v4249 = vld [vmem:[%s573] sm:$0xff]
        %v4250 = vld [vmem:[%s573 + $0x8] sm:$0xff]
        %v4251 = vld [vmem:[%s573 + $0x10] sm:$0xff]
        %v4252 = vld [vmem:[%s573 + $0x18] sm:$0xf]
        %v4253 = vstv %s4248
        %v4254 = vmul.f32 %v4253, %v4249
        %v4255 = vmul.f32 %v4253, %v4250
        %v4256 = vmul.f32 %v4253, %v4251
        %v4257 = vmul.f32 %v4253, %v4252
        %v4258 = vadd.f32 %v4244, %v4254
        %v4259 = vadd.f32 %v4245, %v4255
        %v4260 = vadd.f32 %v4246, %v4256
        %v4261 = vadd.f32 %v4247, %v4257
        %s4262 = sld [smem:[#allocation4 + $0xd6]]
        %v4263 = vld [vmem:[%s598] sm:$0xff]
        %v4264 = vld [vmem:[%s598 + $0x8] sm:$0xff]
        %v4265 = vld [vmem:[%s598 + $0x10] sm:$0xff]
        %v4266 = vld [vmem:[%s598 + $0x18] sm:$0xf]
        %v4267 = vstv %s4262
        %v4268 = vmul.f32 %v4267, %v4263
        %v4269 = vmul.f32 %v4267, %v4264
        %v4270 = vmul.f32 %v4267, %v4265
        %v4271 = vmul.f32 %v4267, %v4266
        %v4272 = vadd.f32 %v4258, %v4268
        %v4273 = vadd.f32 %v4259, %v4269
        %v4274 = vadd.f32 %v4260, %v4270
        %v4275 = vadd.f32 %v4261, %v4271
        %s4276 = sld [smem:[#allocation4 + $0xd7]]
        %v4277 = vld [vmem:[%s607] sm:$0xff]
        %v4278 = vld [vmem:[%s607 + $0x8] sm:$0xff]
        %v4279 = vld [vmem:[%s607 + $0x10] sm:$0xff]
        %v4280 = vld [vmem:[%s607 + $0x18] sm:$0xf]
        %v4281 = vstv %s4276
        %v4282 = vmul.f32 %v4281, %v4277
        %v4283 = vmul.f32 %v4281, %v4278
        %v4284 = vmul.f32 %v4281, %v4279
        %v4285 = vmul.f32 %v4281, %v4280
        %v4286 = vadd.f32 %v4272, %v4282
        %v4287 = vadd.f32 %v4273, %v4283
        %v4288 = vadd.f32 %v4274, %v4284
        %v4289 = vadd.f32 %v4275, %v4285
        %s4290 = sld [smem:[#allocation4 + $0xd8]]
        %v4291 = vld [vmem:[%s632] sm:$0xff]
        %v4292 = vld [vmem:[%s632 + $0x8] sm:$0xff]
        %v4293 = vld [vmem:[%s632 + $0x10] sm:$0xff]
        %v4294 = vld [vmem:[%s632 + $0x18] sm:$0xf]
        %v4295 = vstv %s4290
        %v4296 = vmul.f32 %v4295, %v4291
        %v4297 = vmul.f32 %v4295, %v4292
        %v4298 = vmul.f32 %v4295, %v4293
        %v4299 = vmul.f32 %v4295, %v4294
        %v4300 = vadd.f32 %v4286, %v4296
        %v4301 = vadd.f32 %v4287, %v4297
        %v4302 = vadd.f32 %v4288, %v4298
        %v4303 = vadd.f32 %v4289, %v4299
        %s4304 = sld [smem:[#allocation4 + $0xd9]]
        %v4305 = vld [vmem:[%s657] sm:$0xff]
        %v4306 = vld [vmem:[%s657 + $0x8] sm:$0xff]
        %v4307 = vld [vmem:[%s657 + $0x10] sm:$0xff]
        %v4308 = vld [vmem:[%s657 + $0x18] sm:$0xf]
        %v4309 = vstv %s4304
        %v4310 = vmul.f32 %v4309, %v4305
        %v4311 = vmul.f32 %v4309, %v4306
        %v4312 = vmul.f32 %v4309, %v4307
        %v4313 = vmul.f32 %v4309, %v4308
        %v4314 = vadd.f32 %v4300, %v4310
        %v4315 = vadd.f32 %v4301, %v4311
        %v4316 = vadd.f32 %v4302, %v4312
        %v4317 = vadd.f32 %v4303, %v4313
        %s4318 = sld [smem:[#allocation4 + $0xda]]
        %v4319 = vld [vmem:[%s682] sm:$0xff]
        %v4320 = vld [vmem:[%s682 + $0x8] sm:$0xff]
        %v4321 = vld [vmem:[%s682 + $0x10] sm:$0xff]
        %v4322 = vld [vmem:[%s682 + $0x18] sm:$0xf]
        %v4323 = vstv %s4318
        %v4324 = vmul.f32 %v4323, %v4319
        %v4325 = vmul.f32 %v4323, %v4320
        %v4326 = vmul.f32 %v4323, %v4321
        %v4327 = vmul.f32 %v4323, %v4322
        %v4328 = vadd.f32 %v4314, %v4324
        %v4329 = vadd.f32 %v4315, %v4325
        %v4330 = vadd.f32 %v4316, %v4326
        %v4331 = vadd.f32 %v4317, %v4327
        %s4332 = sld [smem:[#allocation4 + $0xdb]]
        %v4333 = vld [vmem:[%s707] sm:$0xff]
        %v4334 = vld [vmem:[%s707 + $0x8] sm:$0xff]
        %v4335 = vld [vmem:[%s707 + $0x10] sm:$0xff]
        %v4336 = vld [vmem:[%s707 + $0x18] sm:$0xf]
        %v4337 = vstv %s4332
        %v4338 = vmul.f32 %v4337, %v4333
        %v4339 = vmul.f32 %v4337, %v4334
        %v4340 = vmul.f32 %v4337, %v4335
        %v4341 = vmul.f32 %v4337, %v4336
        %v4342 = vadd.f32 %v4328, %v4338
        %v4343 = vadd.f32 %v4329, %v4339
        %v4344 = vadd.f32 %v4330, %v4340
        %v4345 = vadd.f32 %v4331, %v4341
        %s4346 = sld [smem:[#allocation4 + $0xdc]]
        %v4347 = vld [vmem:[%s716] sm:$0xff]
        %v4348 = vld [vmem:[%s716 + $0x8] sm:$0xff]
        %v4349 = vld [vmem:[%s716 + $0x10] sm:$0xff]
        %v4350 = vld [vmem:[%s716 + $0x18] sm:$0xf]
        %v4351 = vstv %s4346
        %v4352 = vmul.f32 %v4351, %v4347
        %v4353 = vmul.f32 %v4351, %v4348
        %v4354 = vmul.f32 %v4351, %v4349
        %v4355 = vmul.f32 %v4351, %v4350
        %v4356 = vadd.f32 %v4342, %v4352
        %v4357 = vadd.f32 %v4343, %v4353
        %v4358 = vadd.f32 %v4344, %v4354
        %v4359 = vadd.f32 %v4345, %v4355
        %s4360 = sld [smem:[#allocation4 + $0xdd]]
        %v4361 = vld [vmem:[%s741] sm:$0xff]
        %v4362 = vld [vmem:[%s741 + $0x8] sm:$0xff]
        %v4363 = vld [vmem:[%s741 + $0x10] sm:$0xff]
        %v4364 = vld [vmem:[%s741 + $0x18] sm:$0xf]
        %v4365 = vstv %s4360
        %v4366 = vmul.f32 %v4365, %v4361
        %v4367 = vmul.f32 %v4365, %v4362
        %v4368 = vmul.f32 %v4365, %v4363
        %v4369 = vmul.f32 %v4365, %v4364
        %v4370 = vadd.f32 %v4356, %v4366
        %v4371 = vadd.f32 %v4357, %v4367
        %v4372 = vadd.f32 %v4358, %v4368
        %v4373 = vadd.f32 %v4359, %v4369
        %s4374 = sld [smem:[#allocation4 + $0xde]]
        %v4375 = vld [vmem:[%s766] sm:$0xff]
        %v4376 = vld [vmem:[%s766 + $0x8] sm:$0xff]
        %v4377 = vld [vmem:[%s766 + $0x10] sm:$0xff]
        %v4378 = vld [vmem:[%s766 + $0x18] sm:$0xf]
        %v4379 = vstv %s4374
        %v4380 = vmul.f32 %v4379, %v4375
        %v4381 = vmul.f32 %v4379, %v4376
        %v4382 = vmul.f32 %v4379, %v4377
        %v4383 = vmul.f32 %v4379, %v4378
        %v4384 = vadd.f32 %v4370, %v4380
        %v4385 = vadd.f32 %v4371, %v4381
        %v4386 = vadd.f32 %v4372, %v4382
        %v4387 = vadd.f32 %v4373, %v4383
        %s4388 = sld [smem:[#allocation4 + $0xdf]]
        %v4389 = vld [vmem:[%s791] sm:$0xff]
        %v4390 = vld [vmem:[%s791 + $0x8] sm:$0xff]
        %v4391 = vld [vmem:[%s791 + $0x10] sm:$0xff]
        %v4392 = vld [vmem:[%s791 + $0x18] sm:$0xf]
        %v4393 = vstv %s4388
        %v4394 = vmul.f32 %v4393, %v4389
        %v4395 = vmul.f32 %v4393, %v4390
        %v4396 = vmul.f32 %v4393, %v4391
        %v4397 = vmul.f32 %v4393, %v4392
        %v4398 = vadd.f32 %v4384, %v4394
        %v4399 = vadd.f32 %v4385, %v4395
        %v4400 = vadd.f32 %v4386, %v4396
        %v4401 = vadd.f32 %v4387, %v4397
        %s4402 = sld [smem:[#allocation4 + $0xe0]]
        %v4403 = vld [vmem:[%s816] sm:$0xff]
        %v4404 = vld [vmem:[%s816 + $0x8] sm:$0xff]
        %v4405 = vld [vmem:[%s816 + $0x10] sm:$0xff]
        %v4406 = vld [vmem:[%s816 + $0x18] sm:$0xf]
        %v4407 = vstv %s4402
        %v4408 = vmul.f32 %v4407, %v4403
        %v4409 = vmul.f32 %v4407, %v4404
        %v4410 = vmul.f32 %v4407, %v4405
        %v4411 = vmul.f32 %v4407, %v4406
        %v4412 = vadd.f32 %v4398, %v4408
        %v4413 = vadd.f32 %v4399, %v4409
        %v4414 = vadd.f32 %v4400, %v4410
        %v4415 = vadd.f32 %v4401, %v4411
        %s4416 = scalar_lea.vmem %s162, 256
        %4417 = vst.msk [vmem:[%s4416] sm:$0xff] %vm1167, %v4412
        %4418 = vst.msk [vmem:[%s4416 + $0x8] sm:$0xff] %vm1167, %v4413
        %4419 = vst.msk [vmem:[%s4416 + $0x10] sm:$0xff] %vm1167, %v4414
        %4420 = vst.msk [vmem:[%s4416 + $0x18] sm:$0xf] %vm1171, %v4415
        %4425 = vrot.lane.b32.xlu0 %v4412, 96
        %v4426 = vpop.permute.xlu0 %4425
        %4427 = vrot.lane.b32.xlu0 %v4413, 96
        %v4428 = vpop.permute.xlu0 %4427
        %4429 = vrot.lane.b32.xlu0 %v4414, 96
        %v4430 = vpop.permute.xlu0 %4429
        %4431 = vrot.lane.b32.xlu0 %v4415, 96
        %v4432 = vpop.permute.xlu0 %4431
        %s4437 = scalar_lea.vmem %s162, 576
        %4438 = vst.msk [vmem:[%s4437] sm:$0xff] %vm1167, %v4426
        %4439 = vst.msk [vmem:[%s4437 + $0x8] sm:$0xff] %vm1167, %v4428
        %4440 = vst.msk [vmem:[%s4437 + $0x10] sm:$0xff] %vm1167, %v4430
        %4441 = vst.msk [vmem:[%s4437 + $0x18] sm:$0xf] %vm1171, %v4432
        %4442 = vrot.lane.b32.xlu0 %v4412, 64
        %v4443 = vpop.permute.xlu0 %4442
        %4444 = vrot.lane.b32.xlu0 %v4413, 64
        %v4445 = vpop.permute.xlu0 %4444
        %4446 = vrot.lane.b32.xlu0 %v4414, 64
        %v4447 = vpop.permute.xlu0 %4446
        %4448 = vrot.lane.b32.xlu0 %v4415, 64
        %v4449 = vpop.permute.xlu0 %4448
        %s4454 = scalar_lea.vmem %s162, 896
        %4455 = vst.msk [vmem:[%s4454] sm:$0xff] %vm1167, %v4443
        %4456 = vst.msk [vmem:[%s4454 + $0x8] sm:$0xff] %vm1167, %v4445
        %4457 = vst.msk [vmem:[%s4454 + $0x10] sm:$0xff] %vm1167, %v4447
        %4458 = vst.msk [vmem:[%s4454 + $0x18] sm:$0xf] %vm1171, %v4449
        %4459 = vrot.lane.b32.xlu0 %v4412, 32
        %v4460 = vpop.permute.xlu0 %4459
        %4461 = vrot.lane.b32.xlu0 %v4413, 32
        %v4462 = vpop.permute.xlu0 %4461
        %4463 = vrot.lane.b32.xlu0 %v4414, 32
        %v4464 = vpop.permute.xlu0 %4463
        %4465 = vrot.lane.b32.xlu0 %v4415, 32
        %v4466 = vpop.permute.xlu0 %4465
        %s4471 = scalar_lea.vmem %s162, 1216
        %4472 = vst.msk [vmem:[%s4471] sm:$0xff] %vm1167, %v4460
        %4473 = vst.msk [vmem:[%s4471 + $0x8] sm:$0xff] %vm1167, %v4462
        %4474 = vst.msk [vmem:[%s4471 + $0x10] sm:$0xff] %vm1167, %v4464
        %4475 = vst.msk [vmem:[%s4471 + $0x18] sm:$0xf] %vm1171, %v4466
        %s4476 = sld [smem:[#allocation4 + $0xe1]]
        %v4477 = vld [vmem:[#allocation3] sm:$0xff]
        %v4478 = vld [vmem:[#allocation3 + $0x8] sm:$0xff]
        %v4479 = vld [vmem:[#allocation3 + $0x10] sm:$0xff]
        %v4480 = vld [vmem:[#allocation3 + $0x18] sm:$0xf]
        %v4481 = vstv %s4476
        %v4482 = vmul.f32 %v4481, %v4477
        %v4483 = vmul.f32 %v4481, %v4478
        %v4484 = vmul.f32 %v4481, %v4479
        %v4485 = vmul.f32 %v4481, %v4480
        %s4486 = sld [smem:[#allocation4 + $0xe2]]
        %v4487 = vld [vmem:[%s305] sm:$0xff]
        %v4488 = vld [vmem:[%s305 + $0x8] sm:$0xff]
        %v4489 = vld [vmem:[%s305 + $0x10] sm:$0xff]
        %v4490 = vld [vmem:[%s305 + $0x18] sm:$0xf]
        %v4491 = vstv %s4486
        %v4492 = vmul.f32 %v4491, %v4487
        %v4493 = vmul.f32 %v4491, %v4488
        %v4494 = vmul.f32 %v4491, %v4489
        %v4495 = vmul.f32 %v4491, %v4490
        %v4496 = vadd.f32 %v4482, %v4492
        %v4497 = vadd.f32 %v4483, %v4493
        %v4498 = vadd.f32 %v4484, %v4494
        %v4499 = vadd.f32 %v4485, %v4495
        %s4500 = sld [smem:[#allocation4 + $0xe3]]
        %v4501 = vld [vmem:[%s330] sm:$0xff]
        %v4502 = vld [vmem:[%s330 + $0x8] sm:$0xff]
        %v4503 = vld [vmem:[%s330 + $0x10] sm:$0xff]
        %v4504 = vld [vmem:[%s330 + $0x18] sm:$0xf]
        %v4505 = vstv %s4500
        %v4506 = vmul.f32 %v4505, %v4501
        %v4507 = vmul.f32 %v4505, %v4502
        %v4508 = vmul.f32 %v4505, %v4503
        %v4509 = vmul.f32 %v4505, %v4504
        %v4510 = vadd.f32 %v4496, %v4506
        %v4511 = vadd.f32 %v4497, %v4507
        %v4512 = vadd.f32 %v4498, %v4508
        %v4513 = vadd.f32 %v4499, %v4509
        %s4514 = sld [smem:[#allocation4 + $0xe4]]
        %v4515 = vld [vmem:[%s355] sm:$0xff]
        %v4516 = vld [vmem:[%s355 + $0x8] sm:$0xff]
        %v4517 = vld [vmem:[%s355 + $0x10] sm:$0xff]
        %v4518 = vld [vmem:[%s355 + $0x18] sm:$0xf]
        %v4519 = vstv %s4514
        %v4520 = vmul.f32 %v4519, %v4515
        %v4521 = vmul.f32 %v4519, %v4516
        %v4522 = vmul.f32 %v4519, %v4517
        %v4523 = vmul.f32 %v4519, %v4518
        %v4524 = vadd.f32 %v4510, %v4520
        %v4525 = vadd.f32 %v4511, %v4521
        %v4526 = vadd.f32 %v4512, %v4522
        %v4527 = vadd.f32 %v4513, %v4523
        %s4528 = sld [smem:[#allocation4 + $0xe5]]
        %v4529 = vld [vmem:[%s380] sm:$0xff]
        %v4530 = vld [vmem:[%s380 + $0x8] sm:$0xff]
        %v4531 = vld [vmem:[%s380 + $0x10] sm:$0xff]
        %v4532 = vld [vmem:[%s380 + $0x18] sm:$0xf]
        %v4533 = vstv %s4528
        %v4534 = vmul.f32 %v4533, %v4529
        %v4535 = vmul.f32 %v4533, %v4530
        %v4536 = vmul.f32 %v4533, %v4531
        %v4537 = vmul.f32 %v4533, %v4532
        %v4538 = vadd.f32 %v4524, %v4534
        %v4539 = vadd.f32 %v4525, %v4535
        %v4540 = vadd.f32 %v4526, %v4536
        %v4541 = vadd.f32 %v4527, %v4537
        %s4542 = sld [smem:[#allocation4 + $0xe6]]
        %v4543 = vld [vmem:[%s389] sm:$0xff]
        %v4544 = vld [vmem:[%s389 + $0x8] sm:$0xff]
        %v4545 = vld [vmem:[%s389 + $0x10] sm:$0xff]
        %v4546 = vld [vmem:[%s389 + $0x18] sm:$0xf]
        %v4547 = vstv %s4542
        %v4548 = vmul.f32 %v4547, %v4543
        %v4549 = vmul.f32 %v4547, %v4544
        %v4550 = vmul.f32 %v4547, %v4545
        %v4551 = vmul.f32 %v4547, %v4546
        %v4552 = vadd.f32 %v4538, %v4548
        %v4553 = vadd.f32 %v4539, %v4549
        %v4554 = vadd.f32 %v4540, %v4550
        %v4555 = vadd.f32 %v4541, %v4551
        %s4556 = sld [smem:[#allocation4 + $0xe7]]
        %v4557 = vld [vmem:[%s414] sm:$0xff]
        %v4558 = vld [vmem:[%s414 + $0x8] sm:$0xff]
        %v4559 = vld [vmem:[%s414 + $0x10] sm:$0xff]
        %v4560 = vld [vmem:[%s414 + $0x18] sm:$0xf]
        %v4561 = vstv %s4556
        %v4562 = vmul.f32 %v4561, %v4557
        %v4563 = vmul.f32 %v4561, %v4558
        %v4564 = vmul.f32 %v4561, %v4559
        %v4565 = vmul.f32 %v4561, %v4560
        %v4566 = vadd.f32 %v4552, %v4562
        %v4567 = vadd.f32 %v4553, %v4563
        %v4568 = vadd.f32 %v4554, %v4564
        %v4569 = vadd.f32 %v4555, %v4565
        %s4570 = sld [smem:[#allocation4 + $0xe8]]
        %v4571 = vld [vmem:[%s439] sm:$0xff]
        %v4572 = vld [vmem:[%s439 + $0x8] sm:$0xff]
        %v4573 = vld [vmem:[%s439 + $0x10] sm:$0xff]
        %v4574 = vld [vmem:[%s439 + $0x18] sm:$0xf]
        %v4575 = vstv %s4570
        %v4576 = vmul.f32 %v4575, %v4571
        %v4577 = vmul.f32 %v4575, %v4572
        %v4578 = vmul.f32 %v4575, %v4573
        %v4579 = vmul.f32 %v4575, %v4574
        %v4580 = vadd.f32 %v4566, %v4576
        %v4581 = vadd.f32 %v4567, %v4577
        %v4582 = vadd.f32 %v4568, %v4578
        %v4583 = vadd.f32 %v4569, %v4579
        %s4584 = sld [smem:[#allocation4 + $0xe9]]
        %v4585 = vld [vmem:[%s464] sm:$0xff]
        %v4586 = vld [vmem:[%s464 + $0x8] sm:$0xff]
        %v4587 = vld [vmem:[%s464 + $0x10] sm:$0xff]
        %v4588 = vld [vmem:[%s464 + $0x18] sm:$0xf]
        %v4589 = vstv %s4584
        %v4590 = vmul.f32 %v4589, %v4585
        %v4591 = vmul.f32 %v4589, %v4586
        %v4592 = vmul.f32 %v4589, %v4587
        %v4593 = vmul.f32 %v4589, %v4588
        %v4594 = vadd.f32 %v4580, %v4590
        %v4595 = vadd.f32 %v4581, %v4591
        %v4596 = vadd.f32 %v4582, %v4592
        %v4597 = vadd.f32 %v4583, %v4593
        %s4598 = sld [smem:[#allocation4 + $0xea]]
        %v4599 = vld [vmem:[%s489] sm:$0xff]
        %v4600 = vld [vmem:[%s489 + $0x8] sm:$0xff]
        %v4601 = vld [vmem:[%s489 + $0x10] sm:$0xff]
        %v4602 = vld [vmem:[%s489 + $0x18] sm:$0xf]
        %v4603 = vstv %s4598
        %v4604 = vmul.f32 %v4603, %v4599
        %v4605 = vmul.f32 %v4603, %v4600
        %v4606 = vmul.f32 %v4603, %v4601
        %v4607 = vmul.f32 %v4603, %v4602
        %v4608 = vadd.f32 %v4594, %v4604
        %v4609 = vadd.f32 %v4595, %v4605
        %v4610 = vadd.f32 %v4596, %v4606
        %v4611 = vadd.f32 %v4597, %v4607
        %s4612 = sld [smem:[#allocation4 + $0xeb]]
        %v4613 = vld [vmem:[%s498] sm:$0xff]
        %v4614 = vld [vmem:[%s498 + $0x8] sm:$0xff]
        %v4615 = vld [vmem:[%s498 + $0x10] sm:$0xff]
        %v4616 = vld [vmem:[%s498 + $0x18] sm:$0xf]
        %v4617 = vstv %s4612
        %v4618 = vmul.f32 %v4617, %v4613
        %v4619 = vmul.f32 %v4617, %v4614
        %v4620 = vmul.f32 %v4617, %v4615
        %v4621 = vmul.f32 %v4617, %v4616
        %v4622 = vadd.f32 %v4608, %v4618
        %v4623 = vadd.f32 %v4609, %v4619
        %v4624 = vadd.f32 %v4610, %v4620
        %v4625 = vadd.f32 %v4611, %v4621
        %s4626 = sld [smem:[#allocation4 + $0xec]]
        %v4627 = vld [vmem:[%s523] sm:$0xff]
        %v4628 = vld [vmem:[%s523 + $0x8] sm:$0xff]
        %v4629 = vld [vmem:[%s523 + $0x10] sm:$0xff]
        %v4630 = vld [vmem:[%s523 + $0x18] sm:$0xf]
        %v4631 = vstv %s4626
        %v4632 = vmul.f32 %v4631, %v4627
        %v4633 = vmul.f32 %v4631, %v4628
        %v4634 = vmul.f32 %v4631, %v4629
        %v4635 = vmul.f32 %v4631, %v4630
        %v4636 = vadd.f32 %v4622, %v4632
        %v4637 = vadd.f32 %v4623, %v4633
        %v4638 = vadd.f32 %v4624, %v4634
        %v4639 = vadd.f32 %v4625, %v4635
        %s4640 = sld [smem:[#allocation4 + $0xed]]
        %v4641 = vld [vmem:[%s548] sm:$0xff]
        %v4642 = vld [vmem:[%s548 + $0x8] sm:$0xff]
        %v4643 = vld [vmem:[%s548 + $0x10] sm:$0xff]
        %v4644 = vld [vmem:[%s548 + $0x18] sm:$0xf]
        %v4645 = vstv %s4640
        %v4646 = vmul.f32 %v4645, %v4641
        %v4647 = vmul.f32 %v4645, %v4642
        %v4648 = vmul.f32 %v4645, %v4643
        %v4649 = vmul.f32 %v4645, %v4644
        %v4650 = vadd.f32 %v4636, %v4646
        %v4651 = vadd.f32 %v4637, %v4647
        %v4652 = vadd.f32 %v4638, %v4648
        %v4653 = vadd.f32 %v4639, %v4649
        %s4654 = sld [smem:[#allocation4 + $0xee]]
        %v4655 = vld [vmem:[%s573] sm:$0xff]
        %v4656 = vld [vmem:[%s573 + $0x8] sm:$0xff]
        %v4657 = vld [vmem:[%s573 + $0x10] sm:$0xff]
        %v4658 = vld [vmem:[%s573 + $0x18] sm:$0xf]
        %v4659 = vstv %s4654
        %v4660 = vmul.f32 %v4659, %v4655
        %v4661 = vmul.f32 %v4659, %v4656
        %v4662 = vmul.f32 %v4659, %v4657
        %v4663 = vmul.f32 %v4659, %v4658
        %v4664 = vadd.f32 %v4650, %v4660
        %v4665 = vadd.f32 %v4651, %v4661
        %v4666 = vadd.f32 %v4652, %v4662
        %v4667 = vadd.f32 %v4653, %v4663
        %s4668 = sld [smem:[#allocation4 + $0xef]]
        %v4669 = vld [vmem:[%s598] sm:$0xff]
        %v4670 = vld [vmem:[%s598 + $0x8] sm:$0xff]
        %v4671 = vld [vmem:[%s598 + $0x10] sm:$0xff]
        %v4672 = vld [vmem:[%s598 + $0x18] sm:$0xf]
        %v4673 = vstv %s4668
        %v4674 = vmul.f32 %v4673, %v4669
        %v4675 = vmul.f32 %v4673, %v4670
        %v4676 = vmul.f32 %v4673, %v4671
        %v4677 = vmul.f32 %v4673, %v4672
        %v4678 = vadd.f32 %v4664, %v4674
        %v4679 = vadd.f32 %v4665, %v4675
        %v4680 = vadd.f32 %v4666, %v4676
        %v4681 = vadd.f32 %v4667, %v4677
        %s4682 = sld [smem:[#allocation4 + $0xf0]]
        %v4683 = vld [vmem:[%s607] sm:$0xff]
        %v4684 = vld [vmem:[%s607 + $0x8] sm:$0xff]
        %v4685 = vld [vmem:[%s607 + $0x10] sm:$0xff]
        %v4686 = vld [vmem:[%s607 + $0x18] sm:$0xf]
        %v4687 = vstv %s4682
        %v4688 = vmul.f32 %v4687, %v4683
        %v4689 = vmul.f32 %v4687, %v4684
        %v4690 = vmul.f32 %v4687, %v4685
        %v4691 = vmul.f32 %v4687, %v4686
        %v4692 = vadd.f32 %v4678, %v4688
        %v4693 = vadd.f32 %v4679, %v4689
        %v4694 = vadd.f32 %v4680, %v4690
        %v4695 = vadd.f32 %v4681, %v4691
        %s4696 = sld [smem:[#allocation4 + $0xf1]]
        %v4697 = vld [vmem:[%s632] sm:$0xff]
        %v4698 = vld [vmem:[%s632 + $0x8] sm:$0xff]
        %v4699 = vld [vmem:[%s632 + $0x10] sm:$0xff]
        %v4700 = vld [vmem:[%s632 + $0x18] sm:$0xf]
        %v4701 = vstv %s4696
        %v4702 = vmul.f32 %v4701, %v4697
        %v4703 = vmul.f32 %v4701, %v4698
        %v4704 = vmul.f32 %v4701, %v4699
        %v4705 = vmul.f32 %v4701, %v4700
        %v4706 = vadd.f32 %v4692, %v4702
        %v4707 = vadd.f32 %v4693, %v4703
        %v4708 = vadd.f32 %v4694, %v4704
        %v4709 = vadd.f32 %v4695, %v4705
        %s4710 = sld [smem:[#allocation4 + $0xf2]]
        %v4711 = vld [vmem:[%s657] sm:$0xff]
        %v4712 = vld [vmem:[%s657 + $0x8] sm:$0xff]
        %v4713 = vld [vmem:[%s657 + $0x10] sm:$0xff]
        %v4714 = vld [vmem:[%s657 + $0x18] sm:$0xf]
        %v4715 = vstv %s4710
        %v4716 = vmul.f32 %v4715, %v4711
        %v4717 = vmul.f32 %v4715, %v4712
        %v4718 = vmul.f32 %v4715, %v4713
        %v4719 = vmul.f32 %v4715, %v4714
        %v4720 = vadd.f32 %v4706, %v4716
        %v4721 = vadd.f32 %v4707, %v4717
        %v4722 = vadd.f32 %v4708, %v4718
        %v4723 = vadd.f32 %v4709, %v4719
        %s4724 = sld [smem:[#allocation4 + $0xf3]]
        %v4725 = vld [vmem:[%s682] sm:$0xff]
        %v4726 = vld [vmem:[%s682 + $0x8] sm:$0xff]
        %v4727 = vld [vmem:[%s682 + $0x10] sm:$0xff]
        %v4728 = vld [vmem:[%s682 + $0x18] sm:$0xf]
        %v4729 = vstv %s4724
        %v4730 = vmul.f32 %v4729, %v4725
        %v4731 = vmul.f32 %v4729, %v4726
        %v4732 = vmul.f32 %v4729, %v4727
        %v4733 = vmul.f32 %v4729, %v4728
        %v4734 = vadd.f32 %v4720, %v4730
        %v4735 = vadd.f32 %v4721, %v4731
        %v4736 = vadd.f32 %v4722, %v4732
        %v4737 = vadd.f32 %v4723, %v4733
        %s4738 = sld [smem:[#allocation4 + $0xf4]]
        %v4739 = vld [vmem:[%s707] sm:$0xff]
        %v4740 = vld [vmem:[%s707 + $0x8] sm:$0xff]
        %v4741 = vld [vmem:[%s707 + $0x10] sm:$0xff]
        %v4742 = vld [vmem:[%s707 + $0x18] sm:$0xf]
        %v4743 = vstv %s4738
        %v4744 = vmul.f32 %v4743, %v4739
        %v4745 = vmul.f32 %v4743, %v4740
        %v4746 = vmul.f32 %v4743, %v4741
        %v4747 = vmul.f32 %v4743, %v4742
        %v4748 = vadd.f32 %v4734, %v4744
        %v4749 = vadd.f32 %v4735, %v4745
        %v4750 = vadd.f32 %v4736, %v4746
        %v4751 = vadd.f32 %v4737, %v4747
        %s4752 = sld [smem:[#allocation4 + $0xf5]]
        %v4753 = vld [vmem:[%s716] sm:$0xff]
        %v4754 = vld [vmem:[%s716 + $0x8] sm:$0xff]
        %v4755 = vld [vmem:[%s716 + $0x10] sm:$0xff]
        %v4756 = vld [vmem:[%s716 + $0x18] sm:$0xf]
        %v4757 = vstv %s4752
        %v4758 = vmul.f32 %v4757, %v4753
        %v4759 = vmul.f32 %v4757, %v4754
        %v4760 = vmul.f32 %v4757, %v4755
        %v4761 = vmul.f32 %v4757, %v4756
        %v4762 = vadd.f32 %v4748, %v4758
        %v4763 = vadd.f32 %v4749, %v4759
        %v4764 = vadd.f32 %v4750, %v4760
        %v4765 = vadd.f32 %v4751, %v4761
        %s4766 = sld [smem:[#allocation4 + $0xf6]]
        %v4767 = vld [vmem:[%s741] sm:$0xff]
        %v4768 = vld [vmem:[%s741 + $0x8] sm:$0xff]
        %v4769 = vld [vmem:[%s741 + $0x10] sm:$0xff]
        %v4770 = vld [vmem:[%s741 + $0x18] sm:$0xf]
        %v4771 = vstv %s4766
        %v4772 = vmul.f32 %v4771, %v4767
        %v4773 = vmul.f32 %v4771, %v4768
        %v4774 = vmul.f32 %v4771, %v4769
        %v4775 = vmul.f32 %v4771, %v4770
        %v4776 = vadd.f32 %v4762, %v4772
        %v4777 = vadd.f32 %v4763, %v4773
        %v4778 = vadd.f32 %v4764, %v4774
        %v4779 = vadd.f32 %v4765, %v4775
        %s4780 = sld [smem:[#allocation4 + $0xf7]]
        %v4781 = vld [vmem:[%s766] sm:$0xff]
        %v4782 = vld [vmem:[%s766 + $0x8] sm:$0xff]
        %v4783 = vld [vmem:[%s766 + $0x10] sm:$0xff]
        %v4784 = vld [vmem:[%s766 + $0x18] sm:$0xf]
        %v4785 = vstv %s4780
        %v4786 = vmul.f32 %v4785, %v4781
        %v4787 = vmul.f32 %v4785, %v4782
        %v4788 = vmul.f32 %v4785, %v4783
        %v4789 = vmul.f32 %v4785, %v4784
        %v4790 = vadd.f32 %v4776, %v4786
        %v4791 = vadd.f32 %v4777, %v4787
        %v4792 = vadd.f32 %v4778, %v4788
        %v4793 = vadd.f32 %v4779, %v4789
        %s4794 = sld [smem:[#allocation4 + $0xf8]]
        %v4795 = vld [vmem:[%s791] sm:$0xff]
        %v4796 = vld [vmem:[%s791 + $0x8] sm:$0xff]
        %v4797 = vld [vmem:[%s791 + $0x10] sm:$0xff]
        %v4798 = vld [vmem:[%s791 + $0x18] sm:$0xf]
        %v4799 = vstv %s4794
        %v4800 = vmul.f32 %v4799, %v4795
        %v4801 = vmul.f32 %v4799, %v4796
        %v4802 = vmul.f32 %v4799, %v4797
        %v4803 = vmul.f32 %v4799, %v4798
        %v4804 = vadd.f32 %v4790, %v4800
        %v4805 = vadd.f32 %v4791, %v4801
        %v4806 = vadd.f32 %v4792, %v4802
        %v4807 = vadd.f32 %v4793, %v4803
        %s4808 = sld [smem:[#allocation4 + $0xf9]]
        %v4809 = vld [vmem:[%s816] sm:$0xff]
        %v4810 = vld [vmem:[%s816 + $0x8] sm:$0xff]
        %v4811 = vld [vmem:[%s816 + $0x10] sm:$0xff]
        %v4812 = vld [vmem:[%s816 + $0x18] sm:$0xf]
        %v4813 = vstv %s4808
        %v4814 = vmul.f32 %v4813, %v4809
        %v4815 = vmul.f32 %v4813, %v4810
        %v4816 = vmul.f32 %v4813, %v4811
        %v4817 = vmul.f32 %v4813, %v4812
        %v4818 = vadd.f32 %v4804, %v4814
        %v4819 = vadd.f32 %v4805, %v4815
        %v4820 = vadd.f32 %v4806, %v4816
        %v4821 = vadd.f32 %v4807, %v4817
        %s4822 = scalar_lea.vmem %s162, 288
        %4823 = vst.msk [vmem:[%s4822] sm:$0xff] %vm1167, %v4818
        %4824 = vst.msk [vmem:[%s4822 + $0x8] sm:$0xff] %vm1167, %v4819
        %4825 = vst.msk [vmem:[%s4822 + $0x10] sm:$0xff] %vm1167, %v4820
        %4826 = vst.msk [vmem:[%s4822 + $0x18] sm:$0xf] %vm1171, %v4821
        %4831 = vrot.lane.b32.xlu0 %v4818, 96
        %v4832 = vpop.permute.xlu0 %4831
        %4833 = vrot.lane.b32.xlu0 %v4819, 96
        %v4834 = vpop.permute.xlu0 %4833
        %4835 = vrot.lane.b32.xlu0 %v4820, 96
        %v4836 = vpop.permute.xlu0 %4835
        %4837 = vrot.lane.b32.xlu0 %v4821, 96
        %v4838 = vpop.permute.xlu0 %4837
        %s4843 = scalar_lea.vmem %s162, 608
        %4844 = vst.msk [vmem:[%s4843] sm:$0xff] %vm1167, %v4832
        %4845 = vst.msk [vmem:[%s4843 + $0x8] sm:$0xff] %vm1167, %v4834
        %4846 = vst.msk [vmem:[%s4843 + $0x10] sm:$0xff] %vm1167, %v4836
        %4847 = vst.msk [vmem:[%s4843 + $0x18] sm:$0xf] %vm1171, %v4838
        %4848 = vrot.lane.b32.xlu0 %v4818, 64
        %v4849 = vpop.permute.xlu0 %4848
        %4850 = vrot.lane.b32.xlu0 %v4819, 64
        %v4851 = vpop.permute.xlu0 %4850
        %4852 = vrot.lane.b32.xlu0 %v4820, 64
        %v4853 = vpop.permute.xlu0 %4852
        %4854 = vrot.lane.b32.xlu0 %v4821, 64
        %v4855 = vpop.permute.xlu0 %4854
        %s4860 = scalar_lea.vmem %s162, 928
        %4861 = vst.msk [vmem:[%s4860] sm:$0xff] %vm1167, %v4849
        %4862 = vst.msk [vmem:[%s4860 + $0x8] sm:$0xff] %vm1167, %v4851
        %4863 = vst.msk [vmem:[%s4860 + $0x10] sm:$0xff] %vm1167, %v4853
        %4864 = vst.msk [vmem:[%s4860 + $0x18] sm:$0xf] %vm1171, %v4855
        %4865 = vrot.lane.b32.xlu0 %v4818, 32
        %v4866 = vpop.permute.xlu0 %4865
        %4867 = vrot.lane.b32.xlu0 %v4819, 32
        %v4868 = vpop.permute.xlu0 %4867
        %4869 = vrot.lane.b32.xlu0 %v4820, 32
        %v4870 = vpop.permute.xlu0 %4869
        %4871 = vrot.lane.b32.xlu0 %v4821, 32
        %v4872 = vpop.permute.xlu0 %4871
        %s4877 = scalar_lea.vmem %s162, 1248
        %4878 = vst.msk [vmem:[%s4877] sm:$0xff] %vm1167, %v4866
        %4879 = vst.msk [vmem:[%s4877 + $0x8] sm:$0xff] %vm1167, %v4868
        %4880 = vst.msk [vmem:[%s4877 + $0x10] sm:$0xff] %vm1167, %v4870
        %4881 = vst.msk [vmem:[%s4877 + $0x18] sm:$0xf] %vm1171, %v4872
        %s4882 = smul.u32 4, %s14
        %p4883 = scmp.lt.s32.totalorder %s4882, 7
        %s4884 = scalar_select %p4883, %s4882, 7
        %s4885 = smul.addr %s4884, 40
        %s4886 = smul.addr %s4885, 8
        %s4887 = scalar_lea.vmem %s2, %s4886
        // Predicated region
        $region33: #{tpu_custom_call.1} parent=27 // pred_check
          %p4888 = pneg %p79
        $region34: #{tpu_custom_call.1} parent=27 // pred_check_branch
          %4890 = sbr.rel (%p4888) target = $region36
        $region35: #{tpu_custom_call.1} parent=27 // pred_region
          %s4891 = smul.u32 4, %s14
        $region36: #{tpu_custom_call.1} parent=27 // pred_fallthru
          _
      $region28: #{tpu_custom_call.1} parent=5 // pred_fallthru
        _
      %p4892 = scmp.le.s32.totalorder 2, %s9
      // Predicated region
      $region37: #{tpu_custom_call.1} parent=5 // pred_check
        %p4893 = pneg %p4892
      $region38: #{tpu_custom_call.1} parent=5 // pred_check_branch
        %4895 = sbr.rel (%p4893) target = $region40
      $region39: #{tpu_custom_call.1} parent=5 // pred_region
        %s4896 = ssub.s32 %s9, 2
        // Predicated region
        $region41: #{tpu_custom_call.1} parent=39 // pred_check
          %p4897 = pneg %p85
        $region42: #{tpu_custom_call.1} parent=39 // pred_check_branch
          %4899 = sbr.rel (%p4897) target = $region44
        $region43: #{tpu_custom_call.1} parent=39 // pred_region
          %s4900 = smul.u32 4, %s15
          %p4901 = scmp.lt.s32.totalorder %s4900, 7
          %s4902 = scalar_select %p4901, %s4900, 7
          %s4903 = smul.addr %s4902, 40
          %s4904 = smul.addr %s4903, 8
          %s4905 = scalar_lea.vmem %s2, %s4904
        $region44: #{tpu_custom_call.1} parent=39 // pred_fallthru
          _
      $region40: #{tpu_custom_call.1} parent=5 // pred_fallthru
        _
    $region6: #{tpu_custom_call.1} parent=1 // loop_footer
      %s13 = sadd.s32 1, %s9
    $region7: #{tpu_custom_call.1} parent=1 // loop_footer_branch
      %8 = sbr.rel target = $region3
    $region8: #{tpu_custom_call.1} parent=1 // loop_exit
      _
    %4906 = vsyncpa [#allocation5], 1
    %s4907 = scalar_lea.sflag [#allocation5], 1
    %4908 = vsyncpa %s4907, 1

</llo_original>
